<compile_context>
chip_gen: v6e
topology: v6e:2x2x1
jax: 0.10.0
libtpu: 0.0.40
codegen_flags: <defaults>
</compile_context>

<pallas_src>
import functools

import jax
import jax.numpy as jnp
from jax.experimental import pallas as pl
from jax.experimental.pallas import tpu as pltpu


# --------------------------------------------------------------------------
# Pallas kernel: fused multi-head GATLayer, streamed edge-block reduction
# --------------------------------------------------------------------------
def _gat_fused_kernel(m_ref, ef_ref, w_ref, sel_ref, out_ref,
                      m_scr, acc_scr, *, slope, nheads, dh, apply_elu):
    """One (node_block, edge_block) tile of the fused GAT layer.

    128-lane column layout of the projected tile / accumulator:
        [0, F)        per-head projected features (F = nheads * dh)
        [F, F + H)    per-head attention-score columns (input side) which
                      double as the per-head softmax denominators (output side)
        [F + H, 128)  zero padding (keeps the output store lane-dense)
    """
    e_idx = pl.program_id(1)
    feat = nheads * dh
    dpad = out_ref.shape[-1]

    @pl.when(e_idx == 0)
    def _init():
        m_scr[...] = jnp.full_like(m_scr, -1e30)
        acc_scr[...] = jnp.zeros_like(acc_scr)

    ef = ef_ref[...]                                                  # (Eb, Din) f32
    sel = sel_ref[...]                                                # (H, dpad) f32

    # Single fused MXU matmul: features in [0,F), raw scores in [F, F+H).
    eh_full = jnp.dot(ef, w_ref[...],
                      preferred_element_type=jnp.float32)             # (Eb, dpad)
    s = eh_full[:, feat:feat + nheads]                                 # (Eb, H)
    s = jnp.where(s > 0, s, slope * s)                                 # LeakyReLU

    # ---- online segment softmax with a per-head block-level shift ---------
    # (no per-edge max gather, no M transpose; exact up to fp underflow for
    #  within-block score spreads > ~88, unreachable for this module).
    gmax = jnp.max(s, axis=0, keepdims=True)                           # (1, H)
    m_old = m_scr[...]                                                 # (1, H)
    m_new = jnp.maximum(m_old, gmax)
    corr = jnp.exp(m_old - m_new)                                      # (1, H) <= 1
    # m_new >= gmax >= s for every edge in the block (incl. padded ones), so
    # the exponent is <= 0; the minimum clamp is kept as cheap insurance.
    p = jnp.exp(jnp.minimum(s - m_new, 0.0))                           # (Eb, H) <= 1

    # Broadcast the per-head scalars over the 128-lane tile via the constant
    # head-selector matrix (tiny MXU matmuls; replaces slice/concat chains).
    p_full = jnp.dot(p, sel, preferred_element_type=jnp.float32)       # (Eb, dpad)
    corr_full = jnp.dot(corr, sel, preferred_element_type=jnp.float32) # (1, dpad)

    # weighted tile: feature columns carry p*eh; the per-head denominator is
    # folded into columns [F, F+H) (p * 1); tail lanes stay zero.
    col = jax.lax.broadcasted_iota(jnp.int32, (1, dpad), 1)
    den_ind = ((col >= feat) & (col < feat + nheads)).astype(jnp.float32)
    eh_w = jnp.where(col < feat, eh_full, den_ind)                     # (Eb, dpad)
    weighted = (p_full * eh_w).astype(jnp.bfloat16)                    # (Eb, dpad)

    # Fused scatter-add of features AND denominators: ONE bf16 MXU matmul with
    # f32 accumulation.  M stays bf16 (never upcast, never transposed).
    scat = jnp.dot(m_ref[...], weighted,
                   preferred_element_type=jnp.float32)                 # (Nb, dpad)
    acc_scr[...] = corr_full * acc_scr[...] + scat
    m_scr[...] = m_new

    @pl.when(e_idx == pl.num_programs(1) - 1)
    def _finalize():
        acc = acc_scr[...]
        inv = 1.0 / (acc[:, feat:feat + nheads] + 1e-16)               # (Nb, H)
        inv_full = jnp.dot(inv, sel, preferred_element_type=jnp.float32)
        o = acc * inv_full
        if apply_elu:
            o = jnp.where(o > 0, o, jnp.exp(jnp.minimum(o, 0.0)) - 1.0)
        out_ref[...] = o


# --------------------------------------------------------------------------
# Wrapper for one fused multi-head GAT layer
# --------------------------------------------------------------------------
def _pad_rows(a, target):
    return jnp.pad(a, ((0, target - a.shape[0]), (0, 0)))


def gat_layer_fused(edge_feat, w_stacked, wa_cols, m_onehot, *, nheads, dh,
                    slope, apply_elu, node_block, edge_block, lane_pad=128,
                    vmem_limit_bytes=None):
    """edge_feat: (E_pad, Din) f32; w_stacked: (Din, nheads*dh); wa_cols: (Din, nheads);
    m_onehot: (N_pad, E_pad) bf16 one-hot of edge_index[0]."""
    e_pad, din = edge_feat.shape
    n_pad = m_onehot.shape[0]
    feat = nheads * dh
    assert feat + nheads <= lane_pad
    assert n_pad % node_block == 0 and e_pad % edge_block == 0

    # Lane-padded weights: features | attention-score columns | zeros.
    w_full = jnp.concatenate(
        [w_stacked.astype(jnp.float32), wa_cols.astype(jnp.float32),
         jnp.zeros((din, lane_pad - feat - nheads), jnp.float32)], axis=1)

    # Head/denominator selector: sel[h, c] = 1 iff c is a feature column of
    # head h or head h's denominator column.
    heads = jnp.arange(nheads)[:, None]
    cols = jnp.arange(lane_pad)[None, :]
    sel = (((cols // dh) == heads) & (cols < feat)) | (cols == feat + heads)
    sel = sel.astype(jnp.float32)

    if vmem_limit_bytes is None:
        # double-buffered inputs/outputs + resident accumulator + headroom;
        # keeps within v7x's 64 MiB; v6e/v5e can raise this and grow tiles.
        est = (2 * (node_block * edge_block * 2            # M tile (bf16)
                    + edge_block * din * 4                 # edge_feat tile
                    + node_block * lane_pad * 4)           # output tile
               + node_block * lane_pad * 4                 # accumulator scratch
               + (4 << 20))
        vmem_limit_bytes = int(min(max(est, 32 << 20), 64 << 20))

    grid = (n_pad // node_block, e_pad // edge_block)
    kernel = functools.partial(_gat_fused_kernel, slope=slope, nheads=nheads,
                               dh=dh, apply_elu=apply_elu)
    return pl.pallas_call(
        kernel,
        out_shape=jax.ShapeDtypeStruct((n_pad, lane_pad), jnp.float32),
        grid=grid,
        in_specs=[
            pl.BlockSpec((node_block, edge_block), lambda n, e: (n, e)),  # M (bf16)
            pl.BlockSpec((edge_block, din), lambda n, e: (e, 0)),         # edge_feat
            pl.BlockSpec((din, lane_pad), lambda n, e: (0, 0)),           # W | Wa | 0
            pl.BlockSpec((nheads, lane_pad), lambda n, e: (0, 0)),        # selector
        ],
        out_specs=pl.BlockSpec((node_block, lane_pad), lambda n, e: (n, 0)),
        scratch_shapes=[
            pltpu.VMEM((1, nheads), jnp.float32),           # running per-head shift
            pltpu.VMEM((node_block, lane_pad), jnp.float32),  # acc (+denom tail)
        ],
        compiler_params=pltpu.CompilerParams(
            dimension_semantics=("parallel", "arbitrary"),
            vmem_limit_bytes=vmem_limit_bytes),
    )(m_onehot, edge_feat, w_full, sel)


# --------------------------------------------------------------------------
# GAT forward (glue in plain JAX: gathers, concats, one-hot construction)
# --------------------------------------------------------------------------
def gat_forward(params, edge_index, x, r, edge_type, edge_type_nhop, *,
                slope, node_block=256, edge_block=1024):
    src, dst = edge_index[0], edge_index[1]
    n_nodes = x.shape[0]
    n_edges = src.shape[0]

    n_pad = -(-n_nodes // node_block) * node_block
    e_pad = -(-n_edges // edge_block) * edge_block

    # bf16 one-hot scatter matrix of edge_index[0]; padded rows/cols are zero.
    src_pad = jnp.concatenate(
        [src, jnp.full((e_pad - n_edges,), -1, dtype=src.dtype)])
    m_onehot = (src_pad[None, :] == jnp.arange(n_pad)[:, None]).astype(jnp.bfloat16)

    nheads = len(params["W_att"])
    dh = params["W_att"][0].shape[1]
    embed_dim = params["W_out"].shape[1]

    # ---- layer 1: fused multi-head attention (concat=True -> in-layer ELU) ----
    edge_embed = jnp.concatenate(
        [r[edge_type], r[edge_type_nhop[:, 0]] + r[edge_type_nhop[:, 1]]], axis=0)
    edge_feat = jnp.concatenate([x[src], x[dst], edge_embed], axis=1)
    edge_feat = _pad_rows(edge_feat, e_pad)

    w1 = jnp.concatenate(params["W_att"], axis=1)                       # (Din, H*Dh)
    wa1 = jnp.concatenate(
        [wh @ ah for wh, ah in zip(params["W_att"], params["a_att"])], axis=1)

    x1_pad = gat_layer_fused(edge_feat, w1, wa1, m_onehot, nheads=nheads, dh=dh,
                             slope=slope, apply_elu=True,
                             node_block=node_block, edge_block=edge_block)
    x1 = x1_pad[:n_nodes, :nheads * dh]
    # dropout_layer: eval mode -> identity

    # ---- relation projection (tiny matmul; left to XLA on purpose) ----
    r_new = r @ params["W_rel"]

    # ---- layer 2: out_att (concat=False, outer F.elu -> one ELU in kernel) ----
    edge_embed2 = jnp.concatenate(
        [r_new[edge_type],
         r_new[edge_type_nhop[:, 0]] + r_new[edge_type_nhop[:, 1]]], axis=0)
    edge_feat2 = jnp.concatenate([x1[src], x1[dst], edge_embed2], axis=1)
    edge_feat2 = _pad_rows(edge_feat2, e_pad)

    wa2 = params["W_out"] @ params["a_out"]                             # (Din2, 1)
    x2_pad = gat_layer_fused(edge_feat2, params["W_out"], wa2, m_onehot,
                             nheads=1, dh=embed_dim, slope=slope, apply_elu=True,
                             node_block=node_block, edge_block=edge_block)
    x2 = x2_pad[:n_nodes, :embed_dim]
    return x2, r_new


# --------------------------------------------------------------------------
# Pure-JAX reference (for correctness check)
# --------------------------------------------------------------------------
def _ref_layer(edge_feat, W, a, src, N, slope, apply_elu):
    eh = edge_feat @ W
    s = jnp.squeeze(eh @ a, -1)
    s = jnp.where(s > 0, s, slope * s)
    smax = jax.ops.segment_max(s, src, num_segments=N)
    ex = jnp.exp(s - smax[src])
    denom = jax.ops.segment_sum(ex, src, num_segments=N)
    alpha = ex / (denom[src] + 1e-16)
    out = jax.ops.segment_sum(alpha[:, None] * eh, src, num_segments=N)
    if apply_elu:
        out = jnp.where(out > 0, out, jnp.exp(out) - 1.0)
    return out


def gat_forward_ref(params, edge_index, x, r, edge_type, edge_type_nhop, *, slope):
    src, dst = edge_index[0], edge_index[1]
    N = x.shape[0]
    edge_embed = jnp.concatenate(
        [r[edge_type], r[edge_type_nhop[:, 0]] + r[edge_type_nhop[:, 1]]], axis=0)
    edge_feat = jnp.concatenate([x[src], x[dst], edge_embed], axis=1)
    heads = [_ref_layer(edge_feat, Wh, ah, src, N, slope, True)
             for Wh, ah in zip(params["W_att"], params["a_att"])]
    x1 = jnp.concatenate(heads, axis=1)
    r_new = r @ params["W_rel"]
    edge_embed2 = jnp.concatenate(
        [r_new[edge_type],
         r_new[edge_type_nhop[:, 0]] + r_new[edge_type_nhop[:, 1]]], axis=0)
    edge_feat2 = jnp.concatenate([x1[src], x1[dst], edge_embed2], axis=1)
    x2 = _ref_layer(edge_feat2, params["W_out"], params["a_out"], src, N, slope, True)
    return x2, r_new


# --------------------------------------------------------------------------
# Main
# --------------------------------------------------------------------------
if __name__ == "__main__":
    # Small but tiling-relevant sizes: grid = (2 node blocks, 2 edge blocks).
    N = 256              # num_nodes
    NFEAT = 16           # nfeat
    REL_DIM = 8          # relation_dim
    EMBED_DIM = 16       # embed_dim
    NHEADS = 2
    NHID = EMBED_DIM // NHEADS
    NUM_REL = 6
    E = 1900             # regular edges
    E_NHOP = 148         # n-hop edges
    ET = E + E_NHOP      # 2048 total edges
    LEAKY_SLOPE = 0.2
    NODE_BLOCK = 128
    EDGE_BLOCK = 1024
    # dropout = 0.0 (eval semantics -> identity)

    key = jax.random.PRNGKey(0)
    ks = jax.random.split(key, 12)

    x = jax.random.normal(ks[0], (N, NFEAT), dtype=jnp.float32)
    r = jax.random.normal(ks[1], (NUM_REL, REL_DIM), dtype=jnp.float32)
    edge_index = jax.random.randint(ks[2], (2, ET), 0, N, dtype=jnp.int32)
    edge_type = jax.random.randint(ks[3], (E,), 0, NUM_REL, dtype=jnp.int32)
    edge_type_nhop = jax.random.randint(ks[4], (E_NHOP, 2), 0, NUM_REL,
                                        dtype=jnp.int32)

    def init(k, shape):
        fan = shape[0]
        return jax.random.normal(k, shape, dtype=jnp.float32) / jnp.sqrt(fan)

    head_keys = jax.random.split(ks[5], NHEADS * 2)
    params = {
        "W_att": [init(head_keys[2 * h], (2 * NFEAT + REL_DIM, NHID))
                  for h in range(NHEADS)],
        "a_att": [init(head_keys[2 * h + 1], (NHID, 1)) for h in range(NHEADS)],
        "W_rel": init(ks[6], (REL_DIM, EMBED_DIM)),
        "W_out": init(ks[7], (2 * EMBED_DIM + EMBED_DIM, EMBED_DIM)),
        "a_out": init(ks[8], (EMBED_DIM, 1)),
    }

    fwd = jax.jit(functools.partial(gat_forward, slope=LEAKY_SLOPE,
                                    node_block=NODE_BLOCK,
                                    edge_block=EDGE_BLOCK))
    x_out, r_out = fwd(params, edge_index, x, r, edge_type, edge_type_nhop)
    jax.block_until_ready((x_out, r_out))

    # verify against pure-JAX reference
    x_ref, r_ref = gat_forward_ref(params, edge_index, x, r, edge_type,
                                   edge_type_nhop, slope=LEAKY_SLOPE)
    assert x_out.shape == (N, EMBED_DIM) and r_out.shape == (NUM_REL, EMBED_DIM)
    assert jnp.allclose(r_out, r_ref, rtol=1e-5, atol=1e-5)
    # bf16 operands on the dominant scatter matmul (per perf review) -> looser
    # tolerance than the pure-f32 path.
    assert jnp.allclose(x_out, x_ref, rtol=5e-2, atol=5e-2), (
        float(jnp.max(jnp.abs(x_out - x_ref))))

    print("KERNEL_OK")
</pallas_src>

<mosaic_0001>
module attributes {stable_mosaic.version = 11 : i64} {
  func.func @_gat_fused_kernel(%arg0: i32, %arg1: i32, %arg2: memref<128x1024xbf16, #tpu.memory_space<vmem>>, %arg3: memref<1024x40xf32, #tpu.memory_space<vmem>>, %arg4: memref<40x128xf32, #tpu.memory_space<vmem>>, %arg5: memref<2x128xf32, #tpu.memory_space<vmem>>, %arg6: memref<128x128xf32, #tpu.memory_space<vmem>>, %arg7: memref<1x2xf32, #tpu.memory_space<vmem>>, %arg8: memref<128x128xf32, #tpu.memory_space<vmem>>) attributes {dimension_semantics = [#tpu.dimension_semantics<parallel>, #tpu.dimension_semantics<arbitrary>], iteration_bounds = array<i64: 2, 2>, scalar_prefetch = 0 : i64, scratch_operands = 2 : i64, tpu.core_type = #tpu.core_type<tc>, window_params = [{transform_indices = @transform_0, window_bounds = array<i64: 128, 1024>}, {transform_indices = @transform_1, window_bounds = array<i64: 1024, 40>}, {pipeline_mode = #tpu.pipeline_mode<synchronous>, transform_indices = @transform_2, window_bounds = array<i64: 40, 128>}, {pipeline_mode = #tpu.pipeline_mode<synchronous>, transform_indices = @transform_3, window_bounds = array<i64: 2, 128>}, {transform_indices = @transform_4, window_bounds = array<i64: 128, 128>}]} {
    %c0_i32 = arith.constant 0 : i32
    %0 = arith.cmpi eq, %arg1, %c0_i32 : i32
    %1 = arith.extui %0 : i1 to i32
    %c0_i32_0 = arith.constant 0 : i32
    %2 = arith.cmpi ne, %1, %c0_i32_0 : i32
    scf.if %2 {
      %cst_25 = arith.constant -1.000000e+30 : f32
      %54 = vector.broadcast %cst_25 : f32 to vector<1x2xf32>
      %c0_26 = arith.constant 0 : index
      %c0_27 = arith.constant 0 : index
      %55 = vector.load %arg7[%c0_26, %c0_27] : memref<1x2xf32, #tpu.memory_space<vmem>>, vector<1x2xf32>
      tpu.vector_store %arg7[%c0_26, %c0_27], %54 {strides = array<i32>} : memref<1x2xf32, #tpu.memory_space<vmem>>, vector<1x2xf32>,
      %cst_28 = arith.constant 0.000000e+00 : f32
      %56 = vector.broadcast %cst_28 : f32 to vector<128x128xf32>
      %c0_29 = arith.constant 0 : index
      %c0_30 = arith.constant 0 : index
      %57 = vector.load %arg8[%c0_29, %c0_30] : memref<128x128xf32, #tpu.memory_space<vmem>>, vector<128x128xf32>
      tpu.vector_store %arg8[%c0_29, %c0_30], %56 {strides = array<i32>} : memref<128x128xf32, #tpu.memory_space<vmem>>, vector<128x128xf32>,
    } else {
    }
    %c0 = arith.constant 0 : index
    %c0_1 = arith.constant 0 : index
    %3 = vector.load %arg3[%c0, %c0_1] : memref<1024x40xf32, #tpu.memory_space<vmem>>, vector<1024x40xf32>
    %c0_2 = arith.constant 0 : index
    %c0_3 = arith.constant 0 : index
    %4 = vector.load %arg5[%c0_2, %c0_3] : memref<2x128xf32, #tpu.memory_space<vmem>>, vector<2x128xf32>
    %c0_4 = arith.constant 0 : index
    %c0_5 = arith.constant 0 : index
    %5 = vector.load %arg4[%c0_4, %c0_5] : memref<40x128xf32, #tpu.memory_space<vmem>>, vector<40x128xf32>
    %cst = arith.constant dense<0.000000e+00> : vector<1024x128xf32>
    %6 = tpu.matmul %3, %5, %cst {dimension_numbers = #tpu.dot_dimension_numbers<[1], [0], [0], [1], [0, 0, 1, 1], [], []>} : vector<1024x40xf32>, vector<40x128xf32>, vector<1024x128xf32> -> vector<1024x128xf32>
    %7 = vector.extract_strided_slice %6 {offsets = [0, 16], sizes = [1024, 2], strides = [1, 1]} : vector<1024x128xf32> to vector<1024x2xf32>
    %cst_6 = arith.constant 0.000000e+00 : f32
    %8 = vector.broadcast %cst_6 : f32 to vector<1024x2xf32>
    %9 = arith.cmpf ogt, %7, %8 : vector<1024x2xf32>
    %cst_7 = arith.constant 2.000000e-01 : f32
    %10 = vector.broadcast %cst_7 : f32 to vector<1024x2xf32>
    %11 = arith.mulf %10, %7 : vector<1024x2xf32>
    %12 = arith.select %9, %7, %11 : vector<1024x2xi1>, vector<1024x2xf32>
    %cst_8 = arith.constant dense<0xFF800000> : vector<2xf32>
    %13 = vector.multi_reduction <maximumf>, %12, %cst_8 [0] : vector<1024x2xf32> to vector<2xf32>
    %14 = vector.shape_cast %13 : vector<2xf32> to vector<1x2xf32>
    %c0_9 = arith.constant 0 : index
    %c0_10 = arith.constant 0 : index
    %15 = vector.load %arg7[%c0_9, %c0_10] : memref<1x2xf32, #tpu.memory_space<vmem>>, vector<1x2xf32>
    %16 = arith.maximumf %15, %14 : vector<1x2xf32>
    %17 = arith.subf %15, %16 : vector<1x2xf32>
    %18 = math.exp %17 : vector<1x2xf32>
    %19 = vector.broadcast %16 : vector<1x2xf32> to vector<1024x2xf32>
    %20 = arith.subf %12, %19 : vector<1024x2xf32>
    %cst_11 = arith.constant 0.000000e+00 : f32
    %21 = vector.broadcast %cst_11 : f32 to vector<1024x2xf32>
    %22 = arith.minimumf %20, %21 : vector<1024x2xf32>
    %23 = math.exp %22 : vector<1024x2xf32>
    %cst_12 = arith.constant dense<0.000000e+00> : vector<1024x128xf32>
    %24 = tpu.matmul %23, %4, %cst_12 {dimension_numbers = #tpu.dot_dimension_numbers<[1], [0], [0], [1], [0, 0, 1, 1], [], []>} : vector<1024x2xf32>, vector<2x128xf32>, vector<1024x128xf32> -> vector<1024x128xf32>
    %cst_13 = arith.constant dense<0.000000e+00> : vector<1x128xf32>
    %25 = tpu.matmul %18, %4, %cst_13 {dimension_numbers = #tpu.dot_dimension_numbers<[1], [0], [0], [1], [0, 0, 1, 1], [], []>} : vector<1x2xf32>, vector<2x128xf32>, vector<1x128xf32> -> vector<1x128xf32>
    %26 = tpu.iota {dimensions = array<i32: 1>} : vector<1x128xi32>
    %c16_i32 = arith.constant 16 : i32
    %27 = vector.broadcast %c16_i32 : i32 to vector<1x128xi32>
    %28 = arith.cmpi sge, %26, %27 : vector<1x128xi32>
    %c18_i32 = arith.constant 18 : i32
    %29 = vector.broadcast %c18_i32 : i32 to vector<1x128xi32>
    %30 = arith.cmpi slt, %26, %29 : vector<1x128xi32>
    %31 = arith.andi %28, %30 : vector<1x128xi1>
    %32 = arith.extui %31 : vector<1x128xi1> to vector<1x128xi32>
    %33 = arith.sitofp %32 : vector<1x128xi32> to vector<1x128xf32>
    %c16_i32_14 = arith.constant 16 : i32
    %34 = vector.broadcast %c16_i32_14 : i32 to vector<1x128xi32>
    %35 = arith.cmpi slt, %26, %34 : vector<1x128xi32>
    %36 = vector.shape_cast %35 : vector<1x128xi1> to vector<1x128xi1>
    %37 = vector.broadcast %36 : vector<1x128xi1> to vector<1024x128xi1>
    %38 = vector.shape_cast %33 : vector<1x128xf32> to vector<1x128xf32>
    %39 = vector.broadcast %38 : vector<1x128xf32> to vector<1024x128xf32>
    %40 = arith.select %37, %6, %39 : vector<1024x128xi1>, vector<1024x128xf32>
    %41 = arith.mulf %24, %40 : vector<1024x128xf32>
    %42 = arith.truncf %41 : vector<1024x128xf32> to vector<1024x128xbf16>
    %c0_15 = arith.constant 0 : index
    %c0_16 = arith.constant 0 : index
    %43 = vector.load %arg2[%c0_15, %c0_16] : memref<128x1024xbf16, #tpu.memory_space<vmem>>, vector<128x1024xbf16>
    %cst_17 = arith.constant dense<0.000000e+00> : vector<128x128xf32>
    %44 = tpu.matmul %43, %42, %cst_17 {dimension_numbers = #tpu.dot_dimension_numbers<[1], [0], [0], [1], [0, 0, 1, 1], [], []>} : vector<128x1024xbf16>, vector<1024x128xbf16>, vector<128x128xf32> -> vector<128x128xf32>
    %c0_18 = arith.constant 0 : index
    %c0_19 = arith.constant 0 : index
    %45 = vector.load %arg8[%c0_18, %c0_19] : memref<128x128xf32, #tpu.memory_space<vmem>>, vector<128x128xf32>
    %46 = vector.broadcast %25 : vector<1x128xf32> to vector<128x128xf32>
    %47 = arith.mulf %46, %45 : vector<128x128xf32>
    %48 = arith.addf %47, %44 : vector<128x128xf32>
    %c0_20 = arith.constant 0 : index
    %c0_21 = arith.constant 0 : index
    %49 = vector.load %arg8[%c0_20, %c0_21] : memref<128x128xf32, #tpu.memory_space<vmem>>, vector<128x128xf32>
    tpu.vector_store %arg8[%c0_20, %c0_21], %48 {strides = array<i32>} : memref<128x128xf32, #tpu.memory_space<vmem>>, vector<128x128xf32>,
    %c0_22 = arith.constant 0 : index
    %c0_23 = arith.constant 0 : index
    %50 = vector.load %arg7[%c0_22, %c0_23] : memref<1x2xf32, #tpu.memory_space<vmem>>, vector<1x2xf32>
    tpu.vector_store %arg7[%c0_22, %c0_23], %16 {strides = array<i32>} : memref<1x2xf32, #tpu.memory_space<vmem>>, vector<1x2xf32>,
    %c1_i32 = arith.constant 1 : i32
    %51 = arith.cmpi eq, %arg1, %c1_i32 : i32
    %52 = arith.extui %51 : i1 to i32
    %c0_i32_24 = arith.constant 0 : i32
    %53 = arith.cmpi ne, %52, %c0_i32_24 : i32
    scf.if %53 {
      %c0_25 = arith.constant 0 : index
      %c0_26 = arith.constant 0 : index
      %54 = vector.load %arg8[%c0_25, %c0_26] : memref<128x128xf32, #tpu.memory_space<vmem>>, vector<128x128xf32>
      %55 = vector.extract_strided_slice %54 {offsets = [0, 16], sizes = [128, 2], strides = [1, 1]} : vector<128x128xf32> to vector<128x2xf32>
      %cst_27 = arith.constant 1.000000e-16 : f32
      %56 = vector.broadcast %cst_27 : f32 to vector<128x2xf32>
      %57 = arith.addf %55, %56 : vector<128x2xf32>
      %cst_28 = arith.constant 1.000000e+00 : f32
      %58 = vector.broadcast %cst_28 : f32 to vector<128x2xf32>
      %59 = arith.divf %58, %57 : vector<128x2xf32>
      %cst_29 = arith.constant dense<0.000000e+00> : vector<128x128xf32>
      %60 = tpu.matmul %59, %4, %cst_29 {dimension_numbers = #tpu.dot_dimension_numbers<[1], [0], [0], [1], [0, 0, 1, 1], [], []>} : vector<128x2xf32>, vector<2x128xf32>, vector<128x128xf32> -> vector<128x128xf32>
      %61 = arith.mulf %54, %60 : vector<128x128xf32>
      %cst_30 = arith.constant 0.000000e+00 : f32
      %62 = vector.broadcast %cst_30 : f32 to vector<128x128xf32>
      %63 = arith.cmpf ogt, %61, %62 : vector<128x128xf32>
      %cst_31 = arith.constant 0.000000e+00 : f32
      %64 = vector.broadcast %cst_31 : f32 to vector<128x128xf32>
      %65 = arith.minimumf %61, %64 : vector<128x128xf32>
      %66 = math.exp %65 : vector<128x128xf32>
      %cst_32 = arith.constant 1.000000e+00 : f32
      %67 = vector.broadcast %cst_32 : f32 to vector<128x128xf32>
      %68 = arith.subf %66, %67 : vector<128x128xf32>
      %69 = arith.select %63, %61, %68 : vector<128x128xi1>, vector<128x128xf32>
      %c0_33 = arith.constant 0 : index
      %c0_34 = arith.constant 0 : index
      %70 = vector.load %arg6[%c0_33, %c0_34] : memref<128x128xf32, #tpu.memory_space<vmem>>, vector<128x128xf32>
      tpu.vector_store %arg6[%c0_33, %c0_34], %69 {strides = array<i32>} : memref<128x128xf32, #tpu.memory_space<vmem>>, vector<128x128xf32>,
    } else {
    }
    return
  }
  func.func @transform_0(%arg0: i32, %arg1: i32) -> (i32, i32) {
    %c0_i32 = arith.constant 0 : i32
    return %arg0, %arg1 : i32, i32
  }
  func.func @transform_1(%arg0: i32, %arg1: i32) -> (i32, i32) {
    %c0_i32 = arith.constant 0 : i32
    %c0_i32_0 = arith.constant 0 : i32
    return %arg1, %c0_i32 : i32, i32
  }
  func.func @transform_2(%arg0: i32, %arg1: i32) -> (i32, i32) {
    %c0_i32 = arith.constant 0 : i32
    %c0_i32_0 = arith.constant 0 : i32
    %c0_i32_1 = arith.constant 0 : i32
    return %c0_i32, %c0_i32_0 : i32, i32
  }
  func.func @transform_3(%arg0: i32, %arg1: i32) -> (i32, i32) {
    %c0_i32 = arith.constant 0 : i32
    %c0_i32_0 = arith.constant 0 : i32
    %c0_i32_1 = arith.constant 0 : i32
    return %c0_i32, %c0_i32_0 : i32, i32
  }
  func.func @transform_4(%arg0: i32, %arg1: i32) -> (i32, i32) {
    %c0_i32 = arith.constant 0 : i32
    %c0_i32_0 = arith.constant 0 : i32
    return %arg0, %c0_i32 : i32, i32
  }
}

module attributes {stable_mosaic.version = 11 : i64} {
  func.func @_gat_fused_kernel(%arg0: i32, %arg1: i32, %arg2: memref<128x1024xbf16, #tpu.memory_space<vmem>>, %arg3: memref<1024x48xf32, #tpu.memory_space<vmem>>, %arg4: memref<48x128xf32, #tpu.memory_space<vmem>>, %arg5: memref<1x128xf32, #tpu.memory_space<vmem>>, %arg6: memref<128x128xf32, #tpu.memory_space<vmem>>, %arg7: memref<1x1xf32, #tpu.memory_space<vmem>>, %arg8: memref<128x128xf32, #tpu.memory_space<vmem>>) attributes {dimension_semantics = [#tpu.dimension_semantics<parallel>, #tpu.dimension_semantics<arbitrary>], iteration_bounds = array<i64: 2, 2>, scalar_prefetch = 0 : i64, scratch_operands = 2 : i64, tpu.core_type = #tpu.core_type<tc>, window_params = [{transform_indices = @transform_0, window_bounds = array<i64: 128, 1024>}, {transform_indices = @transform_1, window_bounds = array<i64: 1024, 48>}, {pipeline_mode = #tpu.pipeline_mode<synchronous>, transform_indices = @transform_2, window_bounds = array<i64: 48, 128>}, {pipeline_mode = #tpu.pipeline_mode<synchronous>, transform_indices = @transform_3, window_bounds = array<i64: 1, 128>}, {transform_indices = @transform_4, window_bounds = array<i64: 128, 128>}]} {
    %c0_i32 = arith.constant 0 : i32
    %0 = arith.cmpi eq, %arg1, %c0_i32 : i32
    %1 = arith.extui %0 : i1 to i32
    %c0_i32_0 = arith.constant 0 : i32
    %2 = arith.cmpi ne, %1, %c0_i32_0 : i32
    scf.if %2 {
      %cst_25 = arith.constant -1.000000e+30 : f32
      %54 = vector.broadcast %cst_25 : f32 to vector<1x1xf32>
      %c0_26 = arith.constant 0 : index
      %c0_27 = arith.constant 0 : index
      %55 = vector.load %arg7[%c0_26, %c0_27] : memref<1x1xf32, #tpu.memory_space<vmem>>, vector<1x1xf32>
      tpu.vector_store %arg7[%c0_26, %c0_27], %54 {strides = array<i32>} : memref<1x1xf32, #tpu.memory_space<vmem>>, vector<1x1xf32>,
      %cst_28 = arith.constant 0.000000e+00 : f32
      %56 = vector.broadcast %cst_28 : f32 to vector<128x128xf32>
      %c0_29 = arith.constant 0 : index
      %c0_30 = arith.constant 0 : index
      %57 = vector.load %arg8[%c0_29, %c0_30] : memref<128x128xf32, #tpu.memory_space<vmem>>, vector<128x128xf32>
      tpu.vector_store %arg8[%c0_29, %c0_30], %56 {strides = array<i32>} : memref<128x128xf32, #tpu.memory_space<vmem>>, vector<128x128xf32>,
    } else {
    }
    %c0 = arith.constant 0 : index
    %c0_1 = arith.constant 0 : index
    %3 = vector.load %arg3[%c0, %c0_1] : memref<1024x48xf32, #tpu.memory_space<vmem>>, vector<1024x48xf32>
    %c0_2 = arith.constant 0 : index
    %c0_3 = arith.constant 0 : index
    %4 = vector.load %arg5[%c0_2, %c0_3] : memref<1x128xf32, #tpu.memory_space<vmem>>, vector<1x128xf32>
    %c0_4 = arith.constant 0 : index
    %c0_5 = arith.constant 0 : index
    %5 = vector.load %arg4[%c0_4, %c0_5] : memref<48x128xf32, #tpu.memory_space<vmem>>, vector<48x128xf32>
    %cst = arith.constant dense<0.000000e+00> : vector<1024x128xf32>
    %6 = tpu.matmul %3, %5, %cst {dimension_numbers = #tpu.dot_dimension_numbers<[1], [0], [0], [1], [0, 0, 1, 1], [], []>} : vector<1024x48xf32>, vector<48x128xf32>, vector<1024x128xf32> -> vector<1024x128xf32>
    %7 = vector.extract_strided_slice %6 {offsets = [0, 16], sizes = [1024, 1], strides = [1, 1]} : vector<1024x128xf32> to vector<1024x1xf32>
    %cst_6 = arith.constant 0.000000e+00 : f32
    %8 = vector.broadcast %cst_6 : f32 to vector<1024x1xf32>
    %9 = arith.cmpf ogt, %7, %8 : vector<1024x1xf32>
    %cst_7 = arith.constant 2.000000e-01 : f32
    %10 = vector.broadcast %cst_7 : f32 to vector<1024x1xf32>
    %11 = arith.mulf %10, %7 : vector<1024x1xf32>
    %12 = arith.select %9, %7, %11 : vector<1024x1xi1>, vector<1024x1xf32>
    %cst_8 = arith.constant dense<0xFF800000> : vector<1xf32>
    %13 = vector.multi_reduction <maximumf>, %12, %cst_8 [0] : vector<1024x1xf32> to vector<1xf32>
    %14 = vector.shape_cast %13 : vector<1xf32> to vector<1x1xf32>
    %c0_9 = arith.constant 0 : index
    %c0_10 = arith.constant 0 : index
    %15 = vector.load %arg7[%c0_9, %c0_10] : memref<1x1xf32, #tpu.memory_space<vmem>>, vector<1x1xf32>
    %16 = arith.maximumf %15, %14 : vector<1x1xf32>
    %17 = arith.subf %15, %16 : vector<1x1xf32>
    %18 = math.exp %17 : vector<1x1xf32>
    %19 = vector.broadcast %16 : vector<1x1xf32> to vector<1024x1xf32>
    %20 = arith.subf %12, %19 : vector<1024x1xf32>
    %cst_11 = arith.constant 0.000000e+00 : f32
    %21 = vector.broadcast %cst_11 : f32 to vector<1024x1xf32>
    %22 = arith.minimumf %20, %21 : vector<1024x1xf32>
    %23 = math.exp %22 : vector<1024x1xf32>
    %cst_12 = arith.constant dense<0.000000e+00> : vector<1024x128xf32>
    %24 = tpu.matmul %23, %4, %cst_12 {dimension_numbers = #tpu.dot_dimension_numbers<[1], [0], [0], [1], [0, 0, 1, 1], [], []>} : vector<1024x1xf32>, vector<1x128xf32>, vector<1024x128xf32> -> vector<1024x128xf32>
    %cst_13 = arith.constant dense<0.000000e+00> : vector<1x128xf32>
    %25 = tpu.matmul %18, %4, %cst_13 {dimension_numbers = #tpu.dot_dimension_numbers<[1], [0], [0], [1], [0, 0, 1, 1], [], []>} : vector<1x1xf32>, vector<1x128xf32>, vector<1x128xf32> -> vector<1x128xf32>
    %26 = tpu.iota {dimensions = array<i32: 1>} : vector<1x128xi32>
    %c16_i32 = arith.constant 16 : i32
    %27 = vector.broadcast %c16_i32 : i32 to vector<1x128xi32>
    %28 = arith.cmpi sge, %26, %27 : vector<1x128xi32>
    %c17_i32 = arith.constant 17 : i32
    %29 = vector.broadcast %c17_i32 : i32 to vector<1x128xi32>
    %30 = arith.cmpi slt, %26, %29 : vector<1x128xi32>
    %31 = arith.andi %28, %30 : vector<1x128xi1>
    %32 = arith.extui %31 : vector<1x128xi1> to vector<1x128xi32>
    %33 = arith.sitofp %32 : vector<1x128xi32> to vector<1x128xf32>
    %c16_i32_14 = arith.constant 16 : i32
    %34 = vector.broadcast %c16_i32_14 : i32 to vector<1x128xi32>
    %35 = arith.cmpi slt, %26, %34 : vector<1x128xi32>
    %36 = vector.shape_cast %35 : vector<1x128xi1> to vector<1x128xi1>
    %37 = vector.broadcast %36 : vector<1x128xi1> to vector<1024x128xi1>
    %38 = vector.shape_cast %33 : vector<1x128xf32> to vector<1x128xf32>
    %39 = vector.broadcast %38 : vector<1x128xf32> to vector<1024x128xf32>
    %40 = arith.select %37, %6, %39 : vector<1024x128xi1>, vector<1024x128xf32>
    %41 = arith.mulf %24, %40 : vector<1024x128xf32>
    %42 = arith.truncf %41 : vector<1024x128xf32> to vector<1024x128xbf16>
    %c0_15 = arith.constant 0 : index
    %c0_16 = arith.constant 0 : index
    %43 = vector.load %arg2[%c0_15, %c0_16] : memref<128x1024xbf16, #tpu.memory_space<vmem>>, vector<128x1024xbf16>
    %cst_17 = arith.constant dense<0.000000e+00> : vector<128x128xf32>
    %44 = tpu.matmul %43, %42, %cst_17 {dimension_numbers = #tpu.dot_dimension_numbers<[1], [0], [0], [1], [0, 0, 1, 1], [], []>} : vector<128x1024xbf16>, vector<1024x128xbf16>, vector<128x128xf32> -> vector<128x128xf32>
    %c0_18 = arith.constant 0 : index
    %c0_19 = arith.constant 0 : index
    %45 = vector.load %arg8[%c0_18, %c0_19] : memref<128x128xf32, #tpu.memory_space<vmem>>, vector<128x128xf32>
    %46 = vector.broadcast %25 : vector<1x128xf32> to vector<128x128xf32>
    %47 = arith.mulf %46, %45 : vector<128x128xf32>
    %48 = arith.addf %47, %44 : vector<128x128xf32>
    %c0_20 = arith.constant 0 : index
    %c0_21 = arith.constant 0 : index
    %49 = vector.load %arg8[%c0_20, %c0_21] : memref<128x128xf32, #tpu.memory_space<vmem>>, vector<128x128xf32>
    tpu.vector_store %arg8[%c0_20, %c0_21], %48 {strides = array<i32>} : memref<128x128xf32, #tpu.memory_space<vmem>>, vector<128x128xf32>,
    %c0_22 = arith.constant 0 : index
    %c0_23 = arith.constant 0 : index
    %50 = vector.load %arg7[%c0_22, %c0_23] : memref<1x1xf32, #tpu.memory_space<vmem>>, vector<1x1xf32>
    tpu.vector_store %arg7[%c0_22, %c0_23], %16 {strides = array<i32>} : memref<1x1xf32, #tpu.memory_space<vmem>>, vector<1x1xf32>,
    %c1_i32 = arith.constant 1 : i32
    %51 = arith.cmpi eq, %arg1, %c1_i32 : i32
    %52 = arith.extui %51 : i1 to i32
    %c0_i32_24 = arith.constant 0 : i32
    %53 = arith.cmpi ne, %52, %c0_i32_24 : i32
    scf.if %53 {
      %c0_25 = arith.constant 0 : index
      %c0_26 = arith.constant 0 : index
      %54 = vector.load %arg8[%c0_25, %c0_26] : memref<128x128xf32, #tpu.memory_space<vmem>>, vector<128x128xf32>
      %55 = vector.extract_strided_slice %54 {offsets = [0, 16], sizes = [128, 1], strides = [1, 1]} : vector<128x128xf32> to vector<128x1xf32>
      %cst_27 = arith.constant 1.000000e-16 : f32
      %56 = vector.broadcast %cst_27 : f32 to vector<128x1xf32>
      %57 = arith.addf %55, %56 : vector<128x1xf32>
      %cst_28 = arith.constant 1.000000e+00 : f32
      %58 = vector.broadcast %cst_28 : f32 to vector<128x1xf32>
      %59 = arith.divf %58, %57 : vector<128x1xf32>
      %cst_29 = arith.constant dense<0.000000e+00> : vector<128x128xf32>
      %60 = tpu.matmul %59, %4, %cst_29 {dimension_numbers = #tpu.dot_dimension_numbers<[1], [0], [0], [1], [0, 0, 1, 1], [], []>} : vector<128x1xf32>, vector<1x128xf32>, vector<128x128xf32> -> vector<128x128xf32>
      %61 = arith.mulf %54, %60 : vector<128x128xf32>
      %cst_30 = arith.constant 0.000000e+00 : f32
      %62 = vector.broadcast %cst_30 : f32 to vector<128x128xf32>
      %63 = arith.cmpf ogt, %61, %62 : vector<128x128xf32>
      %cst_31 = arith.constant 0.000000e+00 : f32
      %64 = vector.broadcast %cst_31 : f32 to vector<128x128xf32>
      %65 = arith.minimumf %61, %64 : vector<128x128xf32>
      %66 = math.exp %65 : vector<128x128xf32>
      %cst_32 = arith.constant 1.000000e+00 : f32
      %67 = vector.broadcast %cst_32 : f32 to vector<128x128xf32>
      %68 = arith.subf %66, %67 : vector<128x128xf32>
      %69 = arith.select %63, %61, %68 : vector<128x128xi1>, vector<128x128xf32>
      %c0_33 = arith.constant 0 : index
      %c0_34 = arith.constant 0 : index
      %70 = vector.load %arg6[%c0_33, %c0_34] : memref<128x128xf32, #tpu.memory_space<vmem>>, vector<128x128xf32>
      tpu.vector_store %arg6[%c0_33, %c0_34], %69 {strides = array<i32>} : memref<128x128xf32, #tpu.memory_space<vmem>>, vector<128x128xf32>,
    } else {
    }
    return
  }
  func.func @transform_0(%arg0: i32, %arg1: i32) -> (i32, i32) {
    %c0_i32 = arith.constant 0 : i32
    return %arg0, %arg1 : i32, i32
  }
  func.func @transform_1(%arg0: i32, %arg1: i32) -> (i32, i32) {
    %c0_i32 = arith.constant 0 : i32
    %c0_i32_0 = arith.constant 0 : i32
    return %arg1, %c0_i32 : i32, i32
  }
  func.func @transform_2(%arg0: i32, %arg1: i32) -> (i32, i32) {
    %c0_i32 = arith.constant 0 : i32
    %c0_i32_0 = arith.constant 0 : i32
    %c0_i32_1 = arith.constant 0 : i32
    return %c0_i32, %c0_i32_0 : i32, i32
  }
  func.func @transform_3(%arg0: i32, %arg1: i32) -> (i32, i32) {
    %c0_i32 = arith.constant 0 : i32
    %c0_i32_0 = arith.constant 0 : i32
    %c0_i32_1 = arith.constant 0 : i32
    return %c0_i32, %c0_i32_0 : i32, i32
  }
  func.func @transform_4(%arg0: i32, %arg1: i32) -> (i32, i32) {
    %c0_i32 = arith.constant 0 : i32
    %c0_i32_0 = arith.constant 0 : i32
    return %arg0, %c0_i32 : i32, i32
  }
}

</mosaic_0001>

<llo_original>
// kernel: gat_forward.2
$region0: #{gat_forward.2}
  #allocation0 [shape = 'u32[]', space=smem, size = 0x4, offset = 0x4, fixed_abs, tag = 'smem constant byte address 0x4 - core index']
  #allocation1 [shape = 'u32[144,128]{1,0:T(1,128)}', space=vmem, size = 0x12000, scoped, tag = 'internal scratch']
  #allocation2 [shape = 'f32[1,2]{1,0:T(1,128)}', space=vmem, size = 0x200, scoped, tag = 'scratch operand']
  #allocation3 [shape = 'f32[128,128]{1,0:T(8,128)}', space=vmem, size = 0x10000, scoped, tag = 'scratch operand']
  %s0 = inlined_call_operand.vmem [shape: bf16[256,2048], index: 0, kind: input, shape index: {}]
  %s1 = inlined_call_operand.vmem [shape: f32[2048,40], index: 1, kind: input, shape index: {}]
  %s2 = inlined_call_operand.vmem [shape: f32[40,128], index: 2, kind: input, shape index: {}]
  %s3 = inlined_call_operand.vmem [shape: f32[2,128], index: 3, kind: input, shape index: {}]
  %s4 = inlined_call_operand.vmem [shape: f32[256,128], index: 4, kind: output, shape index: {}]
  %s5 = sld [smem:[#allocation0]]
  $region80: #{gat_forward.2} parent=0
    _
  %s7 = ssub.s32 1, %s5
  %s8 = scalar_select 0, %s7, %s5
  $region1: #{gat_forward.2} parent=0
    #allocation4 [shape = 'u8[524288]{0}', space=vmem, size = 0x80000, scoped, tag = 'input window, operand 0']
    loop: start=0, step=1, limit=6
    $region2: #{gat_forward.2} parent=1 // loop_pre_header
      _
    $region3: #{gat_forward.2} parent=1 // loop_header
      %s10 = sphi 0, %s14
      %p11 = scmp.ge.s32.totalorder %s10, 6
      %s17 = sphi 0, %s29
      %s18 = sphi 0, %s25
      %s19 = sphi 0, %s17
      %s20 = sphi 0, %s18
      %s21 = sphi 0, %s19
      %s22 = sphi 0, %s20
      %s34 = sphi 0, %s36
      %s37 = sphi 0, %s34
      %s38 = sphi 0, %s37
      %s54 = sphi 0, %s38
      %s60 = sphi 0, %s62
      %s63 = sphi 0, %s60
      %s64 = sphi 0, %s63
      %s80 = sphi 0, %s64
      %s84 = sphi 0, %s84
      %s86 = sphi 0, %s84
      %s87 = sphi 0, %s86
      %s101 = sphi 0, %s87
      %s105 = sphi 0, %s105
      %s107 = sphi 0, %s105
      %s108 = sphi 0, %s107
      %s122 = sphi 0, %s108
      %s128 = sphi 0, %s130
      %s131 = sphi 0, %s128
      %s132 = sphi 0, %s131
      %s148 = sphi 0, %s132
    $region4: #{gat_forward.2} parent=1 // loop_header_branch
      %13 = sbr.rel (%p11) target = $region8
    $region5: #{gat_forward.2} parent=1 // loop_body
      %s15 = ssub.s32 %s10, 1
      %s16 = ssub.s32 %s10, 2
      %s23 = sadd.s32 1, %s18
      %p24 = scmp.ge.s32.totalorder %s23, 2
      %s25 = scalar_select %p24, 0, %s23
      %s26 = sadd.s32 1, %s17
      %s27 = scalar_select %p24, %s26, %s17
      %p28 = scmp.ge.s32.totalorder %s27, 2
      %s29 = scalar_select %p28, 0, %s27
      %s30 = ssub.s32 %s17, %s29
      %s31 = ssub.s32 %s18, %s25
      %s32 = sor.u32 %s30, %s31
      %p33 = scmp.eq.s32.totalorder %s32, 0
      %s35 = sadd.s32 %s34, 1
      %s36 = scalar_select %p33, %s34, %s35
      %p39 = pneg %p33
      %p40 = scmp.eq.s32.totalorder %s10, 3
      %p41 = por %p39, %p40
      %p42 = scmp.ne.s32.totalorder %s34, %s37
      %p43 = scmp.eq.s32.totalorder %s10, 0
      %p44 = por %p42, %p43
      %p45 = scmp.ne.s32.totalorder %s34, %s37
      %p46 = scmp.eq.s32.totalorder %s15, 3
      %p47 = por %p45, %p46
      %p48 = scmp.ne.s32.totalorder %s37, %s38
      %p49 = scmp.eq.s32.totalorder %s15, 0
      %p50 = por %p48, %p49
      %p51 = scmp.ne.s32.totalorder %s37, %s38
      %p52 = scmp.eq.s32.totalorder %s16, 3
      %p53 = por %p51, %p52
      %p55 = scmp.ne.s32.totalorder %s38, %s54
      %p56 = scmp.eq.s32.totalorder %s16, 0
      %p57 = por %p55, %p56
      %s58 = ssub.s32 %s18, %s25
      %p59 = scmp.eq.s32.totalorder %s58, 0
      %s61 = sadd.s32 %s60, 1
      %s62 = scalar_select %p59, %s60, %s61
      %p65 = pneg %p59
      %p66 = scmp.eq.s32.totalorder %s10, 3
      %p67 = por %p65, %p66
      %p68 = scmp.ne.s32.totalorder %s60, %s63
      %p69 = scmp.eq.s32.totalorder %s10, 0
      %p70 = por %p68, %p69
      %p71 = scmp.ne.s32.totalorder %s60, %s63
      %p72 = scmp.eq.s32.totalorder %s15, 3
      %p73 = por %p71, %p72
      %p74 = scmp.ne.s32.totalorder %s63, %s64
      %p75 = scmp.eq.s32.totalorder %s15, 0
      %p76 = por %p74, %p75
      %p77 = scmp.ne.s32.totalorder %s63, %s64
      %p78 = scmp.eq.s32.totalorder %s16, 3
      %p79 = por %p77, %p78
      %p81 = scmp.ne.s32.totalorder %s64, %s80
      %p82 = scmp.eq.s32.totalorder %s16, 0
      %p83 = por %p81, %p82
      %s85 = sadd.s32 %s84, 1
      %p88 = scmp.eq.s32.totalorder %s10, 3
      %p89 = scmp.ne.s32.totalorder %s84, %s86
      %p90 = scmp.eq.s32.totalorder %s10, 0
      %p91 = por %p89, %p90
      %p92 = scmp.ne.s32.totalorder %s84, %s86
      %p93 = scmp.eq.s32.totalorder %s15, 3
      %p94 = por %p92, %p93
      %p95 = scmp.ne.s32.totalorder %s86, %s87
      %p96 = scmp.eq.s32.totalorder %s15, 0
      %p97 = por %p95, %p96
      %p98 = scmp.ne.s32.totalorder %s86, %s87
      %p99 = scmp.eq.s32.totalorder %s16, 3
      %p100 = por %p98, %p99
      %p102 = scmp.ne.s32.totalorder %s87, %s101
      %p103 = scmp.eq.s32.totalorder %s16, 0
      %p104 = por %p102, %p103
      %s106 = sadd.s32 %s105, 1
      %p109 = scmp.eq.s32.totalorder %s10, 3
      %p110 = scmp.ne.s32.totalorder %s105, %s107
      %p111 = scmp.eq.s32.totalorder %s10, 0
      %p112 = por %p110, %p111
      %p113 = scmp.ne.s32.totalorder %s105, %s107
      %p114 = scmp.eq.s32.totalorder %s15, 3
      %p115 = por %p113, %p114
      %p116 = scmp.ne.s32.totalorder %s107, %s108
      %p117 = scmp.eq.s32.totalorder %s15, 0
      %p118 = por %p116, %p117
      %p119 = scmp.ne.s32.totalorder %s107, %s108
      %p120 = scmp.eq.s32.totalorder %s16, 3
      %p121 = por %p119, %p120
      %p123 = scmp.ne.s32.totalorder %s108, %s122
      %p124 = scmp.eq.s32.totalorder %s16, 0
      %p125 = por %p123, %p124
      %s126 = ssub.s32 %s17, %s29
      %p127 = scmp.eq.s32.totalorder %s126, 0
      %s129 = sadd.s32 %s128, 1
      %s130 = scalar_select %p127, %s128, %s129
      %p133 = pneg %p127
      %p134 = scmp.eq.s32.totalorder %s10, 3
      %p135 = por %p133, %p134
      %p136 = scmp.ne.s32.totalorder %s128, %s131
      %p137 = scmp.eq.s32.totalorder %s10, 0
      %p138 = por %p136, %p137
      %p139 = scmp.ne.s32.totalorder %s128, %s131
      %p140 = scmp.eq.s32.totalorder %s15, 3
      %p141 = por %p139, %p140
      %p142 = scmp.ne.s32.totalorder %s131, %s132
      %p143 = scmp.eq.s32.totalorder %s15, 0
      %p144 = por %p142, %p143
      %p145 = scmp.ne.s32.totalorder %s131, %s132
      %p146 = scmp.eq.s32.totalorder %s16, 3
      %p147 = por %p145, %p146
      %p149 = scmp.ne.s32.totalorder %s132, %s148
      %p150 = scmp.eq.s32.totalorder %s16, 0
      %p151 = por %p149, %p150
      %p152 = scmp.le.s32.totalorder 1, %s10
      %p153 = scmp.lt.s32.totalorder %s10, 5
      %p154 = pnand %p152, %p153
      %p155 = pneg %p154
      // Predicated region
      $region9: #{gat_forward.2} parent=5 // pred_check
        _
      $region10: #{gat_forward.2} parent=5 // pred_check_branch
        %157 = sbr.rel (%p154) target = $region12
      $region11: #{gat_forward.2} parent=5 // pred_region
        %s158 = ssub.s32 %s10, 1
        // Predicated region
        $region13: #{gat_forward.2} parent=11 // pred_check
          %p159 = pneg %p97
        $region14: #{gat_forward.2} parent=11 // pred_check_branch
          %161 = sbr.rel (%p159) target = $region16
        $region15: #{gat_forward.2} parent=11 // pred_region
          _
        $region16: #{gat_forward.2} parent=11 // pred_fallthru
          _
        // Predicated region
        $region17: #{gat_forward.2} parent=11 // pred_check
          %p162 = pneg %p118
        $region18: #{gat_forward.2} parent=11 // pred_check_branch
          %164 = sbr.rel (%p162) target = $region20
        $region19: #{gat_forward.2} parent=11 // pred_region
          _
        $region20: #{gat_forward.2} parent=11 // pred_fallthru
          _
      $region12: #{gat_forward.2} parent=5 // pred_fallthru
        _
      %p165 = scmp.lt.s32.totalorder %s10, 4
      // Predicated region
      $region21: #{gat_forward.2} parent=5 // pred_check
        %p166 = pneg %p165
      $region22: #{gat_forward.2} parent=5 // pred_check_branch
        %168 = sbr.rel (%p166) target = $region24
      $region23: #{gat_forward.2} parent=5 // pred_region
        // Predicated region
        $region25: #{gat_forward.2} parent=23 // pred_check
          %p169 = pneg %p44
        $region26: #{gat_forward.2} parent=23 // pred_check_branch
          %171 = sbr.rel (%p169) target = $region28
        $region27: #{gat_forward.2} parent=23 // pred_region
          %s172 = sand.u32 %s34, 1
          %s173 = sand.u32 %s34, 1
          %s174 = smul.addr %s173, 512
          %s175 = scalar_lea.vmem [#allocation4], %s174
          %s176 = smul.u32 16, %s17
          %s177 = smul.u32 8, %s18
          %s178 = smul.addr %s176, 16
          %s179 = sadd.s32 %s177, %s178
          %s180 = smul.addr %s179, 4
          %s181 = scalar_lea.vmem %s0, %s180
          // Predicated region
          $region29: #{gat_forward.2} parent=27 // pred_check
            _
          $region30: #{gat_forward.2} parent=27 // pred_check_branch
            %183 = sbr.rel (0) target = $region32
          $region31: #{gat_forward.2} parent=27 // pred_region
            // Predicated region
            $region33: #{gat_forward.2} parent=31 // pred_check
              _
            $region34: #{gat_forward.2} parent=31 // pred_check_branch
              %185 = sbr.rel (0) target = $region36
            $region35: #{gat_forward.2} parent=31 // pred_region
              loop: start=0, step=1, limit=1
              $region37: #{gat_forward.2} parent=35 // loop_pre_header
                _
              $region38: #{gat_forward.2} parent=35 // loop_header
                %s187 = sphi 0, %s191
                %p188 = scmp.ge.s32.totalorder %s187, 1
                %s192 = sphi %s181, %s181
                %s193 = sphi %s175, %s175
              $region39: #{gat_forward.2} parent=35 // loop_header_branch
                %190 = sbr.rel (%p188) target = $region43
              $region40: #{gat_forward.2} parent=35 // loop_body
                %v194 = vld [vmem:[%s192] sm:$0xff]
                %195 = vst [vmem:[%s193] sm:$0xff] %v194
                %v196 = vld [vmem:[%s192 + $0x8] sm:$0xff]
                %197 = vst [vmem:[%s193 + $0x8] sm:$0xff] %v196
                %v198 = vld [vmem:[%s192 + $0x10] sm:$0xff]
                %199 = vst [vmem:[%s193 + $0x10] sm:$0xff] %v198
                %v200 = vld [vmem:[%s192 + $0x18] sm:$0xff]
                %201 = vst [vmem:[%s193 + $0x18] sm:$0xff] %v200
                %v202 = vld [vmem:[%s192 + $0x40] sm:$0xff]
                %203 = vst [vmem:[%s193 + $0x20] sm:$0xff] %v202
                %v204 = vld [vmem:[%s192 + $0x48] sm:$0xff]
                %205 = vst [vmem:[%s193 + $0x28] sm:$0xff] %v204
                %v206 = vld [vmem:[%s192 + $0x50] sm:$0xff]
                %207 = vst [vmem:[%s193 + $0x30] sm:$0xff] %v206
                %v208 = vld [vmem:[%s192 + $0x58] sm:$0xff]
                %209 = vst [vmem:[%s193 + $0x38] sm:$0xff] %v208
                %v210 = vld [vmem:[%s192 + $0x80] sm:$0xff]
                %211 = vst [vmem:[%s193 + $0x40] sm:$0xff] %v210
                %v212 = vld [vmem:[%s192 + $0x88] sm:$0xff]
                %213 = vst [vmem:[%s193 + $0x48] sm:$0xff] %v212
                %v214 = vld [vmem:[%s192 + $0x90] sm:$0xff]
                %215 = vst [vmem:[%s193 + $0x50] sm:$0xff] %v214
                %v216 = vld [vmem:[%s192 + $0x98] sm:$0xff]
                %217 = vst [vmem:[%s193 + $0x58] sm:$0xff] %v216
                %v218 = vld [vmem:[%s192 + $0xc0] sm:$0xff]
                %219 = vst [vmem:[%s193 + $0x60] sm:$0xff] %v218
                %v220 = vld [vmem:[%s192 + $0xc8] sm:$0xff]
                %221 = vst [vmem:[%s193 + $0x68] sm:$0xff] %v220
                %v222 = vld [vmem:[%s192 + $0xd0] sm:$0xff]
                %223 = vst [vmem:[%s193 + $0x70] sm:$0xff] %v222
                %v224 = vld [vmem:[%s192 + $0xd8] sm:$0xff]
                %225 = vst [vmem:[%s193 + $0x78] sm:$0xff] %v224
                %v226 = vld [vmem:[%s192 + $0x100] sm:$0xff]
                %227 = vst [vmem:[%s193 + $0x80] sm:$0xff] %v226
                %v228 = vld [vmem:[%s192 + $0x108] sm:$0xff]
                %229 = vst [vmem:[%s193 + $0x88] sm:$0xff] %v228
                %v230 = vld [vmem:[%s192 + $0x110] sm:$0xff]
                %231 = vst [vmem:[%s193 + $0x90] sm:$0xff] %v230
                %v232 = vld [vmem:[%s192 + $0x118] sm:$0xff]
                %233 = vst [vmem:[%s193 + $0x98] sm:$0xff] %v232
                %v234 = vld [vmem:[%s192 + $0x140] sm:$0xff]
                %235 = vst [vmem:[%s193 + $0xa0] sm:$0xff] %v234
                %v236 = vld [vmem:[%s192 + $0x148] sm:$0xff]
                %237 = vst [vmem:[%s193 + $0xa8] sm:$0xff] %v236
                %v238 = vld [vmem:[%s192 + $0x150] sm:$0xff]
                %239 = vst [vmem:[%s193 + $0xb0] sm:$0xff] %v238
                %v240 = vld [vmem:[%s192 + $0x158] sm:$0xff]
                %241 = vst [vmem:[%s193 + $0xb8] sm:$0xff] %v240
                %v242 = vld [vmem:[%s192 + $0x180] sm:$0xff]
                %243 = vst [vmem:[%s193 + $0xc0] sm:$0xff] %v242
                %v244 = vld [vmem:[%s192 + $0x188] sm:$0xff]
                %245 = vst [vmem:[%s193 + $0xc8] sm:$0xff] %v244
                %v246 = vld [vmem:[%s192 + $0x190] sm:$0xff]
                %247 = vst [vmem:[%s193 + $0xd0] sm:$0xff] %v246
                %v248 = vld [vmem:[%s192 + $0x198] sm:$0xff]
                %249 = vst [vmem:[%s193 + $0xd8] sm:$0xff] %v248
                %v250 = vld [vmem:[%s192 + $0x1c0] sm:$0xff]
                %251 = vst [vmem:[%s193 + $0xe0] sm:$0xff] %v250
                %v252 = vld [vmem:[%s192 + $0x1c8] sm:$0xff]
                %253 = vst [vmem:[%s193 + $0xe8] sm:$0xff] %v252
                %v254 = vld [vmem:[%s192 + $0x1d0] sm:$0xff]
                %255 = vst [vmem:[%s193 + $0xf0] sm:$0xff] %v254
                %v256 = vld [vmem:[%s192 + $0x1d8] sm:$0xff]
                %257 = vst [vmem:[%s193 + $0xf8] sm:$0xff] %v256
                %v258 = vld [vmem:[%s192 + $0x200] sm:$0xff]
                %259 = vst [vmem:[%s193 + $0x100] sm:$0xff] %v258
                %v260 = vld [vmem:[%s192 + $0x208] sm:$0xff]
                %261 = vst [vmem:[%s193 + $0x108] sm:$0xff] %v260
                %v262 = vld [vmem:[%s192 + $0x210] sm:$0xff]
                %263 = vst [vmem:[%s193 + $0x110] sm:$0xff] %v262
                %v264 = vld [vmem:[%s192 + $0x218] sm:$0xff]
                %265 = vst [vmem:[%s193 + $0x118] sm:$0xff] %v264
                %v266 = vld [vmem:[%s192 + $0x240] sm:$0xff]
                %267 = vst [vmem:[%s193 + $0x120] sm:$0xff] %v266
                %v268 = vld [vmem:[%s192 + $0x248] sm:$0xff]
                %269 = vst [vmem:[%s193 + $0x128] sm:$0xff] %v268
                %v270 = vld [vmem:[%s192 + $0x250] sm:$0xff]
                %271 = vst [vmem:[%s193 + $0x130] sm:$0xff] %v270
                %v272 = vld [vmem:[%s192 + $0x258] sm:$0xff]
                %273 = vst [vmem:[%s193 + $0x138] sm:$0xff] %v272
                %v274 = vld [vmem:[%s192 + $0x280] sm:$0xff]
                %275 = vst [vmem:[%s193 + $0x140] sm:$0xff] %v274
                %v276 = vld [vmem:[%s192 + $0x288] sm:$0xff]
                %277 = vst [vmem:[%s193 + $0x148] sm:$0xff] %v276
                %v278 = vld [vmem:[%s192 + $0x290] sm:$0xff]
                %279 = vst [vmem:[%s193 + $0x150] sm:$0xff] %v278
                %v280 = vld [vmem:[%s192 + $0x298] sm:$0xff]
                %281 = vst [vmem:[%s193 + $0x158] sm:$0xff] %v280
                %v282 = vld [vmem:[%s192 + $0x2c0] sm:$0xff]
                %283 = vst [vmem:[%s193 + $0x160] sm:$0xff] %v282
                %v284 = vld [vmem:[%s192 + $0x2c8] sm:$0xff]
                %285 = vst [vmem:[%s193 + $0x168] sm:$0xff] %v284
                %v286 = vld [vmem:[%s192 + $0x2d0] sm:$0xff]
                %287 = vst [vmem:[%s193 + $0x170] sm:$0xff] %v286
                %v288 = vld [vmem:[%s192 + $0x2d8] sm:$0xff]
                %289 = vst [vmem:[%s193 + $0x178] sm:$0xff] %v288
                %v290 = vld [vmem:[%s192 + $0x300] sm:$0xff]
                %291 = vst [vmem:[%s193 + $0x180] sm:$0xff] %v290
                %v292 = vld [vmem:[%s192 + $0x308] sm:$0xff]
                %293 = vst [vmem:[%s193 + $0x188] sm:$0xff] %v292
                %v294 = vld [vmem:[%s192 + $0x310] sm:$0xff]
                %295 = vst [vmem:[%s193 + $0x190] sm:$0xff] %v294
                %v296 = vld [vmem:[%s192 + $0x318] sm:$0xff]
                %297 = vst [vmem:[%s193 + $0x198] sm:$0xff] %v296
                %v298 = vld [vmem:[%s192 + $0x340] sm:$0xff]
                %299 = vst [vmem:[%s193 + $0x1a0] sm:$0xff] %v298
                %v300 = vld [vmem:[%s192 + $0x348] sm:$0xff]
                %301 = vst [vmem:[%s193 + $0x1a8] sm:$0xff] %v300
                %v302 = vld [vmem:[%s192 + $0x350] sm:$0xff]
                %303 = vst [vmem:[%s193 + $0x1b0] sm:$0xff] %v302
                %v304 = vld [vmem:[%s192 + $0x358] sm:$0xff]
                %305 = vst [vmem:[%s193 + $0x1b8] sm:$0xff] %v304
                %v306 = vld [vmem:[%s192 + $0x380] sm:$0xff]
                %307 = vst [vmem:[%s193 + $0x1c0] sm:$0xff] %v306
                %v308 = vld [vmem:[%s192 + $0x388] sm:$0xff]
                %309 = vst [vmem:[%s193 + $0x1c8] sm:$0xff] %v308
                %v310 = vld [vmem:[%s192 + $0x390] sm:$0xff]
                %311 = vst [vmem:[%s193 + $0x1d0] sm:$0xff] %v310
                %v312 = vld [vmem:[%s192 + $0x398] sm:$0xff]
                %313 = vst [vmem:[%s193 + $0x1d8] sm:$0xff] %v312
                %v314 = vld [vmem:[%s192 + $0x3c0] sm:$0xff]
                %315 = vst [vmem:[%s193 + $0x1e0] sm:$0xff] %v314
                %v316 = vld [vmem:[%s192 + $0x3c8] sm:$0xff]
                %317 = vst [vmem:[%s193 + $0x1e8] sm:$0xff] %v316
                %v318 = vld [vmem:[%s192 + $0x3d0] sm:$0xff]
                %319 = vst [vmem:[%s193 + $0x1f0] sm:$0xff] %v318
                %v320 = vld [vmem:[%s192 + $0x3d8] sm:$0xff]
                %321 = vst [vmem:[%s193 + $0x1f8] sm:$0xff] %v320
              $region41: #{gat_forward.2} parent=35 // loop_footer
                %s191 = sadd.s32 1, %s187
              $region42: #{gat_forward.2} parent=35 // loop_footer_branch
                %186 = sbr.rel target = $region38
              $region43: #{gat_forward.2} parent=35 // loop_exit
                _
            $region36: #{gat_forward.2} parent=31 // pred_fallthru
              _
            // Predicated region
            $region44: #{gat_forward.2} parent=31 // pred_check
              _
            $region45: #{gat_forward.2} parent=31 // pred_check_branch
              %323 = sbr.rel target = $region47
            $region46: #{gat_forward.2} parent=31 // pred_region
              _
            $region47: #{gat_forward.2} parent=31 // pred_fallthru
              _
          $region32: #{gat_forward.2} parent=27 // pred_fallthru
            _
          %324 = vnop
        $region28: #{gat_forward.2} parent=23 // pred_fallthru
          _
        // Predicated region
        $region48: #{gat_forward.2} parent=23 // pred_check
          %p325 = pneg %p70
        $region49: #{gat_forward.2} parent=23 // pred_check_branch
          %327 = sbr.rel (%p325) target = $region51
        $region50: #{gat_forward.2} parent=23 // pred_region
          %s328 = smul.u32 128, %s18
          %p329 = scmp.lt.s32.totalorder %s328, 255
          %s330 = scalar_select %p329, %s328, 255
          %s331 = smul.addr %s330, 8
          %s332 = scalar_lea.vmem %s1, %s331
          %s333 = smul.u32 128, %s18
        $region51: #{gat_forward.2} parent=23 // pred_fallthru
          _
      $region24: #{gat_forward.2} parent=5 // pred_fallthru
        _
      %p334 = scmp.le.s32.totalorder 1, %s10
      %p335 = scmp.lt.s32.totalorder %s10, 5
      %p336 = pnand %p334, %p335
      %p337 = pneg %p336
      // Predicated region
      $region52: #{gat_forward.2} parent=5 // pred_check
        _
      $region53: #{gat_forward.2} parent=5 // pred_check_branch
        %339 = sbr.rel (%p336) target = $region55
      $region54: #{gat_forward.2} parent=5 // pred_region
        %s340 = ssub.s32 %s10, 1
        %s341 = sand.u32 %s37, 1
        %s342 = sand.u32 %s37, 1
        %s343 = smul.addr %s342, 512
        %s344 = scalar_lea.vmem [#allocation4], %s343
        // Predicated region
        $region56: #{gat_forward.2} parent=54 // pred_check
          %p345 = pneg %p50
        $region57: #{gat_forward.2} parent=54 // pred_check_branch
          %347 = sbr.rel (%p345) target = $region59
        $region58: #{gat_forward.2} parent=54 // pred_region
          _
        $region59: #{gat_forward.2} parent=54 // pred_fallthru
          _
        %s348 = sand.u32 %s37, 1
        %s349 = sand.u32 %s37, 1
        %s350 = smul.addr %s349, 512
        %s351 = scalar_lea.vmem [#allocation4], %s350
        %p352 = pneg %p50
        %p353 = pneg %p47
        %s354 = smul.u32 128, %s20
        %p355 = scmp.lt.s32.totalorder %s354, 255
        %s356 = scalar_select %p355, %s354, 255
        %s357 = smul.addr %s356, 8
        %s358 = scalar_lea.vmem %s1, %s357
        %p359 = pneg %p76
        %p360 = pneg %p73
        %p361 = pneg %p97
        %p362 = pneg %p94
        %p363 = pneg %p118
        %p364 = pneg %p115
        %p365 = pneg %p144
        %p366 = pneg %p141
        %s367 = smul.u32 16, %s19
        %p368 = scmp.lt.s32.totalorder %s367, 31
        %s369 = scalar_select %p368, %s367, 31
        %s370 = smul.addr %s369, 8
        %s371 = scalar_lea.vmem %s4, %s370
        %s372 = smul.u32 16, %s19
        %s373 = smul.u32 8, %s20
        %s374 = smul.u32 128, %s20
        %p375 = scmp.lt.s32.totalorder %s374, 255
        %s376 = scalar_select %p375, %s374, 255
        %s377 = smul.addr %s376, 8
        %s378 = scalar_lea.vmem %s1, %s377
        %s379 = smul.u32 128, %s20
        %s380 = smul.u32 16, %s19
        %p381 = scmp.lt.s32.totalorder %s380, 31
        %s382 = scalar_select %p381, %s380, 31
        %s383 = smul.addr %s382, 8
        %s384 = scalar_lea.vmem %s4, %s383
        %s385 = smul.u32 16, %s19
        %p387 = scmp.eq.s32.totalorder %s20, 0
        // Predicated region
        $region60: #{gat_forward.2} parent=54 // pred_check
          %p388 = pneg %p387
        $region61: #{gat_forward.2} parent=54 // pred_check_branch
          %390 = sbr.rel (%p388) target = $region63
        $region62: #{gat_forward.2} parent=54 // pred_region
          %vm391 = vcmask 8192
          %392 = vst.msk [vmem:[#allocation2] sm:$0x1] %vm391, -1e+30
          %393 = vst [vmem:[#allocation3] sm:$0xff] 0.0
          %394 = vst [vmem:[#allocation3 + $0x8] sm:$0xff] 0.0
          %395 = vst [vmem:[#allocation3 + $0x10] sm:$0xff] 0.0
          %396 = vst [vmem:[#allocation3 + $0x18] sm:$0xff] 0.0
          %397 = vst [vmem:[#allocation3 + $0x20] sm:$0xff] 0.0
          %398 = vst [vmem:[#allocation3 + $0x28] sm:$0xff] 0.0
          %399 = vst [vmem:[#allocation3 + $0x30] sm:$0xff] 0.0
          %400 = vst [vmem:[#allocation3 + $0x38] sm:$0xff] 0.0
          %401 = vst [vmem:[#allocation3 + $0x40] sm:$0xff] 0.0
          %402 = vst [vmem:[#allocation3 + $0x48] sm:$0xff] 0.0
          %403 = vst [vmem:[#allocation3 + $0x50] sm:$0xff] 0.0
          %404 = vst [vmem:[#allocation3 + $0x58] sm:$0xff] 0.0
          %405 = vst [vmem:[#allocation3 + $0x60] sm:$0xff] 0.0
          %406 = vst [vmem:[#allocation3 + $0x68] sm:$0xff] 0.0
          %407 = vst [vmem:[#allocation3 + $0x70] sm:$0xff] 0.0
          %408 = vst [vmem:[#allocation3 + $0x78] sm:$0xff] 0.0
        $region63: #{gat_forward.2} parent=54 // pred_fallthru
          _
        %v409 = vld [vmem:[%s378] sm:$0xff]
        %v410 = vld [vmem:[%s378 + $0x8] sm:$0xff]
        %v411 = vld [vmem:[%s378 + $0x10] sm:$0xff]
        %v412 = vld [vmem:[%s378 + $0x18] sm:$0xff]
        %v413 = vld [vmem:[%s378 + $0x20] sm:$0xff]
        %v414 = vld [vmem:[%s378 + $0x28] sm:$0xff]
        %v415 = vld [vmem:[%s378 + $0x30] sm:$0xff]
        %v416 = vld [vmem:[%s378 + $0x38] sm:$0xff]
        %v417 = vld [vmem:[%s378 + $0x40] sm:$0xff]
        %v418 = vld [vmem:[%s378 + $0x48] sm:$0xff]
        %v419 = vld [vmem:[%s378 + $0x50] sm:$0xff]
        %v420 = vld [vmem:[%s378 + $0x58] sm:$0xff]
        %v421 = vld [vmem:[%s378 + $0x60] sm:$0xff]
        %v422 = vld [vmem:[%s378 + $0x68] sm:$0xff]
        %v423 = vld [vmem:[%s378 + $0x70] sm:$0xff]
        %v424 = vld [vmem:[%s378 + $0x78] sm:$0xff]
        %v425 = vld [vmem:[%s378 + $0x80] sm:$0xff]
        %v426 = vld [vmem:[%s378 + $0x88] sm:$0xff]
        %v427 = vld [vmem:[%s378 + $0x90] sm:$0xff]
        %v428 = vld [vmem:[%s378 + $0x98] sm:$0xff]
        %v429 = vld [vmem:[%s378 + $0xa0] sm:$0xff]
        %v430 = vld [vmem:[%s378 + $0xa8] sm:$0xff]
        %v431 = vld [vmem:[%s378 + $0xb0] sm:$0xff]
        %v432 = vld [vmem:[%s378 + $0xb8] sm:$0xff]
        %v433 = vld [vmem:[%s378 + $0xc0] sm:$0xff]
        %v434 = vld [vmem:[%s378 + $0xc8] sm:$0xff]
        %v435 = vld [vmem:[%s378 + $0xd0] sm:$0xff]
        %v436 = vld [vmem:[%s378 + $0xd8] sm:$0xff]
        %v437 = vld [vmem:[%s378 + $0xe0] sm:$0xff]
        %v438 = vld [vmem:[%s378 + $0xe8] sm:$0xff]
        %v439 = vld [vmem:[%s378 + $0xf0] sm:$0xff]
        %v440 = vld [vmem:[%s378 + $0xf8] sm:$0xff]
        %v441 = vld [vmem:[%s378 + $0x100] sm:$0xff]
        %v442 = vld [vmem:[%s378 + $0x108] sm:$0xff]
        %v443 = vld [vmem:[%s378 + $0x110] sm:$0xff]
        %v444 = vld [vmem:[%s378 + $0x118] sm:$0xff]
        %v445 = vld [vmem:[%s378 + $0x120] sm:$0xff]
        %v446 = vld [vmem:[%s378 + $0x128] sm:$0xff]
        %v447 = vld [vmem:[%s378 + $0x130] sm:$0xff]
        %v448 = vld [vmem:[%s378 + $0x138] sm:$0xff]
        %v449 = vld [vmem:[%s378 + $0x140] sm:$0xff]
        %v450 = vld [vmem:[%s378 + $0x148] sm:$0xff]
        %v451 = vld [vmem:[%s378 + $0x150] sm:$0xff]
        %v452 = vld [vmem:[%s378 + $0x158] sm:$0xff]
        %v453 = vld [vmem:[%s378 + $0x160] sm:$0xff]
        %v454 = vld [vmem:[%s378 + $0x168] sm:$0xff]
        %v455 = vld [vmem:[%s378 + $0x170] sm:$0xff]
        %v456 = vld [vmem:[%s378 + $0x178] sm:$0xff]
        %v457 = vld [vmem:[%s378 + $0x180] sm:$0xff]
        %v458 = vld [vmem:[%s378 + $0x188] sm:$0xff]
        %v459 = vld [vmem:[%s378 + $0x190] sm:$0xff]
        %v460 = vld [vmem:[%s378 + $0x198] sm:$0xff]
        %v461 = vld [vmem:[%s378 + $0x1a0] sm:$0xff]
        %v462 = vld [vmem:[%s378 + $0x1a8] sm:$0xff]
        %v463 = vld [vmem:[%s378 + $0x1b0] sm:$0xff]
        %v464 = vld [vmem:[%s378 + $0x1b8] sm:$0xff]
        %v465 = vld [vmem:[%s378 + $0x1c0] sm:$0xff]
        %v466 = vld [vmem:[%s378 + $0x1c8] sm:$0xff]
        %v467 = vld [vmem:[%s378 + $0x1d0] sm:$0xff]
        %v468 = vld [vmem:[%s378 + $0x1d8] sm:$0xff]
        %v469 = vld [vmem:[%s378 + $0x1e0] sm:$0xff]
        %v470 = vld [vmem:[%s378 + $0x1e8] sm:$0xff]
        %v471 = vld [vmem:[%s378 + $0x1f0] sm:$0xff]
        %v472 = vld [vmem:[%s378 + $0x1f8] sm:$0xff]
        %v473 = vld [vmem:[%s378 + $0x200] sm:$0xff]
        %v474 = vld [vmem:[%s378 + $0x208] sm:$0xff]
        %v475 = vld [vmem:[%s378 + $0x210] sm:$0xff]
        %v476 = vld [vmem:[%s378 + $0x218] sm:$0xff]
        %v477 = vld [vmem:[%s378 + $0x220] sm:$0xff]
        %v478 = vld [vmem:[%s378 + $0x228] sm:$0xff]
        %v479 = vld [vmem:[%s378 + $0x230] sm:$0xff]
        %v480 = vld [vmem:[%s378 + $0x238] sm:$0xff]
        %v481 = vld [vmem:[%s378 + $0x240] sm:$0xff]
        %v482 = vld [vmem:[%s378 + $0x248] sm:$0xff]
        %v483 = vld [vmem:[%s378 + $0x250] sm:$0xff]
        %v484 = vld [vmem:[%s378 + $0x258] sm:$0xff]
        %v485 = vld [vmem:[%s378 + $0x260] sm:$0xff]
        %v486 = vld [vmem:[%s378 + $0x268] sm:$0xff]
        %v487 = vld [vmem:[%s378 + $0x270] sm:$0xff]
        %v488 = vld [vmem:[%s378 + $0x278] sm:$0xff]
        %v489 = vld [vmem:[%s378 + $0x280] sm:$0xff]
        %v490 = vld [vmem:[%s378 + $0x288] sm:$0xff]
        %v491 = vld [vmem:[%s378 + $0x290] sm:$0xff]
        %v492 = vld [vmem:[%s378 + $0x298] sm:$0xff]
        %v493 = vld [vmem:[%s378 + $0x2a0] sm:$0xff]
        %v494 = vld [vmem:[%s378 + $0x2a8] sm:$0xff]
        %v495 = vld [vmem:[%s378 + $0x2b0] sm:$0xff]
        %v496 = vld [vmem:[%s378 + $0x2b8] sm:$0xff]
        %v497 = vld [vmem:[%s378 + $0x2c0] sm:$0xff]
        %v498 = vld [vmem:[%s378 + $0x2c8] sm:$0xff]
        %v499 = vld [vmem:[%s378 + $0x2d0] sm:$0xff]
        %v500 = vld [vmem:[%s378 + $0x2d8] sm:$0xff]
        %v501 = vld [vmem:[%s378 + $0x2e0] sm:$0xff]
        %v502 = vld [vmem:[%s378 + $0x2e8] sm:$0xff]
        %v503 = vld [vmem:[%s378 + $0x2f0] sm:$0xff]
        %v504 = vld [vmem:[%s378 + $0x2f8] sm:$0xff]
        %v505 = vld [vmem:[%s378 + $0x300] sm:$0xff]
        %v506 = vld [vmem:[%s378 + $0x308] sm:$0xff]
        %v507 = vld [vmem:[%s378 + $0x310] sm:$0xff]
        %v508 = vld [vmem:[%s378 + $0x318] sm:$0xff]
        %v509 = vld [vmem:[%s378 + $0x320] sm:$0xff]
        %v510 = vld [vmem:[%s378 + $0x328] sm:$0xff]
        %v511 = vld [vmem:[%s378 + $0x330] sm:$0xff]
        %v512 = vld [vmem:[%s378 + $0x338] sm:$0xff]
        %v513 = vld [vmem:[%s378 + $0x340] sm:$0xff]
        %v514 = vld [vmem:[%s378 + $0x348] sm:$0xff]
        %v515 = vld [vmem:[%s378 + $0x350] sm:$0xff]
        %v516 = vld [vmem:[%s378 + $0x358] sm:$0xff]
        %v517 = vld [vmem:[%s378 + $0x360] sm:$0xff]
        %v518 = vld [vmem:[%s378 + $0x368] sm:$0xff]
        %v519 = vld [vmem:[%s378 + $0x370] sm:$0xff]
        %v520 = vld [vmem:[%s378 + $0x378] sm:$0xff]
        %v521 = vld [vmem:[%s378 + $0x380] sm:$0xff]
        %v522 = vld [vmem:[%s378 + $0x388] sm:$0xff]
        %v523 = vld [vmem:[%s378 + $0x390] sm:$0xff]
        %v524 = vld [vmem:[%s378 + $0x398] sm:$0xff]
        %v525 = vld [vmem:[%s378 + $0x3a0] sm:$0xff]
        %v526 = vld [vmem:[%s378 + $0x3a8] sm:$0xff]
        %v527 = vld [vmem:[%s378 + $0x3b0] sm:$0xff]
        %v528 = vld [vmem:[%s378 + $0x3b8] sm:$0xff]
        %v529 = vld [vmem:[%s378 + $0x3c0] sm:$0xff]
        %v530 = vld [vmem:[%s378 + $0x3c8] sm:$0xff]
        %v531 = vld [vmem:[%s378 + $0x3d0] sm:$0xff]
        %v532 = vld [vmem:[%s378 + $0x3d8] sm:$0xff]
        %v533 = vld [vmem:[%s378 + $0x3e0] sm:$0xff]
        %v534 = vld [vmem:[%s378 + $0x3e8] sm:$0xff]
        %v535 = vld [vmem:[%s378 + $0x3f0] sm:$0xff]
        %v536 = vld [vmem:[%s378 + $0x3f8] sm:$0xff]
        %v537 = vld [vmem:[%s3] sm:$0x3]
        %v538 = vld [vmem:[%s2] sm:$0xff]
        %v539 = vld [vmem:[%s2 + $0x8] sm:$0xff]
        %v540 = vld [vmem:[%s2 + $0x10] sm:$0xff]
        %v541 = vld [vmem:[%s2 + $0x18] sm:$0xff]
        %v542 = vld [vmem:[%s2 + $0x20] sm:$0xff]
        %vm543 = vcmask 326656
        %v545 = vsel %vm543, %v409, 0
        %v548 = vsel %vm543, %v410, 0
        %v551 = vsel %vm543, %v411, 0
        %v554 = vsel %vm543, %v412, 0
        %v557 = vsel %vm543, %v413, 0
        %v560 = vsel %vm543, %v414, 0
        %v563 = vsel %vm543, %v415, 0
        %v566 = vsel %vm543, %v416, 0
        %v569 = vsel %vm543, %v417, 0
        %v572 = vsel %vm543, %v418, 0
        %v575 = vsel %vm543, %v419, 0
        %v578 = vsel %vm543, %v420, 0
        %v581 = vsel %vm543, %v421, 0
        %v584 = vsel %vm543, %v422, 0
        %v587 = vsel %vm543, %v423, 0
        %v590 = vsel %vm543, %v424, 0
        %v593 = vsel %vm543, %v425, 0
        %v596 = vsel %vm543, %v426, 0
        %v599 = vsel %vm543, %v427, 0
        %v602 = vsel %vm543, %v428, 0
        %v605 = vsel %vm543, %v429, 0
        %v608 = vsel %vm543, %v430, 0
        %v611 = vsel %vm543, %v431, 0
        %v614 = vsel %vm543, %v432, 0
        %v617 = vsel %vm543, %v433, 0
        %v620 = vsel %vm543, %v434, 0
        %v623 = vsel %vm543, %v435, 0
        %v626 = vsel %vm543, %v436, 0
        %v629 = vsel %vm543, %v437, 0
        %v632 = vsel %vm543, %v438, 0
        %v635 = vsel %vm543, %v439, 0
        %v638 = vsel %vm543, %v440, 0
        %v641 = vsel %vm543, %v441, 0
        %v644 = vsel %vm543, %v442, 0
        %v647 = vsel %vm543, %v443, 0
        %v650 = vsel %vm543, %v444, 0
        %v653 = vsel %vm543, %v445, 0
        %v656 = vsel %vm543, %v446, 0
        %v659 = vsel %vm543, %v447, 0
        %v662 = vsel %vm543, %v448, 0
        %v665 = vsel %vm543, %v449, 0
        %v668 = vsel %vm543, %v450, 0
        %v671 = vsel %vm543, %v451, 0
        %v674 = vsel %vm543, %v452, 0
        %v677 = vsel %vm543, %v453, 0
        %v680 = vsel %vm543, %v454, 0
        %v683 = vsel %vm543, %v455, 0
        %v686 = vsel %vm543, %v456, 0
        %v689 = vsel %vm543, %v457, 0
        %v692 = vsel %vm543, %v458, 0
        %v695 = vsel %vm543, %v459, 0
        %v698 = vsel %vm543, %v460, 0
        %v701 = vsel %vm543, %v461, 0
        %v704 = vsel %vm543, %v462, 0
        %v707 = vsel %vm543, %v463, 0
        %v710 = vsel %vm543, %v464, 0
        %v713 = vsel %vm543, %v465, 0
        %v716 = vsel %vm543, %v466, 0
        %v719 = vsel %vm543, %v467, 0
        %v722 = vsel %vm543, %v468, 0
        %v725 = vsel %vm543, %v469, 0
        %v728 = vsel %vm543, %v470, 0
        %v731 = vsel %vm543, %v471, 0
        %v734 = vsel %vm543, %v472, 0
        %v737 = vsel %vm543, %v473, 0
        %v740 = vsel %vm543, %v474, 0
        %v743 = vsel %vm543, %v475, 0
        %v746 = vsel %vm543, %v476, 0
        %v749 = vsel %vm543, %v477, 0
        %v752 = vsel %vm543, %v478, 0
        %v755 = vsel %vm543, %v479, 0
        %v758 = vsel %vm543, %v480, 0
        %v761 = vsel %vm543, %v481, 0
        %v764 = vsel %vm543, %v482, 0
        %v767 = vsel %vm543, %v483, 0
        %v770 = vsel %vm543, %v484, 0
        %v773 = vsel %vm543, %v485, 0
        %v776 = vsel %vm543, %v486, 0
        %v779 = vsel %vm543, %v487, 0
        %v782 = vsel %vm543, %v488, 0
        %v785 = vsel %vm543, %v489, 0
        %v788 = vsel %vm543, %v490, 0
        %v791 = vsel %vm543, %v491, 0
        %v794 = vsel %vm543, %v492, 0
        %v797 = vsel %vm543, %v493, 0
        %v800 = vsel %vm543, %v494, 0
        %v803 = vsel %vm543, %v495, 0
        %v806 = vsel %vm543, %v496, 0
        %v809 = vsel %vm543, %v497, 0
        %v812 = vsel %vm543, %v498, 0
        %v815 = vsel %vm543, %v499, 0
        %v818 = vsel %vm543, %v500, 0
        %v821 = vsel %vm543, %v501, 0
        %v824 = vsel %vm543, %v502, 0
        %v827 = vsel %vm543, %v503, 0
        %v830 = vsel %vm543, %v504, 0
        %v833 = vsel %vm543, %v505, 0
        %v836 = vsel %vm543, %v506, 0
        %v839 = vsel %vm543, %v507, 0
        %v842 = vsel %vm543, %v508, 0
        %v845 = vsel %vm543, %v509, 0
        %v848 = vsel %vm543, %v510, 0
        %v851 = vsel %vm543, %v511, 0
        %v854 = vsel %vm543, %v512, 0
        %v857 = vsel %vm543, %v513, 0
        %v860 = vsel %vm543, %v514, 0
        %v863 = vsel %vm543, %v515, 0
        %v866 = vsel %vm543, %v516, 0
        %v869 = vsel %vm543, %v517, 0
        %v872 = vsel %vm543, %v518, 0
        %v875 = vsel %vm543, %v519, 0
        %v878 = vsel %vm543, %v520, 0
        %v881 = vsel %vm543, %v521, 0
        %v884 = vsel %vm543, %v522, 0
        %v887 = vsel %vm543, %v523, 0
        %v890 = vsel %vm543, %v524, 0
        %v893 = vsel %vm543, %v525, 0
        %v896 = vsel %vm543, %v526, 0
        %v899 = vsel %vm543, %v527, 0
        %v902 = vsel %vm543, %v528, 0
        %v905 = vsel %vm543, %v529, 0
        %v908 = vsel %vm543, %v530, 0
        %v911 = vsel %vm543, %v531, 0
        %v914 = vsel %vm543, %v532, 0
        %v917 = vsel %vm543, %v533, 0
        %v920 = vsel %vm543, %v534, 0
        %v923 = vsel %vm543, %v535, 0
        %v926 = vsel %vm543, %v536, 0
        %928 = vmatprep.subr.mxu0 0.0
        %929 = vmatpush1.msra.mxu0 0.0
        %930 = vmatprep.subr.mxu0 0.0
        %931 = vmatpush1.msra.mxu0 0.0
        %932 = vmatprep.subr.mxu0 0.0
        %933 = vmatpush1.msra.mxu0 0.0
        %934 = vmatprep.subr.mxu0 0.0
        %935 = vmatpush1.msra.mxu0 0.0
        %936 = vmatprep.subr.mxu0 0.0
        %937 = vmatpush1.msra.mxu0 0.0
        %938 = vmatprep.subr.mxu0 0.0
        %939 = vmatpush1.msra.mxu0 0.0
        %940 = vmatprep.subr.mxu0 0.0
        %941 = vmatpush1.msra.mxu0 0.0
        %942 = vmatprep.subr.mxu0 0.0
        %943 = vmatpush1.msra.mxu0 0.0
        %944 = vmatprep.subr.mxu0 0.0
        %945 = vmatpush1.msra.mxu0 0.0
        %946 = vmatprep.subr.mxu0 0.0
        %947 = vmatpush1.msra.mxu0 0.0
        %948 = vmatprep.subr.mxu0 0.0
        %949 = vmatpush1.msra.mxu0 0.0
        %950 = vmatprep.subr.mxu0 0.0
        %951 = vmatpush1.msra.mxu0 %v542
        %952 = vmatprep.subr.mxu0 0.0
        %953 = vmatpush1.msra.mxu0 %v541
        %954 = vmatprep.subr.mxu0 0.0
        %955 = vmatpush1.msra.mxu0 %v540
        %956 = vmatprep.subr.mxu0 0.0
        %957 = vmatpush1.msra.mxu0 %v539
        %958 = vmatprep.subr.mxu0 0.0
        %959 = vmatpush1.msra.mxu0 %v538
        %960 = vmatprep.subr.mxu0 0.0
        %961 = vmatpush2.msra.mxu0 0.0
        %962 = vmatprep.subr.mxu0 0.0
        %963 = vmatpush2.msra.mxu0 0.0
        %964 = vmatprep.subr.mxu0 0.0
        %965 = vmatpush2.msra.mxu0 0.0
        %966 = vmatprep.subr.mxu0 0.0
        %967 = vmatpush2.msra.mxu0 0.0
        %968 = vmatprep.subr.mxu0 0.0
        %969 = vmatpush2.msra.mxu0 0.0
        %970 = vmatprep.subr.mxu0 0.0
        %971 = vmatpush2.msra.mxu0 0.0
        %972 = vmatprep.subr.mxu0 0.0
        %973 = vmatpush2.msra.mxu0 0.0
        %974 = vmatprep.subr.mxu0 0.0
        %975 = vmatpush2.msra.mxu0 0.0
        %976 = vmatprep.subr.mxu0 0.0
        %977 = vmatpush2.msra.mxu0 0.0
        %978 = vmatprep.subr.mxu0 0.0
        %979 = vmatpush2.msra.mxu0 0.0
        %980 = vmatprep.subr.mxu0 0.0
        %981 = vmatpush2.msra.mxu0 0.0
        %982 = vmatprep.subr.mxu0 0.0
        %983 = vmatpush2.msra.mxu0 0.0
        %984 = vmatprep.subr.mxu0 0.0
        %985 = vmatpush2.msra.mxu0 0.0
        %986 = vmatprep.subr.mxu0 0.0
        %987 = vmatpush2.msra.mxu0 0.0
        %988 = vmatprep.subr.mxu0 0.0
        %989 = vmatpush2.msra.mxu0 0.0
        %990 = vmatprep.subr.mxu0 0.0
        %991 = vmatpush2.msra.mxu0 0.0
        %992 = vmatprep.mubr.f32.mxu0 0.0
        %993 = vmatmul.mubr.f32.gmra.mxu0 %v545
        %v994 = vpop.f32.mrf.mxu0
        %v995 = vadd.f32 0.0, %v994
        %v996 = vpop.f32.mrf.mxu0
        %997 = vmatprep.mubr.f32.mxu0 0.0
        %998 = vmatmul.mubr.f32.gmra.mxu0 %v548
        %v999 = vpop.f32.mrf.mxu0
        %v1000 = vadd.f32 0.0, %v999
        %v1001 = vpop.f32.mrf.mxu0
        %1002 = vmatprep.mubr.f32.mxu0 0.0
        %1003 = vmatmul.mubr.f32.gmra.mxu0 %v551
        %v1004 = vpop.f32.mrf.mxu0
        %v1005 = vadd.f32 0.0, %v1004
        %v1006 = vpop.f32.mrf.mxu0
        %1007 = vmatprep.mubr.f32.mxu0 0.0
        %1008 = vmatmul.mubr.f32.gmra.mxu0 %v554
        %v1009 = vpop.f32.mrf.mxu0
        %v1010 = vadd.f32 0.0, %v1009
        %v1011 = vpop.f32.mrf.mxu0
        %1012 = vmatprep.mubr.f32.mxu0 0.0
        %1013 = vmatmul.mubr.f32.gmra.mxu0 %v557
        %v1014 = vpop.f32.mrf.mxu0
        %v1015 = vadd.f32 0.0, %v1014
        %v1016 = vpop.f32.mrf.mxu0
        %1017 = vmatprep.mubr.f32.mxu0 0.0
        %1018 = vmatmul.mubr.f32.gmra.mxu0 %v560
        %v1019 = vpop.f32.mrf.mxu0
        %v1020 = vadd.f32 0.0, %v1019
        %v1021 = vpop.f32.mrf.mxu0
        %1022 = vmatprep.mubr.f32.mxu0 0.0
        %1023 = vmatmul.mubr.f32.gmra.mxu0 %v563
        %v1024 = vpop.f32.mrf.mxu0
        %v1025 = vadd.f32 0.0, %v1024
        %v1026 = vpop.f32.mrf.mxu0
        %1027 = vmatprep.mubr.f32.mxu0 0.0
        %1028 = vmatmul.mubr.f32.gmra.mxu0 %v566
        %v1029 = vpop.f32.mrf.mxu0
        %v1030 = vadd.f32 0.0, %v1029
        %v1031 = vpop.f32.mrf.mxu0
        %1032 = vmatprep.mubr.f32.mxu0 0.0
        %1033 = vmatmul.mubr.f32.gmra.mxu0 %v569
        %v1034 = vpop.f32.mrf.mxu0
        %v1035 = vadd.f32 0.0, %v1034
        %v1036 = vpop.f32.mrf.mxu0
        %1037 = vmatprep.mubr.f32.mxu0 0.0
        %1038 = vmatmul.mubr.f32.gmra.mxu0 %v572
        %v1039 = vpop.f32.mrf.mxu0
        %v1040 = vadd.f32 0.0, %v1039
        %v1041 = vpop.f32.mrf.mxu0
        %1042 = vmatprep.mubr.f32.mxu0 0.0
        %1043 = vmatmul.mubr.f32.gmra.mxu0 %v575
        %v1044 = vpop.f32.mrf.mxu0
        %v1045 = vadd.f32 0.0, %v1044
        %v1046 = vpop.f32.mrf.mxu0
        %1047 = vmatprep.mubr.f32.mxu0 0.0
        %1048 = vmatmul.mubr.f32.gmra.mxu0 %v578
        %v1049 = vpop.f32.mrf.mxu0
        %v1050 = vadd.f32 0.0, %v1049
        %v1051 = vpop.f32.mrf.mxu0
        %1052 = vmatprep.mubr.f32.mxu0 0.0
        %1053 = vmatmul.mubr.f32.gmra.mxu0 %v581
        %v1054 = vpop.f32.mrf.mxu0
        %v1055 = vadd.f32 0.0, %v1054
        %v1056 = vpop.f32.mrf.mxu0
        %1057 = vmatprep.mubr.f32.mxu0 0.0
        %1058 = vmatmul.mubr.f32.gmra.mxu0 %v584
        %v1059 = vpop.f32.mrf.mxu0
        %v1060 = vadd.f32 0.0, %v1059
        %v1061 = vpop.f32.mrf.mxu0
        %1062 = vmatprep.mubr.f32.mxu0 0.0
        %1063 = vmatmul.mubr.f32.gmra.mxu0 %v587
        %v1064 = vpop.f32.mrf.mxu0
        %v1065 = vadd.f32 0.0, %v1064
        %v1066 = vpop.f32.mrf.mxu0
        %1067 = vmatprep.mubr.f32.mxu0 0.0
        %1068 = vmatmul.mubr.f32.gmra.mxu0 %v590
        %v1069 = vpop.f32.mrf.mxu0
        %v1070 = vadd.f32 0.0, %v1069
        %v1071 = vpop.f32.mrf.mxu0
        %1072 = vmatprep.mubr.f32.mxu0 0.0
        %1073 = vmatmul.mubr.f32.gmra.mxu0 %v593
        %v1074 = vpop.f32.mrf.mxu0
        %v1075 = vadd.f32 0.0, %v1074
        %v1076 = vpop.f32.mrf.mxu0
        %1077 = vmatprep.mubr.f32.mxu0 0.0
        %1078 = vmatmul.mubr.f32.gmra.mxu0 %v596
        %v1079 = vpop.f32.mrf.mxu0
        %v1080 = vadd.f32 0.0, %v1079
        %v1081 = vpop.f32.mrf.mxu0
        %1082 = vmatprep.mubr.f32.mxu0 0.0
        %1083 = vmatmul.mubr.f32.gmra.mxu0 %v599
        %v1084 = vpop.f32.mrf.mxu0
        %v1085 = vadd.f32 0.0, %v1084
        %v1086 = vpop.f32.mrf.mxu0
        %1087 = vmatprep.mubr.f32.mxu0 0.0
        %1088 = vmatmul.mubr.f32.gmra.mxu0 %v602
        %v1089 = vpop.f32.mrf.mxu0
        %v1090 = vadd.f32 0.0, %v1089
        %v1091 = vpop.f32.mrf.mxu0
        %1092 = vmatprep.mubr.f32.mxu0 0.0
        %1093 = vmatmul.mubr.f32.gmra.mxu0 %v605
        %v1094 = vpop.f32.mrf.mxu0
        %v1095 = vadd.f32 0.0, %v1094
        %v1096 = vpop.f32.mrf.mxu0
        %1097 = vmatprep.mubr.f32.mxu0 0.0
        %1098 = vmatmul.mubr.f32.gmra.mxu0 %v608
        %v1099 = vpop.f32.mrf.mxu0
        %v1100 = vadd.f32 0.0, %v1099
        %v1101 = vpop.f32.mrf.mxu0
        %1102 = vmatprep.mubr.f32.mxu0 0.0
        %1103 = vmatmul.mubr.f32.gmra.mxu0 %v611
        %v1104 = vpop.f32.mrf.mxu0
        %v1105 = vadd.f32 0.0, %v1104
        %v1106 = vpop.f32.mrf.mxu0
        %1107 = vmatprep.mubr.f32.mxu0 0.0
        %1108 = vmatmul.mubr.f32.gmra.mxu0 %v614
        %v1109 = vpop.f32.mrf.mxu0
        %v1110 = vadd.f32 0.0, %v1109
        %v1111 = vpop.f32.mrf.mxu0
        %1112 = vmatprep.mubr.f32.mxu0 0.0
        %1113 = vmatmul.mubr.f32.gmra.mxu0 %v617
        %v1114 = vpop.f32.mrf.mxu0
        %v1115 = vadd.f32 0.0, %v1114
        %v1116 = vpop.f32.mrf.mxu0
        %1117 = vmatprep.mubr.f32.mxu0 0.0
        %1118 = vmatmul.mubr.f32.gmra.mxu0 %v620
        %v1119 = vpop.f32.mrf.mxu0
        %v1120 = vadd.f32 0.0, %v1119
        %v1121 = vpop.f32.mrf.mxu0
        %1122 = vmatprep.mubr.f32.mxu0 0.0
        %1123 = vmatmul.mubr.f32.gmra.mxu0 %v623
        %v1124 = vpop.f32.mrf.mxu0
        %v1125 = vadd.f32 0.0, %v1124
        %v1126 = vpop.f32.mrf.mxu0
        %1127 = vmatprep.mubr.f32.mxu0 0.0
        %1128 = vmatmul.mubr.f32.gmra.mxu0 %v626
        %v1129 = vpop.f32.mrf.mxu0
        %v1130 = vadd.f32 0.0, %v1129
        %v1131 = vpop.f32.mrf.mxu0
        %1132 = vmatprep.mubr.f32.mxu0 0.0
        %1133 = vmatmul.mubr.f32.gmra.mxu0 %v629
        %v1134 = vpop.f32.mrf.mxu0
        %v1135 = vadd.f32 0.0, %v1134
        %v1136 = vpop.f32.mrf.mxu0
        %1137 = vmatprep.mubr.f32.mxu0 0.0
        %1138 = vmatmul.mubr.f32.gmra.mxu0 %v632
        %v1139 = vpop.f32.mrf.mxu0
        %v1140 = vadd.f32 0.0, %v1139
        %v1141 = vpop.f32.mrf.mxu0
        %1142 = vmatprep.mubr.f32.mxu0 0.0
        %1143 = vmatmul.mubr.f32.gmra.mxu0 %v635
        %v1144 = vpop.f32.mrf.mxu0
        %v1145 = vadd.f32 0.0, %v1144
        %v1146 = vpop.f32.mrf.mxu0
        %1147 = vmatprep.mubr.f32.mxu0 0.0
        %1148 = vmatmul.mubr.f32.gmra.mxu0 %v638
        %v1149 = vpop.f32.mrf.mxu0
        %v1150 = vadd.f32 0.0, %v1149
        %v1151 = vpop.f32.mrf.mxu0
        %1152 = vmatprep.mubr.f32.mxu0 0.0
        %1153 = vmatmul.mubr.f32.gmra.mxu0 %v641
        %v1154 = vpop.f32.mrf.mxu0
        %v1155 = vadd.f32 0.0, %v1154
        %v1156 = vpop.f32.mrf.mxu0
        %1157 = vmatprep.mubr.f32.mxu0 0.0
        %1158 = vmatmul.mubr.f32.gmra.mxu0 %v644
        %v1159 = vpop.f32.mrf.mxu0
        %v1160 = vadd.f32 0.0, %v1159
        %v1161 = vpop.f32.mrf.mxu0
        %1162 = vmatprep.mubr.f32.mxu0 0.0
        %1163 = vmatmul.mubr.f32.gmra.mxu0 %v647
        %v1164 = vpop.f32.mrf.mxu0
        %v1165 = vadd.f32 0.0, %v1164
        %v1166 = vpop.f32.mrf.mxu0
        %1167 = vmatprep.mubr.f32.mxu0 0.0
        %1168 = vmatmul.mubr.f32.gmra.mxu0 %v650
        %v1169 = vpop.f32.mrf.mxu0
        %v1170 = vadd.f32 0.0, %v1169
        %v1171 = vpop.f32.mrf.mxu0
        %1172 = vmatprep.mubr.f32.mxu0 0.0
        %1173 = vmatmul.mubr.f32.gmra.mxu0 %v653
        %v1174 = vpop.f32.mrf.mxu0
        %v1175 = vadd.f32 0.0, %v1174
        %v1176 = vpop.f32.mrf.mxu0
        %1177 = vmatprep.mubr.f32.mxu0 0.0
        %1178 = vmatmul.mubr.f32.gmra.mxu0 %v656
        %v1179 = vpop.f32.mrf.mxu0
        %v1180 = vadd.f32 0.0, %v1179
        %v1181 = vpop.f32.mrf.mxu0
        %1182 = vmatprep.mubr.f32.mxu0 0.0
        %1183 = vmatmul.mubr.f32.gmra.mxu0 %v659
        %v1184 = vpop.f32.mrf.mxu0
        %v1185 = vadd.f32 0.0, %v1184
        %v1186 = vpop.f32.mrf.mxu0
        %1187 = vmatprep.mubr.f32.mxu0 0.0
        %1188 = vmatmul.mubr.f32.gmra.mxu0 %v662
        %v1189 = vpop.f32.mrf.mxu0
        %v1190 = vadd.f32 0.0, %v1189
        %v1191 = vpop.f32.mrf.mxu0
        %1192 = vmatprep.mubr.f32.mxu0 0.0
        %1193 = vmatmul.mubr.f32.gmra.mxu0 %v665
        %v1194 = vpop.f32.mrf.mxu0
        %v1195 = vadd.f32 0.0, %v1194
        %v1196 = vpop.f32.mrf.mxu0
        %1197 = vmatprep.mubr.f32.mxu0 0.0
        %1198 = vmatmul.mubr.f32.gmra.mxu0 %v668
        %v1199 = vpop.f32.mrf.mxu0
        %v1200 = vadd.f32 0.0, %v1199
        %v1201 = vpop.f32.mrf.mxu0
        %1202 = vmatprep.mubr.f32.mxu0 0.0
        %1203 = vmatmul.mubr.f32.gmra.mxu0 %v671
        %v1204 = vpop.f32.mrf.mxu0
        %v1205 = vadd.f32 0.0, %v1204
        %v1206 = vpop.f32.mrf.mxu0
        %1207 = vmatprep.mubr.f32.mxu0 0.0
        %1208 = vmatmul.mubr.f32.gmra.mxu0 %v674
        %v1209 = vpop.f32.mrf.mxu0
        %v1210 = vadd.f32 0.0, %v1209
        %v1211 = vpop.f32.mrf.mxu0
        %1212 = vmatprep.mubr.f32.mxu0 0.0
        %1213 = vmatmul.mubr.f32.gmra.mxu0 %v677
        %v1214 = vpop.f32.mrf.mxu0
        %v1215 = vadd.f32 0.0, %v1214
        %v1216 = vpop.f32.mrf.mxu0
        %1217 = vmatprep.mubr.f32.mxu0 0.0
        %1218 = vmatmul.mubr.f32.gmra.mxu0 %v680
        %v1219 = vpop.f32.mrf.mxu0
        %v1220 = vadd.f32 0.0, %v1219
        %v1221 = vpop.f32.mrf.mxu0
        %1222 = vmatprep.mubr.f32.mxu0 0.0
        %1223 = vmatmul.mubr.f32.gmra.mxu0 %v683
        %v1224 = vpop.f32.mrf.mxu0
        %v1225 = vadd.f32 0.0, %v1224
        %v1226 = vpop.f32.mrf.mxu0
        %1227 = vmatprep.mubr.f32.mxu0 0.0
        %1228 = vmatmul.mubr.f32.gmra.mxu0 %v686
        %v1229 = vpop.f32.mrf.mxu0
        %v1230 = vadd.f32 0.0, %v1229
        %v1231 = vpop.f32.mrf.mxu0
        %1232 = vmatprep.mubr.f32.mxu0 0.0
        %1233 = vmatmul.mubr.f32.gmra.mxu0 %v689
        %v1234 = vpop.f32.mrf.mxu0
        %v1235 = vadd.f32 0.0, %v1234
        %v1236 = vpop.f32.mrf.mxu0
        %1237 = vmatprep.mubr.f32.mxu0 0.0
        %1238 = vmatmul.mubr.f32.gmra.mxu0 %v692
        %v1239 = vpop.f32.mrf.mxu0
        %v1240 = vadd.f32 0.0, %v1239
        %v1241 = vpop.f32.mrf.mxu0
        %1242 = vmatprep.mubr.f32.mxu0 0.0
        %1243 = vmatmul.mubr.f32.gmra.mxu0 %v695
        %v1244 = vpop.f32.mrf.mxu0
        %v1245 = vadd.f32 0.0, %v1244
        %v1246 = vpop.f32.mrf.mxu0
        %1247 = vmatprep.mubr.f32.mxu0 0.0
        %1248 = vmatmul.mubr.f32.gmra.mxu0 %v698
        %v1249 = vpop.f32.mrf.mxu0
        %v1250 = vadd.f32 0.0, %v1249
        %v1251 = vpop.f32.mrf.mxu0
        %1252 = vmatprep.mubr.f32.mxu0 0.0
        %1253 = vmatmul.mubr.f32.gmra.mxu0 %v701
        %v1254 = vpop.f32.mrf.mxu0
        %v1255 = vadd.f32 0.0, %v1254
        %v1256 = vpop.f32.mrf.mxu0
        %1257 = vmatprep.mubr.f32.mxu0 0.0
        %1258 = vmatmul.mubr.f32.gmra.mxu0 %v704
        %v1259 = vpop.f32.mrf.mxu0
        %v1260 = vadd.f32 0.0, %v1259
        %v1261 = vpop.f32.mrf.mxu0
        %1262 = vmatprep.mubr.f32.mxu0 0.0
        %1263 = vmatmul.mubr.f32.gmra.mxu0 %v707
        %v1264 = vpop.f32.mrf.mxu0
        %v1265 = vadd.f32 0.0, %v1264
        %v1266 = vpop.f32.mrf.mxu0
        %1267 = vmatprep.mubr.f32.mxu0 0.0
        %1268 = vmatmul.mubr.f32.gmra.mxu0 %v710
        %v1269 = vpop.f32.mrf.mxu0
        %v1270 = vadd.f32 0.0, %v1269
        %v1271 = vpop.f32.mrf.mxu0
        %1272 = vmatprep.mubr.f32.mxu0 0.0
        %1273 = vmatmul.mubr.f32.gmra.mxu0 %v713
        %v1274 = vpop.f32.mrf.mxu0
        %v1275 = vadd.f32 0.0, %v1274
        %v1276 = vpop.f32.mrf.mxu0
        %1277 = vmatprep.mubr.f32.mxu0 0.0
        %1278 = vmatmul.mubr.f32.gmra.mxu0 %v716
        %v1279 = vpop.f32.mrf.mxu0
        %v1280 = vadd.f32 0.0, %v1279
        %v1281 = vpop.f32.mrf.mxu0
        %1282 = vmatprep.mubr.f32.mxu0 0.0
        %1283 = vmatmul.mubr.f32.gmra.mxu0 %v719
        %v1284 = vpop.f32.mrf.mxu0
        %v1285 = vadd.f32 0.0, %v1284
        %v1286 = vpop.f32.mrf.mxu0
        %1287 = vmatprep.mubr.f32.mxu0 0.0
        %1288 = vmatmul.mubr.f32.gmra.mxu0 %v722
        %v1289 = vpop.f32.mrf.mxu0
        %v1290 = vadd.f32 0.0, %v1289
        %v1291 = vpop.f32.mrf.mxu0
        %1292 = vmatprep.mubr.f32.mxu0 0.0
        %1293 = vmatmul.mubr.f32.gmra.mxu0 %v725
        %v1294 = vpop.f32.mrf.mxu0
        %v1295 = vadd.f32 0.0, %v1294
        %v1296 = vpop.f32.mrf.mxu0
        %1297 = vmatprep.mubr.f32.mxu0 0.0
        %1298 = vmatmul.mubr.f32.gmra.mxu0 %v728
        %v1299 = vpop.f32.mrf.mxu0
        %v1300 = vadd.f32 0.0, %v1299
        %v1301 = vpop.f32.mrf.mxu0
        %1302 = vmatprep.mubr.f32.mxu0 0.0
        %1303 = vmatmul.mubr.f32.gmra.mxu0 %v731
        %v1304 = vpop.f32.mrf.mxu0
        %v1305 = vadd.f32 0.0, %v1304
        %v1306 = vpop.f32.mrf.mxu0
        %1307 = vmatprep.mubr.f32.mxu0 0.0
        %1308 = vmatmul.mubr.f32.gmra.mxu0 %v734
        %v1309 = vpop.f32.mrf.mxu0
        %v1310 = vadd.f32 0.0, %v1309
        %v1311 = vpop.f32.mrf.mxu0
        %1312 = vmatprep.mubr.f32.mxu0 0.0
        %1313 = vmatmul.mubr.f32.gmra.mxu0 %v737
        %v1314 = vpop.f32.mrf.mxu0
        %v1315 = vadd.f32 0.0, %v1314
        %v1316 = vpop.f32.mrf.mxu0
        %1317 = vmatprep.mubr.f32.mxu0 0.0
        %1318 = vmatmul.mubr.f32.gmra.mxu0 %v740
        %v1319 = vpop.f32.mrf.mxu0
        %v1320 = vadd.f32 0.0, %v1319
        %v1321 = vpop.f32.mrf.mxu0
        %1322 = vmatprep.mubr.f32.mxu0 0.0
        %1323 = vmatmul.mubr.f32.gmra.mxu0 %v743
        %v1324 = vpop.f32.mrf.mxu0
        %v1325 = vadd.f32 0.0, %v1324
        %v1326 = vpop.f32.mrf.mxu0
        %1327 = vmatprep.mubr.f32.mxu0 0.0
        %1328 = vmatmul.mubr.f32.gmra.mxu0 %v746
        %v1329 = vpop.f32.mrf.mxu0
        %v1330 = vadd.f32 0.0, %v1329
        %v1331 = vpop.f32.mrf.mxu0
        %1332 = vmatprep.mubr.f32.mxu0 0.0
        %1333 = vmatmul.mubr.f32.gmra.mxu0 %v749
        %v1334 = vpop.f32.mrf.mxu0
        %v1335 = vadd.f32 0.0, %v1334
        %v1336 = vpop.f32.mrf.mxu0
        %1337 = vmatprep.mubr.f32.mxu0 0.0
        %1338 = vmatmul.mubr.f32.gmra.mxu0 %v752
        %v1339 = vpop.f32.mrf.mxu0
        %v1340 = vadd.f32 0.0, %v1339
        %v1341 = vpop.f32.mrf.mxu0
        %1342 = vmatprep.mubr.f32.mxu0 0.0
        %1343 = vmatmul.mubr.f32.gmra.mxu0 %v755
        %v1344 = vpop.f32.mrf.mxu0
        %v1345 = vadd.f32 0.0, %v1344
        %v1346 = vpop.f32.mrf.mxu0
        %1347 = vmatprep.mubr.f32.mxu0 0.0
        %1348 = vmatmul.mubr.f32.gmra.mxu0 %v758
        %v1349 = vpop.f32.mrf.mxu0
        %v1350 = vadd.f32 0.0, %v1349
        %v1351 = vpop.f32.mrf.mxu0
        %1352 = vmatprep.mubr.f32.mxu0 0.0
        %1353 = vmatmul.mubr.f32.gmra.mxu0 %v761
        %v1354 = vpop.f32.mrf.mxu0
        %v1355 = vadd.f32 0.0, %v1354
        %v1356 = vpop.f32.mrf.mxu0
        %1357 = vmatprep.mubr.f32.mxu0 0.0
        %1358 = vmatmul.mubr.f32.gmra.mxu0 %v764
        %v1359 = vpop.f32.mrf.mxu0
        %v1360 = vadd.f32 0.0, %v1359
        %v1361 = vpop.f32.mrf.mxu0
        %1362 = vmatprep.mubr.f32.mxu0 0.0
        %1363 = vmatmul.mubr.f32.gmra.mxu0 %v767
        %v1364 = vpop.f32.mrf.mxu0
        %v1365 = vadd.f32 0.0, %v1364
        %v1366 = vpop.f32.mrf.mxu0
        %1367 = vmatprep.mubr.f32.mxu0 0.0
        %1368 = vmatmul.mubr.f32.gmra.mxu0 %v770
        %v1369 = vpop.f32.mrf.mxu0
        %v1370 = vadd.f32 0.0, %v1369
        %v1371 = vpop.f32.mrf.mxu0
        %1372 = vmatprep.mubr.f32.mxu0 0.0
        %1373 = vmatmul.mubr.f32.gmra.mxu0 %v773
        %v1374 = vpop.f32.mrf.mxu0
        %v1375 = vadd.f32 0.0, %v1374
        %v1376 = vpop.f32.mrf.mxu0
        %1377 = vmatprep.mubr.f32.mxu0 0.0
        %1378 = vmatmul.mubr.f32.gmra.mxu0 %v776
        %v1379 = vpop.f32.mrf.mxu0
        %v1380 = vadd.f32 0.0, %v1379
        %v1381 = vpop.f32.mrf.mxu0
        %1382 = vmatprep.mubr.f32.mxu0 0.0
        %1383 = vmatmul.mubr.f32.gmra.mxu0 %v779
        %v1384 = vpop.f32.mrf.mxu0
        %v1385 = vadd.f32 0.0, %v1384
        %v1386 = vpop.f32.mrf.mxu0
        %1387 = vmatprep.mubr.f32.mxu0 0.0
        %1388 = vmatmul.mubr.f32.gmra.mxu0 %v782
        %v1389 = vpop.f32.mrf.mxu0
        %v1390 = vadd.f32 0.0, %v1389
        %v1391 = vpop.f32.mrf.mxu0
        %1392 = vmatprep.mubr.f32.mxu0 0.0
        %1393 = vmatmul.mubr.f32.gmra.mxu0 %v785
        %v1394 = vpop.f32.mrf.mxu0
        %v1395 = vadd.f32 0.0, %v1394
        %v1396 = vpop.f32.mrf.mxu0
        %1397 = vmatprep.mubr.f32.mxu0 0.0
        %1398 = vmatmul.mubr.f32.gmra.mxu0 %v788
        %v1399 = vpop.f32.mrf.mxu0
        %v1400 = vadd.f32 0.0, %v1399
        %v1401 = vpop.f32.mrf.mxu0
        %1402 = vmatprep.mubr.f32.mxu0 0.0
        %1403 = vmatmul.mubr.f32.gmra.mxu0 %v791
        %v1404 = vpop.f32.mrf.mxu0
        %v1405 = vadd.f32 0.0, %v1404
        %v1406 = vpop.f32.mrf.mxu0
        %1407 = vmatprep.mubr.f32.mxu0 0.0
        %1408 = vmatmul.mubr.f32.gmra.mxu0 %v794
        %v1409 = vpop.f32.mrf.mxu0
        %v1410 = vadd.f32 0.0, %v1409
        %v1411 = vpop.f32.mrf.mxu0
        %1412 = vmatprep.mubr.f32.mxu0 0.0
        %1413 = vmatmul.mubr.f32.gmra.mxu0 %v797
        %v1414 = vpop.f32.mrf.mxu0
        %v1415 = vadd.f32 0.0, %v1414
        %v1416 = vpop.f32.mrf.mxu0
        %1417 = vmatprep.mubr.f32.mxu0 0.0
        %1418 = vmatmul.mubr.f32.gmra.mxu0 %v800
        %v1419 = vpop.f32.mrf.mxu0
        %v1420 = vadd.f32 0.0, %v1419
        %v1421 = vpop.f32.mrf.mxu0
        %1422 = vmatprep.mubr.f32.mxu0 0.0
        %1423 = vmatmul.mubr.f32.gmra.mxu0 %v803
        %v1424 = vpop.f32.mrf.mxu0
        %v1425 = vadd.f32 0.0, %v1424
        %v1426 = vpop.f32.mrf.mxu0
        %1427 = vmatprep.mubr.f32.mxu0 0.0
        %1428 = vmatmul.mubr.f32.gmra.mxu0 %v806
        %v1429 = vpop.f32.mrf.mxu0
        %v1430 = vadd.f32 0.0, %v1429
        %v1431 = vpop.f32.mrf.mxu0
        %1432 = vmatprep.mubr.f32.mxu0 0.0
        %1433 = vmatmul.mubr.f32.gmra.mxu0 %v809
        %v1434 = vpop.f32.mrf.mxu0
        %v1435 = vadd.f32 0.0, %v1434
        %v1436 = vpop.f32.mrf.mxu0
        %1437 = vmatprep.mubr.f32.mxu0 0.0
        %1438 = vmatmul.mubr.f32.gmra.mxu0 %v812
        %v1439 = vpop.f32.mrf.mxu0
        %v1440 = vadd.f32 0.0, %v1439
        %v1441 = vpop.f32.mrf.mxu0
        %1442 = vmatprep.mubr.f32.mxu0 0.0
        %1443 = vmatmul.mubr.f32.gmra.mxu0 %v815
        %v1444 = vpop.f32.mrf.mxu0
        %v1445 = vadd.f32 0.0, %v1444
        %v1446 = vpop.f32.mrf.mxu0
        %1447 = vmatprep.mubr.f32.mxu0 0.0
        %1448 = vmatmul.mubr.f32.gmra.mxu0 %v818
        %v1449 = vpop.f32.mrf.mxu0
        %v1450 = vadd.f32 0.0, %v1449
        %v1451 = vpop.f32.mrf.mxu0
        %1452 = vmatprep.mubr.f32.mxu0 0.0
        %1453 = vmatmul.mubr.f32.gmra.mxu0 %v821
        %v1454 = vpop.f32.mrf.mxu0
        %v1455 = vadd.f32 0.0, %v1454
        %v1456 = vpop.f32.mrf.mxu0
        %1457 = vmatprep.mubr.f32.mxu0 0.0
        %1458 = vmatmul.mubr.f32.gmra.mxu0 %v824
        %v1459 = vpop.f32.mrf.mxu0
        %v1460 = vadd.f32 0.0, %v1459
        %v1461 = vpop.f32.mrf.mxu0
        %1462 = vmatprep.mubr.f32.mxu0 0.0
        %1463 = vmatmul.mubr.f32.gmra.mxu0 %v827
        %v1464 = vpop.f32.mrf.mxu0
        %v1465 = vadd.f32 0.0, %v1464
        %v1466 = vpop.f32.mrf.mxu0
        %1467 = vmatprep.mubr.f32.mxu0 0.0
        %1468 = vmatmul.mubr.f32.gmra.mxu0 %v830
        %v1469 = vpop.f32.mrf.mxu0
        %v1470 = vadd.f32 0.0, %v1469
        %v1471 = vpop.f32.mrf.mxu0
        %1472 = vmatprep.mubr.f32.mxu0 0.0
        %1473 = vmatmul.mubr.f32.gmra.mxu0 %v833
        %v1474 = vpop.f32.mrf.mxu0
        %v1475 = vadd.f32 0.0, %v1474
        %v1476 = vpop.f32.mrf.mxu0
        %1477 = vmatprep.mubr.f32.mxu0 0.0
        %1478 = vmatmul.mubr.f32.gmra.mxu0 %v836
        %v1479 = vpop.f32.mrf.mxu0
        %v1480 = vadd.f32 0.0, %v1479
        %v1481 = vpop.f32.mrf.mxu0
        %1482 = vmatprep.mubr.f32.mxu0 0.0
        %1483 = vmatmul.mubr.f32.gmra.mxu0 %v839
        %v1484 = vpop.f32.mrf.mxu0
        %v1485 = vadd.f32 0.0, %v1484
        %v1486 = vpop.f32.mrf.mxu0
        %1487 = vmatprep.mubr.f32.mxu0 0.0
        %1488 = vmatmul.mubr.f32.gmra.mxu0 %v842
        %v1489 = vpop.f32.mrf.mxu0
        %v1490 = vadd.f32 0.0, %v1489
        %v1491 = vpop.f32.mrf.mxu0
        %1492 = vmatprep.mubr.f32.mxu0 0.0
        %1493 = vmatmul.mubr.f32.gmra.mxu0 %v845
        %v1494 = vpop.f32.mrf.mxu0
        %v1495 = vadd.f32 0.0, %v1494
        %v1496 = vpop.f32.mrf.mxu0
        %1497 = vmatprep.mubr.f32.mxu0 0.0
        %1498 = vmatmul.mubr.f32.gmra.mxu0 %v848
        %v1499 = vpop.f32.mrf.mxu0
        %v1500 = vadd.f32 0.0, %v1499
        %v1501 = vpop.f32.mrf.mxu0
        %1502 = vmatprep.mubr.f32.mxu0 0.0
        %1503 = vmatmul.mubr.f32.gmra.mxu0 %v851
        %v1504 = vpop.f32.mrf.mxu0
        %v1505 = vadd.f32 0.0, %v1504
        %v1506 = vpop.f32.mrf.mxu0
        %1507 = vmatprep.mubr.f32.mxu0 0.0
        %1508 = vmatmul.mubr.f32.gmra.mxu0 %v854
        %v1509 = vpop.f32.mrf.mxu0
        %v1510 = vadd.f32 0.0, %v1509
        %v1511 = vpop.f32.mrf.mxu0
        %1512 = vmatprep.mubr.f32.mxu0 0.0
        %1513 = vmatmul.mubr.f32.gmra.mxu0 %v857
        %v1514 = vpop.f32.mrf.mxu0
        %v1515 = vadd.f32 0.0, %v1514
        %v1516 = vpop.f32.mrf.mxu0
        %1517 = vmatprep.mubr.f32.mxu0 0.0
        %1518 = vmatmul.mubr.f32.gmra.mxu0 %v860
        %v1519 = vpop.f32.mrf.mxu0
        %v1520 = vadd.f32 0.0, %v1519
        %v1521 = vpop.f32.mrf.mxu0
        %1522 = vmatprep.mubr.f32.mxu0 0.0
        %1523 = vmatmul.mubr.f32.gmra.mxu0 %v863
        %v1524 = vpop.f32.mrf.mxu0
        %v1525 = vadd.f32 0.0, %v1524
        %v1526 = vpop.f32.mrf.mxu0
        %1527 = vmatprep.mubr.f32.mxu0 0.0
        %1528 = vmatmul.mubr.f32.gmra.mxu0 %v866
        %v1529 = vpop.f32.mrf.mxu0
        %v1530 = vadd.f32 0.0, %v1529
        %v1531 = vpop.f32.mrf.mxu0
        %1532 = vmatprep.mubr.f32.mxu0 0.0
        %1533 = vmatmul.mubr.f32.gmra.mxu0 %v869
        %v1534 = vpop.f32.mrf.mxu0
        %v1535 = vadd.f32 0.0, %v1534
        %v1536 = vpop.f32.mrf.mxu0
        %1537 = vmatprep.mubr.f32.mxu0 0.0
        %1538 = vmatmul.mubr.f32.gmra.mxu0 %v872
        %v1539 = vpop.f32.mrf.mxu0
        %v1540 = vadd.f32 0.0, %v1539
        %v1541 = vpop.f32.mrf.mxu0
        %1542 = vmatprep.mubr.f32.mxu0 0.0
        %1543 = vmatmul.mubr.f32.gmra.mxu0 %v875
        %v1544 = vpop.f32.mrf.mxu0
        %v1545 = vadd.f32 0.0, %v1544
        %v1546 = vpop.f32.mrf.mxu0
        %1547 = vmatprep.mubr.f32.mxu0 0.0
        %1548 = vmatmul.mubr.f32.gmra.mxu0 %v878
        %v1549 = vpop.f32.mrf.mxu0
        %v1550 = vadd.f32 0.0, %v1549
        %v1551 = vpop.f32.mrf.mxu0
        %1552 = vmatprep.mubr.f32.mxu0 0.0
        %1553 = vmatmul.mubr.f32.gmra.mxu0 %v881
        %v1554 = vpop.f32.mrf.mxu0
        %v1555 = vadd.f32 0.0, %v1554
        %v1556 = vpop.f32.mrf.mxu0
        %1557 = vmatprep.mubr.f32.mxu0 0.0
        %1558 = vmatmul.mubr.f32.gmra.mxu0 %v884
        %v1559 = vpop.f32.mrf.mxu0
        %v1560 = vadd.f32 0.0, %v1559
        %v1561 = vpop.f32.mrf.mxu0
        %1562 = vmatprep.mubr.f32.mxu0 0.0
        %1563 = vmatmul.mubr.f32.gmra.mxu0 %v887
        %v1564 = vpop.f32.mrf.mxu0
        %v1565 = vadd.f32 0.0, %v1564
        %v1566 = vpop.f32.mrf.mxu0
        %1567 = vmatprep.mubr.f32.mxu0 0.0
        %1568 = vmatmul.mubr.f32.gmra.mxu0 %v890
        %v1569 = vpop.f32.mrf.mxu0
        %v1570 = vadd.f32 0.0, %v1569
        %v1571 = vpop.f32.mrf.mxu0
        %1572 = vmatprep.mubr.f32.mxu0 0.0
        %1573 = vmatmul.mubr.f32.gmra.mxu0 %v893
        %v1574 = vpop.f32.mrf.mxu0
        %v1575 = vadd.f32 0.0, %v1574
        %v1576 = vpop.f32.mrf.mxu0
        %1577 = vmatprep.mubr.f32.mxu0 0.0
        %1578 = vmatmul.mubr.f32.gmra.mxu0 %v896
        %v1579 = vpop.f32.mrf.mxu0
        %v1580 = vadd.f32 0.0, %v1579
        %v1581 = vpop.f32.mrf.mxu0
        %1582 = vmatprep.mubr.f32.mxu0 0.0
        %1583 = vmatmul.mubr.f32.gmra.mxu0 %v899
        %v1584 = vpop.f32.mrf.mxu0
        %v1585 = vadd.f32 0.0, %v1584
        %v1586 = vpop.f32.mrf.mxu0
        %1587 = vmatprep.mubr.f32.mxu0 0.0
        %1588 = vmatmul.mubr.f32.gmra.mxu0 %v902
        %v1589 = vpop.f32.mrf.mxu0
        %v1590 = vadd.f32 0.0, %v1589
        %v1591 = vpop.f32.mrf.mxu0
        %1592 = vmatprep.mubr.f32.mxu0 0.0
        %1593 = vmatmul.mubr.f32.gmra.mxu0 %v905
        %v1594 = vpop.f32.mrf.mxu0
        %v1595 = vadd.f32 0.0, %v1594
        %v1596 = vpop.f32.mrf.mxu0
        %1597 = vmatprep.mubr.f32.mxu0 0.0
        %1598 = vmatmul.mubr.f32.gmra.mxu0 %v908
        %v1599 = vpop.f32.mrf.mxu0
        %v1600 = vadd.f32 0.0, %v1599
        %v1601 = vpop.f32.mrf.mxu0
        %1602 = vmatprep.mubr.f32.mxu0 0.0
        %1603 = vmatmul.mubr.f32.gmra.mxu0 %v911
        %v1604 = vpop.f32.mrf.mxu0
        %v1605 = vadd.f32 0.0, %v1604
        %v1606 = vpop.f32.mrf.mxu0
        %1607 = vmatprep.mubr.f32.mxu0 0.0
        %1608 = vmatmul.mubr.f32.gmra.mxu0 %v914
        %v1609 = vpop.f32.mrf.mxu0
        %v1610 = vadd.f32 0.0, %v1609
        %v1611 = vpop.f32.mrf.mxu0
        %1612 = vmatprep.mubr.f32.mxu0 0.0
        %1613 = vmatmul.mubr.f32.gmra.mxu0 %v917
        %v1614 = vpop.f32.mrf.mxu0
        %v1615 = vadd.f32 0.0, %v1614
        %v1616 = vpop.f32.mrf.mxu0
        %1617 = vmatprep.mubr.f32.mxu0 0.0
        %1618 = vmatmul.mubr.f32.gmra.mxu0 %v920
        %v1619 = vpop.f32.mrf.mxu0
        %v1620 = vadd.f32 0.0, %v1619
        %v1621 = vpop.f32.mrf.mxu0
        %1622 = vmatprep.mubr.f32.mxu0 0.0
        %1623 = vmatmul.mubr.f32.gmra.mxu0 %v923
        %v1624 = vpop.f32.mrf.mxu0
        %v1625 = vadd.f32 0.0, %v1624
        %v1626 = vpop.f32.mrf.mxu0
        %1627 = vmatprep.mubr.f32.mxu0 0.0
        %1628 = vmatmul.mubr.f32.gmra.mxu0 %v926
        %v1629 = vpop.f32.mrf.mxu0
        %v1630 = vadd.f32 0.0, %v1629
        %v1631 = vpop.f32.mrf.mxu0
        %1632 = vdwg.mxu0
        %vm1633 = vcmp.gt.f32.partialorder %v995, 0.0
        %vm1634 = vcmp.gt.f32.partialorder %v1000, 0.0
        %vm1635 = vcmp.gt.f32.partialorder %v1005, 0.0
        %vm1636 = vcmp.gt.f32.partialorder %v1010, 0.0
        %vm1637 = vcmp.gt.f32.partialorder %v1015, 0.0
        %vm1638 = vcmp.gt.f32.partialorder %v1020, 0.0
        %vm1639 = vcmp.gt.f32.partialorder %v1025, 0.0
        %vm1640 = vcmp.gt.f32.partialorder %v1030, 0.0
        %vm1641 = vcmp.gt.f32.partialorder %v1035, 0.0
        %vm1642 = vcmp.gt.f32.partialorder %v1040, 0.0
        %vm1643 = vcmp.gt.f32.partialorder %v1045, 0.0
        %vm1644 = vcmp.gt.f32.partialorder %v1050, 0.0
        %vm1645 = vcmp.gt.f32.partialorder %v1055, 0.0
        %vm1646 = vcmp.gt.f32.partialorder %v1060, 0.0
        %vm1647 = vcmp.gt.f32.partialorder %v1065, 0.0
        %vm1648 = vcmp.gt.f32.partialorder %v1070, 0.0
        %vm1649 = vcmp.gt.f32.partialorder %v1075, 0.0
        %vm1650 = vcmp.gt.f32.partialorder %v1080, 0.0
        %vm1651 = vcmp.gt.f32.partialorder %v1085, 0.0
        %vm1652 = vcmp.gt.f32.partialorder %v1090, 0.0
        %vm1653 = vcmp.gt.f32.partialorder %v1095, 0.0
        %vm1654 = vcmp.gt.f32.partialorder %v1100, 0.0
        %vm1655 = vcmp.gt.f32.partialorder %v1105, 0.0
        %vm1656 = vcmp.gt.f32.partialorder %v1110, 0.0
        %vm1657 = vcmp.gt.f32.partialorder %v1115, 0.0
        %vm1658 = vcmp.gt.f32.partialorder %v1120, 0.0
        %vm1659 = vcmp.gt.f32.partialorder %v1125, 0.0
        %vm1660 = vcmp.gt.f32.partialorder %v1130, 0.0
        %vm1661 = vcmp.gt.f32.partialorder %v1135, 0.0
        %vm1662 = vcmp.gt.f32.partialorder %v1140, 0.0
        %vm1663 = vcmp.gt.f32.partialorder %v1145, 0.0
        %vm1664 = vcmp.gt.f32.partialorder %v1150, 0.0
        %vm1665 = vcmp.gt.f32.partialorder %v1155, 0.0
        %vm1666 = vcmp.gt.f32.partialorder %v1160, 0.0
        %vm1667 = vcmp.gt.f32.partialorder %v1165, 0.0
        %vm1668 = vcmp.gt.f32.partialorder %v1170, 0.0
        %vm1669 = vcmp.gt.f32.partialorder %v1175, 0.0
        %vm1670 = vcmp.gt.f32.partialorder %v1180, 0.0
        %vm1671 = vcmp.gt.f32.partialorder %v1185, 0.0
        %vm1672 = vcmp.gt.f32.partialorder %v1190, 0.0
        %vm1673 = vcmp.gt.f32.partialorder %v1195, 0.0
        %vm1674 = vcmp.gt.f32.partialorder %v1200, 0.0
        %vm1675 = vcmp.gt.f32.partialorder %v1205, 0.0
        %vm1676 = vcmp.gt.f32.partialorder %v1210, 0.0
        %vm1677 = vcmp.gt.f32.partialorder %v1215, 0.0
        %vm1678 = vcmp.gt.f32.partialorder %v1220, 0.0
        %vm1679 = vcmp.gt.f32.partialorder %v1225, 0.0
        %vm1680 = vcmp.gt.f32.partialorder %v1230, 0.0
        %vm1681 = vcmp.gt.f32.partialorder %v1235, 0.0
        %vm1682 = vcmp.gt.f32.partialorder %v1240, 0.0
        %vm1683 = vcmp.gt.f32.partialorder %v1245, 0.0
        %vm1684 = vcmp.gt.f32.partialorder %v1250, 0.0
        %vm1685 = vcmp.gt.f32.partialorder %v1255, 0.0
        %vm1686 = vcmp.gt.f32.partialorder %v1260, 0.0
        %vm1687 = vcmp.gt.f32.partialorder %v1265, 0.0
        %vm1688 = vcmp.gt.f32.partialorder %v1270, 0.0
        %vm1689 = vcmp.gt.f32.partialorder %v1275, 0.0
        %vm1690 = vcmp.gt.f32.partialorder %v1280, 0.0
        %vm1691 = vcmp.gt.f32.partialorder %v1285, 0.0
        %vm1692 = vcmp.gt.f32.partialorder %v1290, 0.0
        %vm1693 = vcmp.gt.f32.partialorder %v1295, 0.0
        %vm1694 = vcmp.gt.f32.partialorder %v1300, 0.0
        %vm1695 = vcmp.gt.f32.partialorder %v1305, 0.0
        %vm1696 = vcmp.gt.f32.partialorder %v1310, 0.0
        %vm1697 = vcmp.gt.f32.partialorder %v1315, 0.0
        %vm1698 = vcmp.gt.f32.partialorder %v1320, 0.0
        %vm1699 = vcmp.gt.f32.partialorder %v1325, 0.0
        %vm1700 = vcmp.gt.f32.partialorder %v1330, 0.0
        %vm1701 = vcmp.gt.f32.partialorder %v1335, 0.0
        %vm1702 = vcmp.gt.f32.partialorder %v1340, 0.0
        %vm1703 = vcmp.gt.f32.partialorder %v1345, 0.0
        %vm1704 = vcmp.gt.f32.partialorder %v1350, 0.0
        %vm1705 = vcmp.gt.f32.partialorder %v1355, 0.0
        %vm1706 = vcmp.gt.f32.partialorder %v1360, 0.0
        %vm1707 = vcmp.gt.f32.partialorder %v1365, 0.0
        %vm1708 = vcmp.gt.f32.partialorder %v1370, 0.0
        %vm1709 = vcmp.gt.f32.partialorder %v1375, 0.0
        %vm1710 = vcmp.gt.f32.partialorder %v1380, 0.0
        %vm1711 = vcmp.gt.f32.partialorder %v1385, 0.0
        %vm1712 = vcmp.gt.f32.partialorder %v1390, 0.0
        %vm1713 = vcmp.gt.f32.partialorder %v1395, 0.0
        %vm1714 = vcmp.gt.f32.partialorder %v1400, 0.0
        %vm1715 = vcmp.gt.f32.partialorder %v1405, 0.0
        %vm1716 = vcmp.gt.f32.partialorder %v1410, 0.0
        %vm1717 = vcmp.gt.f32.partialorder %v1415, 0.0
        %vm1718 = vcmp.gt.f32.partialorder %v1420, 0.0
        %vm1719 = vcmp.gt.f32.partialorder %v1425, 0.0
        %vm1720 = vcmp.gt.f32.partialorder %v1430, 0.0
        %vm1721 = vcmp.gt.f32.partialorder %v1435, 0.0
        %vm1722 = vcmp.gt.f32.partialorder %v1440, 0.0
        %vm1723 = vcmp.gt.f32.partialorder %v1445, 0.0
        %vm1724 = vcmp.gt.f32.partialorder %v1450, 0.0
        %vm1725 = vcmp.gt.f32.partialorder %v1455, 0.0
        %vm1726 = vcmp.gt.f32.partialorder %v1460, 0.0
        %vm1727 = vcmp.gt.f32.partialorder %v1465, 0.0
        %vm1728 = vcmp.gt.f32.partialorder %v1470, 0.0
        %vm1729 = vcmp.gt.f32.partialorder %v1475, 0.0
        %vm1730 = vcmp.gt.f32.partialorder %v1480, 0.0
        %vm1731 = vcmp.gt.f32.partialorder %v1485, 0.0
        %vm1732 = vcmp.gt.f32.partialorder %v1490, 0.0
        %vm1733 = vcmp.gt.f32.partialorder %v1495, 0.0
        %vm1734 = vcmp.gt.f32.partialorder %v1500, 0.0
        %vm1735 = vcmp.gt.f32.partialorder %v1505, 0.0
        %vm1736 = vcmp.gt.f32.partialorder %v1510, 0.0
        %vm1737 = vcmp.gt.f32.partialorder %v1515, 0.0
        %vm1738 = vcmp.gt.f32.partialorder %v1520, 0.0
        %vm1739 = vcmp.gt.f32.partialorder %v1525, 0.0
        %vm1740 = vcmp.gt.f32.partialorder %v1530, 0.0
        %vm1741 = vcmp.gt.f32.partialorder %v1535, 0.0
        %vm1742 = vcmp.gt.f32.partialorder %v1540, 0.0
        %vm1743 = vcmp.gt.f32.partialorder %v1545, 0.0
        %vm1744 = vcmp.gt.f32.partialorder %v1550, 0.0
        %vm1745 = vcmp.gt.f32.partialorder %v1555, 0.0
        %vm1746 = vcmp.gt.f32.partialorder %v1560, 0.0
        %vm1747 = vcmp.gt.f32.partialorder %v1565, 0.0
        %vm1748 = vcmp.gt.f32.partialorder %v1570, 0.0
        %vm1749 = vcmp.gt.f32.partialorder %v1575, 0.0
        %vm1750 = vcmp.gt.f32.partialorder %v1580, 0.0
        %vm1751 = vcmp.gt.f32.partialorder %v1585, 0.0
        %vm1752 = vcmp.gt.f32.partialorder %v1590, 0.0
        %vm1753 = vcmp.gt.f32.partialorder %v1595, 0.0
        %vm1754 = vcmp.gt.f32.partialorder %v1600, 0.0
        %vm1755 = vcmp.gt.f32.partialorder %v1605, 0.0
        %vm1756 = vcmp.gt.f32.partialorder %v1610, 0.0
        %vm1757 = vcmp.gt.f32.partialorder %v1615, 0.0
        %vm1758 = vcmp.gt.f32.partialorder %v1620, 0.0
        %vm1759 = vcmp.gt.f32.partialorder %v1625, 0.0
        %vm1760 = vcmp.gt.f32.partialorder %v1630, 0.0
        %v1761 = vmul.f32 %v995, 0.2
        %v1762 = vmul.f32 %v1000, 0.2
        %v1763 = vmul.f32 %v1005, 0.2
        %v1764 = vmul.f32 %v1010, 0.2
        %v1765 = vmul.f32 %v1015, 0.2
        %v1766 = vmul.f32 %v1020, 0.2
        %v1767 = vmul.f32 %v1025, 0.2
        %v1768 = vmul.f32 %v1030, 0.2
        %v1769 = vmul.f32 %v1035, 0.2
        %v1770 = vmul.f32 %v1040, 0.2
        %v1771 = vmul.f32 %v1045, 0.2
        %v1772 = vmul.f32 %v1050, 0.2
        %v1773 = vmul.f32 %v1055, 0.2
        %v1774 = vmul.f32 %v1060, 0.2
        %v1775 = vmul.f32 %v1065, 0.2
        %v1776 = vmul.f32 %v1070, 0.2
        %v1777 = vmul.f32 %v1075, 0.2
        %v1778 = vmul.f32 %v1080, 0.2
        %v1779 = vmul.f32 %v1085, 0.2
        %v1780 = vmul.f32 %v1090, 0.2
        %v1781 = vmul.f32 %v1095, 0.2
        %v1782 = vmul.f32 %v1100, 0.2
        %v1783 = vmul.f32 %v1105, 0.2
        %v1784 = vmul.f32 %v1110, 0.2
        %v1785 = vmul.f32 %v1115, 0.2
        %v1786 = vmul.f32 %v1120, 0.2
        %v1787 = vmul.f32 %v1125, 0.2
        %v1788 = vmul.f32 %v1130, 0.2
        %v1789 = vmul.f32 %v1135, 0.2
        %v1790 = vmul.f32 %v1140, 0.2
        %v1791 = vmul.f32 %v1145, 0.2
        %v1792 = vmul.f32 %v1150, 0.2
        %v1793 = vmul.f32 %v1155, 0.2
        %v1794 = vmul.f32 %v1160, 0.2
        %v1795 = vmul.f32 %v1165, 0.2
        %v1796 = vmul.f32 %v1170, 0.2
        %v1797 = vmul.f32 %v1175, 0.2
        %v1798 = vmul.f32 %v1180, 0.2
        %v1799 = vmul.f32 %v1185, 0.2
        %v1800 = vmul.f32 %v1190, 0.2
        %v1801 = vmul.f32 %v1195, 0.2
        %v1802 = vmul.f32 %v1200, 0.2
        %v1803 = vmul.f32 %v1205, 0.2
        %v1804 = vmul.f32 %v1210, 0.2
        %v1805 = vmul.f32 %v1215, 0.2
        %v1806 = vmul.f32 %v1220, 0.2
        %v1807 = vmul.f32 %v1225, 0.2
        %v1808 = vmul.f32 %v1230, 0.2
        %v1809 = vmul.f32 %v1235, 0.2
        %v1810 = vmul.f32 %v1240, 0.2
        %v1811 = vmul.f32 %v1245, 0.2
        %v1812 = vmul.f32 %v1250, 0.2
        %v1813 = vmul.f32 %v1255, 0.2
        %v1814 = vmul.f32 %v1260, 0.2
        %v1815 = vmul.f32 %v1265, 0.2
        %v1816 = vmul.f32 %v1270, 0.2
        %v1817 = vmul.f32 %v1275, 0.2
        %v1818 = vmul.f32 %v1280, 0.2
        %v1819 = vmul.f32 %v1285, 0.2
        %v1820 = vmul.f32 %v1290, 0.2
        %v1821 = vmul.f32 %v1295, 0.2
        %v1822 = vmul.f32 %v1300, 0.2
        %v1823 = vmul.f32 %v1305, 0.2
        %v1824 = vmul.f32 %v1310, 0.2
        %v1825 = vmul.f32 %v1315, 0.2
        %v1826 = vmul.f32 %v1320, 0.2
        %v1827 = vmul.f32 %v1325, 0.2
        %v1828 = vmul.f32 %v1330, 0.2
        %v1829 = vmul.f32 %v1335, 0.2
        %v1830 = vmul.f32 %v1340, 0.2
        %v1831 = vmul.f32 %v1345, 0.2
        %v1832 = vmul.f32 %v1350, 0.2
        %v1833 = vmul.f32 %v1355, 0.2
        %v1834 = vmul.f32 %v1360, 0.2
        %v1835 = vmul.f32 %v1365, 0.2
        %v1836 = vmul.f32 %v1370, 0.2
        %v1837 = vmul.f32 %v1375, 0.2
        %v1838 = vmul.f32 %v1380, 0.2
        %v1839 = vmul.f32 %v1385, 0.2
        %v1840 = vmul.f32 %v1390, 0.2
        %v1841 = vmul.f32 %v1395, 0.2
        %v1842 = vmul.f32 %v1400, 0.2
        %v1843 = vmul.f32 %v1405, 0.2
        %v1844 = vmul.f32 %v1410, 0.2
        %v1845 = vmul.f32 %v1415, 0.2
        %v1846 = vmul.f32 %v1420, 0.2
        %v1847 = vmul.f32 %v1425, 0.2
        %v1848 = vmul.f32 %v1430, 0.2
        %v1849 = vmul.f32 %v1435, 0.2
        %v1850 = vmul.f32 %v1440, 0.2
        %v1851 = vmul.f32 %v1445, 0.2
        %v1852 = vmul.f32 %v1450, 0.2
        %v1853 = vmul.f32 %v1455, 0.2
        %v1854 = vmul.f32 %v1460, 0.2
        %v1855 = vmul.f32 %v1465, 0.2
        %v1856 = vmul.f32 %v1470, 0.2
        %v1857 = vmul.f32 %v1475, 0.2
        %v1858 = vmul.f32 %v1480, 0.2
        %v1859 = vmul.f32 %v1485, 0.2
        %v1860 = vmul.f32 %v1490, 0.2
        %v1861 = vmul.f32 %v1495, 0.2
        %v1862 = vmul.f32 %v1500, 0.2
        %v1863 = vmul.f32 %v1505, 0.2
        %v1864 = vmul.f32 %v1510, 0.2
        %v1865 = vmul.f32 %v1515, 0.2
        %v1866 = vmul.f32 %v1520, 0.2
        %v1867 = vmul.f32 %v1525, 0.2
        %v1868 = vmul.f32 %v1530, 0.2
        %v1869 = vmul.f32 %v1535, 0.2
        %v1870 = vmul.f32 %v1540, 0.2
        %v1871 = vmul.f32 %v1545, 0.2
        %v1872 = vmul.f32 %v1550, 0.2
        %v1873 = vmul.f32 %v1555, 0.2
        %v1874 = vmul.f32 %v1560, 0.2
        %v1875 = vmul.f32 %v1565, 0.2
        %v1876 = vmul.f32 %v1570, 0.2
        %v1877 = vmul.f32 %v1575, 0.2
        %v1878 = vmul.f32 %v1580, 0.2
        %v1879 = vmul.f32 %v1585, 0.2
        %v1880 = vmul.f32 %v1590, 0.2
        %v1881 = vmul.f32 %v1595, 0.2
        %v1882 = vmul.f32 %v1600, 0.2
        %v1883 = vmul.f32 %v1605, 0.2
        %v1884 = vmul.f32 %v1610, 0.2
        %v1885 = vmul.f32 %v1615, 0.2
        %v1886 = vmul.f32 %v1620, 0.2
        %v1887 = vmul.f32 %v1625, 0.2
        %v1888 = vmul.f32 %v1630, 0.2
        %v1889 = vsel %vm1633, %v995, %v1761
        %v1890 = vsel %vm1634, %v1000, %v1762
        %v1891 = vsel %vm1635, %v1005, %v1763
        %v1892 = vsel %vm1636, %v1010, %v1764
        %v1893 = vsel %vm1637, %v1015, %v1765
        %v1894 = vsel %vm1638, %v1020, %v1766
        %v1895 = vsel %vm1639, %v1025, %v1767
        %v1896 = vsel %vm1640, %v1030, %v1768
        %v1897 = vsel %vm1641, %v1035, %v1769
        %v1898 = vsel %vm1642, %v1040, %v1770
        %v1899 = vsel %vm1643, %v1045, %v1771
        %v1900 = vsel %vm1644, %v1050, %v1772
        %v1901 = vsel %vm1645, %v1055, %v1773
        %v1902 = vsel %vm1646, %v1060, %v1774
        %v1903 = vsel %vm1647, %v1065, %v1775
        %v1904 = vsel %vm1648, %v1070, %v1776
        %v1905 = vsel %vm1649, %v1075, %v1777
        %v1906 = vsel %vm1650, %v1080, %v1778
        %v1907 = vsel %vm1651, %v1085, %v1779
        %v1908 = vsel %vm1652, %v1090, %v1780
        %v1909 = vsel %vm1653, %v1095, %v1781
        %v1910 = vsel %vm1654, %v1100, %v1782
        %v1911 = vsel %vm1655, %v1105, %v1783
        %v1912 = vsel %vm1656, %v1110, %v1784
        %v1913 = vsel %vm1657, %v1115, %v1785
        %v1914 = vsel %vm1658, %v1120, %v1786
        %v1915 = vsel %vm1659, %v1125, %v1787
        %v1916 = vsel %vm1660, %v1130, %v1788
        %v1917 = vsel %vm1661, %v1135, %v1789
        %v1918 = vsel %vm1662, %v1140, %v1790
        %v1919 = vsel %vm1663, %v1145, %v1791
        %v1920 = vsel %vm1664, %v1150, %v1792
        %v1921 = vsel %vm1665, %v1155, %v1793
        %v1922 = vsel %vm1666, %v1160, %v1794
        %v1923 = vsel %vm1667, %v1165, %v1795
        %v1924 = vsel %vm1668, %v1170, %v1796
        %v1925 = vsel %vm1669, %v1175, %v1797
        %v1926 = vsel %vm1670, %v1180, %v1798
        %v1927 = vsel %vm1671, %v1185, %v1799
        %v1928 = vsel %vm1672, %v1190, %v1800
        %v1929 = vsel %vm1673, %v1195, %v1801
        %v1930 = vsel %vm1674, %v1200, %v1802
        %v1931 = vsel %vm1675, %v1205, %v1803
        %v1932 = vsel %vm1676, %v1210, %v1804
        %v1933 = vsel %vm1677, %v1215, %v1805
        %v1934 = vsel %vm1678, %v1220, %v1806
        %v1935 = vsel %vm1679, %v1225, %v1807
        %v1936 = vsel %vm1680, %v1230, %v1808
        %v1937 = vsel %vm1681, %v1235, %v1809
        %v1938 = vsel %vm1682, %v1240, %v1810
        %v1939 = vsel %vm1683, %v1245, %v1811
        %v1940 = vsel %vm1684, %v1250, %v1812
        %v1941 = vsel %vm1685, %v1255, %v1813
        %v1942 = vsel %vm1686, %v1260, %v1814
        %v1943 = vsel %vm1687, %v1265, %v1815
        %v1944 = vsel %vm1688, %v1270, %v1816
        %v1945 = vsel %vm1689, %v1275, %v1817
        %v1946 = vsel %vm1690, %v1280, %v1818
        %v1947 = vsel %vm1691, %v1285, %v1819
        %v1948 = vsel %vm1692, %v1290, %v1820
        %v1949 = vsel %vm1693, %v1295, %v1821
        %v1950 = vsel %vm1694, %v1300, %v1822
        %v1951 = vsel %vm1695, %v1305, %v1823
        %v1952 = vsel %vm1696, %v1310, %v1824
        %v1953 = vsel %vm1697, %v1315, %v1825
        %v1954 = vsel %vm1698, %v1320, %v1826
        %v1955 = vsel %vm1699, %v1325, %v1827
        %v1956 = vsel %vm1700, %v1330, %v1828
        %v1957 = vsel %vm1701, %v1335, %v1829
        %v1958 = vsel %vm1702, %v1340, %v1830
        %v1959 = vsel %vm1703, %v1345, %v1831
        %v1960 = vsel %vm1704, %v1350, %v1832
        %v1961 = vsel %vm1705, %v1355, %v1833
        %v1962 = vsel %vm1706, %v1360, %v1834
        %v1963 = vsel %vm1707, %v1365, %v1835
        %v1964 = vsel %vm1708, %v1370, %v1836
        %v1965 = vsel %vm1709, %v1375, %v1837
        %v1966 = vsel %vm1710, %v1380, %v1838
        %v1967 = vsel %vm1711, %v1385, %v1839
        %v1968 = vsel %vm1712, %v1390, %v1840
        %v1969 = vsel %vm1713, %v1395, %v1841
        %v1970 = vsel %vm1714, %v1400, %v1842
        %v1971 = vsel %vm1715, %v1405, %v1843
        %v1972 = vsel %vm1716, %v1410, %v1844
        %v1973 = vsel %vm1717, %v1415, %v1845
        %v1974 = vsel %vm1718, %v1420, %v1846
        %v1975 = vsel %vm1719, %v1425, %v1847
        %v1976 = vsel %vm1720, %v1430, %v1848
        %v1977 = vsel %vm1721, %v1435, %v1849
        %v1978 = vsel %vm1722, %v1440, %v1850
        %v1979 = vsel %vm1723, %v1445, %v1851
        %v1980 = vsel %vm1724, %v1450, %v1852
        %v1981 = vsel %vm1725, %v1455, %v1853
        %v1982 = vsel %vm1726, %v1460, %v1854
        %v1983 = vsel %vm1727, %v1465, %v1855
        %v1984 = vsel %vm1728, %v1470, %v1856
        %v1985 = vsel %vm1729, %v1475, %v1857
        %v1986 = vsel %vm1730, %v1480, %v1858
        %v1987 = vsel %vm1731, %v1485, %v1859
        %v1988 = vsel %vm1732, %v1490, %v1860
        %v1989 = vsel %vm1733, %v1495, %v1861
        %v1990 = vsel %vm1734, %v1500, %v1862
        %v1991 = vsel %vm1735, %v1505, %v1863
        %v1992 = vsel %vm1736, %v1510, %v1864
        %v1993 = vsel %vm1737, %v1515, %v1865
        %v1994 = vsel %vm1738, %v1520, %v1866
        %v1995 = vsel %vm1739, %v1525, %v1867
        %v1996 = vsel %vm1740, %v1530, %v1868
        %v1997 = vsel %vm1741, %v1535, %v1869
        %v1998 = vsel %vm1742, %v1540, %v1870
        %v1999 = vsel %vm1743, %v1545, %v1871
        %v2000 = vsel %vm1744, %v1550, %v1872
        %v2001 = vsel %vm1745, %v1555, %v1873
        %v2002 = vsel %vm1746, %v1560, %v1874
        %v2003 = vsel %vm1747, %v1565, %v1875
        %v2004 = vsel %vm1748, %v1570, %v1876
        %v2005 = vsel %vm1749, %v1575, %v1877
        %v2006 = vsel %vm1750, %v1580, %v1878
        %v2007 = vsel %vm1751, %v1585, %v1879
        %v2008 = vsel %vm1752, %v1590, %v1880
        %v2009 = vsel %vm1753, %v1595, %v1881
        %v2010 = vsel %vm1754, %v1600, %v1882
        %v2011 = vsel %vm1755, %v1605, %v1883
        %v2012 = vsel %vm1756, %v1610, %v1884
        %v2013 = vsel %vm1757, %v1615, %v1885
        %v2014 = vsel %vm1758, %v1620, %v1886
        %v2015 = vsel %vm1759, %v1625, %v1887
        %v2016 = vsel %vm1760, %v1630, %v1888
        %vm2017 = vcmask 146560
        %v2018 = vsel %vm2017, %v1889, -inf
        %v2019 = vsel %vm2017, %v1890, -inf
        %v2020 = vsel %vm2017, %v1891, -inf
        %v2021 = vsel %vm2017, %v1892, -inf
        %v2022 = vsel %vm2017, %v1893, -inf
        %v2023 = vmax.f32 %v2018, %v2022
        %v2024 = vsel %vm2017, %v1894, -inf
        %v2025 = vmax.f32 %v2019, %v2024
        %v2026 = vsel %vm2017, %v1895, -inf
        %v2027 = vmax.f32 %v2020, %v2026
        %v2028 = vsel %vm2017, %v1896, -inf
        %v2029 = vmax.f32 %v2021, %v2028
        %v2030 = vsel %vm2017, %v1897, -inf
        %v2031 = vmax.f32 %v2023, %v2030
        %v2032 = vsel %vm2017, %v1898, -inf
        %v2033 = vmax.f32 %v2025, %v2032
        %v2034 = vsel %vm2017, %v1899, -inf
        %v2035 = vmax.f32 %v2027, %v2034
        %v2036 = vsel %vm2017, %v1900, -inf
        %v2037 = vmax.f32 %v2029, %v2036
        %v2038 = vsel %vm2017, %v1901, -inf
        %v2039 = vmax.f32 %v2031, %v2038
        %v2040 = vsel %vm2017, %v1902, -inf
        %v2041 = vmax.f32 %v2033, %v2040
        %v2042 = vsel %vm2017, %v1903, -inf
        %v2043 = vmax.f32 %v2035, %v2042
        %v2044 = vsel %vm2017, %v1904, -inf
        %v2045 = vmax.f32 %v2037, %v2044
        %v2046 = vsel %vm2017, %v1905, -inf
        %v2047 = vmax.f32 %v2039, %v2046
        %v2048 = vsel %vm2017, %v1906, -inf
        %v2049 = vmax.f32 %v2041, %v2048
        %v2050 = vsel %vm2017, %v1907, -inf
        %v2051 = vmax.f32 %v2043, %v2050
        %v2052 = vsel %vm2017, %v1908, -inf
        %v2053 = vmax.f32 %v2045, %v2052
        %v2054 = vsel %vm2017, %v1909, -inf
        %v2055 = vmax.f32 %v2047, %v2054
        %v2056 = vsel %vm2017, %v1910, -inf
        %v2057 = vmax.f32 %v2049, %v2056
        %v2058 = vsel %vm2017, %v1911, -inf
        %v2059 = vmax.f32 %v2051, %v2058
        %v2060 = vsel %vm2017, %v1912, -inf
        %v2061 = vmax.f32 %v2053, %v2060
        %v2062 = vsel %vm2017, %v1913, -inf
        %v2063 = vmax.f32 %v2055, %v2062
        %v2064 = vsel %vm2017, %v1914, -inf
        %v2065 = vmax.f32 %v2057, %v2064
        %v2066 = vsel %vm2017, %v1915, -inf
        %v2067 = vmax.f32 %v2059, %v2066
        %v2068 = vsel %vm2017, %v1916, -inf
        %v2069 = vmax.f32 %v2061, %v2068
        %v2070 = vsel %vm2017, %v1917, -inf
        %v2071 = vmax.f32 %v2063, %v2070
        %v2072 = vsel %vm2017, %v1918, -inf
        %v2073 = vmax.f32 %v2065, %v2072
        %v2074 = vsel %vm2017, %v1919, -inf
        %v2075 = vmax.f32 %v2067, %v2074
        %v2076 = vsel %vm2017, %v1920, -inf
        %v2077 = vmax.f32 %v2069, %v2076
        %v2078 = vsel %vm2017, %v1921, -inf
        %v2079 = vmax.f32 %v2071, %v2078
        %v2080 = vsel %vm2017, %v1922, -inf
        %v2081 = vmax.f32 %v2073, %v2080
        %v2082 = vsel %vm2017, %v1923, -inf
        %v2083 = vmax.f32 %v2075, %v2082
        %v2084 = vsel %vm2017, %v1924, -inf
        %v2085 = vmax.f32 %v2077, %v2084
        %v2086 = vsel %vm2017, %v1925, -inf
        %v2087 = vmax.f32 %v2079, %v2086
        %v2088 = vsel %vm2017, %v1926, -inf
        %v2089 = vmax.f32 %v2081, %v2088
        %v2090 = vsel %vm2017, %v1927, -inf
        %v2091 = vmax.f32 %v2083, %v2090
        %v2092 = vsel %vm2017, %v1928, -inf
        %v2093 = vmax.f32 %v2085, %v2092
        %v2094 = vsel %vm2017, %v1929, -inf
        %v2095 = vmax.f32 %v2087, %v2094
        %v2096 = vsel %vm2017, %v1930, -inf
        %v2097 = vmax.f32 %v2089, %v2096
        %v2098 = vsel %vm2017, %v1931, -inf
        %v2099 = vmax.f32 %v2091, %v2098
        %v2100 = vsel %vm2017, %v1932, -inf
        %v2101 = vmax.f32 %v2093, %v2100
        %v2102 = vsel %vm2017, %v1933, -inf
        %v2103 = vmax.f32 %v2095, %v2102
        %v2104 = vsel %vm2017, %v1934, -inf
        %v2105 = vmax.f32 %v2097, %v2104
        %v2106 = vsel %vm2017, %v1935, -inf
        %v2107 = vmax.f32 %v2099, %v2106
        %v2108 = vsel %vm2017, %v1936, -inf
        %v2109 = vmax.f32 %v2101, %v2108
        %v2110 = vsel %vm2017, %v1937, -inf
        %v2111 = vmax.f32 %v2103, %v2110
        %v2112 = vsel %vm2017, %v1938, -inf
        %v2113 = vmax.f32 %v2105, %v2112
        %v2114 = vsel %vm2017, %v1939, -inf
        %v2115 = vmax.f32 %v2107, %v2114
        %v2116 = vsel %vm2017, %v1940, -inf
        %v2117 = vmax.f32 %v2109, %v2116
        %v2118 = vsel %vm2017, %v1941, -inf
        %v2119 = vmax.f32 %v2111, %v2118
        %v2120 = vsel %vm2017, %v1942, -inf
        %v2121 = vmax.f32 %v2113, %v2120
        %v2122 = vsel %vm2017, %v1943, -inf
        %v2123 = vmax.f32 %v2115, %v2122
        %v2124 = vsel %vm2017, %v1944, -inf
        %v2125 = vmax.f32 %v2117, %v2124
        %v2126 = vsel %vm2017, %v1945, -inf
        %v2127 = vmax.f32 %v2119, %v2126
        %v2128 = vsel %vm2017, %v1946, -inf
        %v2129 = vmax.f32 %v2121, %v2128
        %v2130 = vsel %vm2017, %v1947, -inf
        %v2131 = vmax.f32 %v2123, %v2130
        %v2132 = vsel %vm2017, %v1948, -inf
        %v2133 = vmax.f32 %v2125, %v2132
        %v2134 = vsel %vm2017, %v1949, -inf
        %v2135 = vmax.f32 %v2127, %v2134
        %v2136 = vsel %vm2017, %v1950, -inf
        %v2137 = vmax.f32 %v2129, %v2136
        %v2138 = vsel %vm2017, %v1951, -inf
        %v2139 = vmax.f32 %v2131, %v2138
        %v2140 = vsel %vm2017, %v1952, -inf
        %v2141 = vmax.f32 %v2133, %v2140
        %v2142 = vsel %vm2017, %v1953, -inf
        %v2143 = vmax.f32 %v2135, %v2142
        %v2144 = vsel %vm2017, %v1954, -inf
        %v2145 = vmax.f32 %v2137, %v2144
        %v2146 = vsel %vm2017, %v1955, -inf
        %v2147 = vmax.f32 %v2139, %v2146
        %v2148 = vsel %vm2017, %v1956, -inf
        %v2149 = vmax.f32 %v2141, %v2148
        %v2150 = vsel %vm2017, %v1957, -inf
        %v2151 = vmax.f32 %v2143, %v2150
        %v2152 = vsel %vm2017, %v1958, -inf
        %v2153 = vmax.f32 %v2145, %v2152
        %v2154 = vsel %vm2017, %v1959, -inf
        %v2155 = vmax.f32 %v2147, %v2154
        %v2156 = vsel %vm2017, %v1960, -inf
        %v2157 = vmax.f32 %v2149, %v2156
        %v2158 = vsel %vm2017, %v1961, -inf
        %v2159 = vmax.f32 %v2151, %v2158
        %v2160 = vsel %vm2017, %v1962, -inf
        %v2161 = vmax.f32 %v2153, %v2160
        %v2162 = vsel %vm2017, %v1963, -inf
        %v2163 = vmax.f32 %v2155, %v2162
        %v2164 = vsel %vm2017, %v1964, -inf
        %v2165 = vmax.f32 %v2157, %v2164
        %v2166 = vsel %vm2017, %v1965, -inf
        %v2167 = vmax.f32 %v2159, %v2166
        %v2168 = vsel %vm2017, %v1966, -inf
        %v2169 = vmax.f32 %v2161, %v2168
        %v2170 = vsel %vm2017, %v1967, -inf
        %v2171 = vmax.f32 %v2163, %v2170
        %v2172 = vsel %vm2017, %v1968, -inf
        %v2173 = vmax.f32 %v2165, %v2172
        %v2174 = vsel %vm2017, %v1969, -inf
        %v2175 = vmax.f32 %v2167, %v2174
        %v2176 = vsel %vm2017, %v1970, -inf
        %v2177 = vmax.f32 %v2169, %v2176
        %v2178 = vsel %vm2017, %v1971, -inf
        %v2179 = vmax.f32 %v2171, %v2178
        %v2180 = vsel %vm2017, %v1972, -inf
        %v2181 = vmax.f32 %v2173, %v2180
        %v2182 = vsel %vm2017, %v1973, -inf
        %v2183 = vmax.f32 %v2175, %v2182
        %v2184 = vsel %vm2017, %v1974, -inf
        %v2185 = vmax.f32 %v2177, %v2184
        %v2186 = vsel %vm2017, %v1975, -inf
        %v2187 = vmax.f32 %v2179, %v2186
        %v2188 = vsel %vm2017, %v1976, -inf
        %v2189 = vmax.f32 %v2181, %v2188
        %v2190 = vsel %vm2017, %v1977, -inf
        %v2191 = vmax.f32 %v2183, %v2190
        %v2192 = vsel %vm2017, %v1978, -inf
        %v2193 = vmax.f32 %v2185, %v2192
        %v2194 = vsel %vm2017, %v1979, -inf
        %v2195 = vmax.f32 %v2187, %v2194
        %v2196 = vsel %vm2017, %v1980, -inf
        %v2197 = vmax.f32 %v2189, %v2196
        %v2198 = vsel %vm2017, %v1981, -inf
        %v2199 = vmax.f32 %v2191, %v2198
        %v2200 = vsel %vm2017, %v1982, -inf
        %v2201 = vmax.f32 %v2193, %v2200
        %v2202 = vsel %vm2017, %v1983, -inf
        %v2203 = vmax.f32 %v2195, %v2202
        %v2204 = vsel %vm2017, %v1984, -inf
        %v2205 = vmax.f32 %v2197, %v2204
        %v2206 = vsel %vm2017, %v1985, -inf
        %v2207 = vmax.f32 %v2199, %v2206
        %v2208 = vsel %vm2017, %v1986, -inf
        %v2209 = vmax.f32 %v2201, %v2208
        %v2210 = vsel %vm2017, %v1987, -inf
        %v2211 = vmax.f32 %v2203, %v2210
        %v2212 = vsel %vm2017, %v1988, -inf
        %v2213 = vmax.f32 %v2205, %v2212
        %v2214 = vsel %vm2017, %v1989, -inf
        %v2215 = vmax.f32 %v2207, %v2214
        %v2216 = vsel %vm2017, %v1990, -inf
        %v2217 = vmax.f32 %v2209, %v2216
        %v2218 = vsel %vm2017, %v1991, -inf
        %v2219 = vmax.f32 %v2211, %v2218
        %v2220 = vsel %vm2017, %v1992, -inf
        %v2221 = vmax.f32 %v2213, %v2220
        %v2222 = vsel %vm2017, %v1993, -inf
        %v2223 = vmax.f32 %v2215, %v2222
        %v2224 = vsel %vm2017, %v1994, -inf
        %v2225 = vmax.f32 %v2217, %v2224
        %v2226 = vsel %vm2017, %v1995, -inf
        %v2227 = vmax.f32 %v2219, %v2226
        %v2228 = vsel %vm2017, %v1996, -inf
        %v2229 = vmax.f32 %v2221, %v2228
        %v2230 = vsel %vm2017, %v1997, -inf
        %v2231 = vmax.f32 %v2223, %v2230
        %v2232 = vsel %vm2017, %v1998, -inf
        %v2233 = vmax.f32 %v2225, %v2232
        %v2234 = vsel %vm2017, %v1999, -inf
        %v2235 = vmax.f32 %v2227, %v2234
        %v2236 = vsel %vm2017, %v2000, -inf
        %v2237 = vmax.f32 %v2229, %v2236
        %v2238 = vsel %vm2017, %v2001, -inf
        %v2239 = vmax.f32 %v2231, %v2238
        %v2240 = vsel %vm2017, %v2002, -inf
        %v2241 = vmax.f32 %v2233, %v2240
        %v2242 = vsel %vm2017, %v2003, -inf
        %v2243 = vmax.f32 %v2235, %v2242
        %v2244 = vsel %vm2017, %v2004, -inf
        %v2245 = vmax.f32 %v2237, %v2244
        %v2246 = vsel %vm2017, %v2005, -inf
        %v2247 = vmax.f32 %v2239, %v2246
        %v2248 = vsel %vm2017, %v2006, -inf
        %v2249 = vmax.f32 %v2241, %v2248
        %v2250 = vsel %vm2017, %v2007, -inf
        %v2251 = vmax.f32 %v2243, %v2250
        %v2252 = vsel %vm2017, %v2008, -inf
        %v2253 = vmax.f32 %v2245, %v2252
        %v2254 = vsel %vm2017, %v2009, -inf
        %v2255 = vmax.f32 %v2247, %v2254
        %v2256 = vsel %vm2017, %v2010, -inf
        %v2257 = vmax.f32 %v2249, %v2256
        %v2258 = vsel %vm2017, %v2011, -inf
        %v2259 = vmax.f32 %v2251, %v2258
        %v2260 = vsel %vm2017, %v2012, -inf
        %v2261 = vmax.f32 %v2253, %v2260
        %v2262 = vsel %vm2017, %v2013, -inf
        %v2263 = vmax.f32 %v2255, %v2262
        %v2264 = vsel %vm2017, %v2014, -inf
        %v2265 = vmax.f32 %v2257, %v2264
        %v2266 = vsel %vm2017, %v2015, -inf
        %v2267 = vmax.f32 %v2259, %v2266
        %v2268 = vsel %vm2017, %v2016, -inf
        %v2269 = vmax.f32 %v2261, %v2268
        %v2270 = vmax.f32 %v2263, %v2265
        %v2271 = vmax.f32 %v2267, %v2269
        %v2272 = vmax.f32 %v2270, %v2271
        %v2273 = vrot.slane %v2272, 4
        %v2274 = vmax.f32 %v2272, %v2273
        %v2275 = vrot.slane %v2274, 2
        %v2276 = vmax.f32 %v2274, %v2275
        %v2277 = vrot.slane %v2276, 1
        %v2278 = vmax.f32 %v2276, %v2277
        %v2279 = vld [vmem:[#allocation2] sm:$0x1]
        %v2282 = vunpack.c.l.s4 1966171168
        %v2283 = vunpack.c.0.s8 %v2282
        %v2284 = vlaneseq
        %v2285 = vshrl.u32 %v2284, 7
        %v2286 = vsub.s32 %v2283, %v2285
        %v2287 = vrot.slane %v2278, %v2286
        %v2289 = vunpack.c.l.s4 1966171168
        %v2290 = vunpack.c.0.s8 %v2289
        %v2291 = vlaneseq
        %v2292 = vshrl.u32 %v2291, 7
        %v2293 = vsub.s32 %v2290, %v2292
        %v2294 = vrot.slane %v2287, %v2293
        %2295 = vrot.lane.b32.xlu0 %v2294, 112
        %v2296 = vpop.permute.xlu0 %2295
        %v2298 = vmax.f32 %v2279, %v2296
        %v2299 = vsub.f32 %v2279, %v2298
        %v2300 = vmul.f32 %v2299, 1.442695
        %v2301 = vpow.pop %v2300
        %v2303 = vlaneseq
        %v2304 = vshrl.u32 %v2303, 7
        %v2305 = vsub.s32 0, %v2304
        %v2306 = vrot.slane %v2298, %v2305
        %2307 = vrot.lane.b32.xlu0 %v2306, 16
        %v2308 = vpop.permute.xlu0 %2307
        %v2310 = vsub.f32 %v1889, %v2308
        %v2311 = vsub.f32 %v1890, %v2308
        %v2312 = vsub.f32 %v1891, %v2308
        %v2313 = vsub.f32 %v1892, %v2308
        %v2314 = vsub.f32 %v1893, %v2308
        %v2315 = vsub.f32 %v1894, %v2308
        %v2316 = vsub.f32 %v1895, %v2308
        %v2317 = vsub.f32 %v1896, %v2308
        %v2318 = vsub.f32 %v1897, %v2308
        %v2319 = vsub.f32 %v1898, %v2308
        %v2320 = vsub.f32 %v1899, %v2308
        %v2321 = vsub.f32 %v1900, %v2308
        %v2322 = vsub.f32 %v1901, %v2308
        %v2323 = vsub.f32 %v1902, %v2308
        %v2324 = vsub.f32 %v1903, %v2308
        %v2325 = vsub.f32 %v1904, %v2308
        %v2326 = vsub.f32 %v1905, %v2308
        %v2327 = vsub.f32 %v1906, %v2308
        %v2328 = vsub.f32 %v1907, %v2308
        %v2329 = vsub.f32 %v1908, %v2308
        %v2330 = vsub.f32 %v1909, %v2308
        %v2331 = vsub.f32 %v1910, %v2308
        %v2332 = vsub.f32 %v1911, %v2308
        %v2333 = vsub.f32 %v1912, %v2308
        %v2334 = vsub.f32 %v1913, %v2308
        %v2335 = vsub.f32 %v1914, %v2308
        %v2336 = vsub.f32 %v1915, %v2308
        %v2337 = vsub.f32 %v1916, %v2308
        %v2338 = vsub.f32 %v1917, %v2308
        %v2339 = vsub.f32 %v1918, %v2308
        %v2340 = vsub.f32 %v1919, %v2308
        %v2341 = vsub.f32 %v1920, %v2308
        %v2342 = vsub.f32 %v1921, %v2308
        %v2343 = vsub.f32 %v1922, %v2308
        %v2344 = vsub.f32 %v1923, %v2308
        %v2345 = vsub.f32 %v1924, %v2308
        %v2346 = vsub.f32 %v1925, %v2308
        %v2347 = vsub.f32 %v1926, %v2308
        %v2348 = vsub.f32 %v1927, %v2308
        %v2349 = vsub.f32 %v1928, %v2308
        %v2350 = vsub.f32 %v1929, %v2308
        %v2351 = vsub.f32 %v1930, %v2308
        %v2352 = vsub.f32 %v1931, %v2308
        %v2353 = vsub.f32 %v1932, %v2308
        %v2354 = vsub.f32 %v1933, %v2308
        %v2355 = vsub.f32 %v1934, %v2308
        %v2356 = vsub.f32 %v1935, %v2308
        %v2357 = vsub.f32 %v1936, %v2308
        %v2358 = vsub.f32 %v1937, %v2308
        %v2359 = vsub.f32 %v1938, %v2308
        %v2360 = vsub.f32 %v1939, %v2308
        %v2361 = vsub.f32 %v1940, %v2308
        %v2362 = vsub.f32 %v1941, %v2308
        %v2363 = vsub.f32 %v1942, %v2308
        %v2364 = vsub.f32 %v1943, %v2308
        %v2365 = vsub.f32 %v1944, %v2308
        %v2366 = vsub.f32 %v1945, %v2308
        %v2367 = vsub.f32 %v1946, %v2308
        %v2368 = vsub.f32 %v1947, %v2308
        %v2369 = vsub.f32 %v1948, %v2308
        %v2370 = vsub.f32 %v1949, %v2308
        %v2371 = vsub.f32 %v1950, %v2308
        %v2372 = vsub.f32 %v1951, %v2308
        %v2373 = vsub.f32 %v1952, %v2308
        %v2374 = vsub.f32 %v1953, %v2308
        %v2375 = vsub.f32 %v1954, %v2308
        %v2376 = vsub.f32 %v1955, %v2308
        %v2377 = vsub.f32 %v1956, %v2308
        %v2378 = vsub.f32 %v1957, %v2308
        %v2379 = vsub.f32 %v1958, %v2308
        %v2380 = vsub.f32 %v1959, %v2308
        %v2381 = vsub.f32 %v1960, %v2308
        %v2382 = vsub.f32 %v1961, %v2308
        %v2383 = vsub.f32 %v1962, %v2308
        %v2384 = vsub.f32 %v1963, %v2308
        %v2385 = vsub.f32 %v1964, %v2308
        %v2386 = vsub.f32 %v1965, %v2308
        %v2387 = vsub.f32 %v1966, %v2308
        %v2388 = vsub.f32 %v1967, %v2308
        %v2389 = vsub.f32 %v1968, %v2308
        %v2390 = vsub.f32 %v1969, %v2308
        %v2391 = vsub.f32 %v1970, %v2308
        %v2392 = vsub.f32 %v1971, %v2308
        %v2393 = vsub.f32 %v1972, %v2308
        %v2394 = vsub.f32 %v1973, %v2308
        %v2395 = vsub.f32 %v1974, %v2308
        %v2396 = vsub.f32 %v1975, %v2308
        %v2397 = vsub.f32 %v1976, %v2308
        %v2398 = vsub.f32 %v1977, %v2308
        %v2399 = vsub.f32 %v1978, %v2308
        %v2400 = vsub.f32 %v1979, %v2308
        %v2401 = vsub.f32 %v1980, %v2308
        %v2402 = vsub.f32 %v1981, %v2308
        %v2403 = vsub.f32 %v1982, %v2308
        %v2404 = vsub.f32 %v1983, %v2308
        %v2405 = vsub.f32 %v1984, %v2308
        %v2406 = vsub.f32 %v1985, %v2308
        %v2407 = vsub.f32 %v1986, %v2308
        %v2408 = vsub.f32 %v1987, %v2308
        %v2409 = vsub.f32 %v1988, %v2308
        %v2410 = vsub.f32 %v1989, %v2308
        %v2411 = vsub.f32 %v1990, %v2308
        %v2412 = vsub.f32 %v1991, %v2308
        %v2413 = vsub.f32 %v1992, %v2308
        %v2414 = vsub.f32 %v1993, %v2308
        %v2415 = vsub.f32 %v1994, %v2308
        %v2416 = vsub.f32 %v1995, %v2308
        %v2417 = vsub.f32 %v1996, %v2308
        %v2418 = vsub.f32 %v1997, %v2308
        %v2419 = vsub.f32 %v1998, %v2308
        %v2420 = vsub.f32 %v1999, %v2308
        %v2421 = vsub.f32 %v2000, %v2308
        %v2422 = vsub.f32 %v2001, %v2308
        %v2423 = vsub.f32 %v2002, %v2308
        %v2424 = vsub.f32 %v2003, %v2308
        %v2425 = vsub.f32 %v2004, %v2308
        %v2426 = vsub.f32 %v2005, %v2308
        %v2427 = vsub.f32 %v2006, %v2308
        %v2428 = vsub.f32 %v2007, %v2308
        %v2429 = vsub.f32 %v2008, %v2308
        %v2430 = vsub.f32 %v2009, %v2308
        %v2431 = vsub.f32 %v2010, %v2308
        %v2432 = vsub.f32 %v2011, %v2308
        %v2433 = vsub.f32 %v2012, %v2308
        %v2434 = vsub.f32 %v2013, %v2308
        %v2435 = vsub.f32 %v2014, %v2308
        %v2436 = vsub.f32 %v2015, %v2308
        %v2437 = vsub.f32 %v2016, %v2308
        %v2438 = vmin.f32 %v2310, 0.0
        %v2439 = vmin.f32 %v2311, 0.0
        %v2440 = vmin.f32 %v2312, 0.0
        %v2441 = vmin.f32 %v2313, 0.0
        %v2442 = vmin.f32 %v2314, 0.0
        %v2443 = vmin.f32 %v2315, 0.0
        %v2444 = vmin.f32 %v2316, 0.0
        %v2445 = vmin.f32 %v2317, 0.0
        %v2446 = vmin.f32 %v2318, 0.0
        %v2447 = vmin.f32 %v2319, 0.0
        %v2448 = vmin.f32 %v2320, 0.0
        %v2449 = vmin.f32 %v2321, 0.0
        %v2450 = vmin.f32 %v2322, 0.0
        %v2451 = vmin.f32 %v2323, 0.0
        %v2452 = vmin.f32 %v2324, 0.0
        %v2453 = vmin.f32 %v2325, 0.0
        %v2454 = vmin.f32 %v2326, 0.0
        %v2455 = vmin.f32 %v2327, 0.0
        %v2456 = vmin.f32 %v2328, 0.0
        %v2457 = vmin.f32 %v2329, 0.0
        %v2458 = vmin.f32 %v2330, 0.0
        %v2459 = vmin.f32 %v2331, 0.0
        %v2460 = vmin.f32 %v2332, 0.0
        %v2461 = vmin.f32 %v2333, 0.0
        %v2462 = vmin.f32 %v2334, 0.0
        %v2463 = vmin.f32 %v2335, 0.0
        %v2464 = vmin.f32 %v2336, 0.0
        %v2465 = vmin.f32 %v2337, 0.0
        %v2466 = vmin.f32 %v2338, 0.0
        %v2467 = vmin.f32 %v2339, 0.0
        %v2468 = vmin.f32 %v2340, 0.0
        %v2469 = vmin.f32 %v2341, 0.0
        %v2470 = vmin.f32 %v2342, 0.0
        %v2471 = vmin.f32 %v2343, 0.0
        %v2472 = vmin.f32 %v2344, 0.0
        %v2473 = vmin.f32 %v2345, 0.0
        %v2474 = vmin.f32 %v2346, 0.0
        %v2475 = vmin.f32 %v2347, 0.0
        %v2476 = vmin.f32 %v2348, 0.0
        %v2477 = vmin.f32 %v2349, 0.0
        %v2478 = vmin.f32 %v2350, 0.0
        %v2479 = vmin.f32 %v2351, 0.0
        %v2480 = vmin.f32 %v2352, 0.0
        %v2481 = vmin.f32 %v2353, 0.0
        %v2482 = vmin.f32 %v2354, 0.0
        %v2483 = vmin.f32 %v2355, 0.0
        %v2484 = vmin.f32 %v2356, 0.0
        %v2485 = vmin.f32 %v2357, 0.0
        %v2486 = vmin.f32 %v2358, 0.0
        %v2487 = vmin.f32 %v2359, 0.0
        %v2488 = vmin.f32 %v2360, 0.0
        %v2489 = vmin.f32 %v2361, 0.0
        %v2490 = vmin.f32 %v2362, 0.0
        %v2491 = vmin.f32 %v2363, 0.0
        %v2492 = vmin.f32 %v2364, 0.0
        %v2493 = vmin.f32 %v2365, 0.0
        %v2494 = vmin.f32 %v2366, 0.0
        %v2495 = vmin.f32 %v2367, 0.0
        %v2496 = vmin.f32 %v2368, 0.0
        %v2497 = vmin.f32 %v2369, 0.0
        %v2498 = vmin.f32 %v2370, 0.0
        %v2499 = vmin.f32 %v2371, 0.0
        %v2500 = vmin.f32 %v2372, 0.0
        %v2501 = vmin.f32 %v2373, 0.0
        %v2502 = vmin.f32 %v2374, 0.0
        %v2503 = vmin.f32 %v2375, 0.0
        %v2504 = vmin.f32 %v2376, 0.0
        %v2505 = vmin.f32 %v2377, 0.0
        %v2506 = vmin.f32 %v2378, 0.0
        %v2507 = vmin.f32 %v2379, 0.0
        %v2508 = vmin.f32 %v2380, 0.0
        %v2509 = vmin.f32 %v2381, 0.0
        %v2510 = vmin.f32 %v2382, 0.0
        %v2511 = vmin.f32 %v2383, 0.0
        %v2512 = vmin.f32 %v2384, 0.0
        %v2513 = vmin.f32 %v2385, 0.0
        %v2514 = vmin.f32 %v2386, 0.0
        %v2515 = vmin.f32 %v2387, 0.0
        %v2516 = vmin.f32 %v2388, 0.0
        %v2517 = vmin.f32 %v2389, 0.0
        %v2518 = vmin.f32 %v2390, 0.0
        %v2519 = vmin.f32 %v2391, 0.0
        %v2520 = vmin.f32 %v2392, 0.0
        %v2521 = vmin.f32 %v2393, 0.0
        %v2522 = vmin.f32 %v2394, 0.0
        %v2523 = vmin.f32 %v2395, 0.0
        %v2524 = vmin.f32 %v2396, 0.0
        %v2525 = vmin.f32 %v2397, 0.0
        %v2526 = vmin.f32 %v2398, 0.0
        %v2527 = vmin.f32 %v2399, 0.0
        %v2528 = vmin.f32 %v2400, 0.0
        %v2529 = vmin.f32 %v2401, 0.0
        %v2530 = vmin.f32 %v2402, 0.0
        %v2531 = vmin.f32 %v2403, 0.0
        %v2532 = vmin.f32 %v2404, 0.0
        %v2533 = vmin.f32 %v2405, 0.0
        %v2534 = vmin.f32 %v2406, 0.0
        %v2535 = vmin.f32 %v2407, 0.0
        %v2536 = vmin.f32 %v2408, 0.0
        %v2537 = vmin.f32 %v2409, 0.0
        %v2538 = vmin.f32 %v2410, 0.0
        %v2539 = vmin.f32 %v2411, 0.0
        %v2540 = vmin.f32 %v2412, 0.0
        %v2541 = vmin.f32 %v2413, 0.0
        %v2542 = vmin.f32 %v2414, 0.0
        %v2543 = vmin.f32 %v2415, 0.0
        %v2544 = vmin.f32 %v2416, 0.0
        %v2545 = vmin.f32 %v2417, 0.0
        %v2546 = vmin.f32 %v2418, 0.0
        %v2547 = vmin.f32 %v2419, 0.0
        %v2548 = vmin.f32 %v2420, 0.0
        %v2549 = vmin.f32 %v2421, 0.0
        %v2550 = vmin.f32 %v2422, 0.0
        %v2551 = vmin.f32 %v2423, 0.0
        %v2552 = vmin.f32 %v2424, 0.0
        %v2553 = vmin.f32 %v2425, 0.0
        %v2554 = vmin.f32 %v2426, 0.0
        %v2555 = vmin.f32 %v2427, 0.0
        %v2556 = vmin.f32 %v2428, 0.0
        %v2557 = vmin.f32 %v2429, 0.0
        %v2558 = vmin.f32 %v2430, 0.0
        %v2559 = vmin.f32 %v2431, 0.0
        %v2560 = vmin.f32 %v2432, 0.0
        %v2561 = vmin.f32 %v2433, 0.0
        %v2562 = vmin.f32 %v2434, 0.0
        %v2563 = vmin.f32 %v2435, 0.0
        %v2564 = vmin.f32 %v2436, 0.0
        %v2565 = vmin.f32 %v2437, 0.0
        %v2566 = vmul.f32 %v2438, 1.442695
        %v2567 = vpow.pop %v2566
        %v2568 = vmul.f32 %v2439, 1.442695
        %v2569 = vpow.pop %v2568
        %v2570 = vmul.f32 %v2440, 1.442695
        %v2571 = vpow.pop %v2570
        %v2572 = vmul.f32 %v2441, 1.442695
        %v2573 = vpow.pop %v2572
        %v2574 = vmul.f32 %v2442, 1.442695
        %v2575 = vpow.pop %v2574
        %v2576 = vmul.f32 %v2443, 1.442695
        %v2577 = vpow.pop %v2576
        %v2578 = vmul.f32 %v2444, 1.442695
        %v2579 = vpow.pop %v2578
        %v2580 = vmul.f32 %v2445, 1.442695
        %v2581 = vpow.pop %v2580
        %v2582 = vmul.f32 %v2446, 1.442695
        %v2583 = vpow.pop %v2582
        %v2584 = vmul.f32 %v2447, 1.442695
        %v2585 = vpow.pop %v2584
        %v2586 = vmul.f32 %v2448, 1.442695
        %v2587 = vpow.pop %v2586
        %v2588 = vmul.f32 %v2449, 1.442695
        %v2589 = vpow.pop %v2588
        %v2590 = vmul.f32 %v2450, 1.442695
        %v2591 = vpow.pop %v2590
        %v2592 = vmul.f32 %v2451, 1.442695
        %v2593 = vpow.pop %v2592
        %v2594 = vmul.f32 %v2452, 1.442695
        %v2595 = vpow.pop %v2594
        %v2596 = vmul.f32 %v2453, 1.442695
        %v2597 = vpow.pop %v2596
        %v2598 = vmul.f32 %v2454, 1.442695
        %v2599 = vpow.pop %v2598
        %v2600 = vmul.f32 %v2455, 1.442695
        %v2601 = vpow.pop %v2600
        %v2602 = vmul.f32 %v2456, 1.442695
        %v2603 = vpow.pop %v2602
        %v2604 = vmul.f32 %v2457, 1.442695
        %v2605 = vpow.pop %v2604
        %v2606 = vmul.f32 %v2458, 1.442695
        %v2607 = vpow.pop %v2606
        %v2608 = vmul.f32 %v2459, 1.442695
        %v2609 = vpow.pop %v2608
        %v2610 = vmul.f32 %v2460, 1.442695
        %v2611 = vpow.pop %v2610
        %v2612 = vmul.f32 %v2461, 1.442695
        %v2613 = vpow.pop %v2612
        %v2614 = vmul.f32 %v2462, 1.442695
        %v2615 = vpow.pop %v2614
        %v2616 = vmul.f32 %v2463, 1.442695
        %v2617 = vpow.pop %v2616
        %v2618 = vmul.f32 %v2464, 1.442695
        %v2619 = vpow.pop %v2618
        %v2620 = vmul.f32 %v2465, 1.442695
        %v2621 = vpow.pop %v2620
        %v2622 = vmul.f32 %v2466, 1.442695
        %v2623 = vpow.pop %v2622
        %v2624 = vmul.f32 %v2467, 1.442695
        %v2625 = vpow.pop %v2624
        %v2626 = vmul.f32 %v2468, 1.442695
        %v2627 = vpow.pop %v2626
        %v2628 = vmul.f32 %v2469, 1.442695
        %v2629 = vpow.pop %v2628
        %v2630 = vmul.f32 %v2470, 1.442695
        %v2631 = vpow.pop %v2630
        %v2632 = vmul.f32 %v2471, 1.442695
        %v2633 = vpow.pop %v2632
        %v2634 = vmul.f32 %v2472, 1.442695
        %v2635 = vpow.pop %v2634
        %v2636 = vmul.f32 %v2473, 1.442695
        %v2637 = vpow.pop %v2636
        %v2638 = vmul.f32 %v2474, 1.442695
        %v2639 = vpow.pop %v2638
        %v2640 = vmul.f32 %v2475, 1.442695
        %v2641 = vpow.pop %v2640
        %v2642 = vmul.f32 %v2476, 1.442695
        %v2643 = vpow.pop %v2642
        %v2644 = vmul.f32 %v2477, 1.442695
        %v2645 = vpow.pop %v2644
        %v2646 = vmul.f32 %v2478, 1.442695
        %v2647 = vpow.pop %v2646
        %v2648 = vmul.f32 %v2479, 1.442695
        %v2649 = vpow.pop %v2648
        %v2650 = vmul.f32 %v2480, 1.442695
        %v2651 = vpow.pop %v2650
        %v2652 = vmul.f32 %v2481, 1.442695
        %v2653 = vpow.pop %v2652
        %v2654 = vmul.f32 %v2482, 1.442695
        %v2655 = vpow.pop %v2654
        %v2656 = vmul.f32 %v2483, 1.442695
        %v2657 = vpow.pop %v2656
        %v2658 = vmul.f32 %v2484, 1.442695
        %v2659 = vpow.pop %v2658
        %v2660 = vmul.f32 %v2485, 1.442695
        %v2661 = vpow.pop %v2660
        %v2662 = vmul.f32 %v2486, 1.442695
        %v2663 = vpow.pop %v2662
        %v2664 = vmul.f32 %v2487, 1.442695
        %v2665 = vpow.pop %v2664
        %v2666 = vmul.f32 %v2488, 1.442695
        %v2667 = vpow.pop %v2666
        %v2668 = vmul.f32 %v2489, 1.442695
        %v2669 = vpow.pop %v2668
        %v2670 = vmul.f32 %v2490, 1.442695
        %v2671 = vpow.pop %v2670
        %v2672 = vmul.f32 %v2491, 1.442695
        %v2673 = vpow.pop %v2672
        %v2674 = vmul.f32 %v2492, 1.442695
        %v2675 = vpow.pop %v2674
        %v2676 = vmul.f32 %v2493, 1.442695
        %v2677 = vpow.pop %v2676
        %v2678 = vmul.f32 %v2494, 1.442695
        %v2679 = vpow.pop %v2678
        %v2680 = vmul.f32 %v2495, 1.442695
        %v2681 = vpow.pop %v2680
        %v2682 = vmul.f32 %v2496, 1.442695
        %v2683 = vpow.pop %v2682
        %v2684 = vmul.f32 %v2497, 1.442695
        %v2685 = vpow.pop %v2684
        %v2686 = vmul.f32 %v2498, 1.442695
        %v2687 = vpow.pop %v2686
        %v2688 = vmul.f32 %v2499, 1.442695
        %v2689 = vpow.pop %v2688
        %v2690 = vmul.f32 %v2500, 1.442695
        %v2691 = vpow.pop %v2690
        %v2692 = vmul.f32 %v2501, 1.442695
        %v2693 = vpow.pop %v2692
        %v2694 = vmul.f32 %v2502, 1.442695
        %v2695 = vpow.pop %v2694
        %v2696 = vmul.f32 %v2503, 1.442695
        %v2697 = vpow.pop %v2696
        %v2698 = vmul.f32 %v2504, 1.442695
        %v2699 = vpow.pop %v2698
        %v2700 = vmul.f32 %v2505, 1.442695
        %v2701 = vpow.pop %v2700
        %v2702 = vmul.f32 %v2506, 1.442695
        %v2703 = vpow.pop %v2702
        %v2704 = vmul.f32 %v2507, 1.442695
        %v2705 = vpow.pop %v2704
        %v2706 = vmul.f32 %v2508, 1.442695
        %v2707 = vpow.pop %v2706
        %v2708 = vmul.f32 %v2509, 1.442695
        %v2709 = vpow.pop %v2708
        %v2710 = vmul.f32 %v2510, 1.442695
        %v2711 = vpow.pop %v2710
        %v2712 = vmul.f32 %v2511, 1.442695
        %v2713 = vpow.pop %v2712
        %v2714 = vmul.f32 %v2512, 1.442695
        %v2715 = vpow.pop %v2714
        %v2716 = vmul.f32 %v2513, 1.442695
        %v2717 = vpow.pop %v2716
        %v2718 = vmul.f32 %v2514, 1.442695
        %v2719 = vpow.pop %v2718
        %v2720 = vmul.f32 %v2515, 1.442695
        %v2721 = vpow.pop %v2720
        %v2722 = vmul.f32 %v2516, 1.442695
        %v2723 = vpow.pop %v2722
        %v2724 = vmul.f32 %v2517, 1.442695
        %v2725 = vpow.pop %v2724
        %v2726 = vmul.f32 %v2518, 1.442695
        %v2727 = vpow.pop %v2726
        %v2728 = vmul.f32 %v2519, 1.442695
        %v2729 = vpow.pop %v2728
        %v2730 = vmul.f32 %v2520, 1.442695
        %v2731 = vpow.pop %v2730
        %v2732 = vmul.f32 %v2521, 1.442695
        %v2733 = vpow.pop %v2732
        %v2734 = vmul.f32 %v2522, 1.442695
        %v2735 = vpow.pop %v2734
        %v2736 = vmul.f32 %v2523, 1.442695
        %v2737 = vpow.pop %v2736
        %v2738 = vmul.f32 %v2524, 1.442695
        %v2739 = vpow.pop %v2738
        %v2740 = vmul.f32 %v2525, 1.442695
        %v2741 = vpow.pop %v2740
        %v2742 = vmul.f32 %v2526, 1.442695
        %v2743 = vpow.pop %v2742
        %v2744 = vmul.f32 %v2527, 1.442695
        %v2745 = vpow.pop %v2744
        %v2746 = vmul.f32 %v2528, 1.442695
        %v2747 = vpow.pop %v2746
        %v2748 = vmul.f32 %v2529, 1.442695
        %v2749 = vpow.pop %v2748
        %v2750 = vmul.f32 %v2530, 1.442695
        %v2751 = vpow.pop %v2750
        %v2752 = vmul.f32 %v2531, 1.442695
        %v2753 = vpow.pop %v2752
        %v2754 = vmul.f32 %v2532, 1.442695
        %v2755 = vpow.pop %v2754
        %v2756 = vmul.f32 %v2533, 1.442695
        %v2757 = vpow.pop %v2756
        %v2758 = vmul.f32 %v2534, 1.442695
        %v2759 = vpow.pop %v2758
        %v2760 = vmul.f32 %v2535, 1.442695
        %v2761 = vpow.pop %v2760
        %v2762 = vmul.f32 %v2536, 1.442695
        %v2763 = vpow.pop %v2762
        %v2764 = vmul.f32 %v2537, 1.442695
        %v2765 = vpow.pop %v2764
        %v2766 = vmul.f32 %v2538, 1.442695
        %v2767 = vpow.pop %v2766
        %v2768 = vmul.f32 %v2539, 1.442695
        %v2769 = vpow.pop %v2768
        %v2770 = vmul.f32 %v2540, 1.442695
        %v2771 = vpow.pop %v2770
        %v2772 = vmul.f32 %v2541, 1.442695
        %v2773 = vpow.pop %v2772
        %v2774 = vmul.f32 %v2542, 1.442695
        %v2775 = vpow.pop %v2774
        %v2776 = vmul.f32 %v2543, 1.442695
        %v2777 = vpow.pop %v2776
        %v2778 = vmul.f32 %v2544, 1.442695
        %v2779 = vpow.pop %v2778
        %v2780 = vmul.f32 %v2545, 1.442695
        %v2781 = vpow.pop %v2780
        %v2782 = vmul.f32 %v2546, 1.442695
        %v2783 = vpow.pop %v2782
        %v2784 = vmul.f32 %v2547, 1.442695
        %v2785 = vpow.pop %v2784
        %v2786 = vmul.f32 %v2548, 1.442695
        %v2787 = vpow.pop %v2786
        %v2788 = vmul.f32 %v2549, 1.442695
        %v2789 = vpow.pop %v2788
        %v2790 = vmul.f32 %v2550, 1.442695
        %v2791 = vpow.pop %v2790
        %v2792 = vmul.f32 %v2551, 1.442695
        %v2793 = vpow.pop %v2792
        %v2794 = vmul.f32 %v2552, 1.442695
        %v2795 = vpow.pop %v2794
        %v2796 = vmul.f32 %v2553, 1.442695
        %v2797 = vpow.pop %v2796
        %v2798 = vmul.f32 %v2554, 1.442695
        %v2799 = vpow.pop %v2798
        %v2800 = vmul.f32 %v2555, 1.442695
        %v2801 = vpow.pop %v2800
        %v2802 = vmul.f32 %v2556, 1.442695
        %v2803 = vpow.pop %v2802
        %v2804 = vmul.f32 %v2557, 1.442695
        %v2805 = vpow.pop %v2804
        %v2806 = vmul.f32 %v2558, 1.442695
        %v2807 = vpow.pop %v2806
        %v2808 = vmul.f32 %v2559, 1.442695
        %v2809 = vpow.pop %v2808
        %v2810 = vmul.f32 %v2560, 1.442695
        %v2811 = vpow.pop %v2810
        %v2812 = vmul.f32 %v2561, 1.442695
        %v2813 = vpow.pop %v2812
        %v2814 = vmul.f32 %v2562, 1.442695
        %v2815 = vpow.pop %v2814
        %v2816 = vmul.f32 %v2563, 1.442695
        %v2817 = vpow.pop %v2816
        %v2818 = vmul.f32 %v2564, 1.442695
        %v2819 = vpow.pop %v2818
        %v2820 = vmul.f32 %v2565, 1.442695
        %v2821 = vpow.pop %v2820
        %2950 = vrot.lane.b32.xlu0 %v2567, 112
        %v2951 = vpop.permute.xlu0 %2950
        %2952 = vrot.lane.b32.xlu0 %v2569, 112
        %v2953 = vpop.permute.xlu0 %2952
        %2954 = vrot.lane.b32.xlu0 %v2571, 112
        %v2955 = vpop.permute.xlu0 %2954
        %2956 = vrot.lane.b32.xlu0 %v2573, 112
        %v2957 = vpop.permute.xlu0 %2956
        %2958 = vrot.lane.b32.xlu0 %v2575, 112
        %v2959 = vpop.permute.xlu0 %2958
        %2960 = vrot.lane.b32.xlu0 %v2577, 112
        %v2961 = vpop.permute.xlu0 %2960
        %2962 = vrot.lane.b32.xlu0 %v2579, 112
        %v2963 = vpop.permute.xlu0 %2962
        %2964 = vrot.lane.b32.xlu0 %v2581, 112
        %v2965 = vpop.permute.xlu0 %2964
        %2966 = vrot.lane.b32.xlu0 %v2583, 112
        %v2967 = vpop.permute.xlu0 %2966
        %2968 = vrot.lane.b32.xlu0 %v2585, 112
        %v2969 = vpop.permute.xlu0 %2968
        %2970 = vrot.lane.b32.xlu0 %v2587, 112
        %v2971 = vpop.permute.xlu0 %2970
        %2972 = vrot.lane.b32.xlu0 %v2589, 112
        %v2973 = vpop.permute.xlu0 %2972
        %2974 = vrot.lane.b32.xlu0 %v2591, 112
        %v2975 = vpop.permute.xlu0 %2974
        %2976 = vrot.lane.b32.xlu0 %v2593, 112
        %v2977 = vpop.permute.xlu0 %2976
        %2978 = vrot.lane.b32.xlu0 %v2595, 112
        %v2979 = vpop.permute.xlu0 %2978
        %2980 = vrot.lane.b32.xlu0 %v2597, 112
        %v2981 = vpop.permute.xlu0 %2980
        %2982 = vrot.lane.b32.xlu0 %v2599, 112
        %v2983 = vpop.permute.xlu0 %2982
        %2984 = vrot.lane.b32.xlu0 %v2601, 112
        %v2985 = vpop.permute.xlu0 %2984
        %2986 = vrot.lane.b32.xlu0 %v2603, 112
        %v2987 = vpop.permute.xlu0 %2986
        %2988 = vrot.lane.b32.xlu0 %v2605, 112
        %v2989 = vpop.permute.xlu0 %2988
        %2990 = vrot.lane.b32.xlu0 %v2607, 112
        %v2991 = vpop.permute.xlu0 %2990
        %2992 = vrot.lane.b32.xlu0 %v2609, 112
        %v2993 = vpop.permute.xlu0 %2992
        %2994 = vrot.lane.b32.xlu0 %v2611, 112
        %v2995 = vpop.permute.xlu0 %2994
        %2996 = vrot.lane.b32.xlu0 %v2613, 112
        %v2997 = vpop.permute.xlu0 %2996
        %2998 = vrot.lane.b32.xlu0 %v2615, 112
        %v2999 = vpop.permute.xlu0 %2998
        %3000 = vrot.lane.b32.xlu0 %v2617, 112
        %v3001 = vpop.permute.xlu0 %3000
        %3002 = vrot.lane.b32.xlu0 %v2619, 112
        %v3003 = vpop.permute.xlu0 %3002
        %3004 = vrot.lane.b32.xlu0 %v2621, 112
        %v3005 = vpop.permute.xlu0 %3004
        %3006 = vrot.lane.b32.xlu0 %v2623, 112
        %v3007 = vpop.permute.xlu0 %3006
        %3008 = vrot.lane.b32.xlu0 %v2625, 112
        %v3009 = vpop.permute.xlu0 %3008
        %3010 = vrot.lane.b32.xlu0 %v2627, 112
        %v3011 = vpop.permute.xlu0 %3010
        %3012 = vrot.lane.b32.xlu0 %v2629, 112
        %v3013 = vpop.permute.xlu0 %3012
        %3014 = vrot.lane.b32.xlu0 %v2631, 112
        %v3015 = vpop.permute.xlu0 %3014
        %3016 = vrot.lane.b32.xlu0 %v2633, 112
        %v3017 = vpop.permute.xlu0 %3016
        %3018 = vrot.lane.b32.xlu0 %v2635, 112
        %v3019 = vpop.permute.xlu0 %3018
        %3020 = vrot.lane.b32.xlu0 %v2637, 112
        %v3021 = vpop.permute.xlu0 %3020
        %3022 = vrot.lane.b32.xlu0 %v2639, 112
        %v3023 = vpop.permute.xlu0 %3022
        %3024 = vrot.lane.b32.xlu0 %v2641, 112
        %v3025 = vpop.permute.xlu0 %3024
        %3026 = vrot.lane.b32.xlu0 %v2643, 112
        %v3027 = vpop.permute.xlu0 %3026
        %3028 = vrot.lane.b32.xlu0 %v2645, 112
        %v3029 = vpop.permute.xlu0 %3028
        %3030 = vrot.lane.b32.xlu0 %v2647, 112
        %v3031 = vpop.permute.xlu0 %3030
        %3032 = vrot.lane.b32.xlu0 %v2649, 112
        %v3033 = vpop.permute.xlu0 %3032
        %3034 = vrot.lane.b32.xlu0 %v2651, 112
        %v3035 = vpop.permute.xlu0 %3034
        %3036 = vrot.lane.b32.xlu0 %v2653, 112
        %v3037 = vpop.permute.xlu0 %3036
        %3038 = vrot.lane.b32.xlu0 %v2655, 112
        %v3039 = vpop.permute.xlu0 %3038
        %3040 = vrot.lane.b32.xlu0 %v2657, 112
        %v3041 = vpop.permute.xlu0 %3040
        %3042 = vrot.lane.b32.xlu0 %v2659, 112
        %v3043 = vpop.permute.xlu0 %3042
        %3044 = vrot.lane.b32.xlu0 %v2661, 112
        %v3045 = vpop.permute.xlu0 %3044
        %3046 = vrot.lane.b32.xlu0 %v2663, 112
        %v3047 = vpop.permute.xlu0 %3046
        %3048 = vrot.lane.b32.xlu0 %v2665, 112
        %v3049 = vpop.permute.xlu0 %3048
        %3050 = vrot.lane.b32.xlu0 %v2667, 112
        %v3051 = vpop.permute.xlu0 %3050
        %3052 = vrot.lane.b32.xlu0 %v2669, 112
        %v3053 = vpop.permute.xlu0 %3052
        %3054 = vrot.lane.b32.xlu0 %v2671, 112
        %v3055 = vpop.permute.xlu0 %3054
        %3056 = vrot.lane.b32.xlu0 %v2673, 112
        %v3057 = vpop.permute.xlu0 %3056
        %3058 = vrot.lane.b32.xlu0 %v2675, 112
        %v3059 = vpop.permute.xlu0 %3058
        %3060 = vrot.lane.b32.xlu0 %v2677, 112
        %v3061 = vpop.permute.xlu0 %3060
        %3062 = vrot.lane.b32.xlu0 %v2679, 112
        %v3063 = vpop.permute.xlu0 %3062
        %3064 = vrot.lane.b32.xlu0 %v2681, 112
        %v3065 = vpop.permute.xlu0 %3064
        %3066 = vrot.lane.b32.xlu0 %v2683, 112
        %v3067 = vpop.permute.xlu0 %3066
        %3068 = vrot.lane.b32.xlu0 %v2685, 112
        %v3069 = vpop.permute.xlu0 %3068
        %3070 = vrot.lane.b32.xlu0 %v2687, 112
        %v3071 = vpop.permute.xlu0 %3070
        %3072 = vrot.lane.b32.xlu0 %v2689, 112
        %v3073 = vpop.permute.xlu0 %3072
        %3074 = vrot.lane.b32.xlu0 %v2691, 112
        %v3075 = vpop.permute.xlu0 %3074
        %3076 = vrot.lane.b32.xlu0 %v2693, 112
        %v3077 = vpop.permute.xlu0 %3076
        %3078 = vrot.lane.b32.xlu0 %v2695, 112
        %v3079 = vpop.permute.xlu0 %3078
        %3080 = vrot.lane.b32.xlu0 %v2697, 112
        %v3081 = vpop.permute.xlu0 %3080
        %3082 = vrot.lane.b32.xlu0 %v2699, 112
        %v3083 = vpop.permute.xlu0 %3082
        %3084 = vrot.lane.b32.xlu0 %v2701, 112
        %v3085 = vpop.permute.xlu0 %3084
        %3086 = vrot.lane.b32.xlu0 %v2703, 112
        %v3087 = vpop.permute.xlu0 %3086
        %3088 = vrot.lane.b32.xlu0 %v2705, 112
        %v3089 = vpop.permute.xlu0 %3088
        %3090 = vrot.lane.b32.xlu0 %v2707, 112
        %v3091 = vpop.permute.xlu0 %3090
        %3092 = vrot.lane.b32.xlu0 %v2709, 112
        %v3093 = vpop.permute.xlu0 %3092
        %3094 = vrot.lane.b32.xlu0 %v2711, 112
        %v3095 = vpop.permute.xlu0 %3094
        %3096 = vrot.lane.b32.xlu0 %v2713, 112
        %v3097 = vpop.permute.xlu0 %3096
        %3098 = vrot.lane.b32.xlu0 %v2715, 112
        %v3099 = vpop.permute.xlu0 %3098
        %3100 = vrot.lane.b32.xlu0 %v2717, 112
        %v3101 = vpop.permute.xlu0 %3100
        %3102 = vrot.lane.b32.xlu0 %v2719, 112
        %v3103 = vpop.permute.xlu0 %3102
        %3104 = vrot.lane.b32.xlu0 %v2721, 112
        %v3105 = vpop.permute.xlu0 %3104
        %3106 = vrot.lane.b32.xlu0 %v2723, 112
        %v3107 = vpop.permute.xlu0 %3106
        %3108 = vrot.lane.b32.xlu0 %v2725, 112
        %v3109 = vpop.permute.xlu0 %3108
        %3110 = vrot.lane.b32.xlu0 %v2727, 112
        %v3111 = vpop.permute.xlu0 %3110
        %3112 = vrot.lane.b32.xlu0 %v2729, 112
        %v3113 = vpop.permute.xlu0 %3112
        %3114 = vrot.lane.b32.xlu0 %v2731, 112
        %v3115 = vpop.permute.xlu0 %3114
        %3116 = vrot.lane.b32.xlu0 %v2733, 112
        %v3117 = vpop.permute.xlu0 %3116
        %3118 = vrot.lane.b32.xlu0 %v2735, 112
        %v3119 = vpop.permute.xlu0 %3118
        %3120 = vrot.lane.b32.xlu0 %v2737, 112
        %v3121 = vpop.permute.xlu0 %3120
        %3122 = vrot.lane.b32.xlu0 %v2739, 112
        %v3123 = vpop.permute.xlu0 %3122
        %3124 = vrot.lane.b32.xlu0 %v2741, 112
        %v3125 = vpop.permute.xlu0 %3124
        %3126 = vrot.lane.b32.xlu0 %v2743, 112
        %v3127 = vpop.permute.xlu0 %3126
        %3128 = vrot.lane.b32.xlu0 %v2745, 112
        %v3129 = vpop.permute.xlu0 %3128
        %3130 = vrot.lane.b32.xlu0 %v2747, 112
        %v3131 = vpop.permute.xlu0 %3130
        %3132 = vrot.lane.b32.xlu0 %v2749, 112
        %v3133 = vpop.permute.xlu0 %3132
        %3134 = vrot.lane.b32.xlu0 %v2751, 112
        %v3135 = vpop.permute.xlu0 %3134
        %3136 = vrot.lane.b32.xlu0 %v2753, 112
        %v3137 = vpop.permute.xlu0 %3136
        %3138 = vrot.lane.b32.xlu0 %v2755, 112
        %v3139 = vpop.permute.xlu0 %3138
        %3140 = vrot.lane.b32.xlu0 %v2757, 112
        %v3141 = vpop.permute.xlu0 %3140
        %3142 = vrot.lane.b32.xlu0 %v2759, 112
        %v3143 = vpop.permute.xlu0 %3142
        %3144 = vrot.lane.b32.xlu0 %v2761, 112
        %v3145 = vpop.permute.xlu0 %3144
        %3146 = vrot.lane.b32.xlu0 %v2763, 112
        %v3147 = vpop.permute.xlu0 %3146
        %3148 = vrot.lane.b32.xlu0 %v2765, 112
        %v3149 = vpop.permute.xlu0 %3148
        %3150 = vrot.lane.b32.xlu0 %v2767, 112
        %v3151 = vpop.permute.xlu0 %3150
        %3152 = vrot.lane.b32.xlu0 %v2769, 112
        %v3153 = vpop.permute.xlu0 %3152
        %3154 = vrot.lane.b32.xlu0 %v2771, 112
        %v3155 = vpop.permute.xlu0 %3154
        %3156 = vrot.lane.b32.xlu0 %v2773, 112
        %v3157 = vpop.permute.xlu0 %3156
        %3158 = vrot.lane.b32.xlu0 %v2775, 112
        %v3159 = vpop.permute.xlu0 %3158
        %3160 = vrot.lane.b32.xlu0 %v2777, 112
        %v3161 = vpop.permute.xlu0 %3160
        %3162 = vrot.lane.b32.xlu0 %v2779, 112
        %v3163 = vpop.permute.xlu0 %3162
        %3164 = vrot.lane.b32.xlu0 %v2781, 112
        %v3165 = vpop.permute.xlu0 %3164
        %3166 = vrot.lane.b32.xlu0 %v2783, 112
        %v3167 = vpop.permute.xlu0 %3166
        %3168 = vrot.lane.b32.xlu0 %v2785, 112
        %v3169 = vpop.permute.xlu0 %3168
        %3170 = vrot.lane.b32.xlu0 %v2787, 112
        %v3171 = vpop.permute.xlu0 %3170
        %3172 = vrot.lane.b32.xlu0 %v2789, 112
        %v3173 = vpop.permute.xlu0 %3172
        %3174 = vrot.lane.b32.xlu0 %v2791, 112
        %v3175 = vpop.permute.xlu0 %3174
        %3176 = vrot.lane.b32.xlu0 %v2793, 112
        %v3177 = vpop.permute.xlu0 %3176
        %3178 = vrot.lane.b32.xlu0 %v2795, 112
        %v3179 = vpop.permute.xlu0 %3178
        %3180 = vrot.lane.b32.xlu0 %v2797, 112
        %v3181 = vpop.permute.xlu0 %3180
        %3182 = vrot.lane.b32.xlu0 %v2799, 112
        %v3183 = vpop.permute.xlu0 %3182
        %3184 = vrot.lane.b32.xlu0 %v2801, 112
        %v3185 = vpop.permute.xlu0 %3184
        %3186 = vrot.lane.b32.xlu0 %v2803, 112
        %v3187 = vpop.permute.xlu0 %3186
        %3188 = vrot.lane.b32.xlu0 %v2805, 112
        %v3189 = vpop.permute.xlu0 %3188
        %3190 = vrot.lane.b32.xlu0 %v2807, 112
        %v3191 = vpop.permute.xlu0 %3190
        %3192 = vrot.lane.b32.xlu0 %v2809, 112
        %v3193 = vpop.permute.xlu0 %3192
        %3194 = vrot.lane.b32.xlu0 %v2811, 112
        %v3195 = vpop.permute.xlu0 %3194
        %3196 = vrot.lane.b32.xlu0 %v2813, 112
        %v3197 = vpop.permute.xlu0 %3196
        %3198 = vrot.lane.b32.xlu0 %v2815, 112
        %v3199 = vpop.permute.xlu0 %3198
        %3200 = vrot.lane.b32.xlu0 %v2817, 112
        %v3201 = vpop.permute.xlu0 %3200
        %3202 = vrot.lane.b32.xlu0 %v2819, 112
        %v3203 = vpop.permute.xlu0 %3202
        %3204 = vrot.lane.b32.xlu0 %v2821, 112
        %v3205 = vpop.permute.xlu0 %3204
        %vm3206 = vcmask 15360
        %v3207 = vsel %vm3206, %v2951, 0
        %v3209 = vsel %vm3206, %v2953, 0
        %v3211 = vsel %vm3206, %v2955, 0
        %v3213 = vsel %vm3206, %v2957, 0
        %v3215 = vsel %vm3206, %v2959, 0
        %v3217 = vsel %vm3206, %v2961, 0
        %v3219 = vsel %vm3206, %v2963, 0
        %v3221 = vsel %vm3206, %v2965, 0
        %v3223 = vsel %vm3206, %v2967, 0
        %v3225 = vsel %vm3206, %v2969, 0
        %v3227 = vsel %vm3206, %v2971, 0
        %v3229 = vsel %vm3206, %v2973, 0
        %v3231 = vsel %vm3206, %v2975, 0
        %v3233 = vsel %vm3206, %v2977, 0
        %v3235 = vsel %vm3206, %v2979, 0
        %v3237 = vsel %vm3206, %v2981, 0
        %v3239 = vsel %vm3206, %v2983, 0
        %v3241 = vsel %vm3206, %v2985, 0
        %v3243 = vsel %vm3206, %v2987, 0
        %v3245 = vsel %vm3206, %v2989, 0
        %v3247 = vsel %vm3206, %v2991, 0
        %v3249 = vsel %vm3206, %v2993, 0
        %v3251 = vsel %vm3206, %v2995, 0
        %v3253 = vsel %vm3206, %v2997, 0
        %v3255 = vsel %vm3206, %v2999, 0
        %v3257 = vsel %vm3206, %v3001, 0
        %v3259 = vsel %vm3206, %v3003, 0
        %v3261 = vsel %vm3206, %v3005, 0
        %v3263 = vsel %vm3206, %v3007, 0
        %v3265 = vsel %vm3206, %v3009, 0
        %v3267 = vsel %vm3206, %v3011, 0
        %v3269 = vsel %vm3206, %v3013, 0
        %v3271 = vsel %vm3206, %v3015, 0
        %v3273 = vsel %vm3206, %v3017, 0
        %v3275 = vsel %vm3206, %v3019, 0
        %v3277 = vsel %vm3206, %v3021, 0
        %v3279 = vsel %vm3206, %v3023, 0
        %v3281 = vsel %vm3206, %v3025, 0
        %v3283 = vsel %vm3206, %v3027, 0
        %v3285 = vsel %vm3206, %v3029, 0
        %v3287 = vsel %vm3206, %v3031, 0
        %v3289 = vsel %vm3206, %v3033, 0
        %v3291 = vsel %vm3206, %v3035, 0
        %v3293 = vsel %vm3206, %v3037, 0
        %v3295 = vsel %vm3206, %v3039, 0
        %v3297 = vsel %vm3206, %v3041, 0
        %v3299 = vsel %vm3206, %v3043, 0
        %v3301 = vsel %vm3206, %v3045, 0
        %v3303 = vsel %vm3206, %v3047, 0
        %v3305 = vsel %vm3206, %v3049, 0
        %v3307 = vsel %vm3206, %v3051, 0
        %v3309 = vsel %vm3206, %v3053, 0
        %v3311 = vsel %vm3206, %v3055, 0
        %v3313 = vsel %vm3206, %v3057, 0
        %v3315 = vsel %vm3206, %v3059, 0
        %v3317 = vsel %vm3206, %v3061, 0
        %v3319 = vsel %vm3206, %v3063, 0
        %v3321 = vsel %vm3206, %v3065, 0
        %v3323 = vsel %vm3206, %v3067, 0
        %v3325 = vsel %vm3206, %v3069, 0
        %v3327 = vsel %vm3206, %v3071, 0
        %v3329 = vsel %vm3206, %v3073, 0
        %v3331 = vsel %vm3206, %v3075, 0
        %v3333 = vsel %vm3206, %v3077, 0
        %v3335 = vsel %vm3206, %v3079, 0
        %v3337 = vsel %vm3206, %v3081, 0
        %v3339 = vsel %vm3206, %v3083, 0
        %v3341 = vsel %vm3206, %v3085, 0
        %v3343 = vsel %vm3206, %v3087, 0
        %v3345 = vsel %vm3206, %v3089, 0
        %v3347 = vsel %vm3206, %v3091, 0
        %v3349 = vsel %vm3206, %v3093, 0
        %v3351 = vsel %vm3206, %v3095, 0
        %v3353 = vsel %vm3206, %v3097, 0
        %v3355 = vsel %vm3206, %v3099, 0
        %v3357 = vsel %vm3206, %v3101, 0
        %v3359 = vsel %vm3206, %v3103, 0
        %v3361 = vsel %vm3206, %v3105, 0
        %v3363 = vsel %vm3206, %v3107, 0
        %v3365 = vsel %vm3206, %v3109, 0
        %v3367 = vsel %vm3206, %v3111, 0
        %v3369 = vsel %vm3206, %v3113, 0
        %v3371 = vsel %vm3206, %v3115, 0
        %v3373 = vsel %vm3206, %v3117, 0
        %v3375 = vsel %vm3206, %v3119, 0
        %v3377 = vsel %vm3206, %v3121, 0
        %v3379 = vsel %vm3206, %v3123, 0
        %v3381 = vsel %vm3206, %v3125, 0
        %v3383 = vsel %vm3206, %v3127, 0
        %v3385 = vsel %vm3206, %v3129, 0
        %v3387 = vsel %vm3206, %v3131, 0
        %v3389 = vsel %vm3206, %v3133, 0
        %v3391 = vsel %vm3206, %v3135, 0
        %v3393 = vsel %vm3206, %v3137, 0
        %v3395 = vsel %vm3206, %v3139, 0
        %v3397 = vsel %vm3206, %v3141, 0
        %v3399 = vsel %vm3206, %v3143, 0
        %v3401 = vsel %vm3206, %v3145, 0
        %v3403 = vsel %vm3206, %v3147, 0
        %v3405 = vsel %vm3206, %v3149, 0
        %v3407 = vsel %vm3206, %v3151, 0
        %v3409 = vsel %vm3206, %v3153, 0
        %v3411 = vsel %vm3206, %v3155, 0
        %v3413 = vsel %vm3206, %v3157, 0
        %v3415 = vsel %vm3206, %v3159, 0
        %v3417 = vsel %vm3206, %v3161, 0
        %v3419 = vsel %vm3206, %v3163, 0
        %v3421 = vsel %vm3206, %v3165, 0
        %v3423 = vsel %vm3206, %v3167, 0
        %v3425 = vsel %vm3206, %v3169, 0
        %v3427 = vsel %vm3206, %v3171, 0
        %v3429 = vsel %vm3206, %v3173, 0
        %v3431 = vsel %vm3206, %v3175, 0
        %v3433 = vsel %vm3206, %v3177, 0
        %v3435 = vsel %vm3206, %v3179, 0
        %v3437 = vsel %vm3206, %v3181, 0
        %v3439 = vsel %vm3206, %v3183, 0
        %v3441 = vsel %vm3206, %v3185, 0
        %v3443 = vsel %vm3206, %v3187, 0
        %v3445 = vsel %vm3206, %v3189, 0
        %v3447 = vsel %vm3206, %v3191, 0
        %v3449 = vsel %vm3206, %v3193, 0
        %v3451 = vsel %vm3206, %v3195, 0
        %v3453 = vsel %vm3206, %v3197, 0
        %v3455 = vsel %vm3206, %v3199, 0
        %v3457 = vsel %vm3206, %v3201, 0
        %v3459 = vsel %vm3206, %v3203, 0
        %v3461 = vsel %vm3206, %v3205, 0
        %vm3463 = vcmask 1041408
        %v3465 = vsel %vm3463, %v537, 0
        %3467 = vmatprep.subr.mxu0 0.0
        %3468 = vmatpush1.msra.mxu0 0.0
        %3469 = vmatprep.subr.mxu0 0.0
        %3470 = vmatpush1.msra.mxu0 0.0
        %3471 = vmatprep.subr.mxu0 0.0
        %3472 = vmatpush1.msra.mxu0 0.0
        %3473 = vmatprep.subr.mxu0 0.0
        %3474 = vmatpush1.msra.mxu0 0.0
        %3475 = vmatprep.subr.mxu0 0.0
        %3476 = vmatpush1.msra.mxu0 0.0
        %3477 = vmatprep.subr.mxu0 0.0
        %3478 = vmatpush1.msra.mxu0 0.0
        %3479 = vmatprep.subr.mxu0 0.0
        %3480 = vmatpush1.msra.mxu0 0.0
        %3481 = vmatprep.subr.mxu0 0.0
        %3482 = vmatpush1.msra.mxu0 0.0
        %3483 = vmatprep.subr.mxu0 0.0
        %3484 = vmatpush1.msra.mxu0 0.0
        %3485 = vmatprep.subr.mxu0 0.0
        %3486 = vmatpush1.msra.mxu0 0.0
        %3487 = vmatprep.subr.mxu0 0.0
        %3488 = vmatpush1.msra.mxu0 0.0
        %3489 = vmatprep.subr.mxu0 0.0
        %3490 = vmatpush1.msra.mxu0 0.0
        %3491 = vmatprep.subr.mxu0 0.0
        %3492 = vmatpush1.msra.mxu0 0.0
        %3493 = vmatprep.subr.mxu0 0.0
        %3494 = vmatpush1.msra.mxu0 0.0
        %3495 = vmatprep.subr.mxu0 0.0
        %3496 = vmatpush1.msra.mxu0 0.0
        %3497 = vmatprep.subr.mxu0 0.0
        %3498 = vmatpush1.msra.mxu0 %v3465
        %3499 = vmatprep.subr.mxu0 0.0
        %3500 = vmatpush2.msra.mxu0 0.0
        %3501 = vmatprep.subr.mxu0 0.0
        %3502 = vmatpush2.msra.mxu0 0.0
        %3503 = vmatprep.subr.mxu0 0.0
        %3504 = vmatpush2.msra.mxu0 0.0
        %3505 = vmatprep.subr.mxu0 0.0
        %3506 = vmatpush2.msra.mxu0 0.0
        %3507 = vmatprep.subr.mxu0 0.0
        %3508 = vmatpush2.msra.mxu0 0.0
        %3509 = vmatprep.subr.mxu0 0.0
        %3510 = vmatpush2.msra.mxu0 0.0
        %3511 = vmatprep.subr.mxu0 0.0
        %3512 = vmatpush2.msra.mxu0 0.0
        %3513 = vmatprep.subr.mxu0 0.0
        %3514 = vmatpush2.msra.mxu0 0.0
        %3515 = vmatprep.subr.mxu0 0.0
        %3516 = vmatpush2.msra.mxu0 0.0
        %3517 = vmatprep.subr.mxu0 0.0
        %3518 = vmatpush2.msra.mxu0 0.0
        %3519 = vmatprep.subr.mxu0 0.0
        %3520 = vmatpush2.msra.mxu0 0.0
        %3521 = vmatprep.subr.mxu0 0.0
        %3522 = vmatpush2.msra.mxu0 0.0
        %3523 = vmatprep.subr.mxu0 0.0
        %3524 = vmatpush2.msra.mxu0 0.0
        %3525 = vmatprep.subr.mxu0 0.0
        %3526 = vmatpush2.msra.mxu0 0.0
        %3527 = vmatprep.subr.mxu0 0.0
        %3528 = vmatpush2.msra.mxu0 0.0
        %3529 = vmatprep.subr.mxu0 0.0
        %3530 = vmatpush2.msra.mxu0 0.0
        %3531 = vmatprep.mubr.f32.mxu0 0.0
        %3532 = vmatmul.mubr.f32.gmra.mxu0 %v3207
        %v3533 = vpop.f32.mrf.mxu0
        %v3534 = vadd.f32 0.0, %v3533
        %v3535 = vpop.f32.mrf.mxu0
        %3536 = vmatprep.mubr.f32.mxu0 0.0
        %3537 = vmatmul.mubr.f32.gmra.mxu0 %v3209
        %v3538 = vpop.f32.mrf.mxu0
        %v3539 = vadd.f32 0.0, %v3538
        %v3540 = vpop.f32.mrf.mxu0
        %3541 = vmatprep.mubr.f32.mxu0 0.0
        %3542 = vmatmul.mubr.f32.gmra.mxu0 %v3211
        %v3543 = vpop.f32.mrf.mxu0
        %v3544 = vadd.f32 0.0, %v3543
        %v3545 = vpop.f32.mrf.mxu0
        %3546 = vmatprep.mubr.f32.mxu0 0.0
        %3547 = vmatmul.mubr.f32.gmra.mxu0 %v3213
        %v3548 = vpop.f32.mrf.mxu0
        %v3549 = vadd.f32 0.0, %v3548
        %v3550 = vpop.f32.mrf.mxu0
        %3551 = vmatprep.mubr.f32.mxu0 0.0
        %3552 = vmatmul.mubr.f32.gmra.mxu0 %v3215
        %v3553 = vpop.f32.mrf.mxu0
        %v3554 = vadd.f32 0.0, %v3553
        %v3555 = vpop.f32.mrf.mxu0
        %3556 = vmatprep.mubr.f32.mxu0 0.0
        %3557 = vmatmul.mubr.f32.gmra.mxu0 %v3217
        %v3558 = vpop.f32.mrf.mxu0
        %v3559 = vadd.f32 0.0, %v3558
        %v3560 = vpop.f32.mrf.mxu0
        %3561 = vmatprep.mubr.f32.mxu0 0.0
        %3562 = vmatmul.mubr.f32.gmra.mxu0 %v3219
        %v3563 = vpop.f32.mrf.mxu0
        %v3564 = vadd.f32 0.0, %v3563
        %v3565 = vpop.f32.mrf.mxu0
        %3566 = vmatprep.mubr.f32.mxu0 0.0
        %3567 = vmatmul.mubr.f32.gmra.mxu0 %v3221
        %v3568 = vpop.f32.mrf.mxu0
        %v3569 = vadd.f32 0.0, %v3568
        %v3570 = vpop.f32.mrf.mxu0
        %3571 = vmatprep.mubr.f32.mxu0 0.0
        %3572 = vmatmul.mubr.f32.gmra.mxu0 %v3223
        %v3573 = vpop.f32.mrf.mxu0
        %v3574 = vadd.f32 0.0, %v3573
        %v3575 = vpop.f32.mrf.mxu0
        %3576 = vmatprep.mubr.f32.mxu0 0.0
        %3577 = vmatmul.mubr.f32.gmra.mxu0 %v3225
        %v3578 = vpop.f32.mrf.mxu0
        %v3579 = vadd.f32 0.0, %v3578
        %v3580 = vpop.f32.mrf.mxu0
        %3581 = vmatprep.mubr.f32.mxu0 0.0
        %3582 = vmatmul.mubr.f32.gmra.mxu0 %v3227
        %v3583 = vpop.f32.mrf.mxu0
        %v3584 = vadd.f32 0.0, %v3583
        %v3585 = vpop.f32.mrf.mxu0
        %3586 = vmatprep.mubr.f32.mxu0 0.0
        %3587 = vmatmul.mubr.f32.gmra.mxu0 %v3229
        %v3588 = vpop.f32.mrf.mxu0
        %v3589 = vadd.f32 0.0, %v3588
        %v3590 = vpop.f32.mrf.mxu0
        %3591 = vmatprep.mubr.f32.mxu0 0.0
        %3592 = vmatmul.mubr.f32.gmra.mxu0 %v3231
        %v3593 = vpop.f32.mrf.mxu0
        %v3594 = vadd.f32 0.0, %v3593
        %v3595 = vpop.f32.mrf.mxu0
        %3596 = vmatprep.mubr.f32.mxu0 0.0
        %3597 = vmatmul.mubr.f32.gmra.mxu0 %v3233
        %v3598 = vpop.f32.mrf.mxu0
        %v3599 = vadd.f32 0.0, %v3598
        %v3600 = vpop.f32.mrf.mxu0
        %3601 = vmatprep.mubr.f32.mxu0 0.0
        %3602 = vmatmul.mubr.f32.gmra.mxu0 %v3235
        %v3603 = vpop.f32.mrf.mxu0
        %v3604 = vadd.f32 0.0, %v3603
        %v3605 = vpop.f32.mrf.mxu0
        %3606 = vmatprep.mubr.f32.mxu0 0.0
        %3607 = vmatmul.mubr.f32.gmra.mxu0 %v3237
        %v3608 = vpop.f32.mrf.mxu0
        %v3609 = vadd.f32 0.0, %v3608
        %v3610 = vpop.f32.mrf.mxu0
        %3611 = vmatprep.mubr.f32.mxu0 0.0
        %3612 = vmatmul.mubr.f32.gmra.mxu0 %v3239
        %v3613 = vpop.f32.mrf.mxu0
        %v3614 = vadd.f32 0.0, %v3613
        %v3615 = vpop.f32.mrf.mxu0
        %3616 = vmatprep.mubr.f32.mxu0 0.0
        %3617 = vmatmul.mubr.f32.gmra.mxu0 %v3241
        %v3618 = vpop.f32.mrf.mxu0
        %v3619 = vadd.f32 0.0, %v3618
        %v3620 = vpop.f32.mrf.mxu0
        %3621 = vmatprep.mubr.f32.mxu0 0.0
        %3622 = vmatmul.mubr.f32.gmra.mxu0 %v3243
        %v3623 = vpop.f32.mrf.mxu0
        %v3624 = vadd.f32 0.0, %v3623
        %v3625 = vpop.f32.mrf.mxu0
        %3626 = vmatprep.mubr.f32.mxu0 0.0
        %3627 = vmatmul.mubr.f32.gmra.mxu0 %v3245
        %v3628 = vpop.f32.mrf.mxu0
        %v3629 = vadd.f32 0.0, %v3628
        %v3630 = vpop.f32.mrf.mxu0
        %3631 = vmatprep.mubr.f32.mxu0 0.0
        %3632 = vmatmul.mubr.f32.gmra.mxu0 %v3247
        %v3633 = vpop.f32.mrf.mxu0
        %v3634 = vadd.f32 0.0, %v3633
        %v3635 = vpop.f32.mrf.mxu0
        %3636 = vmatprep.mubr.f32.mxu0 0.0
        %3637 = vmatmul.mubr.f32.gmra.mxu0 %v3249
        %v3638 = vpop.f32.mrf.mxu0
        %v3639 = vadd.f32 0.0, %v3638
        %v3640 = vpop.f32.mrf.mxu0
        %3641 = vmatprep.mubr.f32.mxu0 0.0
        %3642 = vmatmul.mubr.f32.gmra.mxu0 %v3251
        %v3643 = vpop.f32.mrf.mxu0
        %v3644 = vadd.f32 0.0, %v3643
        %v3645 = vpop.f32.mrf.mxu0
        %3646 = vmatprep.mubr.f32.mxu0 0.0
        %3647 = vmatmul.mubr.f32.gmra.mxu0 %v3253
        %v3648 = vpop.f32.mrf.mxu0
        %v3649 = vadd.f32 0.0, %v3648
        %v3650 = vpop.f32.mrf.mxu0
        %3651 = vmatprep.mubr.f32.mxu0 0.0
        %3652 = vmatmul.mubr.f32.gmra.mxu0 %v3255
        %v3653 = vpop.f32.mrf.mxu0
        %v3654 = vadd.f32 0.0, %v3653
        %v3655 = vpop.f32.mrf.mxu0
        %3656 = vmatprep.mubr.f32.mxu0 0.0
        %3657 = vmatmul.mubr.f32.gmra.mxu0 %v3257
        %v3658 = vpop.f32.mrf.mxu0
        %v3659 = vadd.f32 0.0, %v3658
        %v3660 = vpop.f32.mrf.mxu0
        %3661 = vmatprep.mubr.f32.mxu0 0.0
        %3662 = vmatmul.mubr.f32.gmra.mxu0 %v3259
        %v3663 = vpop.f32.mrf.mxu0
        %v3664 = vadd.f32 0.0, %v3663
        %v3665 = vpop.f32.mrf.mxu0
        %3666 = vmatprep.mubr.f32.mxu0 0.0
        %3667 = vmatmul.mubr.f32.gmra.mxu0 %v3261
        %v3668 = vpop.f32.mrf.mxu0
        %v3669 = vadd.f32 0.0, %v3668
        %v3670 = vpop.f32.mrf.mxu0
        %3671 = vmatprep.mubr.f32.mxu0 0.0
        %3672 = vmatmul.mubr.f32.gmra.mxu0 %v3263
        %v3673 = vpop.f32.mrf.mxu0
        %v3674 = vadd.f32 0.0, %v3673
        %v3675 = vpop.f32.mrf.mxu0
        %3676 = vmatprep.mubr.f32.mxu0 0.0
        %3677 = vmatmul.mubr.f32.gmra.mxu0 %v3265
        %v3678 = vpop.f32.mrf.mxu0
        %v3679 = vadd.f32 0.0, %v3678
        %v3680 = vpop.f32.mrf.mxu0
        %3681 = vmatprep.mubr.f32.mxu0 0.0
        %3682 = vmatmul.mubr.f32.gmra.mxu0 %v3267
        %v3683 = vpop.f32.mrf.mxu0
        %v3684 = vadd.f32 0.0, %v3683
        %v3685 = vpop.f32.mrf.mxu0
        %3686 = vmatprep.mubr.f32.mxu0 0.0
        %3687 = vmatmul.mubr.f32.gmra.mxu0 %v3269
        %v3688 = vpop.f32.mrf.mxu0
        %v3689 = vadd.f32 0.0, %v3688
        %v3690 = vpop.f32.mrf.mxu0
        %3691 = vmatprep.mubr.f32.mxu0 0.0
        %3692 = vmatmul.mubr.f32.gmra.mxu0 %v3271
        %v3693 = vpop.f32.mrf.mxu0
        %v3694 = vadd.f32 0.0, %v3693
        %v3695 = vpop.f32.mrf.mxu0
        %3696 = vmatprep.mubr.f32.mxu0 0.0
        %3697 = vmatmul.mubr.f32.gmra.mxu0 %v3273
        %v3698 = vpop.f32.mrf.mxu0
        %v3699 = vadd.f32 0.0, %v3698
        %v3700 = vpop.f32.mrf.mxu0
        %3701 = vmatprep.mubr.f32.mxu0 0.0
        %3702 = vmatmul.mubr.f32.gmra.mxu0 %v3275
        %v3703 = vpop.f32.mrf.mxu0
        %v3704 = vadd.f32 0.0, %v3703
        %v3705 = vpop.f32.mrf.mxu0
        %3706 = vmatprep.mubr.f32.mxu0 0.0
        %3707 = vmatmul.mubr.f32.gmra.mxu0 %v3277
        %v3708 = vpop.f32.mrf.mxu0
        %v3709 = vadd.f32 0.0, %v3708
        %v3710 = vpop.f32.mrf.mxu0
        %3711 = vmatprep.mubr.f32.mxu0 0.0
        %3712 = vmatmul.mubr.f32.gmra.mxu0 %v3279
        %v3713 = vpop.f32.mrf.mxu0
        %v3714 = vadd.f32 0.0, %v3713
        %v3715 = vpop.f32.mrf.mxu0
        %3716 = vmatprep.mubr.f32.mxu0 0.0
        %3717 = vmatmul.mubr.f32.gmra.mxu0 %v3281
        %v3718 = vpop.f32.mrf.mxu0
        %v3719 = vadd.f32 0.0, %v3718
        %v3720 = vpop.f32.mrf.mxu0
        %3721 = vmatprep.mubr.f32.mxu0 0.0
        %3722 = vmatmul.mubr.f32.gmra.mxu0 %v3283
        %v3723 = vpop.f32.mrf.mxu0
        %v3724 = vadd.f32 0.0, %v3723
        %v3725 = vpop.f32.mrf.mxu0
        %3726 = vmatprep.mubr.f32.mxu0 0.0
        %3727 = vmatmul.mubr.f32.gmra.mxu0 %v3285
        %v3728 = vpop.f32.mrf.mxu0
        %v3729 = vadd.f32 0.0, %v3728
        %v3730 = vpop.f32.mrf.mxu0
        %3731 = vmatprep.mubr.f32.mxu0 0.0
        %3732 = vmatmul.mubr.f32.gmra.mxu0 %v3287
        %v3733 = vpop.f32.mrf.mxu0
        %v3734 = vadd.f32 0.0, %v3733
        %v3735 = vpop.f32.mrf.mxu0
        %3736 = vmatprep.mubr.f32.mxu0 0.0
        %3737 = vmatmul.mubr.f32.gmra.mxu0 %v3289
        %v3738 = vpop.f32.mrf.mxu0
        %v3739 = vadd.f32 0.0, %v3738
        %v3740 = vpop.f32.mrf.mxu0
        %3741 = vmatprep.mubr.f32.mxu0 0.0
        %3742 = vmatmul.mubr.f32.gmra.mxu0 %v3291
        %v3743 = vpop.f32.mrf.mxu0
        %v3744 = vadd.f32 0.0, %v3743
        %v3745 = vpop.f32.mrf.mxu0
        %3746 = vmatprep.mubr.f32.mxu0 0.0
        %3747 = vmatmul.mubr.f32.gmra.mxu0 %v3293
        %v3748 = vpop.f32.mrf.mxu0
        %v3749 = vadd.f32 0.0, %v3748
        %v3750 = vpop.f32.mrf.mxu0
        %3751 = vmatprep.mubr.f32.mxu0 0.0
        %3752 = vmatmul.mubr.f32.gmra.mxu0 %v3295
        %v3753 = vpop.f32.mrf.mxu0
        %v3754 = vadd.f32 0.0, %v3753
        %v3755 = vpop.f32.mrf.mxu0
        %3756 = vmatprep.mubr.f32.mxu0 0.0
        %3757 = vmatmul.mubr.f32.gmra.mxu0 %v3297
        %v3758 = vpop.f32.mrf.mxu0
        %v3759 = vadd.f32 0.0, %v3758
        %v3760 = vpop.f32.mrf.mxu0
        %3761 = vmatprep.mubr.f32.mxu0 0.0
        %3762 = vmatmul.mubr.f32.gmra.mxu0 %v3299
        %v3763 = vpop.f32.mrf.mxu0
        %v3764 = vadd.f32 0.0, %v3763
        %v3765 = vpop.f32.mrf.mxu0
        %3766 = vmatprep.mubr.f32.mxu0 0.0
        %3767 = vmatmul.mubr.f32.gmra.mxu0 %v3301
        %v3768 = vpop.f32.mrf.mxu0
        %v3769 = vadd.f32 0.0, %v3768
        %v3770 = vpop.f32.mrf.mxu0
        %3771 = vmatprep.mubr.f32.mxu0 0.0
        %3772 = vmatmul.mubr.f32.gmra.mxu0 %v3303
        %v3773 = vpop.f32.mrf.mxu0
        %v3774 = vadd.f32 0.0, %v3773
        %v3775 = vpop.f32.mrf.mxu0
        %3776 = vmatprep.mubr.f32.mxu0 0.0
        %3777 = vmatmul.mubr.f32.gmra.mxu0 %v3305
        %v3778 = vpop.f32.mrf.mxu0
        %v3779 = vadd.f32 0.0, %v3778
        %v3780 = vpop.f32.mrf.mxu0
        %3781 = vmatprep.mubr.f32.mxu0 0.0
        %3782 = vmatmul.mubr.f32.gmra.mxu0 %v3307
        %v3783 = vpop.f32.mrf.mxu0
        %v3784 = vadd.f32 0.0, %v3783
        %v3785 = vpop.f32.mrf.mxu0
        %3786 = vmatprep.mubr.f32.mxu0 0.0
        %3787 = vmatmul.mubr.f32.gmra.mxu0 %v3309
        %v3788 = vpop.f32.mrf.mxu0
        %v3789 = vadd.f32 0.0, %v3788
        %v3790 = vpop.f32.mrf.mxu0
        %3791 = vmatprep.mubr.f32.mxu0 0.0
        %3792 = vmatmul.mubr.f32.gmra.mxu0 %v3311
        %v3793 = vpop.f32.mrf.mxu0
        %v3794 = vadd.f32 0.0, %v3793
        %v3795 = vpop.f32.mrf.mxu0
        %3796 = vmatprep.mubr.f32.mxu0 0.0
        %3797 = vmatmul.mubr.f32.gmra.mxu0 %v3313
        %v3798 = vpop.f32.mrf.mxu0
        %v3799 = vadd.f32 0.0, %v3798
        %v3800 = vpop.f32.mrf.mxu0
        %3801 = vmatprep.mubr.f32.mxu0 0.0
        %3802 = vmatmul.mubr.f32.gmra.mxu0 %v3315
        %v3803 = vpop.f32.mrf.mxu0
        %v3804 = vadd.f32 0.0, %v3803
        %v3805 = vpop.f32.mrf.mxu0
        %3806 = vmatprep.mubr.f32.mxu0 0.0
        %3807 = vmatmul.mubr.f32.gmra.mxu0 %v3317
        %v3808 = vpop.f32.mrf.mxu0
        %v3809 = vadd.f32 0.0, %v3808
        %v3810 = vpop.f32.mrf.mxu0
        %3811 = vmatprep.mubr.f32.mxu0 0.0
        %3812 = vmatmul.mubr.f32.gmra.mxu0 %v3319
        %v3813 = vpop.f32.mrf.mxu0
        %v3814 = vadd.f32 0.0, %v3813
        %v3815 = vpop.f32.mrf.mxu0
        %3816 = vmatprep.mubr.f32.mxu0 0.0
        %3817 = vmatmul.mubr.f32.gmra.mxu0 %v3321
        %v3818 = vpop.f32.mrf.mxu0
        %v3819 = vadd.f32 0.0, %v3818
        %v3820 = vpop.f32.mrf.mxu0
        %3821 = vmatprep.mubr.f32.mxu0 0.0
        %3822 = vmatmul.mubr.f32.gmra.mxu0 %v3323
        %v3823 = vpop.f32.mrf.mxu0
        %v3824 = vadd.f32 0.0, %v3823
        %v3825 = vpop.f32.mrf.mxu0
        %3826 = vmatprep.mubr.f32.mxu0 0.0
        %3827 = vmatmul.mubr.f32.gmra.mxu0 %v3325
        %v3828 = vpop.f32.mrf.mxu0
        %v3829 = vadd.f32 0.0, %v3828
        %v3830 = vpop.f32.mrf.mxu0
        %3831 = vmatprep.mubr.f32.mxu0 0.0
        %3832 = vmatmul.mubr.f32.gmra.mxu0 %v3327
        %v3833 = vpop.f32.mrf.mxu0
        %v3834 = vadd.f32 0.0, %v3833
        %v3835 = vpop.f32.mrf.mxu0
        %3836 = vmatprep.mubr.f32.mxu0 0.0
        %3837 = vmatmul.mubr.f32.gmra.mxu0 %v3329
        %v3838 = vpop.f32.mrf.mxu0
        %v3839 = vadd.f32 0.0, %v3838
        %v3840 = vpop.f32.mrf.mxu0
        %3841 = vmatprep.mubr.f32.mxu0 0.0
        %3842 = vmatmul.mubr.f32.gmra.mxu0 %v3331
        %v3843 = vpop.f32.mrf.mxu0
        %v3844 = vadd.f32 0.0, %v3843
        %v3845 = vpop.f32.mrf.mxu0
        %3846 = vmatprep.mubr.f32.mxu0 0.0
        %3847 = vmatmul.mubr.f32.gmra.mxu0 %v3333
        %v3848 = vpop.f32.mrf.mxu0
        %v3849 = vadd.f32 0.0, %v3848
        %v3850 = vpop.f32.mrf.mxu0
        %3851 = vmatprep.mubr.f32.mxu0 0.0
        %3852 = vmatmul.mubr.f32.gmra.mxu0 %v3335
        %v3853 = vpop.f32.mrf.mxu0
        %v3854 = vadd.f32 0.0, %v3853
        %v3855 = vpop.f32.mrf.mxu0
        %3856 = vmatprep.mubr.f32.mxu0 0.0
        %3857 = vmatmul.mubr.f32.gmra.mxu0 %v3337
        %v3858 = vpop.f32.mrf.mxu0
        %v3859 = vadd.f32 0.0, %v3858
        %v3860 = vpop.f32.mrf.mxu0
        %3861 = vmatprep.mubr.f32.mxu0 0.0
        %3862 = vmatmul.mubr.f32.gmra.mxu0 %v3339
        %v3863 = vpop.f32.mrf.mxu0
        %v3864 = vadd.f32 0.0, %v3863
        %v3865 = vpop.f32.mrf.mxu0
        %3866 = vmatprep.mubr.f32.mxu0 0.0
        %3867 = vmatmul.mubr.f32.gmra.mxu0 %v3341
        %v3868 = vpop.f32.mrf.mxu0
        %v3869 = vadd.f32 0.0, %v3868
        %v3870 = vpop.f32.mrf.mxu0
        %3871 = vmatprep.mubr.f32.mxu0 0.0
        %3872 = vmatmul.mubr.f32.gmra.mxu0 %v3343
        %v3873 = vpop.f32.mrf.mxu0
        %v3874 = vadd.f32 0.0, %v3873
        %v3875 = vpop.f32.mrf.mxu0
        %3876 = vmatprep.mubr.f32.mxu0 0.0
        %3877 = vmatmul.mubr.f32.gmra.mxu0 %v3345
        %v3878 = vpop.f32.mrf.mxu0
        %v3879 = vadd.f32 0.0, %v3878
        %v3880 = vpop.f32.mrf.mxu0
        %3881 = vmatprep.mubr.f32.mxu0 0.0
        %3882 = vmatmul.mubr.f32.gmra.mxu0 %v3347
        %v3883 = vpop.f32.mrf.mxu0
        %v3884 = vadd.f32 0.0, %v3883
        %v3885 = vpop.f32.mrf.mxu0
        %3886 = vmatprep.mubr.f32.mxu0 0.0
        %3887 = vmatmul.mubr.f32.gmra.mxu0 %v3349
        %v3888 = vpop.f32.mrf.mxu0
        %v3889 = vadd.f32 0.0, %v3888
        %v3890 = vpop.f32.mrf.mxu0
        %3891 = vmatprep.mubr.f32.mxu0 0.0
        %3892 = vmatmul.mubr.f32.gmra.mxu0 %v3351
        %v3893 = vpop.f32.mrf.mxu0
        %v3894 = vadd.f32 0.0, %v3893
        %v3895 = vpop.f32.mrf.mxu0
        %3896 = vmatprep.mubr.f32.mxu0 0.0
        %3897 = vmatmul.mubr.f32.gmra.mxu0 %v3353
        %v3898 = vpop.f32.mrf.mxu0
        %v3899 = vadd.f32 0.0, %v3898
        %v3900 = vpop.f32.mrf.mxu0
        %3901 = vmatprep.mubr.f32.mxu0 0.0
        %3902 = vmatmul.mubr.f32.gmra.mxu0 %v3355
        %v3903 = vpop.f32.mrf.mxu0
        %v3904 = vadd.f32 0.0, %v3903
        %v3905 = vpop.f32.mrf.mxu0
        %3906 = vmatprep.mubr.f32.mxu0 0.0
        %3907 = vmatmul.mubr.f32.gmra.mxu0 %v3357
        %v3908 = vpop.f32.mrf.mxu0
        %v3909 = vadd.f32 0.0, %v3908
        %v3910 = vpop.f32.mrf.mxu0
        %3911 = vmatprep.mubr.f32.mxu0 0.0
        %3912 = vmatmul.mubr.f32.gmra.mxu0 %v3359
        %v3913 = vpop.f32.mrf.mxu0
        %v3914 = vadd.f32 0.0, %v3913
        %v3915 = vpop.f32.mrf.mxu0
        %3916 = vmatprep.mubr.f32.mxu0 0.0
        %3917 = vmatmul.mubr.f32.gmra.mxu0 %v3361
        %v3918 = vpop.f32.mrf.mxu0
        %v3919 = vadd.f32 0.0, %v3918
        %v3920 = vpop.f32.mrf.mxu0
        %3921 = vmatprep.mubr.f32.mxu0 0.0
        %3922 = vmatmul.mubr.f32.gmra.mxu0 %v3363
        %v3923 = vpop.f32.mrf.mxu0
        %v3924 = vadd.f32 0.0, %v3923
        %v3925 = vpop.f32.mrf.mxu0
        %3926 = vmatprep.mubr.f32.mxu0 0.0
        %3927 = vmatmul.mubr.f32.gmra.mxu0 %v3365
        %v3928 = vpop.f32.mrf.mxu0
        %v3929 = vadd.f32 0.0, %v3928
        %v3930 = vpop.f32.mrf.mxu0
        %3931 = vmatprep.mubr.f32.mxu0 0.0
        %3932 = vmatmul.mubr.f32.gmra.mxu0 %v3367
        %v3933 = vpop.f32.mrf.mxu0
        %v3934 = vadd.f32 0.0, %v3933
        %v3935 = vpop.f32.mrf.mxu0
        %3936 = vmatprep.mubr.f32.mxu0 0.0
        %3937 = vmatmul.mubr.f32.gmra.mxu0 %v3369
        %v3938 = vpop.f32.mrf.mxu0
        %v3939 = vadd.f32 0.0, %v3938
        %v3940 = vpop.f32.mrf.mxu0
        %3941 = vmatprep.mubr.f32.mxu0 0.0
        %3942 = vmatmul.mubr.f32.gmra.mxu0 %v3371
        %v3943 = vpop.f32.mrf.mxu0
        %v3944 = vadd.f32 0.0, %v3943
        %v3945 = vpop.f32.mrf.mxu0
        %3946 = vmatprep.mubr.f32.mxu0 0.0
        %3947 = vmatmul.mubr.f32.gmra.mxu0 %v3373
        %v3948 = vpop.f32.mrf.mxu0
        %v3949 = vadd.f32 0.0, %v3948
        %v3950 = vpop.f32.mrf.mxu0
        %3951 = vmatprep.mubr.f32.mxu0 0.0
        %3952 = vmatmul.mubr.f32.gmra.mxu0 %v3375
        %v3953 = vpop.f32.mrf.mxu0
        %v3954 = vadd.f32 0.0, %v3953
        %v3955 = vpop.f32.mrf.mxu0
        %3956 = vmatprep.mubr.f32.mxu0 0.0
        %3957 = vmatmul.mubr.f32.gmra.mxu0 %v3377
        %v3958 = vpop.f32.mrf.mxu0
        %v3959 = vadd.f32 0.0, %v3958
        %v3960 = vpop.f32.mrf.mxu0
        %3961 = vmatprep.mubr.f32.mxu0 0.0
        %3962 = vmatmul.mubr.f32.gmra.mxu0 %v3379
        %v3963 = vpop.f32.mrf.mxu0
        %v3964 = vadd.f32 0.0, %v3963
        %v3965 = vpop.f32.mrf.mxu0
        %3966 = vmatprep.mubr.f32.mxu0 0.0
        %3967 = vmatmul.mubr.f32.gmra.mxu0 %v3381
        %v3968 = vpop.f32.mrf.mxu0
        %v3969 = vadd.f32 0.0, %v3968
        %v3970 = vpop.f32.mrf.mxu0
        %3971 = vmatprep.mubr.f32.mxu0 0.0
        %3972 = vmatmul.mubr.f32.gmra.mxu0 %v3383
        %v3973 = vpop.f32.mrf.mxu0
        %v3974 = vadd.f32 0.0, %v3973
        %v3975 = vpop.f32.mrf.mxu0
        %3976 = vmatprep.mubr.f32.mxu0 0.0
        %3977 = vmatmul.mubr.f32.gmra.mxu0 %v3385
        %v3978 = vpop.f32.mrf.mxu0
        %v3979 = vadd.f32 0.0, %v3978
        %v3980 = vpop.f32.mrf.mxu0
        %3981 = vmatprep.mubr.f32.mxu0 0.0
        %3982 = vmatmul.mubr.f32.gmra.mxu0 %v3387
        %v3983 = vpop.f32.mrf.mxu0
        %v3984 = vadd.f32 0.0, %v3983
        %v3985 = vpop.f32.mrf.mxu0
        %3986 = vmatprep.mubr.f32.mxu0 0.0
        %3987 = vmatmul.mubr.f32.gmra.mxu0 %v3389
        %v3988 = vpop.f32.mrf.mxu0
        %v3989 = vadd.f32 0.0, %v3988
        %v3990 = vpop.f32.mrf.mxu0
        %3991 = vmatprep.mubr.f32.mxu0 0.0
        %3992 = vmatmul.mubr.f32.gmra.mxu0 %v3391
        %v3993 = vpop.f32.mrf.mxu0
        %v3994 = vadd.f32 0.0, %v3993
        %v3995 = vpop.f32.mrf.mxu0
        %3996 = vmatprep.mubr.f32.mxu0 0.0
        %3997 = vmatmul.mubr.f32.gmra.mxu0 %v3393
        %v3998 = vpop.f32.mrf.mxu0
        %v3999 = vadd.f32 0.0, %v3998
        %v4000 = vpop.f32.mrf.mxu0
        %4001 = vmatprep.mubr.f32.mxu0 0.0
        %4002 = vmatmul.mubr.f32.gmra.mxu0 %v3395
        %v4003 = vpop.f32.mrf.mxu0
        %v4004 = vadd.f32 0.0, %v4003
        %v4005 = vpop.f32.mrf.mxu0
        %4006 = vmatprep.mubr.f32.mxu0 0.0
        %4007 = vmatmul.mubr.f32.gmra.mxu0 %v3397
        %v4008 = vpop.f32.mrf.mxu0
        %v4009 = vadd.f32 0.0, %v4008
        %v4010 = vpop.f32.mrf.mxu0
        %4011 = vmatprep.mubr.f32.mxu0 0.0
        %4012 = vmatmul.mubr.f32.gmra.mxu0 %v3399
        %v4013 = vpop.f32.mrf.mxu0
        %v4014 = vadd.f32 0.0, %v4013
        %v4015 = vpop.f32.mrf.mxu0
        %4016 = vmatprep.mubr.f32.mxu0 0.0
        %4017 = vmatmul.mubr.f32.gmra.mxu0 %v3401
        %v4018 = vpop.f32.mrf.mxu0
        %v4019 = vadd.f32 0.0, %v4018
        %v4020 = vpop.f32.mrf.mxu0
        %4021 = vmatprep.mubr.f32.mxu0 0.0
        %4022 = vmatmul.mubr.f32.gmra.mxu0 %v3403
        %v4023 = vpop.f32.mrf.mxu0
        %v4024 = vadd.f32 0.0, %v4023
        %v4025 = vpop.f32.mrf.mxu0
        %4026 = vmatprep.mubr.f32.mxu0 0.0
        %4027 = vmatmul.mubr.f32.gmra.mxu0 %v3405
        %v4028 = vpop.f32.mrf.mxu0
        %v4029 = vadd.f32 0.0, %v4028
        %v4030 = vpop.f32.mrf.mxu0
        %4031 = vmatprep.mubr.f32.mxu0 0.0
        %4032 = vmatmul.mubr.f32.gmra.mxu0 %v3407
        %v4033 = vpop.f32.mrf.mxu0
        %v4034 = vadd.f32 0.0, %v4033
        %v4035 = vpop.f32.mrf.mxu0
        %4036 = vmatprep.mubr.f32.mxu0 0.0
        %4037 = vmatmul.mubr.f32.gmra.mxu0 %v3409
        %v4038 = vpop.f32.mrf.mxu0
        %v4039 = vadd.f32 0.0, %v4038
        %v4040 = vpop.f32.mrf.mxu0
        %4041 = vmatprep.mubr.f32.mxu0 0.0
        %4042 = vmatmul.mubr.f32.gmra.mxu0 %v3411
        %v4043 = vpop.f32.mrf.mxu0
        %v4044 = vadd.f32 0.0, %v4043
        %v4045 = vpop.f32.mrf.mxu0
        %4046 = vmatprep.mubr.f32.mxu0 0.0
        %4047 = vmatmul.mubr.f32.gmra.mxu0 %v3413
        %v4048 = vpop.f32.mrf.mxu0
        %v4049 = vadd.f32 0.0, %v4048
        %v4050 = vpop.f32.mrf.mxu0
        %4051 = vmatprep.mubr.f32.mxu0 0.0
        %4052 = vmatmul.mubr.f32.gmra.mxu0 %v3415
        %v4053 = vpop.f32.mrf.mxu0
        %v4054 = vadd.f32 0.0, %v4053
        %v4055 = vpop.f32.mrf.mxu0
        %4056 = vmatprep.mubr.f32.mxu0 0.0
        %4057 = vmatmul.mubr.f32.gmra.mxu0 %v3417
        %v4058 = vpop.f32.mrf.mxu0
        %v4059 = vadd.f32 0.0, %v4058
        %v4060 = vpop.f32.mrf.mxu0
        %4061 = vmatprep.mubr.f32.mxu0 0.0
        %4062 = vmatmul.mubr.f32.gmra.mxu0 %v3419
        %v4063 = vpop.f32.mrf.mxu0
        %v4064 = vadd.f32 0.0, %v4063
        %v4065 = vpop.f32.mrf.mxu0
        %4066 = vmatprep.mubr.f32.mxu0 0.0
        %4067 = vmatmul.mubr.f32.gmra.mxu0 %v3421
        %v4068 = vpop.f32.mrf.mxu0
        %v4069 = vadd.f32 0.0, %v4068
        %v4070 = vpop.f32.mrf.mxu0
        %4071 = vmatprep.mubr.f32.mxu0 0.0
        %4072 = vmatmul.mubr.f32.gmra.mxu0 %v3423
        %v4073 = vpop.f32.mrf.mxu0
        %v4074 = vadd.f32 0.0, %v4073
        %v4075 = vpop.f32.mrf.mxu0
        %4076 = vmatprep.mubr.f32.mxu0 0.0
        %4077 = vmatmul.mubr.f32.gmra.mxu0 %v3425
        %v4078 = vpop.f32.mrf.mxu0
        %v4079 = vadd.f32 0.0, %v4078
        %v4080 = vpop.f32.mrf.mxu0
        %4081 = vmatprep.mubr.f32.mxu0 0.0
        %4082 = vmatmul.mubr.f32.gmra.mxu0 %v3427
        %v4083 = vpop.f32.mrf.mxu0
        %v4084 = vadd.f32 0.0, %v4083
        %v4085 = vpop.f32.mrf.mxu0
        %4086 = vmatprep.mubr.f32.mxu0 0.0
        %4087 = vmatmul.mubr.f32.gmra.mxu0 %v3429
        %v4088 = vpop.f32.mrf.mxu0
        %v4089 = vadd.f32 0.0, %v4088
        %v4090 = vpop.f32.mrf.mxu0
        %4091 = vmatprep.mubr.f32.mxu0 0.0
        %4092 = vmatmul.mubr.f32.gmra.mxu0 %v3431
        %v4093 = vpop.f32.mrf.mxu0
        %v4094 = vadd.f32 0.0, %v4093
        %v4095 = vpop.f32.mrf.mxu0
        %4096 = vmatprep.mubr.f32.mxu0 0.0
        %4097 = vmatmul.mubr.f32.gmra.mxu0 %v3433
        %v4098 = vpop.f32.mrf.mxu0
        %v4099 = vadd.f32 0.0, %v4098
        %v4100 = vpop.f32.mrf.mxu0
        %4101 = vmatprep.mubr.f32.mxu0 0.0
        %4102 = vmatmul.mubr.f32.gmra.mxu0 %v3435
        %v4103 = vpop.f32.mrf.mxu0
        %v4104 = vadd.f32 0.0, %v4103
        %v4105 = vpop.f32.mrf.mxu0
        %4106 = vmatprep.mubr.f32.mxu0 0.0
        %4107 = vmatmul.mubr.f32.gmra.mxu0 %v3437
        %v4108 = vpop.f32.mrf.mxu0
        %v4109 = vadd.f32 0.0, %v4108
        %v4110 = vpop.f32.mrf.mxu0
        %4111 = vmatprep.mubr.f32.mxu0 0.0
        %4112 = vmatmul.mubr.f32.gmra.mxu0 %v3439
        %v4113 = vpop.f32.mrf.mxu0
        %v4114 = vadd.f32 0.0, %v4113
        %v4115 = vpop.f32.mrf.mxu0
        %4116 = vmatprep.mubr.f32.mxu0 0.0
        %4117 = vmatmul.mubr.f32.gmra.mxu0 %v3441
        %v4118 = vpop.f32.mrf.mxu0
        %v4119 = vadd.f32 0.0, %v4118
        %v4120 = vpop.f32.mrf.mxu0
        %4121 = vmatprep.mubr.f32.mxu0 0.0
        %4122 = vmatmul.mubr.f32.gmra.mxu0 %v3443
        %v4123 = vpop.f32.mrf.mxu0
        %v4124 = vadd.f32 0.0, %v4123
        %v4125 = vpop.f32.mrf.mxu0
        %4126 = vmatprep.mubr.f32.mxu0 0.0
        %4127 = vmatmul.mubr.f32.gmra.mxu0 %v3445
        %v4128 = vpop.f32.mrf.mxu0
        %v4129 = vadd.f32 0.0, %v4128
        %v4130 = vpop.f32.mrf.mxu0
        %4131 = vmatprep.mubr.f32.mxu0 0.0
        %4132 = vmatmul.mubr.f32.gmra.mxu0 %v3447
        %v4133 = vpop.f32.mrf.mxu0
        %v4134 = vadd.f32 0.0, %v4133
        %v4135 = vpop.f32.mrf.mxu0
        %4136 = vmatprep.mubr.f32.mxu0 0.0
        %4137 = vmatmul.mubr.f32.gmra.mxu0 %v3449
        %v4138 = vpop.f32.mrf.mxu0
        %v4139 = vadd.f32 0.0, %v4138
        %v4140 = vpop.f32.mrf.mxu0
        %4141 = vmatprep.mubr.f32.mxu0 0.0
        %4142 = vmatmul.mubr.f32.gmra.mxu0 %v3451
        %v4143 = vpop.f32.mrf.mxu0
        %v4144 = vadd.f32 0.0, %v4143
        %v4145 = vpop.f32.mrf.mxu0
        %4146 = vmatprep.mubr.f32.mxu0 0.0
        %4147 = vmatmul.mubr.f32.gmra.mxu0 %v3453
        %v4148 = vpop.f32.mrf.mxu0
        %v4149 = vadd.f32 0.0, %v4148
        %v4150 = vpop.f32.mrf.mxu0
        %4151 = vmatprep.mubr.f32.mxu0 0.0
        %4152 = vmatmul.mubr.f32.gmra.mxu0 %v3455
        %v4153 = vpop.f32.mrf.mxu0
        %v4154 = vadd.f32 0.0, %v4153
        %v4155 = vpop.f32.mrf.mxu0
        %4156 = vmatprep.mubr.f32.mxu0 0.0
        %4157 = vmatmul.mubr.f32.gmra.mxu0 %v3457
        %v4158 = vpop.f32.mrf.mxu0
        %v4159 = vadd.f32 0.0, %v4158
        %v4160 = vpop.f32.mrf.mxu0
        %4161 = vmatprep.mubr.f32.mxu0 0.0
        %4162 = vmatmul.mubr.f32.gmra.mxu0 %v3459
        %v4163 = vpop.f32.mrf.mxu0
        %v4164 = vadd.f32 0.0, %v4163
        %v4165 = vpop.f32.mrf.mxu0
        %4166 = vmatprep.mubr.f32.mxu0 0.0
        %4167 = vmatmul.mubr.f32.gmra.mxu0 %v3461
        %v4168 = vpop.f32.mrf.mxu0
        %v4169 = vadd.f32 0.0, %v4168
        %v4170 = vpop.f32.mrf.mxu0
        %4171 = vdwg.mxu0
        %v4173 = vsel %vm3206, %v2301, 0
        %4175 = vmatprep.subr.mxu0 0.0
        %4176 = vmatpush1.msra.mxu0 0.0
        %4177 = vmatprep.subr.mxu0 0.0
        %4178 = vmatpush1.msra.mxu0 0.0
        %4179 = vmatprep.subr.mxu0 0.0
        %4180 = vmatpush1.msra.mxu0 0.0
        %4181 = vmatprep.subr.mxu0 0.0
        %4182 = vmatpush1.msra.mxu0 0.0
        %4183 = vmatprep.subr.mxu0 0.0
        %4184 = vmatpush1.msra.mxu0 0.0
        %4185 = vmatprep.subr.mxu0 0.0
        %4186 = vmatpush1.msra.mxu0 0.0
        %4187 = vmatprep.subr.mxu0 0.0
        %4188 = vmatpush1.msra.mxu0 0.0
        %4189 = vmatprep.subr.mxu0 0.0
        %4190 = vmatpush1.msra.mxu0 0.0
        %4191 = vmatprep.subr.mxu0 0.0
        %4192 = vmatpush1.msra.mxu0 0.0
        %4193 = vmatprep.subr.mxu0 0.0
        %4194 = vmatpush1.msra.mxu0 0.0
        %4195 = vmatprep.subr.mxu0 0.0
        %4196 = vmatpush1.msra.mxu0 0.0
        %4197 = vmatprep.subr.mxu0 0.0
        %4198 = vmatpush1.msra.mxu0 0.0
        %4199 = vmatprep.subr.mxu0 0.0
        %4200 = vmatpush1.msra.mxu0 0.0
        %4201 = vmatprep.subr.mxu0 0.0
        %4202 = vmatpush1.msra.mxu0 0.0
        %4203 = vmatprep.subr.mxu0 0.0
        %4204 = vmatpush1.msra.mxu0 0.0
        %4205 = vmatprep.subr.mxu0 0.0
        %4206 = vmatpush1.msra.mxu0 %v3465
        %4207 = vmatprep.subr.mxu0 0.0
        %4208 = vmatpush2.msra.mxu0 0.0
        %4209 = vmatprep.subr.mxu0 0.0
        %4210 = vmatpush2.msra.mxu0 0.0
        %4211 = vmatprep.subr.mxu0 0.0
        %4212 = vmatpush2.msra.mxu0 0.0
        %4213 = vmatprep.subr.mxu0 0.0
        %4214 = vmatpush2.msra.mxu0 0.0
        %4215 = vmatprep.subr.mxu0 0.0
        %4216 = vmatpush2.msra.mxu0 0.0
        %4217 = vmatprep.subr.mxu0 0.0
        %4218 = vmatpush2.msra.mxu0 0.0
        %4219 = vmatprep.subr.mxu0 0.0
        %4220 = vmatpush2.msra.mxu0 0.0
        %4221 = vmatprep.subr.mxu0 0.0
        %4222 = vmatpush2.msra.mxu0 0.0
        %4223 = vmatprep.subr.mxu0 0.0
        %4224 = vmatpush2.msra.mxu0 0.0
        %4225 = vmatprep.subr.mxu0 0.0
        %4226 = vmatpush2.msra.mxu0 0.0
        %4227 = vmatprep.subr.mxu0 0.0
        %4228 = vmatpush2.msra.mxu0 0.0
        %4229 = vmatprep.subr.mxu0 0.0
        %4230 = vmatpush2.msra.mxu0 0.0
        %4231 = vmatprep.subr.mxu0 0.0
        %4232 = vmatpush2.msra.mxu0 0.0
        %4233 = vmatprep.subr.mxu0 0.0
        %4234 = vmatpush2.msra.mxu0 0.0
        %4235 = vmatprep.subr.mxu0 0.0
        %4236 = vmatpush2.msra.mxu0 0.0
        %4237 = vmatprep.subr.mxu0 0.0
        %4238 = vmatpush2.msra.mxu0 0.0
        %4239 = vmatprep.mubr.f32.mxu0 0.0
        %4240 = vmatmul.mubr.f32.gmra.mxu0 %v4173
        %v4241 = vpop.f32.mrf.mxu0
        %v4242 = vadd.f32 0.0, %v4241
        %v4243 = vpop.f32.mrf.mxu0
        %4244 = vdwg.mxu0
        %v4245 = vlaneseq
        %v4246 = vand.u32 %v4245, 127
        %vm4247 = vcmp.ge.s32.totalorder %v4246, 16
        %vm4248 = vcmp.lt.s32.totalorder %v4246, 18
        %vm4249 = vmand %vm4247, %vm4248
        %v4250 = vsel %vm4249, 1, 0
        %v4251 = vcvt.s32.f32 %v4250
        %vm4252 = vcmp.lt.s32.totalorder %v4246, 16
        %v4253 = vsel %vm4252, 1, 0
        %vm4254 = vcmp.eq.s32.totalorder %v4253, 1
        %v4255 = vsel %vm4254, %v995, %v4251
        %v4256 = vsel %vm4254, %v1000, %v4251
        %v4257 = vsel %vm4254, %v1005, %v4251
        %v4258 = vsel %vm4254, %v1010, %v4251
        %v4259 = vsel %vm4254, %v1015, %v4251
        %v4260 = vsel %vm4254, %v1020, %v4251
        %v4261 = vsel %vm4254, %v1025, %v4251
        %v4262 = vsel %vm4254, %v1030, %v4251
        %v4263 = vsel %vm4254, %v1035, %v4251
        %v4264 = vsel %vm4254, %v1040, %v4251
        %v4265 = vsel %vm4254, %v1045, %v4251
        %v4266 = vsel %vm4254, %v1050, %v4251
        %v4267 = vsel %vm4254, %v1055, %v4251
        %v4268 = vsel %vm4254, %v1060, %v4251
        %v4269 = vsel %vm4254, %v1065, %v4251
        %v4270 = vsel %vm4254, %v1070, %v4251
        %v4271 = vsel %vm4254, %v1075, %v4251
        %v4272 = vsel %vm4254, %v1080, %v4251
        %v4273 = vsel %vm4254, %v1085, %v4251
        %v4274 = vsel %vm4254, %v1090, %v4251
        %v4275 = vsel %vm4254, %v1095, %v4251
        %v4276 = vsel %vm4254, %v1100, %v4251
        %v4277 = vsel %vm4254, %v1105, %v4251
        %v4278 = vsel %vm4254, %v1110, %v4251
        %v4279 = vsel %vm4254, %v1115, %v4251
        %v4280 = vsel %vm4254, %v1120, %v4251
        %v4281 = vsel %vm4254, %v1125, %v4251
        %v4282 = vsel %vm4254, %v1130, %v4251
        %v4283 = vsel %vm4254, %v1135, %v4251
        %v4284 = vsel %vm4254, %v1140, %v4251
        %v4285 = vsel %vm4254, %v1145, %v4251
        %v4286 = vsel %vm4254, %v1150, %v4251
        %v4287 = vsel %vm4254, %v1155, %v4251
        %v4288 = vsel %vm4254, %v1160, %v4251
        %v4289 = vsel %vm4254, %v1165, %v4251
        %v4290 = vsel %vm4254, %v1170, %v4251
        %v4291 = vsel %vm4254, %v1175, %v4251
        %v4292 = vsel %vm4254, %v1180, %v4251
        %v4293 = vsel %vm4254, %v1185, %v4251
        %v4294 = vsel %vm4254, %v1190, %v4251
        %v4295 = vsel %vm4254, %v1195, %v4251
        %v4296 = vsel %vm4254, %v1200, %v4251
        %v4297 = vsel %vm4254, %v1205, %v4251
        %v4298 = vsel %vm4254, %v1210, %v4251
        %v4299 = vsel %vm4254, %v1215, %v4251
        %v4300 = vsel %vm4254, %v1220, %v4251
        %v4301 = vsel %vm4254, %v1225, %v4251
        %v4302 = vsel %vm4254, %v1230, %v4251
        %v4303 = vsel %vm4254, %v1235, %v4251
        %v4304 = vsel %vm4254, %v1240, %v4251
        %v4305 = vsel %vm4254, %v1245, %v4251
        %v4306 = vsel %vm4254, %v1250, %v4251
        %v4307 = vsel %vm4254, %v1255, %v4251
        %v4308 = vsel %vm4254, %v1260, %v4251
        %v4309 = vsel %vm4254, %v1265, %v4251
        %v4310 = vsel %vm4254, %v1270, %v4251
        %v4311 = vsel %vm4254, %v1275, %v4251
        %v4312 = vsel %vm4254, %v1280, %v4251
        %v4313 = vsel %vm4254, %v1285, %v4251
        %v4314 = vsel %vm4254, %v1290, %v4251
        %v4315 = vsel %vm4254, %v1295, %v4251
        %v4316 = vsel %vm4254, %v1300, %v4251
        %v4317 = vsel %vm4254, %v1305, %v4251
        %v4318 = vsel %vm4254, %v1310, %v4251
        %v4319 = vsel %vm4254, %v1315, %v4251
        %v4320 = vsel %vm4254, %v1320, %v4251
        %v4321 = vsel %vm4254, %v1325, %v4251
        %v4322 = vsel %vm4254, %v1330, %v4251
        %v4323 = vsel %vm4254, %v1335, %v4251
        %v4324 = vsel %vm4254, %v1340, %v4251
        %v4325 = vsel %vm4254, %v1345, %v4251
        %v4326 = vsel %vm4254, %v1350, %v4251
        %v4327 = vsel %vm4254, %v1355, %v4251
        %v4328 = vsel %vm4254, %v1360, %v4251
        %v4329 = vsel %vm4254, %v1365, %v4251
        %v4330 = vsel %vm4254, %v1370, %v4251
        %v4331 = vsel %vm4254, %v1375, %v4251
        %v4332 = vsel %vm4254, %v1380, %v4251
        %v4333 = vsel %vm4254, %v1385, %v4251
        %v4334 = vsel %vm4254, %v1390, %v4251
        %v4335 = vsel %vm4254, %v1395, %v4251
        %v4336 = vsel %vm4254, %v1400, %v4251
        %v4337 = vsel %vm4254, %v1405, %v4251
        %v4338 = vsel %vm4254, %v1410, %v4251
        %v4339 = vsel %vm4254, %v1415, %v4251
        %v4340 = vsel %vm4254, %v1420, %v4251
        %v4341 = vsel %vm4254, %v1425, %v4251
        %v4342 = vsel %vm4254, %v1430, %v4251
        %v4343 = vsel %vm4254, %v1435, %v4251
        %v4344 = vsel %vm4254, %v1440, %v4251
        %v4345 = vsel %vm4254, %v1445, %v4251
        %v4346 = vsel %vm4254, %v1450, %v4251
        %v4347 = vsel %vm4254, %v1455, %v4251
        %v4348 = vsel %vm4254, %v1460, %v4251
        %v4349 = vsel %vm4254, %v1465, %v4251
        %v4350 = vsel %vm4254, %v1470, %v4251
        %v4351 = vsel %vm4254, %v1475, %v4251
        %v4352 = vsel %vm4254, %v1480, %v4251
        %v4353 = vsel %vm4254, %v1485, %v4251
        %v4354 = vsel %vm4254, %v1490, %v4251
        %v4355 = vsel %vm4254, %v1495, %v4251
        %v4356 = vsel %vm4254, %v1500, %v4251
        %v4357 = vsel %vm4254, %v1505, %v4251
        %v4358 = vsel %vm4254, %v1510, %v4251
        %v4359 = vsel %vm4254, %v1515, %v4251
        %v4360 = vsel %vm4254, %v1520, %v4251
        %v4361 = vsel %vm4254, %v1525, %v4251
        %v4362 = vsel %vm4254, %v1530, %v4251
        %v4363 = vsel %vm4254, %v1535, %v4251
        %v4364 = vsel %vm4254, %v1540, %v4251
        %v4365 = vsel %vm4254, %v1545, %v4251
        %v4366 = vsel %vm4254, %v1550, %v4251
        %v4367 = vsel %vm4254, %v1555, %v4251
        %v4368 = vsel %vm4254, %v1560, %v4251
        %v4369 = vsel %vm4254, %v1565, %v4251
        %v4370 = vsel %vm4254, %v1570, %v4251
        %v4371 = vsel %vm4254, %v1575, %v4251
        %v4372 = vsel %vm4254, %v1580, %v4251
        %v4373 = vsel %vm4254, %v1585, %v4251
        %v4374 = vsel %vm4254, %v1590, %v4251
        %v4375 = vsel %vm4254, %v1595, %v4251
        %v4376 = vsel %vm4254, %v1600, %v4251
        %v4377 = vsel %vm4254, %v1605, %v4251
        %v4378 = vsel %vm4254, %v1610, %v4251
        %v4379 = vsel %vm4254, %v1615, %v4251
        %v4380 = vsel %vm4254, %v1620, %v4251
        %v4381 = vsel %vm4254, %v1625, %v4251
        %v4382 = vsel %vm4254, %v1630, %v4251
        %v4383 = vmul.f32 %v3534, %v4255
        %v4384 = vmul.f32 %v3539, %v4256
        %v4385 = vmul.f32 %v3544, %v4257
        %v4386 = vmul.f32 %v3549, %v4258
        %v4387 = vmul.f32 %v3554, %v4259
        %v4388 = vmul.f32 %v3559, %v4260
        %v4389 = vmul.f32 %v3564, %v4261
        %v4390 = vmul.f32 %v3569, %v4262
        %v4391 = vmul.f32 %v3574, %v4263
        %v4392 = vmul.f32 %v3579, %v4264
        %v4393 = vmul.f32 %v3584, %v4265
        %v4394 = vmul.f32 %v3589, %v4266
        %v4395 = vmul.f32 %v3594, %v4267
        %v4396 = vmul.f32 %v3599, %v4268
        %v4397 = vmul.f32 %v3604, %v4269
        %v4398 = vmul.f32 %v3609, %v4270
        %v4399 = vmul.f32 %v3614, %v4271
        %v4400 = vmul.f32 %v3619, %v4272
        %v4401 = vmul.f32 %v3624, %v4273
        %v4402 = vmul.f32 %v3629, %v4274
        %v4403 = vmul.f32 %v3634, %v4275
        %v4404 = vmul.f32 %v3639, %v4276
        %v4405 = vmul.f32 %v3644, %v4277
        %v4406 = vmul.f32 %v3649, %v4278
        %v4407 = vmul.f32 %v3654, %v4279
        %v4408 = vmul.f32 %v3659, %v4280
        %v4409 = vmul.f32 %v3664, %v4281
        %v4410 = vmul.f32 %v3669, %v4282
        %v4411 = vmul.f32 %v3674, %v4283
        %v4412 = vmul.f32 %v3679, %v4284
        %v4413 = vmul.f32 %v3684, %v4285
        %v4414 = vmul.f32 %v3689, %v4286
        %v4415 = vmul.f32 %v3694, %v4287
        %v4416 = vmul.f32 %v3699, %v4288
        %v4417 = vmul.f32 %v3704, %v4289
        %v4418 = vmul.f32 %v3709, %v4290
        %v4419 = vmul.f32 %v3714, %v4291
        %v4420 = vmul.f32 %v3719, %v4292
        %v4421 = vmul.f32 %v3724, %v4293
        %v4422 = vmul.f32 %v3729, %v4294
        %v4423 = vmul.f32 %v3734, %v4295
        %v4424 = vmul.f32 %v3739, %v4296
        %v4425 = vmul.f32 %v3744, %v4297
        %v4426 = vmul.f32 %v3749, %v4298
        %v4427 = vmul.f32 %v3754, %v4299
        %v4428 = vmul.f32 %v3759, %v4300
        %v4429 = vmul.f32 %v3764, %v4301
        %v4430 = vmul.f32 %v3769, %v4302
        %v4431 = vmul.f32 %v3774, %v4303
        %v4432 = vmul.f32 %v3779, %v4304
        %v4433 = vmul.f32 %v3784, %v4305
        %v4434 = vmul.f32 %v3789, %v4306
        %v4435 = vmul.f32 %v3794, %v4307
        %v4436 = vmul.f32 %v3799, %v4308
        %v4437 = vmul.f32 %v3804, %v4309
        %v4438 = vmul.f32 %v3809, %v4310
        %v4439 = vmul.f32 %v3814, %v4311
        %v4440 = vmul.f32 %v3819, %v4312
        %v4441 = vmul.f32 %v3824, %v4313
        %v4442 = vmul.f32 %v3829, %v4314
        %v4443 = vmul.f32 %v3834, %v4315
        %v4444 = vmul.f32 %v3839, %v4316
        %v4445 = vmul.f32 %v3844, %v4317
        %v4446 = vmul.f32 %v3849, %v4318
        %v4447 = vmul.f32 %v3854, %v4319
        %v4448 = vmul.f32 %v3859, %v4320
        %v4449 = vmul.f32 %v3864, %v4321
        %v4450 = vmul.f32 %v3869, %v4322
        %v4451 = vmul.f32 %v3874, %v4323
        %v4452 = vmul.f32 %v3879, %v4324
        %v4453 = vmul.f32 %v3884, %v4325
        %v4454 = vmul.f32 %v3889, %v4326
        %v4455 = vmul.f32 %v3894, %v4327
        %v4456 = vmul.f32 %v3899, %v4328
        %v4457 = vmul.f32 %v3904, %v4329
        %v4458 = vmul.f32 %v3909, %v4330
        %v4459 = vmul.f32 %v3914, %v4331
        %v4460 = vmul.f32 %v3919, %v4332
        %v4461 = vmul.f32 %v3924, %v4333
        %v4462 = vmul.f32 %v3929, %v4334
        %v4463 = vmul.f32 %v3934, %v4335
        %v4464 = vmul.f32 %v3939, %v4336
        %v4465 = vmul.f32 %v3944, %v4337
        %v4466 = vmul.f32 %v3949, %v4338
        %v4467 = vmul.f32 %v3954, %v4339
        %v4468 = vmul.f32 %v3959, %v4340
        %v4469 = vmul.f32 %v3964, %v4341
        %v4470 = vmul.f32 %v3969, %v4342
        %v4471 = vmul.f32 %v3974, %v4343
        %v4472 = vmul.f32 %v3979, %v4344
        %v4473 = vmul.f32 %v3984, %v4345
        %v4474 = vmul.f32 %v3989, %v4346
        %v4475 = vmul.f32 %v3994, %v4347
        %v4476 = vmul.f32 %v3999, %v4348
        %v4477 = vmul.f32 %v4004, %v4349
        %v4478 = vmul.f32 %v4009, %v4350
        %v4479 = vmul.f32 %v4014, %v4351
        %v4480 = vmul.f32 %v4019, %v4352
        %v4481 = vmul.f32 %v4024, %v4353
        %v4482 = vmul.f32 %v4029, %v4354
        %v4483 = vmul.f32 %v4034, %v4355
        %v4484 = vmul.f32 %v4039, %v4356
        %v4485 = vmul.f32 %v4044, %v4357
        %v4486 = vmul.f32 %v4049, %v4358
        %v4487 = vmul.f32 %v4054, %v4359
        %v4488 = vmul.f32 %v4059, %v4360
        %v4489 = vmul.f32 %v4064, %v4361
        %v4490 = vmul.f32 %v4069, %v4362
        %v4491 = vmul.f32 %v4074, %v4363
        %v4492 = vmul.f32 %v4079, %v4364
        %v4493 = vmul.f32 %v4084, %v4365
        %v4494 = vmul.f32 %v4089, %v4366
        %v4495 = vmul.f32 %v4094, %v4367
        %v4496 = vmul.f32 %v4099, %v4368
        %v4497 = vmul.f32 %v4104, %v4369
        %v4498 = vmul.f32 %v4109, %v4370
        %v4499 = vmul.f32 %v4114, %v4371
        %v4500 = vmul.f32 %v4119, %v4372
        %v4501 = vmul.f32 %v4124, %v4373
        %v4502 = vmul.f32 %v4129, %v4374
        %v4503 = vmul.f32 %v4134, %v4375
        %v4504 = vmul.f32 %v4139, %v4376
        %v4505 = vmul.f32 %v4144, %v4377
        %v4506 = vmul.f32 %v4149, %v4378
        %v4507 = vmul.f32 %v4154, %v4379
        %v4508 = vmul.f32 %v4159, %v4380
        %v4509 = vmul.f32 %v4164, %v4381
        %v4510 = vmul.f32 %v4169, %v4382
        %v4511 = vpack.c.bf16 %v4384, %v4383
        %v4512 = vpack.c.bf16 %v4386, %v4385
        %v4513 = vpack.c.bf16 %v4388, %v4387
        %v4514 = vpack.c.bf16 %v4390, %v4389
        %v4515 = vpack.c.bf16 %v4392, %v4391
        %v4516 = vpack.c.bf16 %v4394, %v4393
        %v4517 = vpack.c.bf16 %v4396, %v4395
        %v4518 = vpack.c.bf16 %v4398, %v4397
        %v4519 = vpack.c.bf16 %v4400, %v4399
        %v4520 = vpack.c.bf16 %v4402, %v4401
        %v4521 = vpack.c.bf16 %v4404, %v4403
        %v4522 = vpack.c.bf16 %v4406, %v4405
        %v4523 = vpack.c.bf16 %v4408, %v4407
        %v4524 = vpack.c.bf16 %v4410, %v4409
        %v4525 = vpack.c.bf16 %v4412, %v4411
        %v4526 = vpack.c.bf16 %v4414, %v4413
        %v4527 = vpack.c.bf16 %v4416, %v4415
        %v4528 = vpack.c.bf16 %v4418, %v4417
        %v4529 = vpack.c.bf16 %v4420, %v4419
        %v4530 = vpack.c.bf16 %v4422, %v4421
        %v4531 = vpack.c.bf16 %v4424, %v4423
        %v4532 = vpack.c.bf16 %v4426, %v4425
        %v4533 = vpack.c.bf16 %v4428, %v4427
        %v4534 = vpack.c.bf16 %v4430, %v4429
        %v4535 = vpack.c.bf16 %v4432, %v4431
        %v4536 = vpack.c.bf16 %v4434, %v4433
        %v4537 = vpack.c.bf16 %v4436, %v4435
        %v4538 = vpack.c.bf16 %v4438, %v4437
        %v4539 = vpack.c.bf16 %v4440, %v4439
        %v4540 = vpack.c.bf16 %v4442, %v4441
        %v4541 = vpack.c.bf16 %v4444, %v4443
        %v4542 = vpack.c.bf16 %v4446, %v4445
        %v4543 = vpack.c.bf16 %v4448, %v4447
        %v4544 = vpack.c.bf16 %v4450, %v4449
        %v4545 = vpack.c.bf16 %v4452, %v4451
        %v4546 = vpack.c.bf16 %v4454, %v4453
        %v4547 = vpack.c.bf16 %v4456, %v4455
        %v4548 = vpack.c.bf16 %v4458, %v4457
        %v4549 = vpack.c.bf16 %v4460, %v4459
        %v4550 = vpack.c.bf16 %v4462, %v4461
        %v4551 = vpack.c.bf16 %v4464, %v4463
        %v4552 = vpack.c.bf16 %v4466, %v4465
        %v4553 = vpack.c.bf16 %v4468, %v4467
        %v4554 = vpack.c.bf16 %v4470, %v4469
        %v4555 = vpack.c.bf16 %v4472, %v4471
        %v4556 = vpack.c.bf16 %v4474, %v4473
        %v4557 = vpack.c.bf16 %v4476, %v4475
        %v4558 = vpack.c.bf16 %v4478, %v4477
        %v4559 = vpack.c.bf16 %v4480, %v4479
        %v4560 = vpack.c.bf16 %v4482, %v4481
        %v4561 = vpack.c.bf16 %v4484, %v4483
        %v4562 = vpack.c.bf16 %v4486, %v4485
        %v4563 = vpack.c.bf16 %v4488, %v4487
        %v4564 = vpack.c.bf16 %v4490, %v4489
        %v4565 = vpack.c.bf16 %v4492, %v4491
        %v4566 = vpack.c.bf16 %v4494, %v4493
        %v4567 = vpack.c.bf16 %v4496, %v4495
        %v4568 = vpack.c.bf16 %v4498, %v4497
        %v4569 = vpack.c.bf16 %v4500, %v4499
        %v4570 = vpack.c.bf16 %v4502, %v4501
        %v4571 = vpack.c.bf16 %v4504, %v4503
        %v4572 = vpack.c.bf16 %v4506, %v4505
        %v4573 = vpack.c.bf16 %v4508, %v4507
        %v4574 = vpack.c.bf16 %v4510, %v4509
        %v4575 = vld [vmem:[%s344] sm:$0xff]
        %v4576 = vld [vmem:[%s344 + $0x8] sm:$0xff]
        %v4577 = vld [vmem:[%s344 + $0x10] sm:$0xff]
        %v4578 = vld [vmem:[%s344 + $0x18] sm:$0xff]
        %v4579 = vld [vmem:[%s344 + $0x20] sm:$0xff]
        %v4580 = vld [vmem:[%s344 + $0x28] sm:$0xff]
        %v4581 = vld [vmem:[%s344 + $0x30] sm:$0xff]
        %v4582 = vld [vmem:[%s344 + $0x38] sm:$0xff]
        %v4583 = vld [vmem:[%s344 + $0x40] sm:$0xff]
        %v4584 = vld [vmem:[%s344 + $0x48] sm:$0xff]
        %v4585 = vld [vmem:[%s344 + $0x50] sm:$0xff]
        %v4586 = vld [vmem:[%s344 + $0x58] sm:$0xff]
        %v4587 = vld [vmem:[%s344 + $0x60] sm:$0xff]
        %v4588 = vld [vmem:[%s344 + $0x68] sm:$0xff]
        %v4589 = vld [vmem:[%s344 + $0x70] sm:$0xff]
        %v4590 = vld [vmem:[%s344 + $0x78] sm:$0xff]
        %v4591 = vld [vmem:[%s344 + $0x80] sm:$0xff]
        %v4592 = vld [vmem:[%s344 + $0x88] sm:$0xff]
        %v4593 = vld [vmem:[%s344 + $0x90] sm:$0xff]
        %v4594 = vld [vmem:[%s344 + $0x98] sm:$0xff]
        %v4595 = vld [vmem:[%s344 + $0xa0] sm:$0xff]
        %v4596 = vld [vmem:[%s344 + $0xa8] sm:$0xff]
        %v4597 = vld [vmem:[%s344 + $0xb0] sm:$0xff]
        %v4598 = vld [vmem:[%s344 + $0xb8] sm:$0xff]
        %v4599 = vld [vmem:[%s344 + $0xc0] sm:$0xff]
        %v4600 = vld [vmem:[%s344 + $0xc8] sm:$0xff]
        %v4601 = vld [vmem:[%s344 + $0xd0] sm:$0xff]
        %v4602 = vld [vmem:[%s344 + $0xd8] sm:$0xff]
        %v4603 = vld [vmem:[%s344 + $0xe0] sm:$0xff]
        %v4604 = vld [vmem:[%s344 + $0xe8] sm:$0xff]
        %v4605 = vld [vmem:[%s344 + $0xf0] sm:$0xff]
        %v4606 = vld [vmem:[%s344 + $0xf8] sm:$0xff]
        %v4607 = vld [vmem:[%s344 + $0x100] sm:$0xff]
        %v4608 = vld [vmem:[%s344 + $0x108] sm:$0xff]
        %v4609 = vld [vmem:[%s344 + $0x110] sm:$0xff]
        %v4610 = vld [vmem:[%s344 + $0x118] sm:$0xff]
        %v4611 = vld [vmem:[%s344 + $0x120] sm:$0xff]
        %v4612 = vld [vmem:[%s344 + $0x128] sm:$0xff]
        %v4613 = vld [vmem:[%s344 + $0x130] sm:$0xff]
        %v4614 = vld [vmem:[%s344 + $0x138] sm:$0xff]
        %v4615 = vld [vmem:[%s344 + $0x140] sm:$0xff]
        %v4616 = vld [vmem:[%s344 + $0x148] sm:$0xff]
        %v4617 = vld [vmem:[%s344 + $0x150] sm:$0xff]
        %v4618 = vld [vmem:[%s344 + $0x158] sm:$0xff]
        %v4619 = vld [vmem:[%s344 + $0x160] sm:$0xff]
        %v4620 = vld [vmem:[%s344 + $0x168] sm:$0xff]
        %v4621 = vld [vmem:[%s344 + $0x170] sm:$0xff]
        %v4622 = vld [vmem:[%s344 + $0x178] sm:$0xff]
        %v4623 = vld [vmem:[%s344 + $0x180] sm:$0xff]
        %v4624 = vld [vmem:[%s344 + $0x188] sm:$0xff]
        %v4625 = vld [vmem:[%s344 + $0x190] sm:$0xff]
        %v4626 = vld [vmem:[%s344 + $0x198] sm:$0xff]
        %v4627 = vld [vmem:[%s344 + $0x1a0] sm:$0xff]
        %v4628 = vld [vmem:[%s344 + $0x1a8] sm:$0xff]
        %v4629 = vld [vmem:[%s344 + $0x1b0] sm:$0xff]
        %v4630 = vld [vmem:[%s344 + $0x1b8] sm:$0xff]
        %v4631 = vld [vmem:[%s344 + $0x1c0] sm:$0xff]
        %v4632 = vld [vmem:[%s344 + $0x1c8] sm:$0xff]
        %v4633 = vld [vmem:[%s344 + $0x1d0] sm:$0xff]
        %v4634 = vld [vmem:[%s344 + $0x1d8] sm:$0xff]
        %v4635 = vld [vmem:[%s344 + $0x1e0] sm:$0xff]
        %v4636 = vld [vmem:[%s344 + $0x1e8] sm:$0xff]
        %v4637 = vld [vmem:[%s344 + $0x1f0] sm:$0xff]
        %v4638 = vld [vmem:[%s344 + $0x1f8] sm:$0xff]
        %v4703 = vunpack.c.l.b16 %v4575
        %v4704 = vunpack.c.h.b16 %v4575
        %v4705 = vunpack.c.l.b16 %v4576
        %v4706 = vunpack.c.h.b16 %v4576
        %v4707 = vunpack.c.l.b16 %v4577
        %v4708 = vunpack.c.h.b16 %v4577
        %v4709 = vunpack.c.l.b16 %v4578
        %v4710 = vunpack.c.h.b16 %v4578
        %v4711 = vunpack.c.l.b16 %v4579
        %v4712 = vunpack.c.h.b16 %v4579
        %v4713 = vunpack.c.l.b16 %v4580
        %v4714 = vunpack.c.h.b16 %v4580
        %v4715 = vunpack.c.l.b16 %v4581
        %v4716 = vunpack.c.h.b16 %v4581
        %v4717 = vunpack.c.l.b16 %v4582
        %v4718 = vunpack.c.h.b16 %v4582
        %v4719 = vunpack.c.l.b16 %v4583
        %v4720 = vunpack.c.h.b16 %v4583
        %v4721 = vunpack.c.l.b16 %v4584
        %v4722 = vunpack.c.h.b16 %v4584
        %v4723 = vunpack.c.l.b16 %v4585
        %v4724 = vunpack.c.h.b16 %v4585
        %v4725 = vunpack.c.l.b16 %v4586
        %v4726 = vunpack.c.h.b16 %v4586
        %v4727 = vunpack.c.l.b16 %v4587
        %v4728 = vunpack.c.h.b16 %v4587
        %v4729 = vunpack.c.l.b16 %v4588
        %v4730 = vunpack.c.h.b16 %v4588
        %v4731 = vunpack.c.l.b16 %v4589
        %v4732 = vunpack.c.h.b16 %v4589
        %v4733 = vunpack.c.l.b16 %v4590
        %v4734 = vunpack.c.h.b16 %v4590
        %v4735 = vunpack.c.l.b16 %v4591
        %v4736 = vunpack.c.h.b16 %v4591
        %v4737 = vunpack.c.l.b16 %v4592
        %v4738 = vunpack.c.h.b16 %v4592
        %v4739 = vunpack.c.l.b16 %v4593
        %v4740 = vunpack.c.h.b16 %v4593
        %v4741 = vunpack.c.l.b16 %v4594
        %v4742 = vunpack.c.h.b16 %v4594
        %v4743 = vunpack.c.l.b16 %v4595
        %v4744 = vunpack.c.h.b16 %v4595
        %v4745 = vunpack.c.l.b16 %v4596
        %v4746 = vunpack.c.h.b16 %v4596
        %v4747 = vunpack.c.l.b16 %v4597
        %v4748 = vunpack.c.h.b16 %v4597
        %v4749 = vunpack.c.l.b16 %v4598
        %v4750 = vunpack.c.h.b16 %v4598
        %v4751 = vunpack.c.l.b16 %v4599
        %v4752 = vunpack.c.h.b16 %v4599
        %v4753 = vunpack.c.l.b16 %v4600
        %v4754 = vunpack.c.h.b16 %v4600
        %v4755 = vunpack.c.l.b16 %v4601
        %v4756 = vunpack.c.h.b16 %v4601
        %v4757 = vunpack.c.l.b16 %v4602
        %v4758 = vunpack.c.h.b16 %v4602
        %v4759 = vunpack.c.l.b16 %v4603
        %v4760 = vunpack.c.h.b16 %v4603
        %v4761 = vunpack.c.l.b16 %v4604
        %v4762 = vunpack.c.h.b16 %v4604
        %v4763 = vunpack.c.l.b16 %v4605
        %v4764 = vunpack.c.h.b16 %v4605
        %v4765 = vunpack.c.l.b16 %v4606
        %v4766 = vunpack.c.h.b16 %v4606
        %v4767 = vunpack.c.l.b16 %v4607
        %v4768 = vunpack.c.h.b16 %v4607
        %v4769 = vunpack.c.l.b16 %v4608
        %v4770 = vunpack.c.h.b16 %v4608
        %v4771 = vunpack.c.l.b16 %v4609
        %v4772 = vunpack.c.h.b16 %v4609
        %v4773 = vunpack.c.l.b16 %v4610
        %v4774 = vunpack.c.h.b16 %v4610
        %v4775 = vunpack.c.l.b16 %v4611
        %v4776 = vunpack.c.h.b16 %v4611
        %v4777 = vunpack.c.l.b16 %v4612
        %v4778 = vunpack.c.h.b16 %v4612
        %v4779 = vunpack.c.l.b16 %v4613
        %v4780 = vunpack.c.h.b16 %v4613
        %v4781 = vunpack.c.l.b16 %v4614
        %v4782 = vunpack.c.h.b16 %v4614
        %v4783 = vunpack.c.l.b16 %v4615
        %v4784 = vunpack.c.h.b16 %v4615
        %v4785 = vunpack.c.l.b16 %v4616
        %v4786 = vunpack.c.h.b16 %v4616
        %v4787 = vunpack.c.l.b16 %v4617
        %v4788 = vunpack.c.h.b16 %v4617
        %v4789 = vunpack.c.l.b16 %v4618
        %v4790 = vunpack.c.h.b16 %v4618
        %v4791 = vunpack.c.l.b16 %v4619
        %v4792 = vunpack.c.h.b16 %v4619
        %v4793 = vunpack.c.l.b16 %v4620
        %v4794 = vunpack.c.h.b16 %v4620
        %v4795 = vunpack.c.l.b16 %v4621
        %v4796 = vunpack.c.h.b16 %v4621
        %v4797 = vunpack.c.l.b16 %v4622
        %v4798 = vunpack.c.h.b16 %v4622
        %v4799 = vunpack.c.l.b16 %v4623
        %v4800 = vunpack.c.h.b16 %v4623
        %v4801 = vunpack.c.l.b16 %v4624
        %v4802 = vunpack.c.h.b16 %v4624
        %v4803 = vunpack.c.l.b16 %v4625
        %v4804 = vunpack.c.h.b16 %v4625
        %v4805 = vunpack.c.l.b16 %v4626
        %v4806 = vunpack.c.h.b16 %v4626
        %v4807 = vunpack.c.l.b16 %v4627
        %v4808 = vunpack.c.h.b16 %v4627
        %v4809 = vunpack.c.l.b16 %v4628
        %v4810 = vunpack.c.h.b16 %v4628
        %v4811 = vunpack.c.l.b16 %v4629
        %v4812 = vunpack.c.h.b16 %v4629
        %v4813 = vunpack.c.l.b16 %v4630
        %v4814 = vunpack.c.h.b16 %v4630
        %v4815 = vunpack.c.l.b16 %v4631
        %v4816 = vunpack.c.h.b16 %v4631
        %v4817 = vunpack.c.l.b16 %v4632
        %v4818 = vunpack.c.h.b16 %v4632
        %v4819 = vunpack.c.l.b16 %v4633
        %v4820 = vunpack.c.h.b16 %v4633
        %v4821 = vunpack.c.l.b16 %v4634
        %v4822 = vunpack.c.h.b16 %v4634
        %v4823 = vunpack.c.l.b16 %v4635
        %v4824 = vunpack.c.h.b16 %v4635
        %v4825 = vunpack.c.l.b16 %v4636
        %v4826 = vunpack.c.h.b16 %v4636
        %v4827 = vunpack.c.l.b16 %v4637
        %v4828 = vunpack.c.h.b16 %v4637
        %v4829 = vunpack.c.l.b16 %v4638
        %v4830 = vunpack.c.h.b16 %v4638
        %v4831 = vpack.c.b16 %v4711, %v4703
        %v4832 = vpack.c.b16 %v4712, %v4704
        %v4833 = vpack.c.b16 %v4713, %v4705
        %v4834 = vpack.c.b16 %v4714, %v4706
        %v4835 = vpack.c.b16 %v4715, %v4707
        %v4836 = vpack.c.b16 %v4716, %v4708
        %v4837 = vpack.c.b16 %v4717, %v4709
        %v4838 = vpack.c.b16 %v4718, %v4710
        %v4839 = vpack.c.b16 %v4727, %v4719
        %v4840 = vpack.c.b16 %v4728, %v4720
        %v4841 = vpack.c.b16 %v4729, %v4721
        %v4842 = vpack.c.b16 %v4730, %v4722
        %v4843 = vpack.c.b16 %v4731, %v4723
        %v4844 = vpack.c.b16 %v4732, %v4724
        %v4845 = vpack.c.b16 %v4733, %v4725
        %v4846 = vpack.c.b16 %v4734, %v4726
        %v4847 = vpack.c.b16 %v4743, %v4735
        %v4848 = vpack.c.b16 %v4744, %v4736
        %v4849 = vpack.c.b16 %v4745, %v4737
        %v4850 = vpack.c.b16 %v4746, %v4738
        %v4851 = vpack.c.b16 %v4747, %v4739
        %v4852 = vpack.c.b16 %v4748, %v4740
        %v4853 = vpack.c.b16 %v4749, %v4741
        %v4854 = vpack.c.b16 %v4750, %v4742
        %v4855 = vpack.c.b16 %v4759, %v4751
        %v4856 = vpack.c.b16 %v4760, %v4752
        %v4857 = vpack.c.b16 %v4761, %v4753
        %v4858 = vpack.c.b16 %v4762, %v4754
        %v4859 = vpack.c.b16 %v4763, %v4755
        %v4860 = vpack.c.b16 %v4764, %v4756
        %v4861 = vpack.c.b16 %v4765, %v4757
        %v4862 = vpack.c.b16 %v4766, %v4758
        %v4863 = vpack.c.b16 %v4775, %v4767
        %v4864 = vpack.c.b16 %v4776, %v4768
        %v4865 = vpack.c.b16 %v4777, %v4769
        %v4866 = vpack.c.b16 %v4778, %v4770
        %v4867 = vpack.c.b16 %v4779, %v4771
        %v4868 = vpack.c.b16 %v4780, %v4772
        %v4869 = vpack.c.b16 %v4781, %v4773
        %v4870 = vpack.c.b16 %v4782, %v4774
        %v4871 = vpack.c.b16 %v4791, %v4783
        %v4872 = vpack.c.b16 %v4792, %v4784
        %v4873 = vpack.c.b16 %v4793, %v4785
        %v4874 = vpack.c.b16 %v4794, %v4786
        %v4875 = vpack.c.b16 %v4795, %v4787
        %v4876 = vpack.c.b16 %v4796, %v4788
        %v4877 = vpack.c.b16 %v4797, %v4789
        %v4878 = vpack.c.b16 %v4798, %v4790
        %v4879 = vpack.c.b16 %v4807, %v4799
        %v4880 = vpack.c.b16 %v4808, %v4800
        %v4881 = vpack.c.b16 %v4809, %v4801
        %v4882 = vpack.c.b16 %v4810, %v4802
        %v4883 = vpack.c.b16 %v4811, %v4803
        %v4884 = vpack.c.b16 %v4812, %v4804
        %v4885 = vpack.c.b16 %v4813, %v4805
        %v4886 = vpack.c.b16 %v4814, %v4806
        %v4887 = vpack.c.b16 %v4823, %v4815
        %v4888 = vpack.c.b16 %v4824, %v4816
        %v4889 = vpack.c.b16 %v4825, %v4817
        %v4890 = vpack.c.b16 %v4826, %v4818
        %v4891 = vpack.c.b16 %v4827, %v4819
        %v4892 = vpack.c.b16 %v4828, %v4820
        %v4893 = vpack.c.b16 %v4829, %v4821
        %v4894 = vpack.c.b16 %v4830, %v4822
        %4959 = vmatprep.subr.bf16.mxu0 0
        %4960 = vmatpush1.bf16.msra.mxu0 %v4518
        %4961 = vmatprep.subr.bf16.mxu0 0
        %4962 = vmatpush1.bf16.msra.mxu0 %v4517
        %4963 = vmatprep.subr.bf16.mxu0 0
        %4964 = vmatpush1.bf16.msra.mxu0 %v4516
        %4965 = vmatprep.subr.bf16.mxu0 0
        %4966 = vmatpush1.bf16.msra.mxu0 %v4515
        %4967 = vmatprep.subr.bf16.mxu0 0
        %4968 = vmatpush1.bf16.msra.mxu0 %v4514
        %4969 = vmatprep.subr.bf16.mxu0 0
        %4970 = vmatpush1.bf16.msra.mxu0 %v4513
        %4971 = vmatprep.subr.bf16.mxu0 0
        %4972 = vmatpush1.bf16.msra.mxu0 %v4512
        %4973 = vmatprep.subr.bf16.mxu0 0
        %4974 = vmatpush1.bf16.msra.mxu0 %v4511
        %4975 = vmatprep.subr.bf16.mxu0 0
        %4976 = vmatpush2.bf16.msra.mxu0 %v4526
        %4977 = vmatprep.subr.bf16.mxu0 0
        %4978 = vmatpush2.bf16.msra.mxu0 %v4525
        %4979 = vmatprep.subr.bf16.mxu0 0
        %4980 = vmatpush2.bf16.msra.mxu0 %v4524
        %4981 = vmatprep.subr.bf16.mxu0 0
        %4982 = vmatpush2.bf16.msra.mxu0 %v4523
        %4983 = vmatprep.subr.bf16.mxu0 0
        %4984 = vmatpush2.bf16.msra.mxu0 %v4522
        %4985 = vmatprep.subr.bf16.mxu0 0
        %4986 = vmatpush2.bf16.msra.mxu0 %v4521
        %4987 = vmatprep.subr.bf16.mxu0 0
        %4988 = vmatpush2.bf16.msra.mxu0 %v4520
        %4989 = vmatprep.subr.bf16.mxu0 0
        %4990 = vmatpush2.bf16.msra.mxu0 %v4519
        %4991 = vmatprep.mubr.bf16.mxu0 %v4832
        %4992 = vmatmul.mubr.bf16.gmra.mxu0 %v4831
        %v4993 = vpop.f32.mrf.mxu0
        %v4994 = vadd.f32 0.0, %v4993
        %v4995 = vpop.f32.mrf.mxu0
        %v4996 = vpop.f32.mrf.mxu0
        %v4997 = vadd.f32 0.0, %v4996
        %v4998 = vpop.f32.mrf.mxu0
        %4999 = vmatprep.mubr.bf16.mxu0 %v4840
        %5000 = vmatmul.mubr.bf16.gmra.mxu0 %v4839
        %v5001 = vpop.f32.mrf.mxu0
        %v5002 = vadd.f32 0.0, %v5001
        %v5003 = vpop.f32.mrf.mxu0
        %v5004 = vpop.f32.mrf.mxu0
        %v5005 = vadd.f32 0.0, %v5004
        %v5006 = vpop.f32.mrf.mxu0
        %5007 = vmatprep.mubr.bf16.mxu0 %v4848
        %5008 = vmatmul.mubr.bf16.gmra.mxu0 %v4847
        %v5009 = vpop.f32.mrf.mxu0
        %v5010 = vadd.f32 0.0, %v5009
        %v5011 = vpop.f32.mrf.mxu0
        %v5012 = vpop.f32.mrf.mxu0
        %v5013 = vadd.f32 0.0, %v5012
        %v5014 = vpop.f32.mrf.mxu0
        %5015 = vmatprep.mubr.bf16.mxu0 %v4856
        %5016 = vmatmul.mubr.bf16.gmra.mxu0 %v4855
        %v5017 = vpop.f32.mrf.mxu0
        %v5018 = vadd.f32 0.0, %v5017
        %v5019 = vpop.f32.mrf.mxu0
        %v5020 = vpop.f32.mrf.mxu0
        %v5021 = vadd.f32 0.0, %v5020
        %v5022 = vpop.f32.mrf.mxu0
        %5023 = vmatprep.mubr.bf16.mxu0 %v4864
        %5024 = vmatmul.mubr.bf16.gmra.mxu0 %v4863
        %v5025 = vpop.f32.mrf.mxu0
        %v5026 = vadd.f32 0.0, %v5025
        %v5027 = vpop.f32.mrf.mxu0
        %v5028 = vpop.f32.mrf.mxu0
        %v5029 = vadd.f32 0.0, %v5028
        %v5030 = vpop.f32.mrf.mxu0
        %5031 = vmatprep.mubr.bf16.mxu0 %v4872
        %5032 = vmatmul.mubr.bf16.gmra.mxu0 %v4871
        %v5033 = vpop.f32.mrf.mxu0
        %v5034 = vadd.f32 0.0, %v5033
        %v5035 = vpop.f32.mrf.mxu0
        %v5036 = vpop.f32.mrf.mxu0
        %v5037 = vadd.f32 0.0, %v5036
        %v5038 = vpop.f32.mrf.mxu0
        %5039 = vmatprep.mubr.bf16.mxu0 %v4880
        %5040 = vmatmul.mubr.bf16.gmra.mxu0 %v4879
        %v5041 = vpop.f32.mrf.mxu0
        %v5042 = vadd.f32 0.0, %v5041
        %v5043 = vpop.f32.mrf.mxu0
        %v5044 = vpop.f32.mrf.mxu0
        %v5045 = vadd.f32 0.0, %v5044
        %v5046 = vpop.f32.mrf.mxu0
        %5047 = vmatprep.mubr.bf16.mxu0 %v4888
        %5048 = vmatmul.mubr.bf16.gmra.mxu0 %v4887
        %v5049 = vpop.f32.mrf.mxu0
        %v5050 = vadd.f32 0.0, %v5049
        %v5051 = vpop.f32.mrf.mxu0
        %v5052 = vpop.f32.mrf.mxu0
        %v5053 = vadd.f32 0.0, %v5052
        %v5054 = vpop.f32.mrf.mxu0
        %5055 = vdwg.mxu0
        %5056 = vmatprep.subr.bf16.mxu0 0
        %5057 = vmatpush1.bf16.msra.mxu0 %v4534
        %5058 = vmatprep.subr.bf16.mxu0 0
        %5059 = vmatpush1.bf16.msra.mxu0 %v4533
        %5060 = vmatprep.subr.bf16.mxu0 0
        %5061 = vmatpush1.bf16.msra.mxu0 %v4532
        %5062 = vmatprep.subr.bf16.mxu0 0
        %5063 = vmatpush1.bf16.msra.mxu0 %v4531
        %5064 = vmatprep.subr.bf16.mxu0 0
        %5065 = vmatpush1.bf16.msra.mxu0 %v4530
        %5066 = vmatprep.subr.bf16.mxu0 0
        %5067 = vmatpush1.bf16.msra.mxu0 %v4529
        %5068 = vmatprep.subr.bf16.mxu0 0
        %5069 = vmatpush1.bf16.msra.mxu0 %v4528
        %5070 = vmatprep.subr.bf16.mxu0 0
        %5071 = vmatpush1.bf16.msra.mxu0 %v4527
        %5072 = vmatprep.subr.bf16.mxu0 0
        %5073 = vmatpush2.bf16.msra.mxu0 %v4542
        %5074 = vmatprep.subr.bf16.mxu0 0
        %5075 = vmatpush2.bf16.msra.mxu0 %v4541
        %5076 = vmatprep.subr.bf16.mxu0 0
        %5077 = vmatpush2.bf16.msra.mxu0 %v4540
        %5078 = vmatprep.subr.bf16.mxu0 0
        %5079 = vmatpush2.bf16.msra.mxu0 %v4539
        %5080 = vmatprep.subr.bf16.mxu0 0
        %5081 = vmatpush2.bf16.msra.mxu0 %v4538
        %5082 = vmatprep.subr.bf16.mxu0 0
        %5083 = vmatpush2.bf16.msra.mxu0 %v4537
        %5084 = vmatprep.subr.bf16.mxu0 0
        %5085 = vmatpush2.bf16.msra.mxu0 %v4536
        %5086 = vmatprep.subr.bf16.mxu0 0
        %5087 = vmatpush2.bf16.msra.mxu0 %v4535
        %5088 = vmatprep.mubr.bf16.mxu0 %v4834
        %5089 = vmatmul.mubr.bf16.gmra.mxu0 %v4833
        %v5090 = vpop.f32.mrf.mxu0
        %v5091 = vadd.f32 %v4994, %v5090
        %v5092 = vpop.f32.mrf.mxu0
        %v5093 = vpop.f32.mrf.mxu0
        %v5094 = vadd.f32 %v4997, %v5093
        %v5095 = vpop.f32.mrf.mxu0
        %5096 = vmatprep.mubr.bf16.mxu0 %v4842
        %5097 = vmatmul.mubr.bf16.gmra.mxu0 %v4841
        %v5098 = vpop.f32.mrf.mxu0
        %v5099 = vadd.f32 %v5002, %v5098
        %v5100 = vpop.f32.mrf.mxu0
        %v5101 = vpop.f32.mrf.mxu0
        %v5102 = vadd.f32 %v5005, %v5101
        %v5103 = vpop.f32.mrf.mxu0
        %5104 = vmatprep.mubr.bf16.mxu0 %v4850
        %5105 = vmatmul.mubr.bf16.gmra.mxu0 %v4849
        %v5106 = vpop.f32.mrf.mxu0
        %v5107 = vadd.f32 %v5010, %v5106
        %v5108 = vpop.f32.mrf.mxu0
        %v5109 = vpop.f32.mrf.mxu0
        %v5110 = vadd.f32 %v5013, %v5109
        %v5111 = vpop.f32.mrf.mxu0
        %5112 = vmatprep.mubr.bf16.mxu0 %v4858
        %5113 = vmatmul.mubr.bf16.gmra.mxu0 %v4857
        %v5114 = vpop.f32.mrf.mxu0
        %v5115 = vadd.f32 %v5018, %v5114
        %v5116 = vpop.f32.mrf.mxu0
        %v5117 = vpop.f32.mrf.mxu0
        %v5118 = vadd.f32 %v5021, %v5117
        %v5119 = vpop.f32.mrf.mxu0
        %5120 = vmatprep.mubr.bf16.mxu0 %v4866
        %5121 = vmatmul.mubr.bf16.gmra.mxu0 %v4865
        %v5122 = vpop.f32.mrf.mxu0
        %v5123 = vadd.f32 %v5026, %v5122
        %v5124 = vpop.f32.mrf.mxu0
        %v5125 = vpop.f32.mrf.mxu0
        %v5126 = vadd.f32 %v5029, %v5125
        %v5127 = vpop.f32.mrf.mxu0
        %5128 = vmatprep.mubr.bf16.mxu0 %v4874
        %5129 = vmatmul.mubr.bf16.gmra.mxu0 %v4873
        %v5130 = vpop.f32.mrf.mxu0
        %v5131 = vadd.f32 %v5034, %v5130
        %v5132 = vpop.f32.mrf.mxu0
        %v5133 = vpop.f32.mrf.mxu0
        %v5134 = vadd.f32 %v5037, %v5133
        %v5135 = vpop.f32.mrf.mxu0
        %5136 = vmatprep.mubr.bf16.mxu0 %v4882
        %5137 = vmatmul.mubr.bf16.gmra.mxu0 %v4881
        %v5138 = vpop.f32.mrf.mxu0
        %v5139 = vadd.f32 %v5042, %v5138
        %v5140 = vpop.f32.mrf.mxu0
        %v5141 = vpop.f32.mrf.mxu0
        %v5142 = vadd.f32 %v5045, %v5141
        %v5143 = vpop.f32.mrf.mxu0
        %5144 = vmatprep.mubr.bf16.mxu0 %v4890
        %5145 = vmatmul.mubr.bf16.gmra.mxu0 %v4889
        %v5146 = vpop.f32.mrf.mxu0
        %v5147 = vadd.f32 %v5050, %v5146
        %v5148 = vpop.f32.mrf.mxu0
        %v5149 = vpop.f32.mrf.mxu0
        %v5150 = vadd.f32 %v5053, %v5149
        %v5151 = vpop.f32.mrf.mxu0
        %5152 = vdwg.mxu0
        %5153 = vmatprep.subr.bf16.mxu0 0
        %5154 = vmatpush1.bf16.msra.mxu0 %v4550
        %5155 = vmatprep.subr.bf16.mxu0 0
        %5156 = vmatpush1.bf16.msra.mxu0 %v4549
        %5157 = vmatprep.subr.bf16.mxu0 0
        %5158 = vmatpush1.bf16.msra.mxu0 %v4548
        %5159 = vmatprep.subr.bf16.mxu0 0
        %5160 = vmatpush1.bf16.msra.mxu0 %v4547
        %5161 = vmatprep.subr.bf16.mxu0 0
        %5162 = vmatpush1.bf16.msra.mxu0 %v4546
        %5163 = vmatprep.subr.bf16.mxu0 0
        %5164 = vmatpush1.bf16.msra.mxu0 %v4545
        %5165 = vmatprep.subr.bf16.mxu0 0
        %5166 = vmatpush1.bf16.msra.mxu0 %v4544
        %5167 = vmatprep.subr.bf16.mxu0 0
        %5168 = vmatpush1.bf16.msra.mxu0 %v4543
        %5169 = vmatprep.subr.bf16.mxu0 0
        %5170 = vmatpush2.bf16.msra.mxu0 %v4558
        %5171 = vmatprep.subr.bf16.mxu0 0
        %5172 = vmatpush2.bf16.msra.mxu0 %v4557
        %5173 = vmatprep.subr.bf16.mxu0 0
        %5174 = vmatpush2.bf16.msra.mxu0 %v4556
        %5175 = vmatprep.subr.bf16.mxu0 0
        %5176 = vmatpush2.bf16.msra.mxu0 %v4555
        %5177 = vmatprep.subr.bf16.mxu0 0
        %5178 = vmatpush2.bf16.msra.mxu0 %v4554
        %5179 = vmatprep.subr.bf16.mxu0 0
        %5180 = vmatpush2.bf16.msra.mxu0 %v4553
        %5181 = vmatprep.subr.bf16.mxu0 0
        %5182 = vmatpush2.bf16.msra.mxu0 %v4552
        %5183 = vmatprep.subr.bf16.mxu0 0
        %5184 = vmatpush2.bf16.msra.mxu0 %v4551
        %5185 = vmatprep.mubr.bf16.mxu0 %v4836
        %5186 = vmatmul.mubr.bf16.gmra.mxu0 %v4835
        %v5187 = vpop.f32.mrf.mxu0
        %v5188 = vadd.f32 %v5091, %v5187
        %v5189 = vpop.f32.mrf.mxu0
        %v5190 = vpop.f32.mrf.mxu0
        %v5191 = vadd.f32 %v5094, %v5190
        %v5192 = vpop.f32.mrf.mxu0
        %5193 = vmatprep.mubr.bf16.mxu0 %v4844
        %5194 = vmatmul.mubr.bf16.gmra.mxu0 %v4843
        %v5195 = vpop.f32.mrf.mxu0
        %v5196 = vadd.f32 %v5099, %v5195
        %v5197 = vpop.f32.mrf.mxu0
        %v5198 = vpop.f32.mrf.mxu0
        %v5199 = vadd.f32 %v5102, %v5198
        %v5200 = vpop.f32.mrf.mxu0
        %5201 = vmatprep.mubr.bf16.mxu0 %v4852
        %5202 = vmatmul.mubr.bf16.gmra.mxu0 %v4851
        %v5203 = vpop.f32.mrf.mxu0
        %v5204 = vadd.f32 %v5107, %v5203
        %v5205 = vpop.f32.mrf.mxu0
        %v5206 = vpop.f32.mrf.mxu0
        %v5207 = vadd.f32 %v5110, %v5206
        %v5208 = vpop.f32.mrf.mxu0
        %5209 = vmatprep.mubr.bf16.mxu0 %v4860
        %5210 = vmatmul.mubr.bf16.gmra.mxu0 %v4859
        %v5211 = vpop.f32.mrf.mxu0
        %v5212 = vadd.f32 %v5115, %v5211
        %v5213 = vpop.f32.mrf.mxu0
        %v5214 = vpop.f32.mrf.mxu0
        %v5215 = vadd.f32 %v5118, %v5214
        %v5216 = vpop.f32.mrf.mxu0
        %5217 = vmatprep.mubr.bf16.mxu0 %v4868
        %5218 = vmatmul.mubr.bf16.gmra.mxu0 %v4867
        %v5219 = vpop.f32.mrf.mxu0
        %v5220 = vadd.f32 %v5123, %v5219
        %v5221 = vpop.f32.mrf.mxu0
        %v5222 = vpop.f32.mrf.mxu0
        %v5223 = vadd.f32 %v5126, %v5222
        %v5224 = vpop.f32.mrf.mxu0
        %5225 = vmatprep.mubr.bf16.mxu0 %v4876
        %5226 = vmatmul.mubr.bf16.gmra.mxu0 %v4875
        %v5227 = vpop.f32.mrf.mxu0
        %v5228 = vadd.f32 %v5131, %v5227
        %v5229 = vpop.f32.mrf.mxu0
        %v5230 = vpop.f32.mrf.mxu0
        %v5231 = vadd.f32 %v5134, %v5230
        %v5232 = vpop.f32.mrf.mxu0
        %5233 = vmatprep.mubr.bf16.mxu0 %v4884
        %5234 = vmatmul.mubr.bf16.gmra.mxu0 %v4883
        %v5235 = vpop.f32.mrf.mxu0
        %v5236 = vadd.f32 %v5139, %v5235
        %v5237 = vpop.f32.mrf.mxu0
        %v5238 = vpop.f32.mrf.mxu0
        %v5239 = vadd.f32 %v5142, %v5238
        %v5240 = vpop.f32.mrf.mxu0
        %5241 = vmatprep.mubr.bf16.mxu0 %v4892
        %5242 = vmatmul.mubr.bf16.gmra.mxu0 %v4891
        %v5243 = vpop.f32.mrf.mxu0
        %v5244 = vadd.f32 %v5147, %v5243
        %v5245 = vpop.f32.mrf.mxu0
        %v5246 = vpop.f32.mrf.mxu0
        %v5247 = vadd.f32 %v5150, %v5246
        %v5248 = vpop.f32.mrf.mxu0
        %5249 = vdwg.mxu0
        %5250 = vmatprep.subr.bf16.mxu0 0
        %5251 = vmatpush1.bf16.msra.mxu0 %v4566
        %5252 = vmatprep.subr.bf16.mxu0 0
        %5253 = vmatpush1.bf16.msra.mxu0 %v4565
        %5254 = vmatprep.subr.bf16.mxu0 0
        %5255 = vmatpush1.bf16.msra.mxu0 %v4564
        %5256 = vmatprep.subr.bf16.mxu0 0
        %5257 = vmatpush1.bf16.msra.mxu0 %v4563
        %5258 = vmatprep.subr.bf16.mxu0 0
        %5259 = vmatpush1.bf16.msra.mxu0 %v4562
        %5260 = vmatprep.subr.bf16.mxu0 0
        %5261 = vmatpush1.bf16.msra.mxu0 %v4561
        %5262 = vmatprep.subr.bf16.mxu0 0
        %5263 = vmatpush1.bf16.msra.mxu0 %v4560
        %5264 = vmatprep.subr.bf16.mxu0 0
        %5265 = vmatpush1.bf16.msra.mxu0 %v4559
        %5266 = vmatprep.subr.bf16.mxu0 0
        %5267 = vmatpush2.bf16.msra.mxu0 %v4574
        %5268 = vmatprep.subr.bf16.mxu0 0
        %5269 = vmatpush2.bf16.msra.mxu0 %v4573
        %5270 = vmatprep.subr.bf16.mxu0 0
        %5271 = vmatpush2.bf16.msra.mxu0 %v4572
        %5272 = vmatprep.subr.bf16.mxu0 0
        %5273 = vmatpush2.bf16.msra.mxu0 %v4571
        %5274 = vmatprep.subr.bf16.mxu0 0
        %5275 = vmatpush2.bf16.msra.mxu0 %v4570
        %5276 = vmatprep.subr.bf16.mxu0 0
        %5277 = vmatpush2.bf16.msra.mxu0 %v4569
        %5278 = vmatprep.subr.bf16.mxu0 0
        %5279 = vmatpush2.bf16.msra.mxu0 %v4568
        %5280 = vmatprep.subr.bf16.mxu0 0
        %5281 = vmatpush2.bf16.msra.mxu0 %v4567
        %5282 = vmatprep.mubr.bf16.mxu0 %v4838
        %5283 = vmatmul.mubr.bf16.gmra.mxu0 %v4837
        %v5284 = vpop.f32.mrf.mxu0
        %v5285 = vadd.f32 %v5188, %v5284
        %v5286 = vpop.f32.mrf.mxu0
        %v5287 = vpop.f32.mrf.mxu0
        %v5288 = vadd.f32 %v5191, %v5287
        %v5289 = vpop.f32.mrf.mxu0
        %5290 = vmatprep.mubr.bf16.mxu0 %v4846
        %5291 = vmatmul.mubr.bf16.gmra.mxu0 %v4845
        %v5292 = vpop.f32.mrf.mxu0
        %v5293 = vadd.f32 %v5196, %v5292
        %v5294 = vpop.f32.mrf.mxu0
        %v5295 = vpop.f32.mrf.mxu0
        %v5296 = vadd.f32 %v5199, %v5295
        %v5297 = vpop.f32.mrf.mxu0
        %5298 = vmatprep.mubr.bf16.mxu0 %v4854
        %5299 = vmatmul.mubr.bf16.gmra.mxu0 %v4853
        %v5300 = vpop.f32.mrf.mxu0
        %v5301 = vadd.f32 %v5204, %v5300
        %v5302 = vpop.f32.mrf.mxu0
        %v5303 = vpop.f32.mrf.mxu0
        %v5304 = vadd.f32 %v5207, %v5303
        %v5305 = vpop.f32.mrf.mxu0
        %5306 = vmatprep.mubr.bf16.mxu0 %v4862
        %5307 = vmatmul.mubr.bf16.gmra.mxu0 %v4861
        %v5308 = vpop.f32.mrf.mxu0
        %v5309 = vadd.f32 %v5212, %v5308
        %v5310 = vpop.f32.mrf.mxu0
        %v5311 = vpop.f32.mrf.mxu0
        %v5312 = vadd.f32 %v5215, %v5311
        %v5313 = vpop.f32.mrf.mxu0
        %5314 = vmatprep.mubr.bf16.mxu0 %v4870
        %5315 = vmatmul.mubr.bf16.gmra.mxu0 %v4869
        %v5316 = vpop.f32.mrf.mxu0
        %v5317 = vadd.f32 %v5220, %v5316
        %v5318 = vpop.f32.mrf.mxu0
        %v5319 = vpop.f32.mrf.mxu0
        %v5320 = vadd.f32 %v5223, %v5319
        %v5321 = vpop.f32.mrf.mxu0
        %5322 = vmatprep.mubr.bf16.mxu0 %v4878
        %5323 = vmatmul.mubr.bf16.gmra.mxu0 %v4877
        %v5324 = vpop.f32.mrf.mxu0
        %v5325 = vadd.f32 %v5228, %v5324
        %v5326 = vpop.f32.mrf.mxu0
        %v5327 = vpop.f32.mrf.mxu0
        %v5328 = vadd.f32 %v5231, %v5327
        %v5329 = vpop.f32.mrf.mxu0
        %5330 = vmatprep.mubr.bf16.mxu0 %v4886
        %5331 = vmatmul.mubr.bf16.gmra.mxu0 %v4885
        %v5332 = vpop.f32.mrf.mxu0
        %v5333 = vadd.f32 %v5236, %v5332
        %v5334 = vpop.f32.mrf.mxu0
        %v5335 = vpop.f32.mrf.mxu0
        %v5336 = vadd.f32 %v5239, %v5335
        %v5337 = vpop.f32.mrf.mxu0
        %5338 = vmatprep.mubr.bf16.mxu0 %v4894
        %5339 = vmatmul.mubr.bf16.gmra.mxu0 %v4893
        %v5340 = vpop.f32.mrf.mxu0
        %v5341 = vadd.f32 %v5244, %v5340
        %v5342 = vpop.f32.mrf.mxu0
        %v5343 = vpop.f32.mrf.mxu0
        %v5344 = vadd.f32 %v5247, %v5343
        %v5345 = vpop.f32.mrf.mxu0
        %5346 = vdwg.mxu0
        %v5347 = vld [vmem:[#allocation3] sm:$0xff]
        %v5348 = vld [vmem:[#allocation3 + $0x8] sm:$0xff]
        %v5349 = vld [vmem:[#allocation3 + $0x10] sm:$0xff]
        %v5350 = vld [vmem:[#allocation3 + $0x18] sm:$0xff]
        %v5351 = vld [vmem:[#allocation3 + $0x20] sm:$0xff]
        %v5352 = vld [vmem:[#allocation3 + $0x28] sm:$0xff]
        %v5353 = vld [vmem:[#allocation3 + $0x30] sm:$0xff]
        %v5354 = vld [vmem:[#allocation3 + $0x38] sm:$0xff]
        %v5355 = vld [vmem:[#allocation3 + $0x40] sm:$0xff]
        %v5356 = vld [vmem:[#allocation3 + $0x48] sm:$0xff]
        %v5357 = vld [vmem:[#allocation3 + $0x50] sm:$0xff]
        %v5358 = vld [vmem:[#allocation3 + $0x58] sm:$0xff]
        %v5359 = vld [vmem:[#allocation3 + $0x60] sm:$0xff]
        %v5360 = vld [vmem:[#allocation3 + $0x68] sm:$0xff]
        %v5361 = vld [vmem:[#allocation3 + $0x70] sm:$0xff]
        %v5362 = vld [vmem:[#allocation3 + $0x78] sm:$0xff]
        %v5363 = vlaneseq
        %v5364 = vshrl.u32 %v5363, 7
        %v5365 = vsub.s32 0, %v5364
        %v5366 = vrot.slane %v4242, %v5365
        %v5367 = vmul.f32 %v5366, %v5347
        %v5368 = vmul.f32 %v5366, %v5348
        %v5369 = vmul.f32 %v5366, %v5349
        %v5370 = vmul.f32 %v5366, %v5350
        %v5371 = vmul.f32 %v5366, %v5351
        %v5372 = vmul.f32 %v5366, %v5352
        %v5373 = vmul.f32 %v5366, %v5353
        %v5374 = vmul.f32 %v5366, %v5354
        %v5375 = vmul.f32 %v5366, %v5355
        %v5376 = vmul.f32 %v5366, %v5356
        %v5377 = vmul.f32 %v5366, %v5357
        %v5378 = vmul.f32 %v5366, %v5358
        %v5379 = vmul.f32 %v5366, %v5359
        %v5380 = vmul.f32 %v5366, %v5360
        %v5381 = vmul.f32 %v5366, %v5361
        %v5382 = vmul.f32 %v5366, %v5362
        %v5383 = vadd.f32 %v5367, %v5285
        %v5384 = vadd.f32 %v5368, %v5288
        %v5385 = vadd.f32 %v5369, %v5293
        %v5386 = vadd.f32 %v5370, %v5296
        %v5387 = vadd.f32 %v5371, %v5301
        %v5388 = vadd.f32 %v5372, %v5304
        %v5389 = vadd.f32 %v5373, %v5309
        %v5390 = vadd.f32 %v5374, %v5312
        %v5391 = vadd.f32 %v5375, %v5317
        %v5392 = vadd.f32 %v5376, %v5320
        %v5393 = vadd.f32 %v5377, %v5325
        %v5394 = vadd.f32 %v5378, %v5328
        %v5395 = vadd.f32 %v5379, %v5333
        %v5396 = vadd.f32 %v5380, %v5336
        %v5397 = vadd.f32 %v5381, %v5341
        %v5398 = vadd.f32 %v5382, %v5344
        %5399 = vst [vmem:[#allocation3] sm:$0xff] %v5383
        %5400 = vst [vmem:[#allocation3 + $0x8] sm:$0xff] %v5384
        %5401 = vst [vmem:[#allocation3 + $0x10] sm:$0xff] %v5385
        %5402 = vst [vmem:[#allocation3 + $0x18] sm:$0xff] %v5386
        %5403 = vst [vmem:[#allocation3 + $0x20] sm:$0xff] %v5387
        %5404 = vst [vmem:[#allocation3 + $0x28] sm:$0xff] %v5388
        %5405 = vst [vmem:[#allocation3 + $0x30] sm:$0xff] %v5389
        %5406 = vst [vmem:[#allocation3 + $0x38] sm:$0xff] %v5390
        %5407 = vst [vmem:[#allocation3 + $0x40] sm:$0xff] %v5391
        %5408 = vst [vmem:[#allocation3 + $0x48] sm:$0xff] %v5392
        %5409 = vst [vmem:[#allocation3 + $0x50] sm:$0xff] %v5393
        %5410 = vst [vmem:[#allocation3 + $0x58] sm:$0xff] %v5394
        %5411 = vst [vmem:[#allocation3 + $0x60] sm:$0xff] %v5395
        %5412 = vst [vmem:[#allocation3 + $0x68] sm:$0xff] %v5396
        %5413 = vst [vmem:[#allocation3 + $0x70] sm:$0xff] %v5397
        %5414 = vst [vmem:[#allocation3 + $0x78] sm:$0xff] %v5398
        %vm5415 = vcmask 8192
        %5416 = vst.msk [vmem:[#allocation2] sm:$0x1] %vm5415, %v2298
        %p5417 = scmp.eq.s32.totalorder %s20, 1
        // Predicated region
        $region64: #{gat_forward.2} parent=54 // pred_check
          %p5418 = pneg %p5417
        $region65: #{gat_forward.2} parent=54 // pred_check_branch
          %5420 = sbr.rel (%p5418) target = $region67
        $region66: #{gat_forward.2} parent=54 // pred_region
          %v5421 = vld [vmem:[#allocation3] sm:$0xff]
          %v5422 = vld [vmem:[#allocation3 + $0x8] sm:$0xff]
          %v5423 = vld [vmem:[#allocation3 + $0x10] sm:$0xff]
          %v5424 = vld [vmem:[#allocation3 + $0x18] sm:$0xff]
          %v5425 = vld [vmem:[#allocation3 + $0x20] sm:$0xff]
          %v5426 = vld [vmem:[#allocation3 + $0x28] sm:$0xff]
          %v5427 = vld [vmem:[#allocation3 + $0x30] sm:$0xff]
          %v5428 = vld [vmem:[#allocation3 + $0x38] sm:$0xff]
          %v5429 = vld [vmem:[#allocation3 + $0x40] sm:$0xff]
          %v5430 = vld [vmem:[#allocation3 + $0x48] sm:$0xff]
          %v5431 = vld [vmem:[#allocation3 + $0x50] sm:$0xff]
          %v5432 = vld [vmem:[#allocation3 + $0x58] sm:$0xff]
          %v5433 = vld [vmem:[#allocation3 + $0x60] sm:$0xff]
          %v5434 = vld [vmem:[#allocation3 + $0x68] sm:$0xff]
          %v5435 = vld [vmem:[#allocation3 + $0x70] sm:$0xff]
          %v5436 = vld [vmem:[#allocation3 + $0x78] sm:$0xff]
          %v5437 = vadd.f32 %v5421, 1e-16
          %v5438 = vadd.f32 %v5422, 1e-16
          %v5439 = vadd.f32 %v5423, 1e-16
          %v5440 = vadd.f32 %v5424, 1e-16
          %v5441 = vadd.f32 %v5425, 1e-16
          %v5442 = vadd.f32 %v5426, 1e-16
          %v5443 = vadd.f32 %v5427, 1e-16
          %v5444 = vadd.f32 %v5428, 1e-16
          %v5445 = vadd.f32 %v5429, 1e-16
          %v5446 = vadd.f32 %v5430, 1e-16
          %v5447 = vadd.f32 %v5431, 1e-16
          %v5448 = vadd.f32 %v5432, 1e-16
          %v5449 = vadd.f32 %v5433, 1e-16
          %v5450 = vadd.f32 %v5434, 1e-16
          %v5451 = vadd.f32 %v5435, 1e-16
          %v5452 = vadd.f32 %v5436, 1e-16
          %v5453 = vrcp.pop %v5437
          %v5454 = vmul.f32 1.0, %v5453
          %v5455 = vrcp.pop %v5438
          %v5456 = vmul.f32 1.0, %v5455
          %v5457 = vrcp.pop %v5439
          %v5458 = vmul.f32 1.0, %v5457
          %v5459 = vrcp.pop %v5440
          %v5460 = vmul.f32 1.0, %v5459
          %v5461 = vrcp.pop %v5441
          %v5462 = vmul.f32 1.0, %v5461
          %v5463 = vrcp.pop %v5442
          %v5464 = vmul.f32 1.0, %v5463
          %v5465 = vrcp.pop %v5443
          %v5466 = vmul.f32 1.0, %v5465
          %v5467 = vrcp.pop %v5444
          %v5468 = vmul.f32 1.0, %v5467
          %v5469 = vrcp.pop %v5445
          %v5470 = vmul.f32 1.0, %v5469
          %v5471 = vrcp.pop %v5446
          %v5472 = vmul.f32 1.0, %v5471
          %v5473 = vrcp.pop %v5447
          %v5474 = vmul.f32 1.0, %v5473
          %v5475 = vrcp.pop %v5448
          %v5476 = vmul.f32 1.0, %v5475
          %v5477 = vrcp.pop %v5449
          %v5478 = vmul.f32 1.0, %v5477
          %v5479 = vrcp.pop %v5450
          %v5480 = vmul.f32 1.0, %v5479
          %v5481 = vrcp.pop %v5451
          %v5482 = vmul.f32 1.0, %v5481
          %v5483 = vrcp.pop %v5452
          %v5484 = vmul.f32 1.0, %v5483
          %5501 = vrot.lane.b32.xlu0 %v5454, 112
          %v5502 = vpop.permute.xlu0 %5501
          %5503 = vrot.lane.b32.xlu0 %v5456, 112
          %v5504 = vpop.permute.xlu0 %5503
          %5505 = vrot.lane.b32.xlu0 %v5458, 112
          %v5506 = vpop.permute.xlu0 %5505
          %5507 = vrot.lane.b32.xlu0 %v5460, 112
          %v5508 = vpop.permute.xlu0 %5507
          %5509 = vrot.lane.b32.xlu0 %v5462, 112
          %v5510 = vpop.permute.xlu0 %5509
          %5511 = vrot.lane.b32.xlu0 %v5464, 112
          %v5512 = vpop.permute.xlu0 %5511
          %5513 = vrot.lane.b32.xlu0 %v5466, 112
          %v5514 = vpop.permute.xlu0 %5513
          %5515 = vrot.lane.b32.xlu0 %v5468, 112
          %v5516 = vpop.permute.xlu0 %5515
          %5517 = vrot.lane.b32.xlu0 %v5470, 112
          %v5518 = vpop.permute.xlu0 %5517
          %5519 = vrot.lane.b32.xlu0 %v5472, 112
          %v5520 = vpop.permute.xlu0 %5519
          %5521 = vrot.lane.b32.xlu0 %v5474, 112
          %v5522 = vpop.permute.xlu0 %5521
          %5523 = vrot.lane.b32.xlu0 %v5476, 112
          %v5524 = vpop.permute.xlu0 %5523
          %5525 = vrot.lane.b32.xlu0 %v5478, 112
          %v5526 = vpop.permute.xlu0 %5525
          %5527 = vrot.lane.b32.xlu0 %v5480, 112
          %v5528 = vpop.permute.xlu0 %5527
          %5529 = vrot.lane.b32.xlu0 %v5482, 112
          %v5530 = vpop.permute.xlu0 %5529
          %5531 = vrot.lane.b32.xlu0 %v5484, 112
          %v5532 = vpop.permute.xlu0 %5531
          %v5533 = vsel %vm3206, %v5502, 0
          %v5535 = vsel %vm3206, %v5504, 0
          %v5537 = vsel %vm3206, %v5506, 0
          %v5539 = vsel %vm3206, %v5508, 0
          %v5541 = vsel %vm3206, %v5510, 0
          %v5543 = vsel %vm3206, %v5512, 0
          %v5545 = vsel %vm3206, %v5514, 0
          %v5547 = vsel %vm3206, %v5516, 0
          %v5549 = vsel %vm3206, %v5518, 0
          %v5551 = vsel %vm3206, %v5520, 0
          %v5553 = vsel %vm3206, %v5522, 0
          %v5555 = vsel %vm3206, %v5524, 0
          %v5557 = vsel %vm3206, %v5526, 0
          %v5559 = vsel %vm3206, %v5528, 0
          %v5561 = vsel %vm3206, %v5530, 0
          %v5563 = vsel %vm3206, %v5532, 0
          %5565 = vmatprep.subr.mxu0 0.0
          %5566 = vmatpush1.msra.mxu0 0.0
          %5567 = vmatprep.subr.mxu0 0.0
          %5568 = vmatpush1.msra.mxu0 0.0
          %5569 = vmatprep.subr.mxu0 0.0
          %5570 = vmatpush1.msra.mxu0 0.0
          %5571 = vmatprep.subr.mxu0 0.0
          %5572 = vmatpush1.msra.mxu0 0.0
          %5573 = vmatprep.subr.mxu0 0.0
          %5574 = vmatpush1.msra.mxu0 0.0
          %5575 = vmatprep.subr.mxu0 0.0
          %5576 = vmatpush1.msra.mxu0 0.0
          %5577 = vmatprep.subr.mxu0 0.0
          %5578 = vmatpush1.msra.mxu0 0.0
          %5579 = vmatprep.subr.mxu0 0.0
          %5580 = vmatpush1.msra.mxu0 0.0
          %5581 = vmatprep.subr.mxu0 0.0
          %5582 = vmatpush1.msra.mxu0 0.0
          %5583 = vmatprep.subr.mxu0 0.0
          %5584 = vmatpush1.msra.mxu0 0.0
          %5585 = vmatprep.subr.mxu0 0.0
          %5586 = vmatpush1.msra.mxu0 0.0
          %5587 = vmatprep.subr.mxu0 0.0
          %5588 = vmatpush1.msra.mxu0 0.0
          %5589 = vmatprep.subr.mxu0 0.0
          %5590 = vmatpush1.msra.mxu0 0.0
          %5591 = vmatprep.subr.mxu0 0.0
          %5592 = vmatpush1.msra.mxu0 0.0
          %5593 = vmatprep.subr.mxu0 0.0
          %5594 = vmatpush1.msra.mxu0 0.0
          %5595 = vmatprep.subr.mxu0 0.0
          %5596 = vmatpush1.msra.mxu0 %v3465
          %5597 = vmatprep.subr.mxu0 0.0
          %5598 = vmatpush2.msra.mxu0 0.0
          %5599 = vmatprep.subr.mxu0 0.0
          %5600 = vmatpush2.msra.mxu0 0.0
          %5601 = vmatprep.subr.mxu0 0.0
          %5602 = vmatpush2.msra.mxu0 0.0
          %5603 = vmatprep.subr.mxu0 0.0
          %5604 = vmatpush2.msra.mxu0 0.0
          %5605 = vmatprep.subr.mxu0 0.0
          %5606 = vmatpush2.msra.mxu0 0.0
          %5607 = vmatprep.subr.mxu0 0.0
          %5608 = vmatpush2.msra.mxu0 0.0
          %5609 = vmatprep.subr.mxu0 0.0
          %5610 = vmatpush2.msra.mxu0 0.0
          %5611 = vmatprep.subr.mxu0 0.0
          %5612 = vmatpush2.msra.mxu0 0.0
          %5613 = vmatprep.subr.mxu0 0.0
          %5614 = vmatpush2.msra.mxu0 0.0
          %5615 = vmatprep.subr.mxu0 0.0
          %5616 = vmatpush2.msra.mxu0 0.0
          %5617 = vmatprep.subr.mxu0 0.0
          %5618 = vmatpush2.msra.mxu0 0.0
          %5619 = vmatprep.subr.mxu0 0.0
          %5620 = vmatpush2.msra.mxu0 0.0
          %5621 = vmatprep.subr.mxu0 0.0
          %5622 = vmatpush2.msra.mxu0 0.0
          %5623 = vmatprep.subr.mxu0 0.0
          %5624 = vmatpush2.msra.mxu0 0.0
          %5625 = vmatprep.subr.mxu0 0.0
          %5626 = vmatpush2.msra.mxu0 0.0
          %5627 = vmatprep.subr.mxu0 0.0
          %5628 = vmatpush2.msra.mxu0 0.0
          %5629 = vmatprep.mubr.f32.mxu0 0.0
          %5630 = vmatmul.mubr.f32.gmra.mxu0 %v5533
          %v5631 = vpop.f32.mrf.mxu0
          %v5632 = vadd.f32 0.0, %v5631
          %v5633 = vpop.f32.mrf.mxu0
          %5634 = vmatprep.mubr.f32.mxu0 0.0
          %5635 = vmatmul.mubr.f32.gmra.mxu0 %v5535
          %v5636 = vpop.f32.mrf.mxu0
          %v5637 = vadd.f32 0.0, %v5636
          %v5638 = vpop.f32.mrf.mxu0
          %5639 = vmatprep.mubr.f32.mxu0 0.0
          %5640 = vmatmul.mubr.f32.gmra.mxu0 %v5537
          %v5641 = vpop.f32.mrf.mxu0
          %v5642 = vadd.f32 0.0, %v5641
          %v5643 = vpop.f32.mrf.mxu0
          %5644 = vmatprep.mubr.f32.mxu0 0.0
          %5645 = vmatmul.mubr.f32.gmra.mxu0 %v5539
          %v5646 = vpop.f32.mrf.mxu0
          %v5647 = vadd.f32 0.0, %v5646
          %v5648 = vpop.f32.mrf.mxu0
          %5649 = vmatprep.mubr.f32.mxu0 0.0
          %5650 = vmatmul.mubr.f32.gmra.mxu0 %v5541
          %v5651 = vpop.f32.mrf.mxu0
          %v5652 = vadd.f32 0.0, %v5651
          %v5653 = vpop.f32.mrf.mxu0
          %5654 = vmatprep.mubr.f32.mxu0 0.0
          %5655 = vmatmul.mubr.f32.gmra.mxu0 %v5543
          %v5656 = vpop.f32.mrf.mxu0
          %v5657 = vadd.f32 0.0, %v5656
          %v5658 = vpop.f32.mrf.mxu0
          %5659 = vmatprep.mubr.f32.mxu0 0.0
          %5660 = vmatmul.mubr.f32.gmra.mxu0 %v5545
          %v5661 = vpop.f32.mrf.mxu0
          %v5662 = vadd.f32 0.0, %v5661
          %v5663 = vpop.f32.mrf.mxu0
          %5664 = vmatprep.mubr.f32.mxu0 0.0
          %5665 = vmatmul.mubr.f32.gmra.mxu0 %v5547
          %v5666 = vpop.f32.mrf.mxu0
          %v5667 = vadd.f32 0.0, %v5666
          %v5668 = vpop.f32.mrf.mxu0
          %5669 = vmatprep.mubr.f32.mxu0 0.0
          %5670 = vmatmul.mubr.f32.gmra.mxu0 %v5549
          %v5671 = vpop.f32.mrf.mxu0
          %v5672 = vadd.f32 0.0, %v5671
          %v5673 = vpop.f32.mrf.mxu0
          %5674 = vmatprep.mubr.f32.mxu0 0.0
          %5675 = vmatmul.mubr.f32.gmra.mxu0 %v5551
          %v5676 = vpop.f32.mrf.mxu0
          %v5677 = vadd.f32 0.0, %v5676
          %v5678 = vpop.f32.mrf.mxu0
          %5679 = vmatprep.mubr.f32.mxu0 0.0
          %5680 = vmatmul.mubr.f32.gmra.mxu0 %v5553
          %v5681 = vpop.f32.mrf.mxu0
          %v5682 = vadd.f32 0.0, %v5681
          %v5683 = vpop.f32.mrf.mxu0
          %5684 = vmatprep.mubr.f32.mxu0 0.0
          %5685 = vmatmul.mubr.f32.gmra.mxu0 %v5555
          %v5686 = vpop.f32.mrf.mxu0
          %v5687 = vadd.f32 0.0, %v5686
          %v5688 = vpop.f32.mrf.mxu0
          %5689 = vmatprep.mubr.f32.mxu0 0.0
          %5690 = vmatmul.mubr.f32.gmra.mxu0 %v5557
          %v5691 = vpop.f32.mrf.mxu0
          %v5692 = vadd.f32 0.0, %v5691
          %v5693 = vpop.f32.mrf.mxu0
          %5694 = vmatprep.mubr.f32.mxu0 0.0
          %5695 = vmatmul.mubr.f32.gmra.mxu0 %v5559
          %v5696 = vpop.f32.mrf.mxu0
          %v5697 = vadd.f32 0.0, %v5696
          %v5698 = vpop.f32.mrf.mxu0
          %5699 = vmatprep.mubr.f32.mxu0 0.0
          %5700 = vmatmul.mubr.f32.gmra.mxu0 %v5561
          %v5701 = vpop.f32.mrf.mxu0
          %v5702 = vadd.f32 0.0, %v5701
          %v5703 = vpop.f32.mrf.mxu0
          %5704 = vmatprep.mubr.f32.mxu0 0.0
          %5705 = vmatmul.mubr.f32.gmra.mxu0 %v5563
          %v5706 = vpop.f32.mrf.mxu0
          %v5707 = vadd.f32 0.0, %v5706
          %v5708 = vpop.f32.mrf.mxu0
          %5709 = vdwg.mxu0
          %v5710 = vmul.f32 %v5421, %v5632
          %v5711 = vmul.f32 %v5422, %v5637
          %v5712 = vmul.f32 %v5423, %v5642
          %v5713 = vmul.f32 %v5424, %v5647
          %v5714 = vmul.f32 %v5425, %v5652
          %v5715 = vmul.f32 %v5426, %v5657
          %v5716 = vmul.f32 %v5427, %v5662
          %v5717 = vmul.f32 %v5428, %v5667
          %v5718 = vmul.f32 %v5429, %v5672
          %v5719 = vmul.f32 %v5430, %v5677
          %v5720 = vmul.f32 %v5431, %v5682
          %v5721 = vmul.f32 %v5432, %v5687
          %v5722 = vmul.f32 %v5433, %v5692
          %v5723 = vmul.f32 %v5434, %v5697
          %v5724 = vmul.f32 %v5435, %v5702
          %v5725 = vmul.f32 %v5436, %v5707
          %vm5726 = vcmp.gt.f32.partialorder %v5710, 0.0
          %vm5727 = vcmp.gt.f32.partialorder %v5711, 0.0
          %vm5728 = vcmp.gt.f32.partialorder %v5712, 0.0
          %vm5729 = vcmp.gt.f32.partialorder %v5713, 0.0
          %vm5730 = vcmp.gt.f32.partialorder %v5714, 0.0
          %vm5731 = vcmp.gt.f32.partialorder %v5715, 0.0
          %vm5732 = vcmp.gt.f32.partialorder %v5716, 0.0
          %vm5733 = vcmp.gt.f32.partialorder %v5717, 0.0
          %vm5734 = vcmp.gt.f32.partialorder %v5718, 0.0
          %vm5735 = vcmp.gt.f32.partialorder %v5719, 0.0
          %vm5736 = vcmp.gt.f32.partialorder %v5720, 0.0
          %vm5737 = vcmp.gt.f32.partialorder %v5721, 0.0
          %vm5738 = vcmp.gt.f32.partialorder %v5722, 0.0
          %vm5739 = vcmp.gt.f32.partialorder %v5723, 0.0
          %vm5740 = vcmp.gt.f32.partialorder %v5724, 0.0
          %vm5741 = vcmp.gt.f32.partialorder %v5725, 0.0
          %v5742 = vmin.f32 %v5710, 0.0
          %v5743 = vmin.f32 %v5711, 0.0
          %v5744 = vmin.f32 %v5712, 0.0
          %v5745 = vmin.f32 %v5713, 0.0
          %v5746 = vmin.f32 %v5714, 0.0
          %v5747 = vmin.f32 %v5715, 0.0
          %v5748 = vmin.f32 %v5716, 0.0
          %v5749 = vmin.f32 %v5717, 0.0
          %v5750 = vmin.f32 %v5718, 0.0
          %v5751 = vmin.f32 %v5719, 0.0
          %v5752 = vmin.f32 %v5720, 0.0
          %v5753 = vmin.f32 %v5721, 0.0
          %v5754 = vmin.f32 %v5722, 0.0
          %v5755 = vmin.f32 %v5723, 0.0
          %v5756 = vmin.f32 %v5724, 0.0
          %v5757 = vmin.f32 %v5725, 0.0
          %v5758 = vmul.f32 %v5742, 1.442695
          %v5759 = vpow.pop %v5758
          %v5760 = vmul.f32 %v5743, 1.442695
          %v5761 = vpow.pop %v5760
          %v5762 = vmul.f32 %v5744, 1.442695
          %v5763 = vpow.pop %v5762
          %v5764 = vmul.f32 %v5745, 1.442695
          %v5765 = vpow.pop %v5764
          %v5766 = vmul.f32 %v5746, 1.442695
          %v5767 = vpow.pop %v5766
          %v5768 = vmul.f32 %v5747, 1.442695
          %v5769 = vpow.pop %v5768
          %v5770 = vmul.f32 %v5748, 1.442695
          %v5771 = vpow.pop %v5770
          %v5772 = vmul.f32 %v5749, 1.442695
          %v5773 = vpow.pop %v5772
          %v5774 = vmul.f32 %v5750, 1.442695
          %v5775 = vpow.pop %v5774
          %v5776 = vmul.f32 %v5751, 1.442695
          %v5777 = vpow.pop %v5776
          %v5778 = vmul.f32 %v5752, 1.442695
          %v5779 = vpow.pop %v5778
          %v5780 = vmul.f32 %v5753, 1.442695
          %v5781 = vpow.pop %v5780
          %v5782 = vmul.f32 %v5754, 1.442695
          %v5783 = vpow.pop %v5782
          %v5784 = vmul.f32 %v5755, 1.442695
          %v5785 = vpow.pop %v5784
          %v5786 = vmul.f32 %v5756, 1.442695
          %v5787 = vpow.pop %v5786
          %v5788 = vmul.f32 %v5757, 1.442695
          %v5789 = vpow.pop %v5788
          %v5790 = vsub.f32 %v5759, 1.0
          %v5791 = vsub.f32 %v5761, 1.0
          %v5792 = vsub.f32 %v5763, 1.0
          %v5793 = vsub.f32 %v5765, 1.0
          %v5794 = vsub.f32 %v5767, 1.0
          %v5795 = vsub.f32 %v5769, 1.0
          %v5796 = vsub.f32 %v5771, 1.0
          %v5797 = vsub.f32 %v5773, 1.0
          %v5798 = vsub.f32 %v5775, 1.0
          %v5799 = vsub.f32 %v5777, 1.0
          %v5800 = vsub.f32 %v5779, 1.0
          %v5801 = vsub.f32 %v5781, 1.0
          %v5802 = vsub.f32 %v5783, 1.0
          %v5803 = vsub.f32 %v5785, 1.0
          %v5804 = vsub.f32 %v5787, 1.0
          %v5805 = vsub.f32 %v5789, 1.0
          %v5806 = vsel %vm5726, %v5710, %v5790
          %v5807 = vsel %vm5727, %v5711, %v5791
          %v5808 = vsel %vm5728, %v5712, %v5792
          %v5809 = vsel %vm5729, %v5713, %v5793
          %v5810 = vsel %vm5730, %v5714, %v5794
          %v5811 = vsel %vm5731, %v5715, %v5795
          %v5812 = vsel %vm5732, %v5716, %v5796
          %v5813 = vsel %vm5733, %v5717, %v5797
          %v5814 = vsel %vm5734, %v5718, %v5798
          %v5815 = vsel %vm5735, %v5719, %v5799
          %v5816 = vsel %vm5736, %v5720, %v5800
          %v5817 = vsel %vm5737, %v5721, %v5801
          %v5818 = vsel %vm5738, %v5722, %v5802
          %v5819 = vsel %vm5739, %v5723, %v5803
          %v5820 = vsel %vm5740, %v5724, %v5804
          %v5821 = vsel %vm5741, %v5725, %v5805
          %5822 = vst [vmem:[%s384] sm:$0xff] %v5806
          %5823 = vst [vmem:[%s384 + $0x8] sm:$0xff] %v5807
          %5824 = vst [vmem:[%s384 + $0x10] sm:$0xff] %v5808
          %5825 = vst [vmem:[%s384 + $0x18] sm:$0xff] %v5809
          %5826 = vst [vmem:[%s384 + $0x20] sm:$0xff] %v5810
          %5827 = vst [vmem:[%s384 + $0x28] sm:$0xff] %v5811
          %5828 = vst [vmem:[%s384 + $0x30] sm:$0xff] %v5812
          %5829 = vst [vmem:[%s384 + $0x38] sm:$0xff] %v5813
          %5830 = vst [vmem:[%s384 + $0x40] sm:$0xff] %v5814
          %5831 = vst [vmem:[%s384 + $0x48] sm:$0xff] %v5815
          %5832 = vst [vmem:[%s384 + $0x50] sm:$0xff] %v5816
          %5833 = vst [vmem:[%s384 + $0x58] sm:$0xff] %v5817
          %5834 = vst [vmem:[%s384 + $0x60] sm:$0xff] %v5818
          %5835 = vst [vmem:[%s384 + $0x68] sm:$0xff] %v5819
          %5836 = vst [vmem:[%s384 + $0x70] sm:$0xff] %v5820
          %5837 = vst [vmem:[%s384 + $0x78] sm:$0xff] %v5821
        $region67: #{gat_forward.2} parent=54 // pred_fallthru
          _
        %s5838 = smul.u32 16, %s19
        %p5839 = scmp.lt.s32.totalorder %s5838, 31
        %s5840 = scalar_select %p5839, %s5838, 31
        %s5841 = smul.addr %s5840, 8
        %s5842 = scalar_lea.vmem %s4, %s5841
        // Predicated region
        $region68: #{gat_forward.2} parent=54 // pred_check
          %p5843 = pneg %p141
        $region69: #{gat_forward.2} parent=54 // pred_check_branch
          %5845 = sbr.rel (%p5843) target = $region71
        $region70: #{gat_forward.2} parent=54 // pred_region
          %s5846 = smul.u32 16, %s19
        $region71: #{gat_forward.2} parent=54 // pred_fallthru
          _
      $region55: #{gat_forward.2} parent=5 // pred_fallthru
        _
      %p5847 = scmp.le.s32.totalorder 2, %s10
      // Predicated region
      $region72: #{gat_forward.2} parent=5 // pred_check
        %p5848 = pneg %p5847
      $region73: #{gat_forward.2} parent=5 // pred_check_branch
        %5850 = sbr.rel (%p5848) target = $region75
      $region74: #{gat_forward.2} parent=5 // pred_region
        %s5851 = ssub.s32 %s10, 2
        // Predicated region
        $region76: #{gat_forward.2} parent=74 // pred_check
          %p5852 = pneg %p147
        $region77: #{gat_forward.2} parent=74 // pred_check_branch
          %5854 = sbr.rel (%p5852) target = $region79
        $region78: #{gat_forward.2} parent=74 // pred_region
          %s5855 = smul.u32 16, %s21
          %p5856 = scmp.lt.s32.totalorder %s5855, 31
          %s5857 = scalar_select %p5856, %s5855, 31
          %s5858 = smul.addr %s5857, 8
          %s5859 = scalar_lea.vmem %s4, %s5858
        $region79: #{gat_forward.2} parent=74 // pred_fallthru
          _
      $region75: #{gat_forward.2} parent=5 // pred_fallthru
        _
    $region6: #{gat_forward.2} parent=1 // loop_footer
      %s14 = sadd.s32 1, %s10
    $region7: #{gat_forward.2} parent=1 // loop_footer_branch
      %9 = sbr.rel target = $region3
    $region8: #{gat_forward.2} parent=1 // loop_exit
      _

// kernel: gat_forward.3
$region0: #{gat_forward.3}
  #allocation0 [shape = 'u32[]', space=smem, size = 0x4, offset = 0x4, fixed_abs, tag = 'smem constant byte address 0x4 - core index']
  #allocation1 [shape = 'u32[144,128]{1,0:T(1,128)}', space=vmem, size = 0x12000, scoped, tag = 'internal scratch']
  #allocation2 [shape = 'f32[1,1]{1,0:T(1,128)}', space=vmem, size = 0x200, scoped, tag = 'scratch operand']
  #allocation3 [shape = 'f32[128,128]{1,0:T(8,128)}', space=vmem, size = 0x10000, scoped, tag = 'scratch operand']
  %s0 = inlined_call_operand.vmem [shape: bf16[256,2048], index: 0, kind: input, shape index: {}]
  %s1 = inlined_call_operand.vmem [shape: f32[2048,48], index: 1, kind: input, shape index: {}]
  %s2 = inlined_call_operand.vmem [shape: f32[48,128], index: 2, kind: input, shape index: {}]
  %s3 = inlined_call_operand.vmem [shape: f32[1,128], index: 3, kind: input, shape index: {}]
  %s4 = inlined_call_operand.vmem [shape: f32[256,128], index: 4, kind: output, shape index: {}]
  %s5 = sld [smem:[#allocation0]]
  $region80: #{gat_forward.3} parent=0
    _
  %s7 = ssub.s32 1, %s5
  %s8 = scalar_select 0, %s7, %s5
  $region1: #{gat_forward.3} parent=0
    #allocation4 [shape = 'u8[524288]{0}', space=vmem, size = 0x80000, scoped, tag = 'input window, operand 0']
    loop: start=0, step=1, limit=6
    $region2: #{gat_forward.3} parent=1 // loop_pre_header
      _
    $region3: #{gat_forward.3} parent=1 // loop_header
      %s10 = sphi 0, %s14
      %p11 = scmp.ge.s32.totalorder %s10, 6
      %s17 = sphi 0, %s29
      %s18 = sphi 0, %s25
      %s19 = sphi 0, %s17
      %s20 = sphi 0, %s18
      %s21 = sphi 0, %s19
      %s22 = sphi 0, %s20
      %s34 = sphi 0, %s36
      %s37 = sphi 0, %s34
      %s38 = sphi 0, %s37
      %s54 = sphi 0, %s38
      %s60 = sphi 0, %s62
      %s63 = sphi 0, %s60
      %s64 = sphi 0, %s63
      %s80 = sphi 0, %s64
      %s84 = sphi 0, %s84
      %s86 = sphi 0, %s84
      %s87 = sphi 0, %s86
      %s101 = sphi 0, %s87
      %s105 = sphi 0, %s105
      %s107 = sphi 0, %s105
      %s108 = sphi 0, %s107
      %s122 = sphi 0, %s108
      %s128 = sphi 0, %s130
      %s131 = sphi 0, %s128
      %s132 = sphi 0, %s131
      %s148 = sphi 0, %s132
    $region4: #{gat_forward.3} parent=1 // loop_header_branch
      %13 = sbr.rel (%p11) target = $region8
    $region5: #{gat_forward.3} parent=1 // loop_body
      %s15 = ssub.s32 %s10, 1
      %s16 = ssub.s32 %s10, 2
      %s23 = sadd.s32 1, %s18
      %p24 = scmp.ge.s32.totalorder %s23, 2
      %s25 = scalar_select %p24, 0, %s23
      %s26 = sadd.s32 1, %s17
      %s27 = scalar_select %p24, %s26, %s17
      %p28 = scmp.ge.s32.totalorder %s27, 2
      %s29 = scalar_select %p28, 0, %s27
      %s30 = ssub.s32 %s17, %s29
      %s31 = ssub.s32 %s18, %s25
      %s32 = sor.u32 %s30, %s31
      %p33 = scmp.eq.s32.totalorder %s32, 0
      %s35 = sadd.s32 %s34, 1
      %s36 = scalar_select %p33, %s34, %s35
      %p39 = pneg %p33
      %p40 = scmp.eq.s32.totalorder %s10, 3
      %p41 = por %p39, %p40
      %p42 = scmp.ne.s32.totalorder %s34, %s37
      %p43 = scmp.eq.s32.totalorder %s10, 0
      %p44 = por %p42, %p43
      %p45 = scmp.ne.s32.totalorder %s34, %s37
      %p46 = scmp.eq.s32.totalorder %s15, 3
      %p47 = por %p45, %p46
      %p48 = scmp.ne.s32.totalorder %s37, %s38
      %p49 = scmp.eq.s32.totalorder %s15, 0
      %p50 = por %p48, %p49
      %p51 = scmp.ne.s32.totalorder %s37, %s38
      %p52 = scmp.eq.s32.totalorder %s16, 3
      %p53 = por %p51, %p52
      %p55 = scmp.ne.s32.totalorder %s38, %s54
      %p56 = scmp.eq.s32.totalorder %s16, 0
      %p57 = por %p55, %p56
      %s58 = ssub.s32 %s18, %s25
      %p59 = scmp.eq.s32.totalorder %s58, 0
      %s61 = sadd.s32 %s60, 1
      %s62 = scalar_select %p59, %s60, %s61
      %p65 = pneg %p59
      %p66 = scmp.eq.s32.totalorder %s10, 3
      %p67 = por %p65, %p66
      %p68 = scmp.ne.s32.totalorder %s60, %s63
      %p69 = scmp.eq.s32.totalorder %s10, 0
      %p70 = por %p68, %p69
      %p71 = scmp.ne.s32.totalorder %s60, %s63
      %p72 = scmp.eq.s32.totalorder %s15, 3
      %p73 = por %p71, %p72
      %p74 = scmp.ne.s32.totalorder %s63, %s64
      %p75 = scmp.eq.s32.totalorder %s15, 0
      %p76 = por %p74, %p75
      %p77 = scmp.ne.s32.totalorder %s63, %s64
      %p78 = scmp.eq.s32.totalorder %s16, 3
      %p79 = por %p77, %p78
      %p81 = scmp.ne.s32.totalorder %s64, %s80
      %p82 = scmp.eq.s32.totalorder %s16, 0
      %p83 = por %p81, %p82
      %s85 = sadd.s32 %s84, 1
      %p88 = scmp.eq.s32.totalorder %s10, 3
      %p89 = scmp.ne.s32.totalorder %s84, %s86
      %p90 = scmp.eq.s32.totalorder %s10, 0
      %p91 = por %p89, %p90
      %p92 = scmp.ne.s32.totalorder %s84, %s86
      %p93 = scmp.eq.s32.totalorder %s15, 3
      %p94 = por %p92, %p93
      %p95 = scmp.ne.s32.totalorder %s86, %s87
      %p96 = scmp.eq.s32.totalorder %s15, 0
      %p97 = por %p95, %p96
      %p98 = scmp.ne.s32.totalorder %s86, %s87
      %p99 = scmp.eq.s32.totalorder %s16, 3
      %p100 = por %p98, %p99
      %p102 = scmp.ne.s32.totalorder %s87, %s101
      %p103 = scmp.eq.s32.totalorder %s16, 0
      %p104 = por %p102, %p103
      %s106 = sadd.s32 %s105, 1
      %p109 = scmp.eq.s32.totalorder %s10, 3
      %p110 = scmp.ne.s32.totalorder %s105, %s107
      %p111 = scmp.eq.s32.totalorder %s10, 0
      %p112 = por %p110, %p111
      %p113 = scmp.ne.s32.totalorder %s105, %s107
      %p114 = scmp.eq.s32.totalorder %s15, 3
      %p115 = por %p113, %p114
      %p116 = scmp.ne.s32.totalorder %s107, %s108
      %p117 = scmp.eq.s32.totalorder %s15, 0
      %p118 = por %p116, %p117
      %p119 = scmp.ne.s32.totalorder %s107, %s108
      %p120 = scmp.eq.s32.totalorder %s16, 3
      %p121 = por %p119, %p120
      %p123 = scmp.ne.s32.totalorder %s108, %s122
      %p124 = scmp.eq.s32.totalorder %s16, 0
      %p125 = por %p123, %p124
      %s126 = ssub.s32 %s17, %s29
      %p127 = scmp.eq.s32.totalorder %s126, 0
      %s129 = sadd.s32 %s128, 1
      %s130 = scalar_select %p127, %s128, %s129
      %p133 = pneg %p127
      %p134 = scmp.eq.s32.totalorder %s10, 3
      %p135 = por %p133, %p134
      %p136 = scmp.ne.s32.totalorder %s128, %s131
      %p137 = scmp.eq.s32.totalorder %s10, 0
      %p138 = por %p136, %p137
      %p139 = scmp.ne.s32.totalorder %s128, %s131
      %p140 = scmp.eq.s32.totalorder %s15, 3
      %p141 = por %p139, %p140
      %p142 = scmp.ne.s32.totalorder %s131, %s132
      %p143 = scmp.eq.s32.totalorder %s15, 0
      %p144 = por %p142, %p143
      %p145 = scmp.ne.s32.totalorder %s131, %s132
      %p146 = scmp.eq.s32.totalorder %s16, 3
      %p147 = por %p145, %p146
      %p149 = scmp.ne.s32.totalorder %s132, %s148
      %p150 = scmp.eq.s32.totalorder %s16, 0
      %p151 = por %p149, %p150
      %p152 = scmp.le.s32.totalorder 1, %s10
      %p153 = scmp.lt.s32.totalorder %s10, 5
      %p154 = pnand %p152, %p153
      %p155 = pneg %p154
      // Predicated region
      $region9: #{gat_forward.3} parent=5 // pred_check
        _
      $region10: #{gat_forward.3} parent=5 // pred_check_branch
        %157 = sbr.rel (%p154) target = $region12
      $region11: #{gat_forward.3} parent=5 // pred_region
        %s158 = ssub.s32 %s10, 1
        // Predicated region
        $region13: #{gat_forward.3} parent=11 // pred_check
          %p159 = pneg %p97
        $region14: #{gat_forward.3} parent=11 // pred_check_branch
          %161 = sbr.rel (%p159) target = $region16
        $region15: #{gat_forward.3} parent=11 // pred_region
          _
        $region16: #{gat_forward.3} parent=11 // pred_fallthru
          _
        // Predicated region
        $region17: #{gat_forward.3} parent=11 // pred_check
          %p162 = pneg %p118
        $region18: #{gat_forward.3} parent=11 // pred_check_branch
          %164 = sbr.rel (%p162) target = $region20
        $region19: #{gat_forward.3} parent=11 // pred_region
          _
        $region20: #{gat_forward.3} parent=11 // pred_fallthru
          _
      $region12: #{gat_forward.3} parent=5 // pred_fallthru
        _
      %p165 = scmp.lt.s32.totalorder %s10, 4
      // Predicated region
      $region21: #{gat_forward.3} parent=5 // pred_check
        %p166 = pneg %p165
      $region22: #{gat_forward.3} parent=5 // pred_check_branch
        %168 = sbr.rel (%p166) target = $region24
      $region23: #{gat_forward.3} parent=5 // pred_region
        // Predicated region
        $region25: #{gat_forward.3} parent=23 // pred_check
          %p169 = pneg %p44
        $region26: #{gat_forward.3} parent=23 // pred_check_branch
          %171 = sbr.rel (%p169) target = $region28
        $region27: #{gat_forward.3} parent=23 // pred_region
          %s172 = sand.u32 %s34, 1
          %s173 = sand.u32 %s34, 1
          %s174 = smul.addr %s173, 512
          %s175 = scalar_lea.vmem [#allocation4], %s174
          %s176 = smul.u32 16, %s17
          %s177 = smul.u32 8, %s18
          %s178 = smul.addr %s176, 16
          %s179 = sadd.s32 %s177, %s178
          %s180 = smul.addr %s179, 4
          %s181 = scalar_lea.vmem %s0, %s180
          // Predicated region
          $region29: #{gat_forward.3} parent=27 // pred_check
            _
          $region30: #{gat_forward.3} parent=27 // pred_check_branch
            %183 = sbr.rel (0) target = $region32
          $region31: #{gat_forward.3} parent=27 // pred_region
            // Predicated region
            $region33: #{gat_forward.3} parent=31 // pred_check
              _
            $region34: #{gat_forward.3} parent=31 // pred_check_branch
              %185 = sbr.rel (0) target = $region36
            $region35: #{gat_forward.3} parent=31 // pred_region
              loop: start=0, step=1, limit=1
              $region37: #{gat_forward.3} parent=35 // loop_pre_header
                _
              $region38: #{gat_forward.3} parent=35 // loop_header
                %s187 = sphi 0, %s191
                %p188 = scmp.ge.s32.totalorder %s187, 1
                %s192 = sphi %s181, %s181
                %s193 = sphi %s175, %s175
              $region39: #{gat_forward.3} parent=35 // loop_header_branch
                %190 = sbr.rel (%p188) target = $region43
              $region40: #{gat_forward.3} parent=35 // loop_body
                %v194 = vld [vmem:[%s192] sm:$0xff]
                %195 = vst [vmem:[%s193] sm:$0xff] %v194
                %v196 = vld [vmem:[%s192 + $0x8] sm:$0xff]
                %197 = vst [vmem:[%s193 + $0x8] sm:$0xff] %v196
                %v198 = vld [vmem:[%s192 + $0x10] sm:$0xff]
                %199 = vst [vmem:[%s193 + $0x10] sm:$0xff] %v198
                %v200 = vld [vmem:[%s192 + $0x18] sm:$0xff]
                %201 = vst [vmem:[%s193 + $0x18] sm:$0xff] %v200
                %v202 = vld [vmem:[%s192 + $0x40] sm:$0xff]
                %203 = vst [vmem:[%s193 + $0x20] sm:$0xff] %v202
                %v204 = vld [vmem:[%s192 + $0x48] sm:$0xff]
                %205 = vst [vmem:[%s193 + $0x28] sm:$0xff] %v204
                %v206 = vld [vmem:[%s192 + $0x50] sm:$0xff]
                %207 = vst [vmem:[%s193 + $0x30] sm:$0xff] %v206
                %v208 = vld [vmem:[%s192 + $0x58] sm:$0xff]
                %209 = vst [vmem:[%s193 + $0x38] sm:$0xff] %v208
                %v210 = vld [vmem:[%s192 + $0x80] sm:$0xff]
                %211 = vst [vmem:[%s193 + $0x40] sm:$0xff] %v210
                %v212 = vld [vmem:[%s192 + $0x88] sm:$0xff]
                %213 = vst [vmem:[%s193 + $0x48] sm:$0xff] %v212
                %v214 = vld [vmem:[%s192 + $0x90] sm:$0xff]
                %215 = vst [vmem:[%s193 + $0x50] sm:$0xff] %v214
                %v216 = vld [vmem:[%s192 + $0x98] sm:$0xff]
                %217 = vst [vmem:[%s193 + $0x58] sm:$0xff] %v216
                %v218 = vld [vmem:[%s192 + $0xc0] sm:$0xff]
                %219 = vst [vmem:[%s193 + $0x60] sm:$0xff] %v218
                %v220 = vld [vmem:[%s192 + $0xc8] sm:$0xff]
                %221 = vst [vmem:[%s193 + $0x68] sm:$0xff] %v220
                %v222 = vld [vmem:[%s192 + $0xd0] sm:$0xff]
                %223 = vst [vmem:[%s193 + $0x70] sm:$0xff] %v222
                %v224 = vld [vmem:[%s192 + $0xd8] sm:$0xff]
                %225 = vst [vmem:[%s193 + $0x78] sm:$0xff] %v224
                %v226 = vld [vmem:[%s192 + $0x100] sm:$0xff]
                %227 = vst [vmem:[%s193 + $0x80] sm:$0xff] %v226
                %v228 = vld [vmem:[%s192 + $0x108] sm:$0xff]
                %229 = vst [vmem:[%s193 + $0x88] sm:$0xff] %v228
                %v230 = vld [vmem:[%s192 + $0x110] sm:$0xff]
                %231 = vst [vmem:[%s193 + $0x90] sm:$0xff] %v230
                %v232 = vld [vmem:[%s192 + $0x118] sm:$0xff]
                %233 = vst [vmem:[%s193 + $0x98] sm:$0xff] %v232
                %v234 = vld [vmem:[%s192 + $0x140] sm:$0xff]
                %235 = vst [vmem:[%s193 + $0xa0] sm:$0xff] %v234
                %v236 = vld [vmem:[%s192 + $0x148] sm:$0xff]
                %237 = vst [vmem:[%s193 + $0xa8] sm:$0xff] %v236
                %v238 = vld [vmem:[%s192 + $0x150] sm:$0xff]
                %239 = vst [vmem:[%s193 + $0xb0] sm:$0xff] %v238
                %v240 = vld [vmem:[%s192 + $0x158] sm:$0xff]
                %241 = vst [vmem:[%s193 + $0xb8] sm:$0xff] %v240
                %v242 = vld [vmem:[%s192 + $0x180] sm:$0xff]
                %243 = vst [vmem:[%s193 + $0xc0] sm:$0xff] %v242
                %v244 = vld [vmem:[%s192 + $0x188] sm:$0xff]
                %245 = vst [vmem:[%s193 + $0xc8] sm:$0xff] %v244
                %v246 = vld [vmem:[%s192 + $0x190] sm:$0xff]
                %247 = vst [vmem:[%s193 + $0xd0] sm:$0xff] %v246
                %v248 = vld [vmem:[%s192 + $0x198] sm:$0xff]
                %249 = vst [vmem:[%s193 + $0xd8] sm:$0xff] %v248
                %v250 = vld [vmem:[%s192 + $0x1c0] sm:$0xff]
                %251 = vst [vmem:[%s193 + $0xe0] sm:$0xff] %v250
                %v252 = vld [vmem:[%s192 + $0x1c8] sm:$0xff]
                %253 = vst [vmem:[%s193 + $0xe8] sm:$0xff] %v252
                %v254 = vld [vmem:[%s192 + $0x1d0] sm:$0xff]
                %255 = vst [vmem:[%s193 + $0xf0] sm:$0xff] %v254
                %v256 = vld [vmem:[%s192 + $0x1d8] sm:$0xff]
                %257 = vst [vmem:[%s193 + $0xf8] sm:$0xff] %v256
                %v258 = vld [vmem:[%s192 + $0x200] sm:$0xff]
                %259 = vst [vmem:[%s193 + $0x100] sm:$0xff] %v258
                %v260 = vld [vmem:[%s192 + $0x208] sm:$0xff]
                %261 = vst [vmem:[%s193 + $0x108] sm:$0xff] %v260
                %v262 = vld [vmem:[%s192 + $0x210] sm:$0xff]
                %263 = vst [vmem:[%s193 + $0x110] sm:$0xff] %v262
                %v264 = vld [vmem:[%s192 + $0x218] sm:$0xff]
                %265 = vst [vmem:[%s193 + $0x118] sm:$0xff] %v264
                %v266 = vld [vmem:[%s192 + $0x240] sm:$0xff]
                %267 = vst [vmem:[%s193 + $0x120] sm:$0xff] %v266
                %v268 = vld [vmem:[%s192 + $0x248] sm:$0xff]
                %269 = vst [vmem:[%s193 + $0x128] sm:$0xff] %v268
                %v270 = vld [vmem:[%s192 + $0x250] sm:$0xff]
                %271 = vst [vmem:[%s193 + $0x130] sm:$0xff] %v270
                %v272 = vld [vmem:[%s192 + $0x258] sm:$0xff]
                %273 = vst [vmem:[%s193 + $0x138] sm:$0xff] %v272
                %v274 = vld [vmem:[%s192 + $0x280] sm:$0xff]
                %275 = vst [vmem:[%s193 + $0x140] sm:$0xff] %v274
                %v276 = vld [vmem:[%s192 + $0x288] sm:$0xff]
                %277 = vst [vmem:[%s193 + $0x148] sm:$0xff] %v276
                %v278 = vld [vmem:[%s192 + $0x290] sm:$0xff]
                %279 = vst [vmem:[%s193 + $0x150] sm:$0xff] %v278
                %v280 = vld [vmem:[%s192 + $0x298] sm:$0xff]
                %281 = vst [vmem:[%s193 + $0x158] sm:$0xff] %v280
                %v282 = vld [vmem:[%s192 + $0x2c0] sm:$0xff]
                %283 = vst [vmem:[%s193 + $0x160] sm:$0xff] %v282
                %v284 = vld [vmem:[%s192 + $0x2c8] sm:$0xff]
                %285 = vst [vmem:[%s193 + $0x168] sm:$0xff] %v284
                %v286 = vld [vmem:[%s192 + $0x2d0] sm:$0xff]
                %287 = vst [vmem:[%s193 + $0x170] sm:$0xff] %v286
                %v288 = vld [vmem:[%s192 + $0x2d8] sm:$0xff]
                %289 = vst [vmem:[%s193 + $0x178] sm:$0xff] %v288
                %v290 = vld [vmem:[%s192 + $0x300] sm:$0xff]
                %291 = vst [vmem:[%s193 + $0x180] sm:$0xff] %v290
                %v292 = vld [vmem:[%s192 + $0x308] sm:$0xff]
                %293 = vst [vmem:[%s193 + $0x188] sm:$0xff] %v292
                %v294 = vld [vmem:[%s192 + $0x310] sm:$0xff]
                %295 = vst [vmem:[%s193 + $0x190] sm:$0xff] %v294
                %v296 = vld [vmem:[%s192 + $0x318] sm:$0xff]
                %297 = vst [vmem:[%s193 + $0x198] sm:$0xff] %v296
                %v298 = vld [vmem:[%s192 + $0x340] sm:$0xff]
                %299 = vst [vmem:[%s193 + $0x1a0] sm:$0xff] %v298
                %v300 = vld [vmem:[%s192 + $0x348] sm:$0xff]
                %301 = vst [vmem:[%s193 + $0x1a8] sm:$0xff] %v300
                %v302 = vld [vmem:[%s192 + $0x350] sm:$0xff]
                %303 = vst [vmem:[%s193 + $0x1b0] sm:$0xff] %v302
                %v304 = vld [vmem:[%s192 + $0x358] sm:$0xff]
                %305 = vst [vmem:[%s193 + $0x1b8] sm:$0xff] %v304
                %v306 = vld [vmem:[%s192 + $0x380] sm:$0xff]
                %307 = vst [vmem:[%s193 + $0x1c0] sm:$0xff] %v306
                %v308 = vld [vmem:[%s192 + $0x388] sm:$0xff]
                %309 = vst [vmem:[%s193 + $0x1c8] sm:$0xff] %v308
                %v310 = vld [vmem:[%s192 + $0x390] sm:$0xff]
                %311 = vst [vmem:[%s193 + $0x1d0] sm:$0xff] %v310
                %v312 = vld [vmem:[%s192 + $0x398] sm:$0xff]
                %313 = vst [vmem:[%s193 + $0x1d8] sm:$0xff] %v312
                %v314 = vld [vmem:[%s192 + $0x3c0] sm:$0xff]
                %315 = vst [vmem:[%s193 + $0x1e0] sm:$0xff] %v314
                %v316 = vld [vmem:[%s192 + $0x3c8] sm:$0xff]
                %317 = vst [vmem:[%s193 + $0x1e8] sm:$0xff] %v316
                %v318 = vld [vmem:[%s192 + $0x3d0] sm:$0xff]
                %319 = vst [vmem:[%s193 + $0x1f0] sm:$0xff] %v318
                %v320 = vld [vmem:[%s192 + $0x3d8] sm:$0xff]
                %321 = vst [vmem:[%s193 + $0x1f8] sm:$0xff] %v320
              $region41: #{gat_forward.3} parent=35 // loop_footer
                %s191 = sadd.s32 1, %s187
              $region42: #{gat_forward.3} parent=35 // loop_footer_branch
                %186 = sbr.rel target = $region38
              $region43: #{gat_forward.3} parent=35 // loop_exit
                _
            $region36: #{gat_forward.3} parent=31 // pred_fallthru
              _
            // Predicated region
            $region44: #{gat_forward.3} parent=31 // pred_check
              _
            $region45: #{gat_forward.3} parent=31 // pred_check_branch
              %323 = sbr.rel target = $region47
            $region46: #{gat_forward.3} parent=31 // pred_region
              _
            $region47: #{gat_forward.3} parent=31 // pred_fallthru
              _
          $region32: #{gat_forward.3} parent=27 // pred_fallthru
            _
          %324 = vnop
        $region28: #{gat_forward.3} parent=23 // pred_fallthru
          _
        // Predicated region
        $region48: #{gat_forward.3} parent=23 // pred_check
          %p325 = pneg %p70
        $region49: #{gat_forward.3} parent=23 // pred_check_branch
          %327 = sbr.rel (%p325) target = $region51
        $region50: #{gat_forward.3} parent=23 // pred_region
          %s328 = smul.u32 128, %s18
          %p329 = scmp.lt.s32.totalorder %s328, 255
          %s330 = scalar_select %p329, %s328, 255
          %s331 = smul.addr %s330, 8
          %s332 = scalar_lea.vmem %s1, %s331
          %s333 = smul.u32 128, %s18
        $region51: #{gat_forward.3} parent=23 // pred_fallthru
          _
      $region24: #{gat_forward.3} parent=5 // pred_fallthru
        _
      %p334 = scmp.le.s32.totalorder 1, %s10
      %p335 = scmp.lt.s32.totalorder %s10, 5
      %p336 = pnand %p334, %p335
      %p337 = pneg %p336
      // Predicated region
      $region52: #{gat_forward.3} parent=5 // pred_check
        _
      $region53: #{gat_forward.3} parent=5 // pred_check_branch
        %339 = sbr.rel (%p336) target = $region55
      $region54: #{gat_forward.3} parent=5 // pred_region
        %s340 = ssub.s32 %s10, 1
        %s341 = sand.u32 %s37, 1
        %s342 = sand.u32 %s37, 1
        %s343 = smul.addr %s342, 512
        %s344 = scalar_lea.vmem [#allocation4], %s343
        // Predicated region
        $region56: #{gat_forward.3} parent=54 // pred_check
          %p345 = pneg %p50
        $region57: #{gat_forward.3} parent=54 // pred_check_branch
          %347 = sbr.rel (%p345) target = $region59
        $region58: #{gat_forward.3} parent=54 // pred_region
          _
        $region59: #{gat_forward.3} parent=54 // pred_fallthru
          _
        %s348 = sand.u32 %s37, 1
        %s349 = sand.u32 %s37, 1
        %s350 = smul.addr %s349, 512
        %s351 = scalar_lea.vmem [#allocation4], %s350
        %p352 = pneg %p50
        %p353 = pneg %p47
        %s354 = smul.u32 128, %s20
        %p355 = scmp.lt.s32.totalorder %s354, 255
        %s356 = scalar_select %p355, %s354, 255
        %s357 = smul.addr %s356, 8
        %s358 = scalar_lea.vmem %s1, %s357
        %p359 = pneg %p76
        %p360 = pneg %p73
        %p361 = pneg %p97
        %p362 = pneg %p94
        %p363 = pneg %p118
        %p364 = pneg %p115
        %p365 = pneg %p144
        %p366 = pneg %p141
        %s367 = smul.u32 16, %s19
        %p368 = scmp.lt.s32.totalorder %s367, 31
        %s369 = scalar_select %p368, %s367, 31
        %s370 = smul.addr %s369, 8
        %s371 = scalar_lea.vmem %s4, %s370
        %s372 = smul.u32 16, %s19
        %s373 = smul.u32 8, %s20
        %s374 = smul.u32 128, %s20
        %p375 = scmp.lt.s32.totalorder %s374, 255
        %s376 = scalar_select %p375, %s374, 255
        %s377 = smul.addr %s376, 8
        %s378 = scalar_lea.vmem %s1, %s377
        %s379 = smul.u32 128, %s20
        %s380 = smul.u32 16, %s19
        %p381 = scmp.lt.s32.totalorder %s380, 31
        %s382 = scalar_select %p381, %s380, 31
        %s383 = smul.addr %s382, 8
        %s384 = scalar_lea.vmem %s4, %s383
        %s385 = smul.u32 16, %s19
        %p387 = scmp.eq.s32.totalorder %s20, 0
        // Predicated region
        $region60: #{gat_forward.3} parent=54 // pred_check
          %p388 = pneg %p387
        $region61: #{gat_forward.3} parent=54 // pred_check_branch
          %390 = sbr.rel (%p388) target = $region63
        $region62: #{gat_forward.3} parent=54 // pred_region
          %vm391 = vcmask 0
          %392 = vst.msk [vmem:[#allocation2] sm:$0x1] %vm391, -1e+30
          %393 = vst [vmem:[#allocation3] sm:$0xff] 0.0
          %394 = vst [vmem:[#allocation3 + $0x8] sm:$0xff] 0.0
          %395 = vst [vmem:[#allocation3 + $0x10] sm:$0xff] 0.0
          %396 = vst [vmem:[#allocation3 + $0x18] sm:$0xff] 0.0
          %397 = vst [vmem:[#allocation3 + $0x20] sm:$0xff] 0.0
          %398 = vst [vmem:[#allocation3 + $0x28] sm:$0xff] 0.0
          %399 = vst [vmem:[#allocation3 + $0x30] sm:$0xff] 0.0
          %400 = vst [vmem:[#allocation3 + $0x38] sm:$0xff] 0.0
          %401 = vst [vmem:[#allocation3 + $0x40] sm:$0xff] 0.0
          %402 = vst [vmem:[#allocation3 + $0x48] sm:$0xff] 0.0
          %403 = vst [vmem:[#allocation3 + $0x50] sm:$0xff] 0.0
          %404 = vst [vmem:[#allocation3 + $0x58] sm:$0xff] 0.0
          %405 = vst [vmem:[#allocation3 + $0x60] sm:$0xff] 0.0
          %406 = vst [vmem:[#allocation3 + $0x68] sm:$0xff] 0.0
          %407 = vst [vmem:[#allocation3 + $0x70] sm:$0xff] 0.0
          %408 = vst [vmem:[#allocation3 + $0x78] sm:$0xff] 0.0
        $region63: #{gat_forward.3} parent=54 // pred_fallthru
          _
        %v409 = vld [vmem:[%s378] sm:$0xff]
        %v410 = vld [vmem:[%s378 + $0x8] sm:$0xff]
        %v411 = vld [vmem:[%s378 + $0x10] sm:$0xff]
        %v412 = vld [vmem:[%s378 + $0x18] sm:$0xff]
        %v413 = vld [vmem:[%s378 + $0x20] sm:$0xff]
        %v414 = vld [vmem:[%s378 + $0x28] sm:$0xff]
        %v415 = vld [vmem:[%s378 + $0x30] sm:$0xff]
        %v416 = vld [vmem:[%s378 + $0x38] sm:$0xff]
        %v417 = vld [vmem:[%s378 + $0x40] sm:$0xff]
        %v418 = vld [vmem:[%s378 + $0x48] sm:$0xff]
        %v419 = vld [vmem:[%s378 + $0x50] sm:$0xff]
        %v420 = vld [vmem:[%s378 + $0x58] sm:$0xff]
        %v421 = vld [vmem:[%s378 + $0x60] sm:$0xff]
        %v422 = vld [vmem:[%s378 + $0x68] sm:$0xff]
        %v423 = vld [vmem:[%s378 + $0x70] sm:$0xff]
        %v424 = vld [vmem:[%s378 + $0x78] sm:$0xff]
        %v425 = vld [vmem:[%s378 + $0x80] sm:$0xff]
        %v426 = vld [vmem:[%s378 + $0x88] sm:$0xff]
        %v427 = vld [vmem:[%s378 + $0x90] sm:$0xff]
        %v428 = vld [vmem:[%s378 + $0x98] sm:$0xff]
        %v429 = vld [vmem:[%s378 + $0xa0] sm:$0xff]
        %v430 = vld [vmem:[%s378 + $0xa8] sm:$0xff]
        %v431 = vld [vmem:[%s378 + $0xb0] sm:$0xff]
        %v432 = vld [vmem:[%s378 + $0xb8] sm:$0xff]
        %v433 = vld [vmem:[%s378 + $0xc0] sm:$0xff]
        %v434 = vld [vmem:[%s378 + $0xc8] sm:$0xff]
        %v435 = vld [vmem:[%s378 + $0xd0] sm:$0xff]
        %v436 = vld [vmem:[%s378 + $0xd8] sm:$0xff]
        %v437 = vld [vmem:[%s378 + $0xe0] sm:$0xff]
        %v438 = vld [vmem:[%s378 + $0xe8] sm:$0xff]
        %v439 = vld [vmem:[%s378 + $0xf0] sm:$0xff]
        %v440 = vld [vmem:[%s378 + $0xf8] sm:$0xff]
        %v441 = vld [vmem:[%s378 + $0x100] sm:$0xff]
        %v442 = vld [vmem:[%s378 + $0x108] sm:$0xff]
        %v443 = vld [vmem:[%s378 + $0x110] sm:$0xff]
        %v444 = vld [vmem:[%s378 + $0x118] sm:$0xff]
        %v445 = vld [vmem:[%s378 + $0x120] sm:$0xff]
        %v446 = vld [vmem:[%s378 + $0x128] sm:$0xff]
        %v447 = vld [vmem:[%s378 + $0x130] sm:$0xff]
        %v448 = vld [vmem:[%s378 + $0x138] sm:$0xff]
        %v449 = vld [vmem:[%s378 + $0x140] sm:$0xff]
        %v450 = vld [vmem:[%s378 + $0x148] sm:$0xff]
        %v451 = vld [vmem:[%s378 + $0x150] sm:$0xff]
        %v452 = vld [vmem:[%s378 + $0x158] sm:$0xff]
        %v453 = vld [vmem:[%s378 + $0x160] sm:$0xff]
        %v454 = vld [vmem:[%s378 + $0x168] sm:$0xff]
        %v455 = vld [vmem:[%s378 + $0x170] sm:$0xff]
        %v456 = vld [vmem:[%s378 + $0x178] sm:$0xff]
        %v457 = vld [vmem:[%s378 + $0x180] sm:$0xff]
        %v458 = vld [vmem:[%s378 + $0x188] sm:$0xff]
        %v459 = vld [vmem:[%s378 + $0x190] sm:$0xff]
        %v460 = vld [vmem:[%s378 + $0x198] sm:$0xff]
        %v461 = vld [vmem:[%s378 + $0x1a0] sm:$0xff]
        %v462 = vld [vmem:[%s378 + $0x1a8] sm:$0xff]
        %v463 = vld [vmem:[%s378 + $0x1b0] sm:$0xff]
        %v464 = vld [vmem:[%s378 + $0x1b8] sm:$0xff]
        %v465 = vld [vmem:[%s378 + $0x1c0] sm:$0xff]
        %v466 = vld [vmem:[%s378 + $0x1c8] sm:$0xff]
        %v467 = vld [vmem:[%s378 + $0x1d0] sm:$0xff]
        %v468 = vld [vmem:[%s378 + $0x1d8] sm:$0xff]
        %v469 = vld [vmem:[%s378 + $0x1e0] sm:$0xff]
        %v470 = vld [vmem:[%s378 + $0x1e8] sm:$0xff]
        %v471 = vld [vmem:[%s378 + $0x1f0] sm:$0xff]
        %v472 = vld [vmem:[%s378 + $0x1f8] sm:$0xff]
        %v473 = vld [vmem:[%s378 + $0x200] sm:$0xff]
        %v474 = vld [vmem:[%s378 + $0x208] sm:$0xff]
        %v475 = vld [vmem:[%s378 + $0x210] sm:$0xff]
        %v476 = vld [vmem:[%s378 + $0x218] sm:$0xff]
        %v477 = vld [vmem:[%s378 + $0x220] sm:$0xff]
        %v478 = vld [vmem:[%s378 + $0x228] sm:$0xff]
        %v479 = vld [vmem:[%s378 + $0x230] sm:$0xff]
        %v480 = vld [vmem:[%s378 + $0x238] sm:$0xff]
        %v481 = vld [vmem:[%s378 + $0x240] sm:$0xff]
        %v482 = vld [vmem:[%s378 + $0x248] sm:$0xff]
        %v483 = vld [vmem:[%s378 + $0x250] sm:$0xff]
        %v484 = vld [vmem:[%s378 + $0x258] sm:$0xff]
        %v485 = vld [vmem:[%s378 + $0x260] sm:$0xff]
        %v486 = vld [vmem:[%s378 + $0x268] sm:$0xff]
        %v487 = vld [vmem:[%s378 + $0x270] sm:$0xff]
        %v488 = vld [vmem:[%s378 + $0x278] sm:$0xff]
        %v489 = vld [vmem:[%s378 + $0x280] sm:$0xff]
        %v490 = vld [vmem:[%s378 + $0x288] sm:$0xff]
        %v491 = vld [vmem:[%s378 + $0x290] sm:$0xff]
        %v492 = vld [vmem:[%s378 + $0x298] sm:$0xff]
        %v493 = vld [vmem:[%s378 + $0x2a0] sm:$0xff]
        %v494 = vld [vmem:[%s378 + $0x2a8] sm:$0xff]
        %v495 = vld [vmem:[%s378 + $0x2b0] sm:$0xff]
        %v496 = vld [vmem:[%s378 + $0x2b8] sm:$0xff]
        %v497 = vld [vmem:[%s378 + $0x2c0] sm:$0xff]
        %v498 = vld [vmem:[%s378 + $0x2c8] sm:$0xff]
        %v499 = vld [vmem:[%s378 + $0x2d0] sm:$0xff]
        %v500 = vld [vmem:[%s378 + $0x2d8] sm:$0xff]
        %v501 = vld [vmem:[%s378 + $0x2e0] sm:$0xff]
        %v502 = vld [vmem:[%s378 + $0x2e8] sm:$0xff]
        %v503 = vld [vmem:[%s378 + $0x2f0] sm:$0xff]
        %v504 = vld [vmem:[%s378 + $0x2f8] sm:$0xff]
        %v505 = vld [vmem:[%s378 + $0x300] sm:$0xff]
        %v506 = vld [vmem:[%s378 + $0x308] sm:$0xff]
        %v507 = vld [vmem:[%s378 + $0x310] sm:$0xff]
        %v508 = vld [vmem:[%s378 + $0x318] sm:$0xff]
        %v509 = vld [vmem:[%s378 + $0x320] sm:$0xff]
        %v510 = vld [vmem:[%s378 + $0x328] sm:$0xff]
        %v511 = vld [vmem:[%s378 + $0x330] sm:$0xff]
        %v512 = vld [vmem:[%s378 + $0x338] sm:$0xff]
        %v513 = vld [vmem:[%s378 + $0x340] sm:$0xff]
        %v514 = vld [vmem:[%s378 + $0x348] sm:$0xff]
        %v515 = vld [vmem:[%s378 + $0x350] sm:$0xff]
        %v516 = vld [vmem:[%s378 + $0x358] sm:$0xff]
        %v517 = vld [vmem:[%s378 + $0x360] sm:$0xff]
        %v518 = vld [vmem:[%s378 + $0x368] sm:$0xff]
        %v519 = vld [vmem:[%s378 + $0x370] sm:$0xff]
        %v520 = vld [vmem:[%s378 + $0x378] sm:$0xff]
        %v521 = vld [vmem:[%s378 + $0x380] sm:$0xff]
        %v522 = vld [vmem:[%s378 + $0x388] sm:$0xff]
        %v523 = vld [vmem:[%s378 + $0x390] sm:$0xff]
        %v524 = vld [vmem:[%s378 + $0x398] sm:$0xff]
        %v525 = vld [vmem:[%s378 + $0x3a0] sm:$0xff]
        %v526 = vld [vmem:[%s378 + $0x3a8] sm:$0xff]
        %v527 = vld [vmem:[%s378 + $0x3b0] sm:$0xff]
        %v528 = vld [vmem:[%s378 + $0x3b8] sm:$0xff]
        %v529 = vld [vmem:[%s378 + $0x3c0] sm:$0xff]
        %v530 = vld [vmem:[%s378 + $0x3c8] sm:$0xff]
        %v531 = vld [vmem:[%s378 + $0x3d0] sm:$0xff]
        %v532 = vld [vmem:[%s378 + $0x3d8] sm:$0xff]
        %v533 = vld [vmem:[%s378 + $0x3e0] sm:$0xff]
        %v534 = vld [vmem:[%s378 + $0x3e8] sm:$0xff]
        %v535 = vld [vmem:[%s378 + $0x3f0] sm:$0xff]
        %v536 = vld [vmem:[%s378 + $0x3f8] sm:$0xff]
        %v537 = vld [vmem:[%s3] sm:$0x1]
        %v538 = vld [vmem:[%s2] sm:$0xff]
        %v539 = vld [vmem:[%s2 + $0x8] sm:$0xff]
        %v540 = vld [vmem:[%s2 + $0x10] sm:$0xff]
        %v541 = vld [vmem:[%s2 + $0x18] sm:$0xff]
        %v542 = vld [vmem:[%s2 + $0x20] sm:$0xff]
        %v543 = vld [vmem:[%s2 + $0x28] sm:$0xff]
        %vm544 = vcmask 392192
        %v546 = vsel %vm544, %v409, 0
        %v549 = vsel %vm544, %v410, 0
        %v552 = vsel %vm544, %v411, 0
        %v555 = vsel %vm544, %v412, 0
        %v558 = vsel %vm544, %v413, 0
        %v561 = vsel %vm544, %v414, 0
        %v564 = vsel %vm544, %v415, 0
        %v567 = vsel %vm544, %v416, 0
        %v570 = vsel %vm544, %v417, 0
        %v573 = vsel %vm544, %v418, 0
        %v576 = vsel %vm544, %v419, 0
        %v579 = vsel %vm544, %v420, 0
        %v582 = vsel %vm544, %v421, 0
        %v585 = vsel %vm544, %v422, 0
        %v588 = vsel %vm544, %v423, 0
        %v591 = vsel %vm544, %v424, 0
        %v594 = vsel %vm544, %v425, 0
        %v597 = vsel %vm544, %v426, 0
        %v600 = vsel %vm544, %v427, 0
        %v603 = vsel %vm544, %v428, 0
        %v606 = vsel %vm544, %v429, 0
        %v609 = vsel %vm544, %v430, 0
        %v612 = vsel %vm544, %v431, 0
        %v615 = vsel %vm544, %v432, 0
        %v618 = vsel %vm544, %v433, 0
        %v621 = vsel %vm544, %v434, 0
        %v624 = vsel %vm544, %v435, 0
        %v627 = vsel %vm544, %v436, 0
        %v630 = vsel %vm544, %v437, 0
        %v633 = vsel %vm544, %v438, 0
        %v636 = vsel %vm544, %v439, 0
        %v639 = vsel %vm544, %v440, 0
        %v642 = vsel %vm544, %v441, 0
        %v645 = vsel %vm544, %v442, 0
        %v648 = vsel %vm544, %v443, 0
        %v651 = vsel %vm544, %v444, 0
        %v654 = vsel %vm544, %v445, 0
        %v657 = vsel %vm544, %v446, 0
        %v660 = vsel %vm544, %v447, 0
        %v663 = vsel %vm544, %v448, 0
        %v666 = vsel %vm544, %v449, 0
        %v669 = vsel %vm544, %v450, 0
        %v672 = vsel %vm544, %v451, 0
        %v675 = vsel %vm544, %v452, 0
        %v678 = vsel %vm544, %v453, 0
        %v681 = vsel %vm544, %v454, 0
        %v684 = vsel %vm544, %v455, 0
        %v687 = vsel %vm544, %v456, 0
        %v690 = vsel %vm544, %v457, 0
        %v693 = vsel %vm544, %v458, 0
        %v696 = vsel %vm544, %v459, 0
        %v699 = vsel %vm544, %v460, 0
        %v702 = vsel %vm544, %v461, 0
        %v705 = vsel %vm544, %v462, 0
        %v708 = vsel %vm544, %v463, 0
        %v711 = vsel %vm544, %v464, 0
        %v714 = vsel %vm544, %v465, 0
        %v717 = vsel %vm544, %v466, 0
        %v720 = vsel %vm544, %v467, 0
        %v723 = vsel %vm544, %v468, 0
        %v726 = vsel %vm544, %v469, 0
        %v729 = vsel %vm544, %v470, 0
        %v732 = vsel %vm544, %v471, 0
        %v735 = vsel %vm544, %v472, 0
        %v738 = vsel %vm544, %v473, 0
        %v741 = vsel %vm544, %v474, 0
        %v744 = vsel %vm544, %v475, 0
        %v747 = vsel %vm544, %v476, 0
        %v750 = vsel %vm544, %v477, 0
        %v753 = vsel %vm544, %v478, 0
        %v756 = vsel %vm544, %v479, 0
        %v759 = vsel %vm544, %v480, 0
        %v762 = vsel %vm544, %v481, 0
        %v765 = vsel %vm544, %v482, 0
        %v768 = vsel %vm544, %v483, 0
        %v771 = vsel %vm544, %v484, 0
        %v774 = vsel %vm544, %v485, 0
        %v777 = vsel %vm544, %v486, 0
        %v780 = vsel %vm544, %v487, 0
        %v783 = vsel %vm544, %v488, 0
        %v786 = vsel %vm544, %v489, 0
        %v789 = vsel %vm544, %v490, 0
        %v792 = vsel %vm544, %v491, 0
        %v795 = vsel %vm544, %v492, 0
        %v798 = vsel %vm544, %v493, 0
        %v801 = vsel %vm544, %v494, 0
        %v804 = vsel %vm544, %v495, 0
        %v807 = vsel %vm544, %v496, 0
        %v810 = vsel %vm544, %v497, 0
        %v813 = vsel %vm544, %v498, 0
        %v816 = vsel %vm544, %v499, 0
        %v819 = vsel %vm544, %v500, 0
        %v822 = vsel %vm544, %v501, 0
        %v825 = vsel %vm544, %v502, 0
        %v828 = vsel %vm544, %v503, 0
        %v831 = vsel %vm544, %v504, 0
        %v834 = vsel %vm544, %v505, 0
        %v837 = vsel %vm544, %v506, 0
        %v840 = vsel %vm544, %v507, 0
        %v843 = vsel %vm544, %v508, 0
        %v846 = vsel %vm544, %v509, 0
        %v849 = vsel %vm544, %v510, 0
        %v852 = vsel %vm544, %v511, 0
        %v855 = vsel %vm544, %v512, 0
        %v858 = vsel %vm544, %v513, 0
        %v861 = vsel %vm544, %v514, 0
        %v864 = vsel %vm544, %v515, 0
        %v867 = vsel %vm544, %v516, 0
        %v870 = vsel %vm544, %v517, 0
        %v873 = vsel %vm544, %v518, 0
        %v876 = vsel %vm544, %v519, 0
        %v879 = vsel %vm544, %v520, 0
        %v882 = vsel %vm544, %v521, 0
        %v885 = vsel %vm544, %v522, 0
        %v888 = vsel %vm544, %v523, 0
        %v891 = vsel %vm544, %v524, 0
        %v894 = vsel %vm544, %v525, 0
        %v897 = vsel %vm544, %v526, 0
        %v900 = vsel %vm544, %v527, 0
        %v903 = vsel %vm544, %v528, 0
        %v906 = vsel %vm544, %v529, 0
        %v909 = vsel %vm544, %v530, 0
        %v912 = vsel %vm544, %v531, 0
        %v915 = vsel %vm544, %v532, 0
        %v918 = vsel %vm544, %v533, 0
        %v921 = vsel %vm544, %v534, 0
        %v924 = vsel %vm544, %v535, 0
        %v927 = vsel %vm544, %v536, 0
        %929 = vmatprep.subr.mxu0 0.0
        %930 = vmatpush1.msra.mxu0 0.0
        %931 = vmatprep.subr.mxu0 0.0
        %932 = vmatpush1.msra.mxu0 0.0
        %933 = vmatprep.subr.mxu0 0.0
        %934 = vmatpush1.msra.mxu0 0.0
        %935 = vmatprep.subr.mxu0 0.0
        %936 = vmatpush1.msra.mxu0 0.0
        %937 = vmatprep.subr.mxu0 0.0
        %938 = vmatpush1.msra.mxu0 0.0
        %939 = vmatprep.subr.mxu0 0.0
        %940 = vmatpush1.msra.mxu0 0.0
        %941 = vmatprep.subr.mxu0 0.0
        %942 = vmatpush1.msra.mxu0 0.0
        %943 = vmatprep.subr.mxu0 0.0
        %944 = vmatpush1.msra.mxu0 0.0
        %945 = vmatprep.subr.mxu0 0.0
        %946 = vmatpush1.msra.mxu0 0.0
        %947 = vmatprep.subr.mxu0 0.0
        %948 = vmatpush1.msra.mxu0 0.0
        %949 = vmatprep.subr.mxu0 0.0
        %950 = vmatpush1.msra.mxu0 %v543
        %951 = vmatprep.subr.mxu0 0.0
        %952 = vmatpush1.msra.mxu0 %v542
        %953 = vmatprep.subr.mxu0 0.0
        %954 = vmatpush1.msra.mxu0 %v541
        %955 = vmatprep.subr.mxu0 0.0
        %956 = vmatpush1.msra.mxu0 %v540
        %957 = vmatprep.subr.mxu0 0.0
        %958 = vmatpush1.msra.mxu0 %v539
        %959 = vmatprep.subr.mxu0 0.0
        %960 = vmatpush1.msra.mxu0 %v538
        %961 = vmatprep.subr.mxu0 0.0
        %962 = vmatpush2.msra.mxu0 0.0
        %963 = vmatprep.subr.mxu0 0.0
        %964 = vmatpush2.msra.mxu0 0.0
        %965 = vmatprep.subr.mxu0 0.0
        %966 = vmatpush2.msra.mxu0 0.0
        %967 = vmatprep.subr.mxu0 0.0
        %968 = vmatpush2.msra.mxu0 0.0
        %969 = vmatprep.subr.mxu0 0.0
        %970 = vmatpush2.msra.mxu0 0.0
        %971 = vmatprep.subr.mxu0 0.0
        %972 = vmatpush2.msra.mxu0 0.0
        %973 = vmatprep.subr.mxu0 0.0
        %974 = vmatpush2.msra.mxu0 0.0
        %975 = vmatprep.subr.mxu0 0.0
        %976 = vmatpush2.msra.mxu0 0.0
        %977 = vmatprep.subr.mxu0 0.0
        %978 = vmatpush2.msra.mxu0 0.0
        %979 = vmatprep.subr.mxu0 0.0
        %980 = vmatpush2.msra.mxu0 0.0
        %981 = vmatprep.subr.mxu0 0.0
        %982 = vmatpush2.msra.mxu0 0.0
        %983 = vmatprep.subr.mxu0 0.0
        %984 = vmatpush2.msra.mxu0 0.0
        %985 = vmatprep.subr.mxu0 0.0
        %986 = vmatpush2.msra.mxu0 0.0
        %987 = vmatprep.subr.mxu0 0.0
        %988 = vmatpush2.msra.mxu0 0.0
        %989 = vmatprep.subr.mxu0 0.0
        %990 = vmatpush2.msra.mxu0 0.0
        %991 = vmatprep.subr.mxu0 0.0
        %992 = vmatpush2.msra.mxu0 0.0
        %993 = vmatprep.mubr.f32.mxu0 0.0
        %994 = vmatmul.mubr.f32.gmra.mxu0 %v546
        %v995 = vpop.f32.mrf.mxu0
        %v996 = vadd.f32 0.0, %v995
        %v997 = vpop.f32.mrf.mxu0
        %998 = vmatprep.mubr.f32.mxu0 0.0
        %999 = vmatmul.mubr.f32.gmra.mxu0 %v549
        %v1000 = vpop.f32.mrf.mxu0
        %v1001 = vadd.f32 0.0, %v1000
        %v1002 = vpop.f32.mrf.mxu0
        %1003 = vmatprep.mubr.f32.mxu0 0.0
        %1004 = vmatmul.mubr.f32.gmra.mxu0 %v552
        %v1005 = vpop.f32.mrf.mxu0
        %v1006 = vadd.f32 0.0, %v1005
        %v1007 = vpop.f32.mrf.mxu0
        %1008 = vmatprep.mubr.f32.mxu0 0.0
        %1009 = vmatmul.mubr.f32.gmra.mxu0 %v555
        %v1010 = vpop.f32.mrf.mxu0
        %v1011 = vadd.f32 0.0, %v1010
        %v1012 = vpop.f32.mrf.mxu0
        %1013 = vmatprep.mubr.f32.mxu0 0.0
        %1014 = vmatmul.mubr.f32.gmra.mxu0 %v558
        %v1015 = vpop.f32.mrf.mxu0
        %v1016 = vadd.f32 0.0, %v1015
        %v1017 = vpop.f32.mrf.mxu0
        %1018 = vmatprep.mubr.f32.mxu0 0.0
        %1019 = vmatmul.mubr.f32.gmra.mxu0 %v561
        %v1020 = vpop.f32.mrf.mxu0
        %v1021 = vadd.f32 0.0, %v1020
        %v1022 = vpop.f32.mrf.mxu0
        %1023 = vmatprep.mubr.f32.mxu0 0.0
        %1024 = vmatmul.mubr.f32.gmra.mxu0 %v564
        %v1025 = vpop.f32.mrf.mxu0
        %v1026 = vadd.f32 0.0, %v1025
        %v1027 = vpop.f32.mrf.mxu0
        %1028 = vmatprep.mubr.f32.mxu0 0.0
        %1029 = vmatmul.mubr.f32.gmra.mxu0 %v567
        %v1030 = vpop.f32.mrf.mxu0
        %v1031 = vadd.f32 0.0, %v1030
        %v1032 = vpop.f32.mrf.mxu0
        %1033 = vmatprep.mubr.f32.mxu0 0.0
        %1034 = vmatmul.mubr.f32.gmra.mxu0 %v570
        %v1035 = vpop.f32.mrf.mxu0
        %v1036 = vadd.f32 0.0, %v1035
        %v1037 = vpop.f32.mrf.mxu0
        %1038 = vmatprep.mubr.f32.mxu0 0.0
        %1039 = vmatmul.mubr.f32.gmra.mxu0 %v573
        %v1040 = vpop.f32.mrf.mxu0
        %v1041 = vadd.f32 0.0, %v1040
        %v1042 = vpop.f32.mrf.mxu0
        %1043 = vmatprep.mubr.f32.mxu0 0.0
        %1044 = vmatmul.mubr.f32.gmra.mxu0 %v576
        %v1045 = vpop.f32.mrf.mxu0
        %v1046 = vadd.f32 0.0, %v1045
        %v1047 = vpop.f32.mrf.mxu0
        %1048 = vmatprep.mubr.f32.mxu0 0.0
        %1049 = vmatmul.mubr.f32.gmra.mxu0 %v579
        %v1050 = vpop.f32.mrf.mxu0
        %v1051 = vadd.f32 0.0, %v1050
        %v1052 = vpop.f32.mrf.mxu0
        %1053 = vmatprep.mubr.f32.mxu0 0.0
        %1054 = vmatmul.mubr.f32.gmra.mxu0 %v582
        %v1055 = vpop.f32.mrf.mxu0
        %v1056 = vadd.f32 0.0, %v1055
        %v1057 = vpop.f32.mrf.mxu0
        %1058 = vmatprep.mubr.f32.mxu0 0.0
        %1059 = vmatmul.mubr.f32.gmra.mxu0 %v585
        %v1060 = vpop.f32.mrf.mxu0
        %v1061 = vadd.f32 0.0, %v1060
        %v1062 = vpop.f32.mrf.mxu0
        %1063 = vmatprep.mubr.f32.mxu0 0.0
        %1064 = vmatmul.mubr.f32.gmra.mxu0 %v588
        %v1065 = vpop.f32.mrf.mxu0
        %v1066 = vadd.f32 0.0, %v1065
        %v1067 = vpop.f32.mrf.mxu0
        %1068 = vmatprep.mubr.f32.mxu0 0.0
        %1069 = vmatmul.mubr.f32.gmra.mxu0 %v591
        %v1070 = vpop.f32.mrf.mxu0
        %v1071 = vadd.f32 0.0, %v1070
        %v1072 = vpop.f32.mrf.mxu0
        %1073 = vmatprep.mubr.f32.mxu0 0.0
        %1074 = vmatmul.mubr.f32.gmra.mxu0 %v594
        %v1075 = vpop.f32.mrf.mxu0
        %v1076 = vadd.f32 0.0, %v1075
        %v1077 = vpop.f32.mrf.mxu0
        %1078 = vmatprep.mubr.f32.mxu0 0.0
        %1079 = vmatmul.mubr.f32.gmra.mxu0 %v597
        %v1080 = vpop.f32.mrf.mxu0
        %v1081 = vadd.f32 0.0, %v1080
        %v1082 = vpop.f32.mrf.mxu0
        %1083 = vmatprep.mubr.f32.mxu0 0.0
        %1084 = vmatmul.mubr.f32.gmra.mxu0 %v600
        %v1085 = vpop.f32.mrf.mxu0
        %v1086 = vadd.f32 0.0, %v1085
        %v1087 = vpop.f32.mrf.mxu0
        %1088 = vmatprep.mubr.f32.mxu0 0.0
        %1089 = vmatmul.mubr.f32.gmra.mxu0 %v603
        %v1090 = vpop.f32.mrf.mxu0
        %v1091 = vadd.f32 0.0, %v1090
        %v1092 = vpop.f32.mrf.mxu0
        %1093 = vmatprep.mubr.f32.mxu0 0.0
        %1094 = vmatmul.mubr.f32.gmra.mxu0 %v606
        %v1095 = vpop.f32.mrf.mxu0
        %v1096 = vadd.f32 0.0, %v1095
        %v1097 = vpop.f32.mrf.mxu0
        %1098 = vmatprep.mubr.f32.mxu0 0.0
        %1099 = vmatmul.mubr.f32.gmra.mxu0 %v609
        %v1100 = vpop.f32.mrf.mxu0
        %v1101 = vadd.f32 0.0, %v1100
        %v1102 = vpop.f32.mrf.mxu0
        %1103 = vmatprep.mubr.f32.mxu0 0.0
        %1104 = vmatmul.mubr.f32.gmra.mxu0 %v612
        %v1105 = vpop.f32.mrf.mxu0
        %v1106 = vadd.f32 0.0, %v1105
        %v1107 = vpop.f32.mrf.mxu0
        %1108 = vmatprep.mubr.f32.mxu0 0.0
        %1109 = vmatmul.mubr.f32.gmra.mxu0 %v615
        %v1110 = vpop.f32.mrf.mxu0
        %v1111 = vadd.f32 0.0, %v1110
        %v1112 = vpop.f32.mrf.mxu0
        %1113 = vmatprep.mubr.f32.mxu0 0.0
        %1114 = vmatmul.mubr.f32.gmra.mxu0 %v618
        %v1115 = vpop.f32.mrf.mxu0
        %v1116 = vadd.f32 0.0, %v1115
        %v1117 = vpop.f32.mrf.mxu0
        %1118 = vmatprep.mubr.f32.mxu0 0.0
        %1119 = vmatmul.mubr.f32.gmra.mxu0 %v621
        %v1120 = vpop.f32.mrf.mxu0
        %v1121 = vadd.f32 0.0, %v1120
        %v1122 = vpop.f32.mrf.mxu0
        %1123 = vmatprep.mubr.f32.mxu0 0.0
        %1124 = vmatmul.mubr.f32.gmra.mxu0 %v624
        %v1125 = vpop.f32.mrf.mxu0
        %v1126 = vadd.f32 0.0, %v1125
        %v1127 = vpop.f32.mrf.mxu0
        %1128 = vmatprep.mubr.f32.mxu0 0.0
        %1129 = vmatmul.mubr.f32.gmra.mxu0 %v627
        %v1130 = vpop.f32.mrf.mxu0
        %v1131 = vadd.f32 0.0, %v1130
        %v1132 = vpop.f32.mrf.mxu0
        %1133 = vmatprep.mubr.f32.mxu0 0.0
        %1134 = vmatmul.mubr.f32.gmra.mxu0 %v630
        %v1135 = vpop.f32.mrf.mxu0
        %v1136 = vadd.f32 0.0, %v1135
        %v1137 = vpop.f32.mrf.mxu0
        %1138 = vmatprep.mubr.f32.mxu0 0.0
        %1139 = vmatmul.mubr.f32.gmra.mxu0 %v633
        %v1140 = vpop.f32.mrf.mxu0
        %v1141 = vadd.f32 0.0, %v1140
        %v1142 = vpop.f32.mrf.mxu0
        %1143 = vmatprep.mubr.f32.mxu0 0.0
        %1144 = vmatmul.mubr.f32.gmra.mxu0 %v636
        %v1145 = vpop.f32.mrf.mxu0
        %v1146 = vadd.f32 0.0, %v1145
        %v1147 = vpop.f32.mrf.mxu0
        %1148 = vmatprep.mubr.f32.mxu0 0.0
        %1149 = vmatmul.mubr.f32.gmra.mxu0 %v639
        %v1150 = vpop.f32.mrf.mxu0
        %v1151 = vadd.f32 0.0, %v1150
        %v1152 = vpop.f32.mrf.mxu0
        %1153 = vmatprep.mubr.f32.mxu0 0.0
        %1154 = vmatmul.mubr.f32.gmra.mxu0 %v642
        %v1155 = vpop.f32.mrf.mxu0
        %v1156 = vadd.f32 0.0, %v1155
        %v1157 = vpop.f32.mrf.mxu0
        %1158 = vmatprep.mubr.f32.mxu0 0.0
        %1159 = vmatmul.mubr.f32.gmra.mxu0 %v645
        %v1160 = vpop.f32.mrf.mxu0
        %v1161 = vadd.f32 0.0, %v1160
        %v1162 = vpop.f32.mrf.mxu0
        %1163 = vmatprep.mubr.f32.mxu0 0.0
        %1164 = vmatmul.mubr.f32.gmra.mxu0 %v648
        %v1165 = vpop.f32.mrf.mxu0
        %v1166 = vadd.f32 0.0, %v1165
        %v1167 = vpop.f32.mrf.mxu0
        %1168 = vmatprep.mubr.f32.mxu0 0.0
        %1169 = vmatmul.mubr.f32.gmra.mxu0 %v651
        %v1170 = vpop.f32.mrf.mxu0
        %v1171 = vadd.f32 0.0, %v1170
        %v1172 = vpop.f32.mrf.mxu0
        %1173 = vmatprep.mubr.f32.mxu0 0.0
        %1174 = vmatmul.mubr.f32.gmra.mxu0 %v654
        %v1175 = vpop.f32.mrf.mxu0
        %v1176 = vadd.f32 0.0, %v1175
        %v1177 = vpop.f32.mrf.mxu0
        %1178 = vmatprep.mubr.f32.mxu0 0.0
        %1179 = vmatmul.mubr.f32.gmra.mxu0 %v657
        %v1180 = vpop.f32.mrf.mxu0
        %v1181 = vadd.f32 0.0, %v1180
        %v1182 = vpop.f32.mrf.mxu0
        %1183 = vmatprep.mubr.f32.mxu0 0.0
        %1184 = vmatmul.mubr.f32.gmra.mxu0 %v660
        %v1185 = vpop.f32.mrf.mxu0
        %v1186 = vadd.f32 0.0, %v1185
        %v1187 = vpop.f32.mrf.mxu0
        %1188 = vmatprep.mubr.f32.mxu0 0.0
        %1189 = vmatmul.mubr.f32.gmra.mxu0 %v663
        %v1190 = vpop.f32.mrf.mxu0
        %v1191 = vadd.f32 0.0, %v1190
        %v1192 = vpop.f32.mrf.mxu0
        %1193 = vmatprep.mubr.f32.mxu0 0.0
        %1194 = vmatmul.mubr.f32.gmra.mxu0 %v666
        %v1195 = vpop.f32.mrf.mxu0
        %v1196 = vadd.f32 0.0, %v1195
        %v1197 = vpop.f32.mrf.mxu0
        %1198 = vmatprep.mubr.f32.mxu0 0.0
        %1199 = vmatmul.mubr.f32.gmra.mxu0 %v669
        %v1200 = vpop.f32.mrf.mxu0
        %v1201 = vadd.f32 0.0, %v1200
        %v1202 = vpop.f32.mrf.mxu0
        %1203 = vmatprep.mubr.f32.mxu0 0.0
        %1204 = vmatmul.mubr.f32.gmra.mxu0 %v672
        %v1205 = vpop.f32.mrf.mxu0
        %v1206 = vadd.f32 0.0, %v1205
        %v1207 = vpop.f32.mrf.mxu0
        %1208 = vmatprep.mubr.f32.mxu0 0.0
        %1209 = vmatmul.mubr.f32.gmra.mxu0 %v675
        %v1210 = vpop.f32.mrf.mxu0
        %v1211 = vadd.f32 0.0, %v1210
        %v1212 = vpop.f32.mrf.mxu0
        %1213 = vmatprep.mubr.f32.mxu0 0.0
        %1214 = vmatmul.mubr.f32.gmra.mxu0 %v678
        %v1215 = vpop.f32.mrf.mxu0
        %v1216 = vadd.f32 0.0, %v1215
        %v1217 = vpop.f32.mrf.mxu0
        %1218 = vmatprep.mubr.f32.mxu0 0.0
        %1219 = vmatmul.mubr.f32.gmra.mxu0 %v681
        %v1220 = vpop.f32.mrf.mxu0
        %v1221 = vadd.f32 0.0, %v1220
        %v1222 = vpop.f32.mrf.mxu0
        %1223 = vmatprep.mubr.f32.mxu0 0.0
        %1224 = vmatmul.mubr.f32.gmra.mxu0 %v684
        %v1225 = vpop.f32.mrf.mxu0
        %v1226 = vadd.f32 0.0, %v1225
        %v1227 = vpop.f32.mrf.mxu0
        %1228 = vmatprep.mubr.f32.mxu0 0.0
        %1229 = vmatmul.mubr.f32.gmra.mxu0 %v687
        %v1230 = vpop.f32.mrf.mxu0
        %v1231 = vadd.f32 0.0, %v1230
        %v1232 = vpop.f32.mrf.mxu0
        %1233 = vmatprep.mubr.f32.mxu0 0.0
        %1234 = vmatmul.mubr.f32.gmra.mxu0 %v690
        %v1235 = vpop.f32.mrf.mxu0
        %v1236 = vadd.f32 0.0, %v1235
        %v1237 = vpop.f32.mrf.mxu0
        %1238 = vmatprep.mubr.f32.mxu0 0.0
        %1239 = vmatmul.mubr.f32.gmra.mxu0 %v693
        %v1240 = vpop.f32.mrf.mxu0
        %v1241 = vadd.f32 0.0, %v1240
        %v1242 = vpop.f32.mrf.mxu0
        %1243 = vmatprep.mubr.f32.mxu0 0.0
        %1244 = vmatmul.mubr.f32.gmra.mxu0 %v696
        %v1245 = vpop.f32.mrf.mxu0
        %v1246 = vadd.f32 0.0, %v1245
        %v1247 = vpop.f32.mrf.mxu0
        %1248 = vmatprep.mubr.f32.mxu0 0.0
        %1249 = vmatmul.mubr.f32.gmra.mxu0 %v699
        %v1250 = vpop.f32.mrf.mxu0
        %v1251 = vadd.f32 0.0, %v1250
        %v1252 = vpop.f32.mrf.mxu0
        %1253 = vmatprep.mubr.f32.mxu0 0.0
        %1254 = vmatmul.mubr.f32.gmra.mxu0 %v702
        %v1255 = vpop.f32.mrf.mxu0
        %v1256 = vadd.f32 0.0, %v1255
        %v1257 = vpop.f32.mrf.mxu0
        %1258 = vmatprep.mubr.f32.mxu0 0.0
        %1259 = vmatmul.mubr.f32.gmra.mxu0 %v705
        %v1260 = vpop.f32.mrf.mxu0
        %v1261 = vadd.f32 0.0, %v1260
        %v1262 = vpop.f32.mrf.mxu0
        %1263 = vmatprep.mubr.f32.mxu0 0.0
        %1264 = vmatmul.mubr.f32.gmra.mxu0 %v708
        %v1265 = vpop.f32.mrf.mxu0
        %v1266 = vadd.f32 0.0, %v1265
        %v1267 = vpop.f32.mrf.mxu0
        %1268 = vmatprep.mubr.f32.mxu0 0.0
        %1269 = vmatmul.mubr.f32.gmra.mxu0 %v711
        %v1270 = vpop.f32.mrf.mxu0
        %v1271 = vadd.f32 0.0, %v1270
        %v1272 = vpop.f32.mrf.mxu0
        %1273 = vmatprep.mubr.f32.mxu0 0.0
        %1274 = vmatmul.mubr.f32.gmra.mxu0 %v714
        %v1275 = vpop.f32.mrf.mxu0
        %v1276 = vadd.f32 0.0, %v1275
        %v1277 = vpop.f32.mrf.mxu0
        %1278 = vmatprep.mubr.f32.mxu0 0.0
        %1279 = vmatmul.mubr.f32.gmra.mxu0 %v717
        %v1280 = vpop.f32.mrf.mxu0
        %v1281 = vadd.f32 0.0, %v1280
        %v1282 = vpop.f32.mrf.mxu0
        %1283 = vmatprep.mubr.f32.mxu0 0.0
        %1284 = vmatmul.mubr.f32.gmra.mxu0 %v720
        %v1285 = vpop.f32.mrf.mxu0
        %v1286 = vadd.f32 0.0, %v1285
        %v1287 = vpop.f32.mrf.mxu0
        %1288 = vmatprep.mubr.f32.mxu0 0.0
        %1289 = vmatmul.mubr.f32.gmra.mxu0 %v723
        %v1290 = vpop.f32.mrf.mxu0
        %v1291 = vadd.f32 0.0, %v1290
        %v1292 = vpop.f32.mrf.mxu0
        %1293 = vmatprep.mubr.f32.mxu0 0.0
        %1294 = vmatmul.mubr.f32.gmra.mxu0 %v726
        %v1295 = vpop.f32.mrf.mxu0
        %v1296 = vadd.f32 0.0, %v1295
        %v1297 = vpop.f32.mrf.mxu0
        %1298 = vmatprep.mubr.f32.mxu0 0.0
        %1299 = vmatmul.mubr.f32.gmra.mxu0 %v729
        %v1300 = vpop.f32.mrf.mxu0
        %v1301 = vadd.f32 0.0, %v1300
        %v1302 = vpop.f32.mrf.mxu0
        %1303 = vmatprep.mubr.f32.mxu0 0.0
        %1304 = vmatmul.mubr.f32.gmra.mxu0 %v732
        %v1305 = vpop.f32.mrf.mxu0
        %v1306 = vadd.f32 0.0, %v1305
        %v1307 = vpop.f32.mrf.mxu0
        %1308 = vmatprep.mubr.f32.mxu0 0.0
        %1309 = vmatmul.mubr.f32.gmra.mxu0 %v735
        %v1310 = vpop.f32.mrf.mxu0
        %v1311 = vadd.f32 0.0, %v1310
        %v1312 = vpop.f32.mrf.mxu0
        %1313 = vmatprep.mubr.f32.mxu0 0.0
        %1314 = vmatmul.mubr.f32.gmra.mxu0 %v738
        %v1315 = vpop.f32.mrf.mxu0
        %v1316 = vadd.f32 0.0, %v1315
        %v1317 = vpop.f32.mrf.mxu0
        %1318 = vmatprep.mubr.f32.mxu0 0.0
        %1319 = vmatmul.mubr.f32.gmra.mxu0 %v741
        %v1320 = vpop.f32.mrf.mxu0
        %v1321 = vadd.f32 0.0, %v1320
        %v1322 = vpop.f32.mrf.mxu0
        %1323 = vmatprep.mubr.f32.mxu0 0.0
        %1324 = vmatmul.mubr.f32.gmra.mxu0 %v744
        %v1325 = vpop.f32.mrf.mxu0
        %v1326 = vadd.f32 0.0, %v1325
        %v1327 = vpop.f32.mrf.mxu0
        %1328 = vmatprep.mubr.f32.mxu0 0.0
        %1329 = vmatmul.mubr.f32.gmra.mxu0 %v747
        %v1330 = vpop.f32.mrf.mxu0
        %v1331 = vadd.f32 0.0, %v1330
        %v1332 = vpop.f32.mrf.mxu0
        %1333 = vmatprep.mubr.f32.mxu0 0.0
        %1334 = vmatmul.mubr.f32.gmra.mxu0 %v750
        %v1335 = vpop.f32.mrf.mxu0
        %v1336 = vadd.f32 0.0, %v1335
        %v1337 = vpop.f32.mrf.mxu0
        %1338 = vmatprep.mubr.f32.mxu0 0.0
        %1339 = vmatmul.mubr.f32.gmra.mxu0 %v753
        %v1340 = vpop.f32.mrf.mxu0
        %v1341 = vadd.f32 0.0, %v1340
        %v1342 = vpop.f32.mrf.mxu0
        %1343 = vmatprep.mubr.f32.mxu0 0.0
        %1344 = vmatmul.mubr.f32.gmra.mxu0 %v756
        %v1345 = vpop.f32.mrf.mxu0
        %v1346 = vadd.f32 0.0, %v1345
        %v1347 = vpop.f32.mrf.mxu0
        %1348 = vmatprep.mubr.f32.mxu0 0.0
        %1349 = vmatmul.mubr.f32.gmra.mxu0 %v759
        %v1350 = vpop.f32.mrf.mxu0
        %v1351 = vadd.f32 0.0, %v1350
        %v1352 = vpop.f32.mrf.mxu0
        %1353 = vmatprep.mubr.f32.mxu0 0.0
        %1354 = vmatmul.mubr.f32.gmra.mxu0 %v762
        %v1355 = vpop.f32.mrf.mxu0
        %v1356 = vadd.f32 0.0, %v1355
        %v1357 = vpop.f32.mrf.mxu0
        %1358 = vmatprep.mubr.f32.mxu0 0.0
        %1359 = vmatmul.mubr.f32.gmra.mxu0 %v765
        %v1360 = vpop.f32.mrf.mxu0
        %v1361 = vadd.f32 0.0, %v1360
        %v1362 = vpop.f32.mrf.mxu0
        %1363 = vmatprep.mubr.f32.mxu0 0.0
        %1364 = vmatmul.mubr.f32.gmra.mxu0 %v768
        %v1365 = vpop.f32.mrf.mxu0
        %v1366 = vadd.f32 0.0, %v1365
        %v1367 = vpop.f32.mrf.mxu0
        %1368 = vmatprep.mubr.f32.mxu0 0.0
        %1369 = vmatmul.mubr.f32.gmra.mxu0 %v771
        %v1370 = vpop.f32.mrf.mxu0
        %v1371 = vadd.f32 0.0, %v1370
        %v1372 = vpop.f32.mrf.mxu0
        %1373 = vmatprep.mubr.f32.mxu0 0.0
        %1374 = vmatmul.mubr.f32.gmra.mxu0 %v774
        %v1375 = vpop.f32.mrf.mxu0
        %v1376 = vadd.f32 0.0, %v1375
        %v1377 = vpop.f32.mrf.mxu0
        %1378 = vmatprep.mubr.f32.mxu0 0.0
        %1379 = vmatmul.mubr.f32.gmra.mxu0 %v777
        %v1380 = vpop.f32.mrf.mxu0
        %v1381 = vadd.f32 0.0, %v1380
        %v1382 = vpop.f32.mrf.mxu0
        %1383 = vmatprep.mubr.f32.mxu0 0.0
        %1384 = vmatmul.mubr.f32.gmra.mxu0 %v780
        %v1385 = vpop.f32.mrf.mxu0
        %v1386 = vadd.f32 0.0, %v1385
        %v1387 = vpop.f32.mrf.mxu0
        %1388 = vmatprep.mubr.f32.mxu0 0.0
        %1389 = vmatmul.mubr.f32.gmra.mxu0 %v783
        %v1390 = vpop.f32.mrf.mxu0
        %v1391 = vadd.f32 0.0, %v1390
        %v1392 = vpop.f32.mrf.mxu0
        %1393 = vmatprep.mubr.f32.mxu0 0.0
        %1394 = vmatmul.mubr.f32.gmra.mxu0 %v786
        %v1395 = vpop.f32.mrf.mxu0
        %v1396 = vadd.f32 0.0, %v1395
        %v1397 = vpop.f32.mrf.mxu0
        %1398 = vmatprep.mubr.f32.mxu0 0.0
        %1399 = vmatmul.mubr.f32.gmra.mxu0 %v789
        %v1400 = vpop.f32.mrf.mxu0
        %v1401 = vadd.f32 0.0, %v1400
        %v1402 = vpop.f32.mrf.mxu0
        %1403 = vmatprep.mubr.f32.mxu0 0.0
        %1404 = vmatmul.mubr.f32.gmra.mxu0 %v792
        %v1405 = vpop.f32.mrf.mxu0
        %v1406 = vadd.f32 0.0, %v1405
        %v1407 = vpop.f32.mrf.mxu0
        %1408 = vmatprep.mubr.f32.mxu0 0.0
        %1409 = vmatmul.mubr.f32.gmra.mxu0 %v795
        %v1410 = vpop.f32.mrf.mxu0
        %v1411 = vadd.f32 0.0, %v1410
        %v1412 = vpop.f32.mrf.mxu0
        %1413 = vmatprep.mubr.f32.mxu0 0.0
        %1414 = vmatmul.mubr.f32.gmra.mxu0 %v798
        %v1415 = vpop.f32.mrf.mxu0
        %v1416 = vadd.f32 0.0, %v1415
        %v1417 = vpop.f32.mrf.mxu0
        %1418 = vmatprep.mubr.f32.mxu0 0.0
        %1419 = vmatmul.mubr.f32.gmra.mxu0 %v801
        %v1420 = vpop.f32.mrf.mxu0
        %v1421 = vadd.f32 0.0, %v1420
        %v1422 = vpop.f32.mrf.mxu0
        %1423 = vmatprep.mubr.f32.mxu0 0.0
        %1424 = vmatmul.mubr.f32.gmra.mxu0 %v804
        %v1425 = vpop.f32.mrf.mxu0
        %v1426 = vadd.f32 0.0, %v1425
        %v1427 = vpop.f32.mrf.mxu0
        %1428 = vmatprep.mubr.f32.mxu0 0.0
        %1429 = vmatmul.mubr.f32.gmra.mxu0 %v807
        %v1430 = vpop.f32.mrf.mxu0
        %v1431 = vadd.f32 0.0, %v1430
        %v1432 = vpop.f32.mrf.mxu0
        %1433 = vmatprep.mubr.f32.mxu0 0.0
        %1434 = vmatmul.mubr.f32.gmra.mxu0 %v810
        %v1435 = vpop.f32.mrf.mxu0
        %v1436 = vadd.f32 0.0, %v1435
        %v1437 = vpop.f32.mrf.mxu0
        %1438 = vmatprep.mubr.f32.mxu0 0.0
        %1439 = vmatmul.mubr.f32.gmra.mxu0 %v813
        %v1440 = vpop.f32.mrf.mxu0
        %v1441 = vadd.f32 0.0, %v1440
        %v1442 = vpop.f32.mrf.mxu0
        %1443 = vmatprep.mubr.f32.mxu0 0.0
        %1444 = vmatmul.mubr.f32.gmra.mxu0 %v816
        %v1445 = vpop.f32.mrf.mxu0
        %v1446 = vadd.f32 0.0, %v1445
        %v1447 = vpop.f32.mrf.mxu0
        %1448 = vmatprep.mubr.f32.mxu0 0.0
        %1449 = vmatmul.mubr.f32.gmra.mxu0 %v819
        %v1450 = vpop.f32.mrf.mxu0
        %v1451 = vadd.f32 0.0, %v1450
        %v1452 = vpop.f32.mrf.mxu0
        %1453 = vmatprep.mubr.f32.mxu0 0.0
        %1454 = vmatmul.mubr.f32.gmra.mxu0 %v822
        %v1455 = vpop.f32.mrf.mxu0
        %v1456 = vadd.f32 0.0, %v1455
        %v1457 = vpop.f32.mrf.mxu0
        %1458 = vmatprep.mubr.f32.mxu0 0.0
        %1459 = vmatmul.mubr.f32.gmra.mxu0 %v825
        %v1460 = vpop.f32.mrf.mxu0
        %v1461 = vadd.f32 0.0, %v1460
        %v1462 = vpop.f32.mrf.mxu0
        %1463 = vmatprep.mubr.f32.mxu0 0.0
        %1464 = vmatmul.mubr.f32.gmra.mxu0 %v828
        %v1465 = vpop.f32.mrf.mxu0
        %v1466 = vadd.f32 0.0, %v1465
        %v1467 = vpop.f32.mrf.mxu0
        %1468 = vmatprep.mubr.f32.mxu0 0.0
        %1469 = vmatmul.mubr.f32.gmra.mxu0 %v831
        %v1470 = vpop.f32.mrf.mxu0
        %v1471 = vadd.f32 0.0, %v1470
        %v1472 = vpop.f32.mrf.mxu0
        %1473 = vmatprep.mubr.f32.mxu0 0.0
        %1474 = vmatmul.mubr.f32.gmra.mxu0 %v834
        %v1475 = vpop.f32.mrf.mxu0
        %v1476 = vadd.f32 0.0, %v1475
        %v1477 = vpop.f32.mrf.mxu0
        %1478 = vmatprep.mubr.f32.mxu0 0.0
        %1479 = vmatmul.mubr.f32.gmra.mxu0 %v837
        %v1480 = vpop.f32.mrf.mxu0
        %v1481 = vadd.f32 0.0, %v1480
        %v1482 = vpop.f32.mrf.mxu0
        %1483 = vmatprep.mubr.f32.mxu0 0.0
        %1484 = vmatmul.mubr.f32.gmra.mxu0 %v840
        %v1485 = vpop.f32.mrf.mxu0
        %v1486 = vadd.f32 0.0, %v1485
        %v1487 = vpop.f32.mrf.mxu0
        %1488 = vmatprep.mubr.f32.mxu0 0.0
        %1489 = vmatmul.mubr.f32.gmra.mxu0 %v843
        %v1490 = vpop.f32.mrf.mxu0
        %v1491 = vadd.f32 0.0, %v1490
        %v1492 = vpop.f32.mrf.mxu0
        %1493 = vmatprep.mubr.f32.mxu0 0.0
        %1494 = vmatmul.mubr.f32.gmra.mxu0 %v846
        %v1495 = vpop.f32.mrf.mxu0
        %v1496 = vadd.f32 0.0, %v1495
        %v1497 = vpop.f32.mrf.mxu0
        %1498 = vmatprep.mubr.f32.mxu0 0.0
        %1499 = vmatmul.mubr.f32.gmra.mxu0 %v849
        %v1500 = vpop.f32.mrf.mxu0
        %v1501 = vadd.f32 0.0, %v1500
        %v1502 = vpop.f32.mrf.mxu0
        %1503 = vmatprep.mubr.f32.mxu0 0.0
        %1504 = vmatmul.mubr.f32.gmra.mxu0 %v852
        %v1505 = vpop.f32.mrf.mxu0
        %v1506 = vadd.f32 0.0, %v1505
        %v1507 = vpop.f32.mrf.mxu0
        %1508 = vmatprep.mubr.f32.mxu0 0.0
        %1509 = vmatmul.mubr.f32.gmra.mxu0 %v855
        %v1510 = vpop.f32.mrf.mxu0
        %v1511 = vadd.f32 0.0, %v1510
        %v1512 = vpop.f32.mrf.mxu0
        %1513 = vmatprep.mubr.f32.mxu0 0.0
        %1514 = vmatmul.mubr.f32.gmra.mxu0 %v858
        %v1515 = vpop.f32.mrf.mxu0
        %v1516 = vadd.f32 0.0, %v1515
        %v1517 = vpop.f32.mrf.mxu0
        %1518 = vmatprep.mubr.f32.mxu0 0.0
        %1519 = vmatmul.mubr.f32.gmra.mxu0 %v861
        %v1520 = vpop.f32.mrf.mxu0
        %v1521 = vadd.f32 0.0, %v1520
        %v1522 = vpop.f32.mrf.mxu0
        %1523 = vmatprep.mubr.f32.mxu0 0.0
        %1524 = vmatmul.mubr.f32.gmra.mxu0 %v864
        %v1525 = vpop.f32.mrf.mxu0
        %v1526 = vadd.f32 0.0, %v1525
        %v1527 = vpop.f32.mrf.mxu0
        %1528 = vmatprep.mubr.f32.mxu0 0.0
        %1529 = vmatmul.mubr.f32.gmra.mxu0 %v867
        %v1530 = vpop.f32.mrf.mxu0
        %v1531 = vadd.f32 0.0, %v1530
        %v1532 = vpop.f32.mrf.mxu0
        %1533 = vmatprep.mubr.f32.mxu0 0.0
        %1534 = vmatmul.mubr.f32.gmra.mxu0 %v870
        %v1535 = vpop.f32.mrf.mxu0
        %v1536 = vadd.f32 0.0, %v1535
        %v1537 = vpop.f32.mrf.mxu0
        %1538 = vmatprep.mubr.f32.mxu0 0.0
        %1539 = vmatmul.mubr.f32.gmra.mxu0 %v873
        %v1540 = vpop.f32.mrf.mxu0
        %v1541 = vadd.f32 0.0, %v1540
        %v1542 = vpop.f32.mrf.mxu0
        %1543 = vmatprep.mubr.f32.mxu0 0.0
        %1544 = vmatmul.mubr.f32.gmra.mxu0 %v876
        %v1545 = vpop.f32.mrf.mxu0
        %v1546 = vadd.f32 0.0, %v1545
        %v1547 = vpop.f32.mrf.mxu0
        %1548 = vmatprep.mubr.f32.mxu0 0.0
        %1549 = vmatmul.mubr.f32.gmra.mxu0 %v879
        %v1550 = vpop.f32.mrf.mxu0
        %v1551 = vadd.f32 0.0, %v1550
        %v1552 = vpop.f32.mrf.mxu0
        %1553 = vmatprep.mubr.f32.mxu0 0.0
        %1554 = vmatmul.mubr.f32.gmra.mxu0 %v882
        %v1555 = vpop.f32.mrf.mxu0
        %v1556 = vadd.f32 0.0, %v1555
        %v1557 = vpop.f32.mrf.mxu0
        %1558 = vmatprep.mubr.f32.mxu0 0.0
        %1559 = vmatmul.mubr.f32.gmra.mxu0 %v885
        %v1560 = vpop.f32.mrf.mxu0
        %v1561 = vadd.f32 0.0, %v1560
        %v1562 = vpop.f32.mrf.mxu0
        %1563 = vmatprep.mubr.f32.mxu0 0.0
        %1564 = vmatmul.mubr.f32.gmra.mxu0 %v888
        %v1565 = vpop.f32.mrf.mxu0
        %v1566 = vadd.f32 0.0, %v1565
        %v1567 = vpop.f32.mrf.mxu0
        %1568 = vmatprep.mubr.f32.mxu0 0.0
        %1569 = vmatmul.mubr.f32.gmra.mxu0 %v891
        %v1570 = vpop.f32.mrf.mxu0
        %v1571 = vadd.f32 0.0, %v1570
        %v1572 = vpop.f32.mrf.mxu0
        %1573 = vmatprep.mubr.f32.mxu0 0.0
        %1574 = vmatmul.mubr.f32.gmra.mxu0 %v894
        %v1575 = vpop.f32.mrf.mxu0
        %v1576 = vadd.f32 0.0, %v1575
        %v1577 = vpop.f32.mrf.mxu0
        %1578 = vmatprep.mubr.f32.mxu0 0.0
        %1579 = vmatmul.mubr.f32.gmra.mxu0 %v897
        %v1580 = vpop.f32.mrf.mxu0
        %v1581 = vadd.f32 0.0, %v1580
        %v1582 = vpop.f32.mrf.mxu0
        %1583 = vmatprep.mubr.f32.mxu0 0.0
        %1584 = vmatmul.mubr.f32.gmra.mxu0 %v900
        %v1585 = vpop.f32.mrf.mxu0
        %v1586 = vadd.f32 0.0, %v1585
        %v1587 = vpop.f32.mrf.mxu0
        %1588 = vmatprep.mubr.f32.mxu0 0.0
        %1589 = vmatmul.mubr.f32.gmra.mxu0 %v903
        %v1590 = vpop.f32.mrf.mxu0
        %v1591 = vadd.f32 0.0, %v1590
        %v1592 = vpop.f32.mrf.mxu0
        %1593 = vmatprep.mubr.f32.mxu0 0.0
        %1594 = vmatmul.mubr.f32.gmra.mxu0 %v906
        %v1595 = vpop.f32.mrf.mxu0
        %v1596 = vadd.f32 0.0, %v1595
        %v1597 = vpop.f32.mrf.mxu0
        %1598 = vmatprep.mubr.f32.mxu0 0.0
        %1599 = vmatmul.mubr.f32.gmra.mxu0 %v909
        %v1600 = vpop.f32.mrf.mxu0
        %v1601 = vadd.f32 0.0, %v1600
        %v1602 = vpop.f32.mrf.mxu0
        %1603 = vmatprep.mubr.f32.mxu0 0.0
        %1604 = vmatmul.mubr.f32.gmra.mxu0 %v912
        %v1605 = vpop.f32.mrf.mxu0
        %v1606 = vadd.f32 0.0, %v1605
        %v1607 = vpop.f32.mrf.mxu0
        %1608 = vmatprep.mubr.f32.mxu0 0.0
        %1609 = vmatmul.mubr.f32.gmra.mxu0 %v915
        %v1610 = vpop.f32.mrf.mxu0
        %v1611 = vadd.f32 0.0, %v1610
        %v1612 = vpop.f32.mrf.mxu0
        %1613 = vmatprep.mubr.f32.mxu0 0.0
        %1614 = vmatmul.mubr.f32.gmra.mxu0 %v918
        %v1615 = vpop.f32.mrf.mxu0
        %v1616 = vadd.f32 0.0, %v1615
        %v1617 = vpop.f32.mrf.mxu0
        %1618 = vmatprep.mubr.f32.mxu0 0.0
        %1619 = vmatmul.mubr.f32.gmra.mxu0 %v921
        %v1620 = vpop.f32.mrf.mxu0
        %v1621 = vadd.f32 0.0, %v1620
        %v1622 = vpop.f32.mrf.mxu0
        %1623 = vmatprep.mubr.f32.mxu0 0.0
        %1624 = vmatmul.mubr.f32.gmra.mxu0 %v924
        %v1625 = vpop.f32.mrf.mxu0
        %v1626 = vadd.f32 0.0, %v1625
        %v1627 = vpop.f32.mrf.mxu0
        %1628 = vmatprep.mubr.f32.mxu0 0.0
        %1629 = vmatmul.mubr.f32.gmra.mxu0 %v927
        %v1630 = vpop.f32.mrf.mxu0
        %v1631 = vadd.f32 0.0, %v1630
        %v1632 = vpop.f32.mrf.mxu0
        %1633 = vdwg.mxu0
        %vm1634 = vcmp.gt.f32.partialorder %v996, 0.0
        %vm1635 = vcmp.gt.f32.partialorder %v1001, 0.0
        %vm1636 = vcmp.gt.f32.partialorder %v1006, 0.0
        %vm1637 = vcmp.gt.f32.partialorder %v1011, 0.0
        %vm1638 = vcmp.gt.f32.partialorder %v1016, 0.0
        %vm1639 = vcmp.gt.f32.partialorder %v1021, 0.0
        %vm1640 = vcmp.gt.f32.partialorder %v1026, 0.0
        %vm1641 = vcmp.gt.f32.partialorder %v1031, 0.0
        %vm1642 = vcmp.gt.f32.partialorder %v1036, 0.0
        %vm1643 = vcmp.gt.f32.partialorder %v1041, 0.0
        %vm1644 = vcmp.gt.f32.partialorder %v1046, 0.0
        %vm1645 = vcmp.gt.f32.partialorder %v1051, 0.0
        %vm1646 = vcmp.gt.f32.partialorder %v1056, 0.0
        %vm1647 = vcmp.gt.f32.partialorder %v1061, 0.0
        %vm1648 = vcmp.gt.f32.partialorder %v1066, 0.0
        %vm1649 = vcmp.gt.f32.partialorder %v1071, 0.0
        %vm1650 = vcmp.gt.f32.partialorder %v1076, 0.0
        %vm1651 = vcmp.gt.f32.partialorder %v1081, 0.0
        %vm1652 = vcmp.gt.f32.partialorder %v1086, 0.0
        %vm1653 = vcmp.gt.f32.partialorder %v1091, 0.0
        %vm1654 = vcmp.gt.f32.partialorder %v1096, 0.0
        %vm1655 = vcmp.gt.f32.partialorder %v1101, 0.0
        %vm1656 = vcmp.gt.f32.partialorder %v1106, 0.0
        %vm1657 = vcmp.gt.f32.partialorder %v1111, 0.0
        %vm1658 = vcmp.gt.f32.partialorder %v1116, 0.0
        %vm1659 = vcmp.gt.f32.partialorder %v1121, 0.0
        %vm1660 = vcmp.gt.f32.partialorder %v1126, 0.0
        %vm1661 = vcmp.gt.f32.partialorder %v1131, 0.0
        %vm1662 = vcmp.gt.f32.partialorder %v1136, 0.0
        %vm1663 = vcmp.gt.f32.partialorder %v1141, 0.0
        %vm1664 = vcmp.gt.f32.partialorder %v1146, 0.0
        %vm1665 = vcmp.gt.f32.partialorder %v1151, 0.0
        %vm1666 = vcmp.gt.f32.partialorder %v1156, 0.0
        %vm1667 = vcmp.gt.f32.partialorder %v1161, 0.0
        %vm1668 = vcmp.gt.f32.partialorder %v1166, 0.0
        %vm1669 = vcmp.gt.f32.partialorder %v1171, 0.0
        %vm1670 = vcmp.gt.f32.partialorder %v1176, 0.0
        %vm1671 = vcmp.gt.f32.partialorder %v1181, 0.0
        %vm1672 = vcmp.gt.f32.partialorder %v1186, 0.0
        %vm1673 = vcmp.gt.f32.partialorder %v1191, 0.0
        %vm1674 = vcmp.gt.f32.partialorder %v1196, 0.0
        %vm1675 = vcmp.gt.f32.partialorder %v1201, 0.0
        %vm1676 = vcmp.gt.f32.partialorder %v1206, 0.0
        %vm1677 = vcmp.gt.f32.partialorder %v1211, 0.0
        %vm1678 = vcmp.gt.f32.partialorder %v1216, 0.0
        %vm1679 = vcmp.gt.f32.partialorder %v1221, 0.0
        %vm1680 = vcmp.gt.f32.partialorder %v1226, 0.0
        %vm1681 = vcmp.gt.f32.partialorder %v1231, 0.0
        %vm1682 = vcmp.gt.f32.partialorder %v1236, 0.0
        %vm1683 = vcmp.gt.f32.partialorder %v1241, 0.0
        %vm1684 = vcmp.gt.f32.partialorder %v1246, 0.0
        %vm1685 = vcmp.gt.f32.partialorder %v1251, 0.0
        %vm1686 = vcmp.gt.f32.partialorder %v1256, 0.0
        %vm1687 = vcmp.gt.f32.partialorder %v1261, 0.0
        %vm1688 = vcmp.gt.f32.partialorder %v1266, 0.0
        %vm1689 = vcmp.gt.f32.partialorder %v1271, 0.0
        %vm1690 = vcmp.gt.f32.partialorder %v1276, 0.0
        %vm1691 = vcmp.gt.f32.partialorder %v1281, 0.0
        %vm1692 = vcmp.gt.f32.partialorder %v1286, 0.0
        %vm1693 = vcmp.gt.f32.partialorder %v1291, 0.0
        %vm1694 = vcmp.gt.f32.partialorder %v1296, 0.0
        %vm1695 = vcmp.gt.f32.partialorder %v1301, 0.0
        %vm1696 = vcmp.gt.f32.partialorder %v1306, 0.0
        %vm1697 = vcmp.gt.f32.partialorder %v1311, 0.0
        %vm1698 = vcmp.gt.f32.partialorder %v1316, 0.0
        %vm1699 = vcmp.gt.f32.partialorder %v1321, 0.0
        %vm1700 = vcmp.gt.f32.partialorder %v1326, 0.0
        %vm1701 = vcmp.gt.f32.partialorder %v1331, 0.0
        %vm1702 = vcmp.gt.f32.partialorder %v1336, 0.0
        %vm1703 = vcmp.gt.f32.partialorder %v1341, 0.0
        %vm1704 = vcmp.gt.f32.partialorder %v1346, 0.0
        %vm1705 = vcmp.gt.f32.partialorder %v1351, 0.0
        %vm1706 = vcmp.gt.f32.partialorder %v1356, 0.0
        %vm1707 = vcmp.gt.f32.partialorder %v1361, 0.0
        %vm1708 = vcmp.gt.f32.partialorder %v1366, 0.0
        %vm1709 = vcmp.gt.f32.partialorder %v1371, 0.0
        %vm1710 = vcmp.gt.f32.partialorder %v1376, 0.0
        %vm1711 = vcmp.gt.f32.partialorder %v1381, 0.0
        %vm1712 = vcmp.gt.f32.partialorder %v1386, 0.0
        %vm1713 = vcmp.gt.f32.partialorder %v1391, 0.0
        %vm1714 = vcmp.gt.f32.partialorder %v1396, 0.0
        %vm1715 = vcmp.gt.f32.partialorder %v1401, 0.0
        %vm1716 = vcmp.gt.f32.partialorder %v1406, 0.0
        %vm1717 = vcmp.gt.f32.partialorder %v1411, 0.0
        %vm1718 = vcmp.gt.f32.partialorder %v1416, 0.0
        %vm1719 = vcmp.gt.f32.partialorder %v1421, 0.0
        %vm1720 = vcmp.gt.f32.partialorder %v1426, 0.0
        %vm1721 = vcmp.gt.f32.partialorder %v1431, 0.0
        %vm1722 = vcmp.gt.f32.partialorder %v1436, 0.0
        %vm1723 = vcmp.gt.f32.partialorder %v1441, 0.0
        %vm1724 = vcmp.gt.f32.partialorder %v1446, 0.0
        %vm1725 = vcmp.gt.f32.partialorder %v1451, 0.0
        %vm1726 = vcmp.gt.f32.partialorder %v1456, 0.0
        %vm1727 = vcmp.gt.f32.partialorder %v1461, 0.0
        %vm1728 = vcmp.gt.f32.partialorder %v1466, 0.0
        %vm1729 = vcmp.gt.f32.partialorder %v1471, 0.0
        %vm1730 = vcmp.gt.f32.partialorder %v1476, 0.0
        %vm1731 = vcmp.gt.f32.partialorder %v1481, 0.0
        %vm1732 = vcmp.gt.f32.partialorder %v1486, 0.0
        %vm1733 = vcmp.gt.f32.partialorder %v1491, 0.0
        %vm1734 = vcmp.gt.f32.partialorder %v1496, 0.0
        %vm1735 = vcmp.gt.f32.partialorder %v1501, 0.0
        %vm1736 = vcmp.gt.f32.partialorder %v1506, 0.0
        %vm1737 = vcmp.gt.f32.partialorder %v1511, 0.0
        %vm1738 = vcmp.gt.f32.partialorder %v1516, 0.0
        %vm1739 = vcmp.gt.f32.partialorder %v1521, 0.0
        %vm1740 = vcmp.gt.f32.partialorder %v1526, 0.0
        %vm1741 = vcmp.gt.f32.partialorder %v1531, 0.0
        %vm1742 = vcmp.gt.f32.partialorder %v1536, 0.0
        %vm1743 = vcmp.gt.f32.partialorder %v1541, 0.0
        %vm1744 = vcmp.gt.f32.partialorder %v1546, 0.0
        %vm1745 = vcmp.gt.f32.partialorder %v1551, 0.0
        %vm1746 = vcmp.gt.f32.partialorder %v1556, 0.0
        %vm1747 = vcmp.gt.f32.partialorder %v1561, 0.0
        %vm1748 = vcmp.gt.f32.partialorder %v1566, 0.0
        %vm1749 = vcmp.gt.f32.partialorder %v1571, 0.0
        %vm1750 = vcmp.gt.f32.partialorder %v1576, 0.0
        %vm1751 = vcmp.gt.f32.partialorder %v1581, 0.0
        %vm1752 = vcmp.gt.f32.partialorder %v1586, 0.0
        %vm1753 = vcmp.gt.f32.partialorder %v1591, 0.0
        %vm1754 = vcmp.gt.f32.partialorder %v1596, 0.0
        %vm1755 = vcmp.gt.f32.partialorder %v1601, 0.0
        %vm1756 = vcmp.gt.f32.partialorder %v1606, 0.0
        %vm1757 = vcmp.gt.f32.partialorder %v1611, 0.0
        %vm1758 = vcmp.gt.f32.partialorder %v1616, 0.0
        %vm1759 = vcmp.gt.f32.partialorder %v1621, 0.0
        %vm1760 = vcmp.gt.f32.partialorder %v1626, 0.0
        %vm1761 = vcmp.gt.f32.partialorder %v1631, 0.0
        %v1762 = vmul.f32 %v996, 0.2
        %v1763 = vmul.f32 %v1001, 0.2
        %v1764 = vmul.f32 %v1006, 0.2
        %v1765 = vmul.f32 %v1011, 0.2
        %v1766 = vmul.f32 %v1016, 0.2
        %v1767 = vmul.f32 %v1021, 0.2
        %v1768 = vmul.f32 %v1026, 0.2
        %v1769 = vmul.f32 %v1031, 0.2
        %v1770 = vmul.f32 %v1036, 0.2
        %v1771 = vmul.f32 %v1041, 0.2
        %v1772 = vmul.f32 %v1046, 0.2
        %v1773 = vmul.f32 %v1051, 0.2
        %v1774 = vmul.f32 %v1056, 0.2
        %v1775 = vmul.f32 %v1061, 0.2
        %v1776 = vmul.f32 %v1066, 0.2
        %v1777 = vmul.f32 %v1071, 0.2
        %v1778 = vmul.f32 %v1076, 0.2
        %v1779 = vmul.f32 %v1081, 0.2
        %v1780 = vmul.f32 %v1086, 0.2
        %v1781 = vmul.f32 %v1091, 0.2
        %v1782 = vmul.f32 %v1096, 0.2
        %v1783 = vmul.f32 %v1101, 0.2
        %v1784 = vmul.f32 %v1106, 0.2
        %v1785 = vmul.f32 %v1111, 0.2
        %v1786 = vmul.f32 %v1116, 0.2
        %v1787 = vmul.f32 %v1121, 0.2
        %v1788 = vmul.f32 %v1126, 0.2
        %v1789 = vmul.f32 %v1131, 0.2
        %v1790 = vmul.f32 %v1136, 0.2
        %v1791 = vmul.f32 %v1141, 0.2
        %v1792 = vmul.f32 %v1146, 0.2
        %v1793 = vmul.f32 %v1151, 0.2
        %v1794 = vmul.f32 %v1156, 0.2
        %v1795 = vmul.f32 %v1161, 0.2
        %v1796 = vmul.f32 %v1166, 0.2
        %v1797 = vmul.f32 %v1171, 0.2
        %v1798 = vmul.f32 %v1176, 0.2
        %v1799 = vmul.f32 %v1181, 0.2
        %v1800 = vmul.f32 %v1186, 0.2
        %v1801 = vmul.f32 %v1191, 0.2
        %v1802 = vmul.f32 %v1196, 0.2
        %v1803 = vmul.f32 %v1201, 0.2
        %v1804 = vmul.f32 %v1206, 0.2
        %v1805 = vmul.f32 %v1211, 0.2
        %v1806 = vmul.f32 %v1216, 0.2
        %v1807 = vmul.f32 %v1221, 0.2
        %v1808 = vmul.f32 %v1226, 0.2
        %v1809 = vmul.f32 %v1231, 0.2
        %v1810 = vmul.f32 %v1236, 0.2
        %v1811 = vmul.f32 %v1241, 0.2
        %v1812 = vmul.f32 %v1246, 0.2
        %v1813 = vmul.f32 %v1251, 0.2
        %v1814 = vmul.f32 %v1256, 0.2
        %v1815 = vmul.f32 %v1261, 0.2
        %v1816 = vmul.f32 %v1266, 0.2
        %v1817 = vmul.f32 %v1271, 0.2
        %v1818 = vmul.f32 %v1276, 0.2
        %v1819 = vmul.f32 %v1281, 0.2
        %v1820 = vmul.f32 %v1286, 0.2
        %v1821 = vmul.f32 %v1291, 0.2
        %v1822 = vmul.f32 %v1296, 0.2
        %v1823 = vmul.f32 %v1301, 0.2
        %v1824 = vmul.f32 %v1306, 0.2
        %v1825 = vmul.f32 %v1311, 0.2
        %v1826 = vmul.f32 %v1316, 0.2
        %v1827 = vmul.f32 %v1321, 0.2
        %v1828 = vmul.f32 %v1326, 0.2
        %v1829 = vmul.f32 %v1331, 0.2
        %v1830 = vmul.f32 %v1336, 0.2
        %v1831 = vmul.f32 %v1341, 0.2
        %v1832 = vmul.f32 %v1346, 0.2
        %v1833 = vmul.f32 %v1351, 0.2
        %v1834 = vmul.f32 %v1356, 0.2
        %v1835 = vmul.f32 %v1361, 0.2
        %v1836 = vmul.f32 %v1366, 0.2
        %v1837 = vmul.f32 %v1371, 0.2
        %v1838 = vmul.f32 %v1376, 0.2
        %v1839 = vmul.f32 %v1381, 0.2
        %v1840 = vmul.f32 %v1386, 0.2
        %v1841 = vmul.f32 %v1391, 0.2
        %v1842 = vmul.f32 %v1396, 0.2
        %v1843 = vmul.f32 %v1401, 0.2
        %v1844 = vmul.f32 %v1406, 0.2
        %v1845 = vmul.f32 %v1411, 0.2
        %v1846 = vmul.f32 %v1416, 0.2
        %v1847 = vmul.f32 %v1421, 0.2
        %v1848 = vmul.f32 %v1426, 0.2
        %v1849 = vmul.f32 %v1431, 0.2
        %v1850 = vmul.f32 %v1436, 0.2
        %v1851 = vmul.f32 %v1441, 0.2
        %v1852 = vmul.f32 %v1446, 0.2
        %v1853 = vmul.f32 %v1451, 0.2
        %v1854 = vmul.f32 %v1456, 0.2
        %v1855 = vmul.f32 %v1461, 0.2
        %v1856 = vmul.f32 %v1466, 0.2
        %v1857 = vmul.f32 %v1471, 0.2
        %v1858 = vmul.f32 %v1476, 0.2
        %v1859 = vmul.f32 %v1481, 0.2
        %v1860 = vmul.f32 %v1486, 0.2
        %v1861 = vmul.f32 %v1491, 0.2
        %v1862 = vmul.f32 %v1496, 0.2
        %v1863 = vmul.f32 %v1501, 0.2
        %v1864 = vmul.f32 %v1506, 0.2
        %v1865 = vmul.f32 %v1511, 0.2
        %v1866 = vmul.f32 %v1516, 0.2
        %v1867 = vmul.f32 %v1521, 0.2
        %v1868 = vmul.f32 %v1526, 0.2
        %v1869 = vmul.f32 %v1531, 0.2
        %v1870 = vmul.f32 %v1536, 0.2
        %v1871 = vmul.f32 %v1541, 0.2
        %v1872 = vmul.f32 %v1546, 0.2
        %v1873 = vmul.f32 %v1551, 0.2
        %v1874 = vmul.f32 %v1556, 0.2
        %v1875 = vmul.f32 %v1561, 0.2
        %v1876 = vmul.f32 %v1566, 0.2
        %v1877 = vmul.f32 %v1571, 0.2
        %v1878 = vmul.f32 %v1576, 0.2
        %v1879 = vmul.f32 %v1581, 0.2
        %v1880 = vmul.f32 %v1586, 0.2
        %v1881 = vmul.f32 %v1591, 0.2
        %v1882 = vmul.f32 %v1596, 0.2
        %v1883 = vmul.f32 %v1601, 0.2
        %v1884 = vmul.f32 %v1606, 0.2
        %v1885 = vmul.f32 %v1611, 0.2
        %v1886 = vmul.f32 %v1616, 0.2
        %v1887 = vmul.f32 %v1621, 0.2
        %v1888 = vmul.f32 %v1626, 0.2
        %v1889 = vmul.f32 %v1631, 0.2
        %v1890 = vsel %vm1634, %v996, %v1762
        %v1891 = vsel %vm1635, %v1001, %v1763
        %v1892 = vsel %vm1636, %v1006, %v1764
        %v1893 = vsel %vm1637, %v1011, %v1765
        %v1894 = vsel %vm1638, %v1016, %v1766
        %v1895 = vsel %vm1639, %v1021, %v1767
        %v1896 = vsel %vm1640, %v1026, %v1768
        %v1897 = vsel %vm1641, %v1031, %v1769
        %v1898 = vsel %vm1642, %v1036, %v1770
        %v1899 = vsel %vm1643, %v1041, %v1771
        %v1900 = vsel %vm1644, %v1046, %v1772
        %v1901 = vsel %vm1645, %v1051, %v1773
        %v1902 = vsel %vm1646, %v1056, %v1774
        %v1903 = vsel %vm1647, %v1061, %v1775
        %v1904 = vsel %vm1648, %v1066, %v1776
        %v1905 = vsel %vm1649, %v1071, %v1777
        %v1906 = vsel %vm1650, %v1076, %v1778
        %v1907 = vsel %vm1651, %v1081, %v1779
        %v1908 = vsel %vm1652, %v1086, %v1780
        %v1909 = vsel %vm1653, %v1091, %v1781
        %v1910 = vsel %vm1654, %v1096, %v1782
        %v1911 = vsel %vm1655, %v1101, %v1783
        %v1912 = vsel %vm1656, %v1106, %v1784
        %v1913 = vsel %vm1657, %v1111, %v1785
        %v1914 = vsel %vm1658, %v1116, %v1786
        %v1915 = vsel %vm1659, %v1121, %v1787
        %v1916 = vsel %vm1660, %v1126, %v1788
        %v1917 = vsel %vm1661, %v1131, %v1789
        %v1918 = vsel %vm1662, %v1136, %v1790
        %v1919 = vsel %vm1663, %v1141, %v1791
        %v1920 = vsel %vm1664, %v1146, %v1792
        %v1921 = vsel %vm1665, %v1151, %v1793
        %v1922 = vsel %vm1666, %v1156, %v1794
        %v1923 = vsel %vm1667, %v1161, %v1795
        %v1924 = vsel %vm1668, %v1166, %v1796
        %v1925 = vsel %vm1669, %v1171, %v1797
        %v1926 = vsel %vm1670, %v1176, %v1798
        %v1927 = vsel %vm1671, %v1181, %v1799
        %v1928 = vsel %vm1672, %v1186, %v1800
        %v1929 = vsel %vm1673, %v1191, %v1801
        %v1930 = vsel %vm1674, %v1196, %v1802
        %v1931 = vsel %vm1675, %v1201, %v1803
        %v1932 = vsel %vm1676, %v1206, %v1804
        %v1933 = vsel %vm1677, %v1211, %v1805
        %v1934 = vsel %vm1678, %v1216, %v1806
        %v1935 = vsel %vm1679, %v1221, %v1807
        %v1936 = vsel %vm1680, %v1226, %v1808
        %v1937 = vsel %vm1681, %v1231, %v1809
        %v1938 = vsel %vm1682, %v1236, %v1810
        %v1939 = vsel %vm1683, %v1241, %v1811
        %v1940 = vsel %vm1684, %v1246, %v1812
        %v1941 = vsel %vm1685, %v1251, %v1813
        %v1942 = vsel %vm1686, %v1256, %v1814
        %v1943 = vsel %vm1687, %v1261, %v1815
        %v1944 = vsel %vm1688, %v1266, %v1816
        %v1945 = vsel %vm1689, %v1271, %v1817
        %v1946 = vsel %vm1690, %v1276, %v1818
        %v1947 = vsel %vm1691, %v1281, %v1819
        %v1948 = vsel %vm1692, %v1286, %v1820
        %v1949 = vsel %vm1693, %v1291, %v1821
        %v1950 = vsel %vm1694, %v1296, %v1822
        %v1951 = vsel %vm1695, %v1301, %v1823
        %v1952 = vsel %vm1696, %v1306, %v1824
        %v1953 = vsel %vm1697, %v1311, %v1825
        %v1954 = vsel %vm1698, %v1316, %v1826
        %v1955 = vsel %vm1699, %v1321, %v1827
        %v1956 = vsel %vm1700, %v1326, %v1828
        %v1957 = vsel %vm1701, %v1331, %v1829
        %v1958 = vsel %vm1702, %v1336, %v1830
        %v1959 = vsel %vm1703, %v1341, %v1831
        %v1960 = vsel %vm1704, %v1346, %v1832
        %v1961 = vsel %vm1705, %v1351, %v1833
        %v1962 = vsel %vm1706, %v1356, %v1834
        %v1963 = vsel %vm1707, %v1361, %v1835
        %v1964 = vsel %vm1708, %v1366, %v1836
        %v1965 = vsel %vm1709, %v1371, %v1837
        %v1966 = vsel %vm1710, %v1376, %v1838
        %v1967 = vsel %vm1711, %v1381, %v1839
        %v1968 = vsel %vm1712, %v1386, %v1840
        %v1969 = vsel %vm1713, %v1391, %v1841
        %v1970 = vsel %vm1714, %v1396, %v1842
        %v1971 = vsel %vm1715, %v1401, %v1843
        %v1972 = vsel %vm1716, %v1406, %v1844
        %v1973 = vsel %vm1717, %v1411, %v1845
        %v1974 = vsel %vm1718, %v1416, %v1846
        %v1975 = vsel %vm1719, %v1421, %v1847
        %v1976 = vsel %vm1720, %v1426, %v1848
        %v1977 = vsel %vm1721, %v1431, %v1849
        %v1978 = vsel %vm1722, %v1436, %v1850
        %v1979 = vsel %vm1723, %v1441, %v1851
        %v1980 = vsel %vm1724, %v1446, %v1852
        %v1981 = vsel %vm1725, %v1451, %v1853
        %v1982 = vsel %vm1726, %v1456, %v1854
        %v1983 = vsel %vm1727, %v1461, %v1855
        %v1984 = vsel %vm1728, %v1466, %v1856
        %v1985 = vsel %vm1729, %v1471, %v1857
        %v1986 = vsel %vm1730, %v1476, %v1858
        %v1987 = vsel %vm1731, %v1481, %v1859
        %v1988 = vsel %vm1732, %v1486, %v1860
        %v1989 = vsel %vm1733, %v1491, %v1861
        %v1990 = vsel %vm1734, %v1496, %v1862
        %v1991 = vsel %vm1735, %v1501, %v1863
        %v1992 = vsel %vm1736, %v1506, %v1864
        %v1993 = vsel %vm1737, %v1511, %v1865
        %v1994 = vsel %vm1738, %v1516, %v1866
        %v1995 = vsel %vm1739, %v1521, %v1867
        %v1996 = vsel %vm1740, %v1526, %v1868
        %v1997 = vsel %vm1741, %v1531, %v1869
        %v1998 = vsel %vm1742, %v1536, %v1870
        %v1999 = vsel %vm1743, %v1541, %v1871
        %v2000 = vsel %vm1744, %v1546, %v1872
        %v2001 = vsel %vm1745, %v1551, %v1873
        %v2002 = vsel %vm1746, %v1556, %v1874
        %v2003 = vsel %vm1747, %v1561, %v1875
        %v2004 = vsel %vm1748, %v1566, %v1876
        %v2005 = vsel %vm1749, %v1571, %v1877
        %v2006 = vsel %vm1750, %v1576, %v1878
        %v2007 = vsel %vm1751, %v1581, %v1879
        %v2008 = vsel %vm1752, %v1586, %v1880
        %v2009 = vsel %vm1753, %v1591, %v1881
        %v2010 = vsel %vm1754, %v1596, %v1882
        %v2011 = vsel %vm1755, %v1601, %v1883
        %v2012 = vsel %vm1756, %v1606, %v1884
        %v2013 = vsel %vm1757, %v1611, %v1885
        %v2014 = vsel %vm1758, %v1616, %v1886
        %v2015 = vsel %vm1759, %v1621, %v1887
        %v2016 = vsel %vm1760, %v1626, %v1888
        %v2017 = vsel %vm1761, %v1631, %v1889
        %vm2018 = vcmask 138368
        %v2019 = vsel %vm2018, %v1890, -inf
        %v2020 = vsel %vm2018, %v1891, -inf
        %v2021 = vsel %vm2018, %v1892, -inf
        %v2022 = vsel %vm2018, %v1893, -inf
        %v2023 = vsel %vm2018, %v1894, -inf
        %v2024 = vmax.f32 %v2019, %v2023
        %v2025 = vsel %vm2018, %v1895, -inf
        %v2026 = vmax.f32 %v2020, %v2025
        %v2027 = vsel %vm2018, %v1896, -inf
        %v2028 = vmax.f32 %v2021, %v2027
        %v2029 = vsel %vm2018, %v1897, -inf
        %v2030 = vmax.f32 %v2022, %v2029
        %v2031 = vsel %vm2018, %v1898, -inf
        %v2032 = vmax.f32 %v2024, %v2031
        %v2033 = vsel %vm2018, %v1899, -inf
        %v2034 = vmax.f32 %v2026, %v2033
        %v2035 = vsel %vm2018, %v1900, -inf
        %v2036 = vmax.f32 %v2028, %v2035
        %v2037 = vsel %vm2018, %v1901, -inf
        %v2038 = vmax.f32 %v2030, %v2037
        %v2039 = vsel %vm2018, %v1902, -inf
        %v2040 = vmax.f32 %v2032, %v2039
        %v2041 = vsel %vm2018, %v1903, -inf
        %v2042 = vmax.f32 %v2034, %v2041
        %v2043 = vsel %vm2018, %v1904, -inf
        %v2044 = vmax.f32 %v2036, %v2043
        %v2045 = vsel %vm2018, %v1905, -inf
        %v2046 = vmax.f32 %v2038, %v2045
        %v2047 = vsel %vm2018, %v1906, -inf
        %v2048 = vmax.f32 %v2040, %v2047
        %v2049 = vsel %vm2018, %v1907, -inf
        %v2050 = vmax.f32 %v2042, %v2049
        %v2051 = vsel %vm2018, %v1908, -inf
        %v2052 = vmax.f32 %v2044, %v2051
        %v2053 = vsel %vm2018, %v1909, -inf
        %v2054 = vmax.f32 %v2046, %v2053
        %v2055 = vsel %vm2018, %v1910, -inf
        %v2056 = vmax.f32 %v2048, %v2055
        %v2057 = vsel %vm2018, %v1911, -inf
        %v2058 = vmax.f32 %v2050, %v2057
        %v2059 = vsel %vm2018, %v1912, -inf
        %v2060 = vmax.f32 %v2052, %v2059
        %v2061 = vsel %vm2018, %v1913, -inf
        %v2062 = vmax.f32 %v2054, %v2061
        %v2063 = vsel %vm2018, %v1914, -inf
        %v2064 = vmax.f32 %v2056, %v2063
        %v2065 = vsel %vm2018, %v1915, -inf
        %v2066 = vmax.f32 %v2058, %v2065
        %v2067 = vsel %vm2018, %v1916, -inf
        %v2068 = vmax.f32 %v2060, %v2067
        %v2069 = vsel %vm2018, %v1917, -inf
        %v2070 = vmax.f32 %v2062, %v2069
        %v2071 = vsel %vm2018, %v1918, -inf
        %v2072 = vmax.f32 %v2064, %v2071
        %v2073 = vsel %vm2018, %v1919, -inf
        %v2074 = vmax.f32 %v2066, %v2073
        %v2075 = vsel %vm2018, %v1920, -inf
        %v2076 = vmax.f32 %v2068, %v2075
        %v2077 = vsel %vm2018, %v1921, -inf
        %v2078 = vmax.f32 %v2070, %v2077
        %v2079 = vsel %vm2018, %v1922, -inf
        %v2080 = vmax.f32 %v2072, %v2079
        %v2081 = vsel %vm2018, %v1923, -inf
        %v2082 = vmax.f32 %v2074, %v2081
        %v2083 = vsel %vm2018, %v1924, -inf
        %v2084 = vmax.f32 %v2076, %v2083
        %v2085 = vsel %vm2018, %v1925, -inf
        %v2086 = vmax.f32 %v2078, %v2085
        %v2087 = vsel %vm2018, %v1926, -inf
        %v2088 = vmax.f32 %v2080, %v2087
        %v2089 = vsel %vm2018, %v1927, -inf
        %v2090 = vmax.f32 %v2082, %v2089
        %v2091 = vsel %vm2018, %v1928, -inf
        %v2092 = vmax.f32 %v2084, %v2091
        %v2093 = vsel %vm2018, %v1929, -inf
        %v2094 = vmax.f32 %v2086, %v2093
        %v2095 = vsel %vm2018, %v1930, -inf
        %v2096 = vmax.f32 %v2088, %v2095
        %v2097 = vsel %vm2018, %v1931, -inf
        %v2098 = vmax.f32 %v2090, %v2097
        %v2099 = vsel %vm2018, %v1932, -inf
        %v2100 = vmax.f32 %v2092, %v2099
        %v2101 = vsel %vm2018, %v1933, -inf
        %v2102 = vmax.f32 %v2094, %v2101
        %v2103 = vsel %vm2018, %v1934, -inf
        %v2104 = vmax.f32 %v2096, %v2103
        %v2105 = vsel %vm2018, %v1935, -inf
        %v2106 = vmax.f32 %v2098, %v2105
        %v2107 = vsel %vm2018, %v1936, -inf
        %v2108 = vmax.f32 %v2100, %v2107
        %v2109 = vsel %vm2018, %v1937, -inf
        %v2110 = vmax.f32 %v2102, %v2109
        %v2111 = vsel %vm2018, %v1938, -inf
        %v2112 = vmax.f32 %v2104, %v2111
        %v2113 = vsel %vm2018, %v1939, -inf
        %v2114 = vmax.f32 %v2106, %v2113
        %v2115 = vsel %vm2018, %v1940, -inf
        %v2116 = vmax.f32 %v2108, %v2115
        %v2117 = vsel %vm2018, %v1941, -inf
        %v2118 = vmax.f32 %v2110, %v2117
        %v2119 = vsel %vm2018, %v1942, -inf
        %v2120 = vmax.f32 %v2112, %v2119
        %v2121 = vsel %vm2018, %v1943, -inf
        %v2122 = vmax.f32 %v2114, %v2121
        %v2123 = vsel %vm2018, %v1944, -inf
        %v2124 = vmax.f32 %v2116, %v2123
        %v2125 = vsel %vm2018, %v1945, -inf
        %v2126 = vmax.f32 %v2118, %v2125
        %v2127 = vsel %vm2018, %v1946, -inf
        %v2128 = vmax.f32 %v2120, %v2127
        %v2129 = vsel %vm2018, %v1947, -inf
        %v2130 = vmax.f32 %v2122, %v2129
        %v2131 = vsel %vm2018, %v1948, -inf
        %v2132 = vmax.f32 %v2124, %v2131
        %v2133 = vsel %vm2018, %v1949, -inf
        %v2134 = vmax.f32 %v2126, %v2133
        %v2135 = vsel %vm2018, %v1950, -inf
        %v2136 = vmax.f32 %v2128, %v2135
        %v2137 = vsel %vm2018, %v1951, -inf
        %v2138 = vmax.f32 %v2130, %v2137
        %v2139 = vsel %vm2018, %v1952, -inf
        %v2140 = vmax.f32 %v2132, %v2139
        %v2141 = vsel %vm2018, %v1953, -inf
        %v2142 = vmax.f32 %v2134, %v2141
        %v2143 = vsel %vm2018, %v1954, -inf
        %v2144 = vmax.f32 %v2136, %v2143
        %v2145 = vsel %vm2018, %v1955, -inf
        %v2146 = vmax.f32 %v2138, %v2145
        %v2147 = vsel %vm2018, %v1956, -inf
        %v2148 = vmax.f32 %v2140, %v2147
        %v2149 = vsel %vm2018, %v1957, -inf
        %v2150 = vmax.f32 %v2142, %v2149
        %v2151 = vsel %vm2018, %v1958, -inf
        %v2152 = vmax.f32 %v2144, %v2151
        %v2153 = vsel %vm2018, %v1959, -inf
        %v2154 = vmax.f32 %v2146, %v2153
        %v2155 = vsel %vm2018, %v1960, -inf
        %v2156 = vmax.f32 %v2148, %v2155
        %v2157 = vsel %vm2018, %v1961, -inf
        %v2158 = vmax.f32 %v2150, %v2157
        %v2159 = vsel %vm2018, %v1962, -inf
        %v2160 = vmax.f32 %v2152, %v2159
        %v2161 = vsel %vm2018, %v1963, -inf
        %v2162 = vmax.f32 %v2154, %v2161
        %v2163 = vsel %vm2018, %v1964, -inf
        %v2164 = vmax.f32 %v2156, %v2163
        %v2165 = vsel %vm2018, %v1965, -inf
        %v2166 = vmax.f32 %v2158, %v2165
        %v2167 = vsel %vm2018, %v1966, -inf
        %v2168 = vmax.f32 %v2160, %v2167
        %v2169 = vsel %vm2018, %v1967, -inf
        %v2170 = vmax.f32 %v2162, %v2169
        %v2171 = vsel %vm2018, %v1968, -inf
        %v2172 = vmax.f32 %v2164, %v2171
        %v2173 = vsel %vm2018, %v1969, -inf
        %v2174 = vmax.f32 %v2166, %v2173
        %v2175 = vsel %vm2018, %v1970, -inf
        %v2176 = vmax.f32 %v2168, %v2175
        %v2177 = vsel %vm2018, %v1971, -inf
        %v2178 = vmax.f32 %v2170, %v2177
        %v2179 = vsel %vm2018, %v1972, -inf
        %v2180 = vmax.f32 %v2172, %v2179
        %v2181 = vsel %vm2018, %v1973, -inf
        %v2182 = vmax.f32 %v2174, %v2181
        %v2183 = vsel %vm2018, %v1974, -inf
        %v2184 = vmax.f32 %v2176, %v2183
        %v2185 = vsel %vm2018, %v1975, -inf
        %v2186 = vmax.f32 %v2178, %v2185
        %v2187 = vsel %vm2018, %v1976, -inf
        %v2188 = vmax.f32 %v2180, %v2187
        %v2189 = vsel %vm2018, %v1977, -inf
        %v2190 = vmax.f32 %v2182, %v2189
        %v2191 = vsel %vm2018, %v1978, -inf
        %v2192 = vmax.f32 %v2184, %v2191
        %v2193 = vsel %vm2018, %v1979, -inf
        %v2194 = vmax.f32 %v2186, %v2193
        %v2195 = vsel %vm2018, %v1980, -inf
        %v2196 = vmax.f32 %v2188, %v2195
        %v2197 = vsel %vm2018, %v1981, -inf
        %v2198 = vmax.f32 %v2190, %v2197
        %v2199 = vsel %vm2018, %v1982, -inf
        %v2200 = vmax.f32 %v2192, %v2199
        %v2201 = vsel %vm2018, %v1983, -inf
        %v2202 = vmax.f32 %v2194, %v2201
        %v2203 = vsel %vm2018, %v1984, -inf
        %v2204 = vmax.f32 %v2196, %v2203
        %v2205 = vsel %vm2018, %v1985, -inf
        %v2206 = vmax.f32 %v2198, %v2205
        %v2207 = vsel %vm2018, %v1986, -inf
        %v2208 = vmax.f32 %v2200, %v2207
        %v2209 = vsel %vm2018, %v1987, -inf
        %v2210 = vmax.f32 %v2202, %v2209
        %v2211 = vsel %vm2018, %v1988, -inf
        %v2212 = vmax.f32 %v2204, %v2211
        %v2213 = vsel %vm2018, %v1989, -inf
        %v2214 = vmax.f32 %v2206, %v2213
        %v2215 = vsel %vm2018, %v1990, -inf
        %v2216 = vmax.f32 %v2208, %v2215
        %v2217 = vsel %vm2018, %v1991, -inf
        %v2218 = vmax.f32 %v2210, %v2217
        %v2219 = vsel %vm2018, %v1992, -inf
        %v2220 = vmax.f32 %v2212, %v2219
        %v2221 = vsel %vm2018, %v1993, -inf
        %v2222 = vmax.f32 %v2214, %v2221
        %v2223 = vsel %vm2018, %v1994, -inf
        %v2224 = vmax.f32 %v2216, %v2223
        %v2225 = vsel %vm2018, %v1995, -inf
        %v2226 = vmax.f32 %v2218, %v2225
        %v2227 = vsel %vm2018, %v1996, -inf
        %v2228 = vmax.f32 %v2220, %v2227
        %v2229 = vsel %vm2018, %v1997, -inf
        %v2230 = vmax.f32 %v2222, %v2229
        %v2231 = vsel %vm2018, %v1998, -inf
        %v2232 = vmax.f32 %v2224, %v2231
        %v2233 = vsel %vm2018, %v1999, -inf
        %v2234 = vmax.f32 %v2226, %v2233
        %v2235 = vsel %vm2018, %v2000, -inf
        %v2236 = vmax.f32 %v2228, %v2235
        %v2237 = vsel %vm2018, %v2001, -inf
        %v2238 = vmax.f32 %v2230, %v2237
        %v2239 = vsel %vm2018, %v2002, -inf
        %v2240 = vmax.f32 %v2232, %v2239
        %v2241 = vsel %vm2018, %v2003, -inf
        %v2242 = vmax.f32 %v2234, %v2241
        %v2243 = vsel %vm2018, %v2004, -inf
        %v2244 = vmax.f32 %v2236, %v2243
        %v2245 = vsel %vm2018, %v2005, -inf
        %v2246 = vmax.f32 %v2238, %v2245
        %v2247 = vsel %vm2018, %v2006, -inf
        %v2248 = vmax.f32 %v2240, %v2247
        %v2249 = vsel %vm2018, %v2007, -inf
        %v2250 = vmax.f32 %v2242, %v2249
        %v2251 = vsel %vm2018, %v2008, -inf
        %v2252 = vmax.f32 %v2244, %v2251
        %v2253 = vsel %vm2018, %v2009, -inf
        %v2254 = vmax.f32 %v2246, %v2253
        %v2255 = vsel %vm2018, %v2010, -inf
        %v2256 = vmax.f32 %v2248, %v2255
        %v2257 = vsel %vm2018, %v2011, -inf
        %v2258 = vmax.f32 %v2250, %v2257
        %v2259 = vsel %vm2018, %v2012, -inf
        %v2260 = vmax.f32 %v2252, %v2259
        %v2261 = vsel %vm2018, %v2013, -inf
        %v2262 = vmax.f32 %v2254, %v2261
        %v2263 = vsel %vm2018, %v2014, -inf
        %v2264 = vmax.f32 %v2256, %v2263
        %v2265 = vsel %vm2018, %v2015, -inf
        %v2266 = vmax.f32 %v2258, %v2265
        %v2267 = vsel %vm2018, %v2016, -inf
        %v2268 = vmax.f32 %v2260, %v2267
        %v2269 = vsel %vm2018, %v2017, -inf
        %v2270 = vmax.f32 %v2262, %v2269
        %v2271 = vmax.f32 %v2264, %v2266
        %v2272 = vmax.f32 %v2268, %v2270
        %v2273 = vmax.f32 %v2271, %v2272
        %v2274 = vrot.slane %v2273, 4
        %v2275 = vmax.f32 %v2273, %v2274
        %v2276 = vrot.slane %v2275, 2
        %v2277 = vmax.f32 %v2275, %v2276
        %v2278 = vrot.slane %v2277, 1
        %v2279 = vmax.f32 %v2277, %v2278
        %v2280 = vld [vmem:[#allocation2] sm:$0x1]
        %v2283 = vunpack.c.l.s4 1966171168
        %v2284 = vunpack.c.0.s8 %v2283
        %v2285 = vlaneseq
        %v2286 = vshrl.u32 %v2285, 7
        %v2287 = vsub.s32 %v2284, %v2286
        %v2288 = vrot.slane %v2279, %v2287
        %v2290 = vunpack.c.l.s4 1966171168
        %v2291 = vunpack.c.0.s8 %v2290
        %v2292 = vlaneseq
        %v2293 = vshrl.u32 %v2292, 7
        %v2294 = vsub.s32 %v2291, %v2293
        %v2295 = vrot.slane %v2288, %v2294
        %2296 = vrot.lane.b32.xlu0 %v2295, 112
        %v2297 = vpop.permute.xlu0 %2296
        %v2299 = vmax.f32 %v2280, %v2297
        %v2300 = vsub.f32 %v2280, %v2299
        %v2301 = vmul.f32 %v2300, 1.442695
        %v2302 = vpow.pop %v2301
        %v2304 = vlaneseq
        %v2305 = vshrl.u32 %v2304, 7
        %v2306 = vsub.s32 0, %v2305
        %v2307 = vrot.slane %v2299, %v2306
        %2308 = vrot.lane.b32.xlu0 %v2307, 16
        %v2309 = vpop.permute.xlu0 %2308
        %v2311 = vsub.f32 %v1890, %v2309
        %v2312 = vsub.f32 %v1891, %v2309
        %v2313 = vsub.f32 %v1892, %v2309
        %v2314 = vsub.f32 %v1893, %v2309
        %v2315 = vsub.f32 %v1894, %v2309
        %v2316 = vsub.f32 %v1895, %v2309
        %v2317 = vsub.f32 %v1896, %v2309
        %v2318 = vsub.f32 %v1897, %v2309
        %v2319 = vsub.f32 %v1898, %v2309
        %v2320 = vsub.f32 %v1899, %v2309
        %v2321 = vsub.f32 %v1900, %v2309
        %v2322 = vsub.f32 %v1901, %v2309
        %v2323 = vsub.f32 %v1902, %v2309
        %v2324 = vsub.f32 %v1903, %v2309
        %v2325 = vsub.f32 %v1904, %v2309
        %v2326 = vsub.f32 %v1905, %v2309
        %v2327 = vsub.f32 %v1906, %v2309
        %v2328 = vsub.f32 %v1907, %v2309
        %v2329 = vsub.f32 %v1908, %v2309
        %v2330 = vsub.f32 %v1909, %v2309
        %v2331 = vsub.f32 %v1910, %v2309
        %v2332 = vsub.f32 %v1911, %v2309
        %v2333 = vsub.f32 %v1912, %v2309
        %v2334 = vsub.f32 %v1913, %v2309
        %v2335 = vsub.f32 %v1914, %v2309
        %v2336 = vsub.f32 %v1915, %v2309
        %v2337 = vsub.f32 %v1916, %v2309
        %v2338 = vsub.f32 %v1917, %v2309
        %v2339 = vsub.f32 %v1918, %v2309
        %v2340 = vsub.f32 %v1919, %v2309
        %v2341 = vsub.f32 %v1920, %v2309
        %v2342 = vsub.f32 %v1921, %v2309
        %v2343 = vsub.f32 %v1922, %v2309
        %v2344 = vsub.f32 %v1923, %v2309
        %v2345 = vsub.f32 %v1924, %v2309
        %v2346 = vsub.f32 %v1925, %v2309
        %v2347 = vsub.f32 %v1926, %v2309
        %v2348 = vsub.f32 %v1927, %v2309
        %v2349 = vsub.f32 %v1928, %v2309
        %v2350 = vsub.f32 %v1929, %v2309
        %v2351 = vsub.f32 %v1930, %v2309
        %v2352 = vsub.f32 %v1931, %v2309
        %v2353 = vsub.f32 %v1932, %v2309
        %v2354 = vsub.f32 %v1933, %v2309
        %v2355 = vsub.f32 %v1934, %v2309
        %v2356 = vsub.f32 %v1935, %v2309
        %v2357 = vsub.f32 %v1936, %v2309
        %v2358 = vsub.f32 %v1937, %v2309
        %v2359 = vsub.f32 %v1938, %v2309
        %v2360 = vsub.f32 %v1939, %v2309
        %v2361 = vsub.f32 %v1940, %v2309
        %v2362 = vsub.f32 %v1941, %v2309
        %v2363 = vsub.f32 %v1942, %v2309
        %v2364 = vsub.f32 %v1943, %v2309
        %v2365 = vsub.f32 %v1944, %v2309
        %v2366 = vsub.f32 %v1945, %v2309
        %v2367 = vsub.f32 %v1946, %v2309
        %v2368 = vsub.f32 %v1947, %v2309
        %v2369 = vsub.f32 %v1948, %v2309
        %v2370 = vsub.f32 %v1949, %v2309
        %v2371 = vsub.f32 %v1950, %v2309
        %v2372 = vsub.f32 %v1951, %v2309
        %v2373 = vsub.f32 %v1952, %v2309
        %v2374 = vsub.f32 %v1953, %v2309
        %v2375 = vsub.f32 %v1954, %v2309
        %v2376 = vsub.f32 %v1955, %v2309
        %v2377 = vsub.f32 %v1956, %v2309
        %v2378 = vsub.f32 %v1957, %v2309
        %v2379 = vsub.f32 %v1958, %v2309
        %v2380 = vsub.f32 %v1959, %v2309
        %v2381 = vsub.f32 %v1960, %v2309
        %v2382 = vsub.f32 %v1961, %v2309
        %v2383 = vsub.f32 %v1962, %v2309
        %v2384 = vsub.f32 %v1963, %v2309
        %v2385 = vsub.f32 %v1964, %v2309
        %v2386 = vsub.f32 %v1965, %v2309
        %v2387 = vsub.f32 %v1966, %v2309
        %v2388 = vsub.f32 %v1967, %v2309
        %v2389 = vsub.f32 %v1968, %v2309
        %v2390 = vsub.f32 %v1969, %v2309
        %v2391 = vsub.f32 %v1970, %v2309
        %v2392 = vsub.f32 %v1971, %v2309
        %v2393 = vsub.f32 %v1972, %v2309
        %v2394 = vsub.f32 %v1973, %v2309
        %v2395 = vsub.f32 %v1974, %v2309
        %v2396 = vsub.f32 %v1975, %v2309
        %v2397 = vsub.f32 %v1976, %v2309
        %v2398 = vsub.f32 %v1977, %v2309
        %v2399 = vsub.f32 %v1978, %v2309
        %v2400 = vsub.f32 %v1979, %v2309
        %v2401 = vsub.f32 %v1980, %v2309
        %v2402 = vsub.f32 %v1981, %v2309
        %v2403 = vsub.f32 %v1982, %v2309
        %v2404 = vsub.f32 %v1983, %v2309
        %v2405 = vsub.f32 %v1984, %v2309
        %v2406 = vsub.f32 %v1985, %v2309
        %v2407 = vsub.f32 %v1986, %v2309
        %v2408 = vsub.f32 %v1987, %v2309
        %v2409 = vsub.f32 %v1988, %v2309
        %v2410 = vsub.f32 %v1989, %v2309
        %v2411 = vsub.f32 %v1990, %v2309
        %v2412 = vsub.f32 %v1991, %v2309
        %v2413 = vsub.f32 %v1992, %v2309
        %v2414 = vsub.f32 %v1993, %v2309
        %v2415 = vsub.f32 %v1994, %v2309
        %v2416 = vsub.f32 %v1995, %v2309
        %v2417 = vsub.f32 %v1996, %v2309
        %v2418 = vsub.f32 %v1997, %v2309
        %v2419 = vsub.f32 %v1998, %v2309
        %v2420 = vsub.f32 %v1999, %v2309
        %v2421 = vsub.f32 %v2000, %v2309
        %v2422 = vsub.f32 %v2001, %v2309
        %v2423 = vsub.f32 %v2002, %v2309
        %v2424 = vsub.f32 %v2003, %v2309
        %v2425 = vsub.f32 %v2004, %v2309
        %v2426 = vsub.f32 %v2005, %v2309
        %v2427 = vsub.f32 %v2006, %v2309
        %v2428 = vsub.f32 %v2007, %v2309
        %v2429 = vsub.f32 %v2008, %v2309
        %v2430 = vsub.f32 %v2009, %v2309
        %v2431 = vsub.f32 %v2010, %v2309
        %v2432 = vsub.f32 %v2011, %v2309
        %v2433 = vsub.f32 %v2012, %v2309
        %v2434 = vsub.f32 %v2013, %v2309
        %v2435 = vsub.f32 %v2014, %v2309
        %v2436 = vsub.f32 %v2015, %v2309
        %v2437 = vsub.f32 %v2016, %v2309
        %v2438 = vsub.f32 %v2017, %v2309
        %v2439 = vmin.f32 %v2311, 0.0
        %v2440 = vmin.f32 %v2312, 0.0
        %v2441 = vmin.f32 %v2313, 0.0
        %v2442 = vmin.f32 %v2314, 0.0
        %v2443 = vmin.f32 %v2315, 0.0
        %v2444 = vmin.f32 %v2316, 0.0
        %v2445 = vmin.f32 %v2317, 0.0
        %v2446 = vmin.f32 %v2318, 0.0
        %v2447 = vmin.f32 %v2319, 0.0
        %v2448 = vmin.f32 %v2320, 0.0
        %v2449 = vmin.f32 %v2321, 0.0
        %v2450 = vmin.f32 %v2322, 0.0
        %v2451 = vmin.f32 %v2323, 0.0
        %v2452 = vmin.f32 %v2324, 0.0
        %v2453 = vmin.f32 %v2325, 0.0
        %v2454 = vmin.f32 %v2326, 0.0
        %v2455 = vmin.f32 %v2327, 0.0
        %v2456 = vmin.f32 %v2328, 0.0
        %v2457 = vmin.f32 %v2329, 0.0
        %v2458 = vmin.f32 %v2330, 0.0
        %v2459 = vmin.f32 %v2331, 0.0
        %v2460 = vmin.f32 %v2332, 0.0
        %v2461 = vmin.f32 %v2333, 0.0
        %v2462 = vmin.f32 %v2334, 0.0
        %v2463 = vmin.f32 %v2335, 0.0
        %v2464 = vmin.f32 %v2336, 0.0
        %v2465 = vmin.f32 %v2337, 0.0
        %v2466 = vmin.f32 %v2338, 0.0
        %v2467 = vmin.f32 %v2339, 0.0
        %v2468 = vmin.f32 %v2340, 0.0
        %v2469 = vmin.f32 %v2341, 0.0
        %v2470 = vmin.f32 %v2342, 0.0
        %v2471 = vmin.f32 %v2343, 0.0
        %v2472 = vmin.f32 %v2344, 0.0
        %v2473 = vmin.f32 %v2345, 0.0
        %v2474 = vmin.f32 %v2346, 0.0
        %v2475 = vmin.f32 %v2347, 0.0
        %v2476 = vmin.f32 %v2348, 0.0
        %v2477 = vmin.f32 %v2349, 0.0
        %v2478 = vmin.f32 %v2350, 0.0
        %v2479 = vmin.f32 %v2351, 0.0
        %v2480 = vmin.f32 %v2352, 0.0
        %v2481 = vmin.f32 %v2353, 0.0
        %v2482 = vmin.f32 %v2354, 0.0
        %v2483 = vmin.f32 %v2355, 0.0
        %v2484 = vmin.f32 %v2356, 0.0
        %v2485 = vmin.f32 %v2357, 0.0
        %v2486 = vmin.f32 %v2358, 0.0
        %v2487 = vmin.f32 %v2359, 0.0
        %v2488 = vmin.f32 %v2360, 0.0
        %v2489 = vmin.f32 %v2361, 0.0
        %v2490 = vmin.f32 %v2362, 0.0
        %v2491 = vmin.f32 %v2363, 0.0
        %v2492 = vmin.f32 %v2364, 0.0
        %v2493 = vmin.f32 %v2365, 0.0
        %v2494 = vmin.f32 %v2366, 0.0
        %v2495 = vmin.f32 %v2367, 0.0
        %v2496 = vmin.f32 %v2368, 0.0
        %v2497 = vmin.f32 %v2369, 0.0
        %v2498 = vmin.f32 %v2370, 0.0
        %v2499 = vmin.f32 %v2371, 0.0
        %v2500 = vmin.f32 %v2372, 0.0
        %v2501 = vmin.f32 %v2373, 0.0
        %v2502 = vmin.f32 %v2374, 0.0
        %v2503 = vmin.f32 %v2375, 0.0
        %v2504 = vmin.f32 %v2376, 0.0
        %v2505 = vmin.f32 %v2377, 0.0
        %v2506 = vmin.f32 %v2378, 0.0
        %v2507 = vmin.f32 %v2379, 0.0
        %v2508 = vmin.f32 %v2380, 0.0
        %v2509 = vmin.f32 %v2381, 0.0
        %v2510 = vmin.f32 %v2382, 0.0
        %v2511 = vmin.f32 %v2383, 0.0
        %v2512 = vmin.f32 %v2384, 0.0
        %v2513 = vmin.f32 %v2385, 0.0
        %v2514 = vmin.f32 %v2386, 0.0
        %v2515 = vmin.f32 %v2387, 0.0
        %v2516 = vmin.f32 %v2388, 0.0
        %v2517 = vmin.f32 %v2389, 0.0
        %v2518 = vmin.f32 %v2390, 0.0
        %v2519 = vmin.f32 %v2391, 0.0
        %v2520 = vmin.f32 %v2392, 0.0
        %v2521 = vmin.f32 %v2393, 0.0
        %v2522 = vmin.f32 %v2394, 0.0
        %v2523 = vmin.f32 %v2395, 0.0
        %v2524 = vmin.f32 %v2396, 0.0
        %v2525 = vmin.f32 %v2397, 0.0
        %v2526 = vmin.f32 %v2398, 0.0
        %v2527 = vmin.f32 %v2399, 0.0
        %v2528 = vmin.f32 %v2400, 0.0
        %v2529 = vmin.f32 %v2401, 0.0
        %v2530 = vmin.f32 %v2402, 0.0
        %v2531 = vmin.f32 %v2403, 0.0
        %v2532 = vmin.f32 %v2404, 0.0
        %v2533 = vmin.f32 %v2405, 0.0
        %v2534 = vmin.f32 %v2406, 0.0
        %v2535 = vmin.f32 %v2407, 0.0
        %v2536 = vmin.f32 %v2408, 0.0
        %v2537 = vmin.f32 %v2409, 0.0
        %v2538 = vmin.f32 %v2410, 0.0
        %v2539 = vmin.f32 %v2411, 0.0
        %v2540 = vmin.f32 %v2412, 0.0
        %v2541 = vmin.f32 %v2413, 0.0
        %v2542 = vmin.f32 %v2414, 0.0
        %v2543 = vmin.f32 %v2415, 0.0
        %v2544 = vmin.f32 %v2416, 0.0
        %v2545 = vmin.f32 %v2417, 0.0
        %v2546 = vmin.f32 %v2418, 0.0
        %v2547 = vmin.f32 %v2419, 0.0
        %v2548 = vmin.f32 %v2420, 0.0
        %v2549 = vmin.f32 %v2421, 0.0
        %v2550 = vmin.f32 %v2422, 0.0
        %v2551 = vmin.f32 %v2423, 0.0
        %v2552 = vmin.f32 %v2424, 0.0
        %v2553 = vmin.f32 %v2425, 0.0
        %v2554 = vmin.f32 %v2426, 0.0
        %v2555 = vmin.f32 %v2427, 0.0
        %v2556 = vmin.f32 %v2428, 0.0
        %v2557 = vmin.f32 %v2429, 0.0
        %v2558 = vmin.f32 %v2430, 0.0
        %v2559 = vmin.f32 %v2431, 0.0
        %v2560 = vmin.f32 %v2432, 0.0
        %v2561 = vmin.f32 %v2433, 0.0
        %v2562 = vmin.f32 %v2434, 0.0
        %v2563 = vmin.f32 %v2435, 0.0
        %v2564 = vmin.f32 %v2436, 0.0
        %v2565 = vmin.f32 %v2437, 0.0
        %v2566 = vmin.f32 %v2438, 0.0
        %v2567 = vmul.f32 %v2439, 1.442695
        %v2568 = vpow.pop %v2567
        %v2569 = vmul.f32 %v2440, 1.442695
        %v2570 = vpow.pop %v2569
        %v2571 = vmul.f32 %v2441, 1.442695
        %v2572 = vpow.pop %v2571
        %v2573 = vmul.f32 %v2442, 1.442695
        %v2574 = vpow.pop %v2573
        %v2575 = vmul.f32 %v2443, 1.442695
        %v2576 = vpow.pop %v2575
        %v2577 = vmul.f32 %v2444, 1.442695
        %v2578 = vpow.pop %v2577
        %v2579 = vmul.f32 %v2445, 1.442695
        %v2580 = vpow.pop %v2579
        %v2581 = vmul.f32 %v2446, 1.442695
        %v2582 = vpow.pop %v2581
        %v2583 = vmul.f32 %v2447, 1.442695
        %v2584 = vpow.pop %v2583
        %v2585 = vmul.f32 %v2448, 1.442695
        %v2586 = vpow.pop %v2585
        %v2587 = vmul.f32 %v2449, 1.442695
        %v2588 = vpow.pop %v2587
        %v2589 = vmul.f32 %v2450, 1.442695
        %v2590 = vpow.pop %v2589
        %v2591 = vmul.f32 %v2451, 1.442695
        %v2592 = vpow.pop %v2591
        %v2593 = vmul.f32 %v2452, 1.442695
        %v2594 = vpow.pop %v2593
        %v2595 = vmul.f32 %v2453, 1.442695
        %v2596 = vpow.pop %v2595
        %v2597 = vmul.f32 %v2454, 1.442695
        %v2598 = vpow.pop %v2597
        %v2599 = vmul.f32 %v2455, 1.442695
        %v2600 = vpow.pop %v2599
        %v2601 = vmul.f32 %v2456, 1.442695
        %v2602 = vpow.pop %v2601
        %v2603 = vmul.f32 %v2457, 1.442695
        %v2604 = vpow.pop %v2603
        %v2605 = vmul.f32 %v2458, 1.442695
        %v2606 = vpow.pop %v2605
        %v2607 = vmul.f32 %v2459, 1.442695
        %v2608 = vpow.pop %v2607
        %v2609 = vmul.f32 %v2460, 1.442695
        %v2610 = vpow.pop %v2609
        %v2611 = vmul.f32 %v2461, 1.442695
        %v2612 = vpow.pop %v2611
        %v2613 = vmul.f32 %v2462, 1.442695
        %v2614 = vpow.pop %v2613
        %v2615 = vmul.f32 %v2463, 1.442695
        %v2616 = vpow.pop %v2615
        %v2617 = vmul.f32 %v2464, 1.442695
        %v2618 = vpow.pop %v2617
        %v2619 = vmul.f32 %v2465, 1.442695
        %v2620 = vpow.pop %v2619
        %v2621 = vmul.f32 %v2466, 1.442695
        %v2622 = vpow.pop %v2621
        %v2623 = vmul.f32 %v2467, 1.442695
        %v2624 = vpow.pop %v2623
        %v2625 = vmul.f32 %v2468, 1.442695
        %v2626 = vpow.pop %v2625
        %v2627 = vmul.f32 %v2469, 1.442695
        %v2628 = vpow.pop %v2627
        %v2629 = vmul.f32 %v2470, 1.442695
        %v2630 = vpow.pop %v2629
        %v2631 = vmul.f32 %v2471, 1.442695
        %v2632 = vpow.pop %v2631
        %v2633 = vmul.f32 %v2472, 1.442695
        %v2634 = vpow.pop %v2633
        %v2635 = vmul.f32 %v2473, 1.442695
        %v2636 = vpow.pop %v2635
        %v2637 = vmul.f32 %v2474, 1.442695
        %v2638 = vpow.pop %v2637
        %v2639 = vmul.f32 %v2475, 1.442695
        %v2640 = vpow.pop %v2639
        %v2641 = vmul.f32 %v2476, 1.442695
        %v2642 = vpow.pop %v2641
        %v2643 = vmul.f32 %v2477, 1.442695
        %v2644 = vpow.pop %v2643
        %v2645 = vmul.f32 %v2478, 1.442695
        %v2646 = vpow.pop %v2645
        %v2647 = vmul.f32 %v2479, 1.442695
        %v2648 = vpow.pop %v2647
        %v2649 = vmul.f32 %v2480, 1.442695
        %v2650 = vpow.pop %v2649
        %v2651 = vmul.f32 %v2481, 1.442695
        %v2652 = vpow.pop %v2651
        %v2653 = vmul.f32 %v2482, 1.442695
        %v2654 = vpow.pop %v2653
        %v2655 = vmul.f32 %v2483, 1.442695
        %v2656 = vpow.pop %v2655
        %v2657 = vmul.f32 %v2484, 1.442695
        %v2658 = vpow.pop %v2657
        %v2659 = vmul.f32 %v2485, 1.442695
        %v2660 = vpow.pop %v2659
        %v2661 = vmul.f32 %v2486, 1.442695
        %v2662 = vpow.pop %v2661
        %v2663 = vmul.f32 %v2487, 1.442695
        %v2664 = vpow.pop %v2663
        %v2665 = vmul.f32 %v2488, 1.442695
        %v2666 = vpow.pop %v2665
        %v2667 = vmul.f32 %v2489, 1.442695
        %v2668 = vpow.pop %v2667
        %v2669 = vmul.f32 %v2490, 1.442695
        %v2670 = vpow.pop %v2669
        %v2671 = vmul.f32 %v2491, 1.442695
        %v2672 = vpow.pop %v2671
        %v2673 = vmul.f32 %v2492, 1.442695
        %v2674 = vpow.pop %v2673
        %v2675 = vmul.f32 %v2493, 1.442695
        %v2676 = vpow.pop %v2675
        %v2677 = vmul.f32 %v2494, 1.442695
        %v2678 = vpow.pop %v2677
        %v2679 = vmul.f32 %v2495, 1.442695
        %v2680 = vpow.pop %v2679
        %v2681 = vmul.f32 %v2496, 1.442695
        %v2682 = vpow.pop %v2681
        %v2683 = vmul.f32 %v2497, 1.442695
        %v2684 = vpow.pop %v2683
        %v2685 = vmul.f32 %v2498, 1.442695
        %v2686 = vpow.pop %v2685
        %v2687 = vmul.f32 %v2499, 1.442695
        %v2688 = vpow.pop %v2687
        %v2689 = vmul.f32 %v2500, 1.442695
        %v2690 = vpow.pop %v2689
        %v2691 = vmul.f32 %v2501, 1.442695
        %v2692 = vpow.pop %v2691
        %v2693 = vmul.f32 %v2502, 1.442695
        %v2694 = vpow.pop %v2693
        %v2695 = vmul.f32 %v2503, 1.442695
        %v2696 = vpow.pop %v2695
        %v2697 = vmul.f32 %v2504, 1.442695
        %v2698 = vpow.pop %v2697
        %v2699 = vmul.f32 %v2505, 1.442695
        %v2700 = vpow.pop %v2699
        %v2701 = vmul.f32 %v2506, 1.442695
        %v2702 = vpow.pop %v2701
        %v2703 = vmul.f32 %v2507, 1.442695
        %v2704 = vpow.pop %v2703
        %v2705 = vmul.f32 %v2508, 1.442695
        %v2706 = vpow.pop %v2705
        %v2707 = vmul.f32 %v2509, 1.442695
        %v2708 = vpow.pop %v2707
        %v2709 = vmul.f32 %v2510, 1.442695
        %v2710 = vpow.pop %v2709
        %v2711 = vmul.f32 %v2511, 1.442695
        %v2712 = vpow.pop %v2711
        %v2713 = vmul.f32 %v2512, 1.442695
        %v2714 = vpow.pop %v2713
        %v2715 = vmul.f32 %v2513, 1.442695
        %v2716 = vpow.pop %v2715
        %v2717 = vmul.f32 %v2514, 1.442695
        %v2718 = vpow.pop %v2717
        %v2719 = vmul.f32 %v2515, 1.442695
        %v2720 = vpow.pop %v2719
        %v2721 = vmul.f32 %v2516, 1.442695
        %v2722 = vpow.pop %v2721
        %v2723 = vmul.f32 %v2517, 1.442695
        %v2724 = vpow.pop %v2723
        %v2725 = vmul.f32 %v2518, 1.442695
        %v2726 = vpow.pop %v2725
        %v2727 = vmul.f32 %v2519, 1.442695
        %v2728 = vpow.pop %v2727
        %v2729 = vmul.f32 %v2520, 1.442695
        %v2730 = vpow.pop %v2729
        %v2731 = vmul.f32 %v2521, 1.442695
        %v2732 = vpow.pop %v2731
        %v2733 = vmul.f32 %v2522, 1.442695
        %v2734 = vpow.pop %v2733
        %v2735 = vmul.f32 %v2523, 1.442695
        %v2736 = vpow.pop %v2735
        %v2737 = vmul.f32 %v2524, 1.442695
        %v2738 = vpow.pop %v2737
        %v2739 = vmul.f32 %v2525, 1.442695
        %v2740 = vpow.pop %v2739
        %v2741 = vmul.f32 %v2526, 1.442695
        %v2742 = vpow.pop %v2741
        %v2743 = vmul.f32 %v2527, 1.442695
        %v2744 = vpow.pop %v2743
        %v2745 = vmul.f32 %v2528, 1.442695
        %v2746 = vpow.pop %v2745
        %v2747 = vmul.f32 %v2529, 1.442695
        %v2748 = vpow.pop %v2747
        %v2749 = vmul.f32 %v2530, 1.442695
        %v2750 = vpow.pop %v2749
        %v2751 = vmul.f32 %v2531, 1.442695
        %v2752 = vpow.pop %v2751
        %v2753 = vmul.f32 %v2532, 1.442695
        %v2754 = vpow.pop %v2753
        %v2755 = vmul.f32 %v2533, 1.442695
        %v2756 = vpow.pop %v2755
        %v2757 = vmul.f32 %v2534, 1.442695
        %v2758 = vpow.pop %v2757
        %v2759 = vmul.f32 %v2535, 1.442695
        %v2760 = vpow.pop %v2759
        %v2761 = vmul.f32 %v2536, 1.442695
        %v2762 = vpow.pop %v2761
        %v2763 = vmul.f32 %v2537, 1.442695
        %v2764 = vpow.pop %v2763
        %v2765 = vmul.f32 %v2538, 1.442695
        %v2766 = vpow.pop %v2765
        %v2767 = vmul.f32 %v2539, 1.442695
        %v2768 = vpow.pop %v2767
        %v2769 = vmul.f32 %v2540, 1.442695
        %v2770 = vpow.pop %v2769
        %v2771 = vmul.f32 %v2541, 1.442695
        %v2772 = vpow.pop %v2771
        %v2773 = vmul.f32 %v2542, 1.442695
        %v2774 = vpow.pop %v2773
        %v2775 = vmul.f32 %v2543, 1.442695
        %v2776 = vpow.pop %v2775
        %v2777 = vmul.f32 %v2544, 1.442695
        %v2778 = vpow.pop %v2777
        %v2779 = vmul.f32 %v2545, 1.442695
        %v2780 = vpow.pop %v2779
        %v2781 = vmul.f32 %v2546, 1.442695
        %v2782 = vpow.pop %v2781
        %v2783 = vmul.f32 %v2547, 1.442695
        %v2784 = vpow.pop %v2783
        %v2785 = vmul.f32 %v2548, 1.442695
        %v2786 = vpow.pop %v2785
        %v2787 = vmul.f32 %v2549, 1.442695
        %v2788 = vpow.pop %v2787
        %v2789 = vmul.f32 %v2550, 1.442695
        %v2790 = vpow.pop %v2789
        %v2791 = vmul.f32 %v2551, 1.442695
        %v2792 = vpow.pop %v2791
        %v2793 = vmul.f32 %v2552, 1.442695
        %v2794 = vpow.pop %v2793
        %v2795 = vmul.f32 %v2553, 1.442695
        %v2796 = vpow.pop %v2795
        %v2797 = vmul.f32 %v2554, 1.442695
        %v2798 = vpow.pop %v2797
        %v2799 = vmul.f32 %v2555, 1.442695
        %v2800 = vpow.pop %v2799
        %v2801 = vmul.f32 %v2556, 1.442695
        %v2802 = vpow.pop %v2801
        %v2803 = vmul.f32 %v2557, 1.442695
        %v2804 = vpow.pop %v2803
        %v2805 = vmul.f32 %v2558, 1.442695
        %v2806 = vpow.pop %v2805
        %v2807 = vmul.f32 %v2559, 1.442695
        %v2808 = vpow.pop %v2807
        %v2809 = vmul.f32 %v2560, 1.442695
        %v2810 = vpow.pop %v2809
        %v2811 = vmul.f32 %v2561, 1.442695
        %v2812 = vpow.pop %v2811
        %v2813 = vmul.f32 %v2562, 1.442695
        %v2814 = vpow.pop %v2813
        %v2815 = vmul.f32 %v2563, 1.442695
        %v2816 = vpow.pop %v2815
        %v2817 = vmul.f32 %v2564, 1.442695
        %v2818 = vpow.pop %v2817
        %v2819 = vmul.f32 %v2565, 1.442695
        %v2820 = vpow.pop %v2819
        %v2821 = vmul.f32 %v2566, 1.442695
        %v2822 = vpow.pop %v2821
        %2951 = vrot.lane.b32.xlu0 %v2568, 112
        %v2952 = vpop.permute.xlu0 %2951
        %2953 = vrot.lane.b32.xlu0 %v2570, 112
        %v2954 = vpop.permute.xlu0 %2953
        %2955 = vrot.lane.b32.xlu0 %v2572, 112
        %v2956 = vpop.permute.xlu0 %2955
        %2957 = vrot.lane.b32.xlu0 %v2574, 112
        %v2958 = vpop.permute.xlu0 %2957
        %2959 = vrot.lane.b32.xlu0 %v2576, 112
        %v2960 = vpop.permute.xlu0 %2959
        %2961 = vrot.lane.b32.xlu0 %v2578, 112
        %v2962 = vpop.permute.xlu0 %2961
        %2963 = vrot.lane.b32.xlu0 %v2580, 112
        %v2964 = vpop.permute.xlu0 %2963
        %2965 = vrot.lane.b32.xlu0 %v2582, 112
        %v2966 = vpop.permute.xlu0 %2965
        %2967 = vrot.lane.b32.xlu0 %v2584, 112
        %v2968 = vpop.permute.xlu0 %2967
        %2969 = vrot.lane.b32.xlu0 %v2586, 112
        %v2970 = vpop.permute.xlu0 %2969
        %2971 = vrot.lane.b32.xlu0 %v2588, 112
        %v2972 = vpop.permute.xlu0 %2971
        %2973 = vrot.lane.b32.xlu0 %v2590, 112
        %v2974 = vpop.permute.xlu0 %2973
        %2975 = vrot.lane.b32.xlu0 %v2592, 112
        %v2976 = vpop.permute.xlu0 %2975
        %2977 = vrot.lane.b32.xlu0 %v2594, 112
        %v2978 = vpop.permute.xlu0 %2977
        %2979 = vrot.lane.b32.xlu0 %v2596, 112
        %v2980 = vpop.permute.xlu0 %2979
        %2981 = vrot.lane.b32.xlu0 %v2598, 112
        %v2982 = vpop.permute.xlu0 %2981
        %2983 = vrot.lane.b32.xlu0 %v2600, 112
        %v2984 = vpop.permute.xlu0 %2983
        %2985 = vrot.lane.b32.xlu0 %v2602, 112
        %v2986 = vpop.permute.xlu0 %2985
        %2987 = vrot.lane.b32.xlu0 %v2604, 112
        %v2988 = vpop.permute.xlu0 %2987
        %2989 = vrot.lane.b32.xlu0 %v2606, 112
        %v2990 = vpop.permute.xlu0 %2989
        %2991 = vrot.lane.b32.xlu0 %v2608, 112
        %v2992 = vpop.permute.xlu0 %2991
        %2993 = vrot.lane.b32.xlu0 %v2610, 112
        %v2994 = vpop.permute.xlu0 %2993
        %2995 = vrot.lane.b32.xlu0 %v2612, 112
        %v2996 = vpop.permute.xlu0 %2995
        %2997 = vrot.lane.b32.xlu0 %v2614, 112
        %v2998 = vpop.permute.xlu0 %2997
        %2999 = vrot.lane.b32.xlu0 %v2616, 112
        %v3000 = vpop.permute.xlu0 %2999
        %3001 = vrot.lane.b32.xlu0 %v2618, 112
        %v3002 = vpop.permute.xlu0 %3001
        %3003 = vrot.lane.b32.xlu0 %v2620, 112
        %v3004 = vpop.permute.xlu0 %3003
        %3005 = vrot.lane.b32.xlu0 %v2622, 112
        %v3006 = vpop.permute.xlu0 %3005
        %3007 = vrot.lane.b32.xlu0 %v2624, 112
        %v3008 = vpop.permute.xlu0 %3007
        %3009 = vrot.lane.b32.xlu0 %v2626, 112
        %v3010 = vpop.permute.xlu0 %3009
        %3011 = vrot.lane.b32.xlu0 %v2628, 112
        %v3012 = vpop.permute.xlu0 %3011
        %3013 = vrot.lane.b32.xlu0 %v2630, 112
        %v3014 = vpop.permute.xlu0 %3013
        %3015 = vrot.lane.b32.xlu0 %v2632, 112
        %v3016 = vpop.permute.xlu0 %3015
        %3017 = vrot.lane.b32.xlu0 %v2634, 112
        %v3018 = vpop.permute.xlu0 %3017
        %3019 = vrot.lane.b32.xlu0 %v2636, 112
        %v3020 = vpop.permute.xlu0 %3019
        %3021 = vrot.lane.b32.xlu0 %v2638, 112
        %v3022 = vpop.permute.xlu0 %3021
        %3023 = vrot.lane.b32.xlu0 %v2640, 112
        %v3024 = vpop.permute.xlu0 %3023
        %3025 = vrot.lane.b32.xlu0 %v2642, 112
        %v3026 = vpop.permute.xlu0 %3025
        %3027 = vrot.lane.b32.xlu0 %v2644, 112
        %v3028 = vpop.permute.xlu0 %3027
        %3029 = vrot.lane.b32.xlu0 %v2646, 112
        %v3030 = vpop.permute.xlu0 %3029
        %3031 = vrot.lane.b32.xlu0 %v2648, 112
        %v3032 = vpop.permute.xlu0 %3031
        %3033 = vrot.lane.b32.xlu0 %v2650, 112
        %v3034 = vpop.permute.xlu0 %3033
        %3035 = vrot.lane.b32.xlu0 %v2652, 112
        %v3036 = vpop.permute.xlu0 %3035
        %3037 = vrot.lane.b32.xlu0 %v2654, 112
        %v3038 = vpop.permute.xlu0 %3037
        %3039 = vrot.lane.b32.xlu0 %v2656, 112
        %v3040 = vpop.permute.xlu0 %3039
        %3041 = vrot.lane.b32.xlu0 %v2658, 112
        %v3042 = vpop.permute.xlu0 %3041
        %3043 = vrot.lane.b32.xlu0 %v2660, 112
        %v3044 = vpop.permute.xlu0 %3043
        %3045 = vrot.lane.b32.xlu0 %v2662, 112
        %v3046 = vpop.permute.xlu0 %3045
        %3047 = vrot.lane.b32.xlu0 %v2664, 112
        %v3048 = vpop.permute.xlu0 %3047
        %3049 = vrot.lane.b32.xlu0 %v2666, 112
        %v3050 = vpop.permute.xlu0 %3049
        %3051 = vrot.lane.b32.xlu0 %v2668, 112
        %v3052 = vpop.permute.xlu0 %3051
        %3053 = vrot.lane.b32.xlu0 %v2670, 112
        %v3054 = vpop.permute.xlu0 %3053
        %3055 = vrot.lane.b32.xlu0 %v2672, 112
        %v3056 = vpop.permute.xlu0 %3055
        %3057 = vrot.lane.b32.xlu0 %v2674, 112
        %v3058 = vpop.permute.xlu0 %3057
        %3059 = vrot.lane.b32.xlu0 %v2676, 112
        %v3060 = vpop.permute.xlu0 %3059
        %3061 = vrot.lane.b32.xlu0 %v2678, 112
        %v3062 = vpop.permute.xlu0 %3061
        %3063 = vrot.lane.b32.xlu0 %v2680, 112
        %v3064 = vpop.permute.xlu0 %3063
        %3065 = vrot.lane.b32.xlu0 %v2682, 112
        %v3066 = vpop.permute.xlu0 %3065
        %3067 = vrot.lane.b32.xlu0 %v2684, 112
        %v3068 = vpop.permute.xlu0 %3067
        %3069 = vrot.lane.b32.xlu0 %v2686, 112
        %v3070 = vpop.permute.xlu0 %3069
        %3071 = vrot.lane.b32.xlu0 %v2688, 112
        %v3072 = vpop.permute.xlu0 %3071
        %3073 = vrot.lane.b32.xlu0 %v2690, 112
        %v3074 = vpop.permute.xlu0 %3073
        %3075 = vrot.lane.b32.xlu0 %v2692, 112
        %v3076 = vpop.permute.xlu0 %3075
        %3077 = vrot.lane.b32.xlu0 %v2694, 112
        %v3078 = vpop.permute.xlu0 %3077
        %3079 = vrot.lane.b32.xlu0 %v2696, 112
        %v3080 = vpop.permute.xlu0 %3079
        %3081 = vrot.lane.b32.xlu0 %v2698, 112
        %v3082 = vpop.permute.xlu0 %3081
        %3083 = vrot.lane.b32.xlu0 %v2700, 112
        %v3084 = vpop.permute.xlu0 %3083
        %3085 = vrot.lane.b32.xlu0 %v2702, 112
        %v3086 = vpop.permute.xlu0 %3085
        %3087 = vrot.lane.b32.xlu0 %v2704, 112
        %v3088 = vpop.permute.xlu0 %3087
        %3089 = vrot.lane.b32.xlu0 %v2706, 112
        %v3090 = vpop.permute.xlu0 %3089
        %3091 = vrot.lane.b32.xlu0 %v2708, 112
        %v3092 = vpop.permute.xlu0 %3091
        %3093 = vrot.lane.b32.xlu0 %v2710, 112
        %v3094 = vpop.permute.xlu0 %3093
        %3095 = vrot.lane.b32.xlu0 %v2712, 112
        %v3096 = vpop.permute.xlu0 %3095
        %3097 = vrot.lane.b32.xlu0 %v2714, 112
        %v3098 = vpop.permute.xlu0 %3097
        %3099 = vrot.lane.b32.xlu0 %v2716, 112
        %v3100 = vpop.permute.xlu0 %3099
        %3101 = vrot.lane.b32.xlu0 %v2718, 112
        %v3102 = vpop.permute.xlu0 %3101
        %3103 = vrot.lane.b32.xlu0 %v2720, 112
        %v3104 = vpop.permute.xlu0 %3103
        %3105 = vrot.lane.b32.xlu0 %v2722, 112
        %v3106 = vpop.permute.xlu0 %3105
        %3107 = vrot.lane.b32.xlu0 %v2724, 112
        %v3108 = vpop.permute.xlu0 %3107
        %3109 = vrot.lane.b32.xlu0 %v2726, 112
        %v3110 = vpop.permute.xlu0 %3109
        %3111 = vrot.lane.b32.xlu0 %v2728, 112
        %v3112 = vpop.permute.xlu0 %3111
        %3113 = vrot.lane.b32.xlu0 %v2730, 112
        %v3114 = vpop.permute.xlu0 %3113
        %3115 = vrot.lane.b32.xlu0 %v2732, 112
        %v3116 = vpop.permute.xlu0 %3115
        %3117 = vrot.lane.b32.xlu0 %v2734, 112
        %v3118 = vpop.permute.xlu0 %3117
        %3119 = vrot.lane.b32.xlu0 %v2736, 112
        %v3120 = vpop.permute.xlu0 %3119
        %3121 = vrot.lane.b32.xlu0 %v2738, 112
        %v3122 = vpop.permute.xlu0 %3121
        %3123 = vrot.lane.b32.xlu0 %v2740, 112
        %v3124 = vpop.permute.xlu0 %3123
        %3125 = vrot.lane.b32.xlu0 %v2742, 112
        %v3126 = vpop.permute.xlu0 %3125
        %3127 = vrot.lane.b32.xlu0 %v2744, 112
        %v3128 = vpop.permute.xlu0 %3127
        %3129 = vrot.lane.b32.xlu0 %v2746, 112
        %v3130 = vpop.permute.xlu0 %3129
        %3131 = vrot.lane.b32.xlu0 %v2748, 112
        %v3132 = vpop.permute.xlu0 %3131
        %3133 = vrot.lane.b32.xlu0 %v2750, 112
        %v3134 = vpop.permute.xlu0 %3133
        %3135 = vrot.lane.b32.xlu0 %v2752, 112
        %v3136 = vpop.permute.xlu0 %3135
        %3137 = vrot.lane.b32.xlu0 %v2754, 112
        %v3138 = vpop.permute.xlu0 %3137
        %3139 = vrot.lane.b32.xlu0 %v2756, 112
        %v3140 = vpop.permute.xlu0 %3139
        %3141 = vrot.lane.b32.xlu0 %v2758, 112
        %v3142 = vpop.permute.xlu0 %3141
        %3143 = vrot.lane.b32.xlu0 %v2760, 112
        %v3144 = vpop.permute.xlu0 %3143
        %3145 = vrot.lane.b32.xlu0 %v2762, 112
        %v3146 = vpop.permute.xlu0 %3145
        %3147 = vrot.lane.b32.xlu0 %v2764, 112
        %v3148 = vpop.permute.xlu0 %3147
        %3149 = vrot.lane.b32.xlu0 %v2766, 112
        %v3150 = vpop.permute.xlu0 %3149
        %3151 = vrot.lane.b32.xlu0 %v2768, 112
        %v3152 = vpop.permute.xlu0 %3151
        %3153 = vrot.lane.b32.xlu0 %v2770, 112
        %v3154 = vpop.permute.xlu0 %3153
        %3155 = vrot.lane.b32.xlu0 %v2772, 112
        %v3156 = vpop.permute.xlu0 %3155
        %3157 = vrot.lane.b32.xlu0 %v2774, 112
        %v3158 = vpop.permute.xlu0 %3157
        %3159 = vrot.lane.b32.xlu0 %v2776, 112
        %v3160 = vpop.permute.xlu0 %3159
        %3161 = vrot.lane.b32.xlu0 %v2778, 112
        %v3162 = vpop.permute.xlu0 %3161
        %3163 = vrot.lane.b32.xlu0 %v2780, 112
        %v3164 = vpop.permute.xlu0 %3163
        %3165 = vrot.lane.b32.xlu0 %v2782, 112
        %v3166 = vpop.permute.xlu0 %3165
        %3167 = vrot.lane.b32.xlu0 %v2784, 112
        %v3168 = vpop.permute.xlu0 %3167
        %3169 = vrot.lane.b32.xlu0 %v2786, 112
        %v3170 = vpop.permute.xlu0 %3169
        %3171 = vrot.lane.b32.xlu0 %v2788, 112
        %v3172 = vpop.permute.xlu0 %3171
        %3173 = vrot.lane.b32.xlu0 %v2790, 112
        %v3174 = vpop.permute.xlu0 %3173
        %3175 = vrot.lane.b32.xlu0 %v2792, 112
        %v3176 = vpop.permute.xlu0 %3175
        %3177 = vrot.lane.b32.xlu0 %v2794, 112
        %v3178 = vpop.permute.xlu0 %3177
        %3179 = vrot.lane.b32.xlu0 %v2796, 112
        %v3180 = vpop.permute.xlu0 %3179
        %3181 = vrot.lane.b32.xlu0 %v2798, 112
        %v3182 = vpop.permute.xlu0 %3181
        %3183 = vrot.lane.b32.xlu0 %v2800, 112
        %v3184 = vpop.permute.xlu0 %3183
        %3185 = vrot.lane.b32.xlu0 %v2802, 112
        %v3186 = vpop.permute.xlu0 %3185
        %3187 = vrot.lane.b32.xlu0 %v2804, 112
        %v3188 = vpop.permute.xlu0 %3187
        %3189 = vrot.lane.b32.xlu0 %v2806, 112
        %v3190 = vpop.permute.xlu0 %3189
        %3191 = vrot.lane.b32.xlu0 %v2808, 112
        %v3192 = vpop.permute.xlu0 %3191
        %3193 = vrot.lane.b32.xlu0 %v2810, 112
        %v3194 = vpop.permute.xlu0 %3193
        %3195 = vrot.lane.b32.xlu0 %v2812, 112
        %v3196 = vpop.permute.xlu0 %3195
        %3197 = vrot.lane.b32.xlu0 %v2814, 112
        %v3198 = vpop.permute.xlu0 %3197
        %3199 = vrot.lane.b32.xlu0 %v2816, 112
        %v3200 = vpop.permute.xlu0 %3199
        %3201 = vrot.lane.b32.xlu0 %v2818, 112
        %v3202 = vpop.permute.xlu0 %3201
        %3203 = vrot.lane.b32.xlu0 %v2820, 112
        %v3204 = vpop.permute.xlu0 %3203
        %3205 = vrot.lane.b32.xlu0 %v2822, 112
        %v3206 = vpop.permute.xlu0 %3205
        %vm3207 = vcmask 7168
        %v3208 = vsel %vm3207, %v2952, 0
        %v3210 = vsel %vm3207, %v2954, 0
        %v3212 = vsel %vm3207, %v2956, 0
        %v3214 = vsel %vm3207, %v2958, 0
        %v3216 = vsel %vm3207, %v2960, 0
        %v3218 = vsel %vm3207, %v2962, 0
        %v3220 = vsel %vm3207, %v2964, 0
        %v3222 = vsel %vm3207, %v2966, 0
        %v3224 = vsel %vm3207, %v2968, 0
        %v3226 = vsel %vm3207, %v2970, 0
        %v3228 = vsel %vm3207, %v2972, 0
        %v3230 = vsel %vm3207, %v2974, 0
        %v3232 = vsel %vm3207, %v2976, 0
        %v3234 = vsel %vm3207, %v2978, 0
        %v3236 = vsel %vm3207, %v2980, 0
        %v3238 = vsel %vm3207, %v2982, 0
        %v3240 = vsel %vm3207, %v2984, 0
        %v3242 = vsel %vm3207, %v2986, 0
        %v3244 = vsel %vm3207, %v2988, 0
        %v3246 = vsel %vm3207, %v2990, 0
        %v3248 = vsel %vm3207, %v2992, 0
        %v3250 = vsel %vm3207, %v2994, 0
        %v3252 = vsel %vm3207, %v2996, 0
        %v3254 = vsel %vm3207, %v2998, 0
        %v3256 = vsel %vm3207, %v3000, 0
        %v3258 = vsel %vm3207, %v3002, 0
        %v3260 = vsel %vm3207, %v3004, 0
        %v3262 = vsel %vm3207, %v3006, 0
        %v3264 = vsel %vm3207, %v3008, 0
        %v3266 = vsel %vm3207, %v3010, 0
        %v3268 = vsel %vm3207, %v3012, 0
        %v3270 = vsel %vm3207, %v3014, 0
        %v3272 = vsel %vm3207, %v3016, 0
        %v3274 = vsel %vm3207, %v3018, 0
        %v3276 = vsel %vm3207, %v3020, 0
        %v3278 = vsel %vm3207, %v3022, 0
        %v3280 = vsel %vm3207, %v3024, 0
        %v3282 = vsel %vm3207, %v3026, 0
        %v3284 = vsel %vm3207, %v3028, 0
        %v3286 = vsel %vm3207, %v3030, 0
        %v3288 = vsel %vm3207, %v3032, 0
        %v3290 = vsel %vm3207, %v3034, 0
        %v3292 = vsel %vm3207, %v3036, 0
        %v3294 = vsel %vm3207, %v3038, 0
        %v3296 = vsel %vm3207, %v3040, 0
        %v3298 = vsel %vm3207, %v3042, 0
        %v3300 = vsel %vm3207, %v3044, 0
        %v3302 = vsel %vm3207, %v3046, 0
        %v3304 = vsel %vm3207, %v3048, 0
        %v3306 = vsel %vm3207, %v3050, 0
        %v3308 = vsel %vm3207, %v3052, 0
        %v3310 = vsel %vm3207, %v3054, 0
        %v3312 = vsel %vm3207, %v3056, 0
        %v3314 = vsel %vm3207, %v3058, 0
        %v3316 = vsel %vm3207, %v3060, 0
        %v3318 = vsel %vm3207, %v3062, 0
        %v3320 = vsel %vm3207, %v3064, 0
        %v3322 = vsel %vm3207, %v3066, 0
        %v3324 = vsel %vm3207, %v3068, 0
        %v3326 = vsel %vm3207, %v3070, 0
        %v3328 = vsel %vm3207, %v3072, 0
        %v3330 = vsel %vm3207, %v3074, 0
        %v3332 = vsel %vm3207, %v3076, 0
        %v3334 = vsel %vm3207, %v3078, 0
        %v3336 = vsel %vm3207, %v3080, 0
        %v3338 = vsel %vm3207, %v3082, 0
        %v3340 = vsel %vm3207, %v3084, 0
        %v3342 = vsel %vm3207, %v3086, 0
        %v3344 = vsel %vm3207, %v3088, 0
        %v3346 = vsel %vm3207, %v3090, 0
        %v3348 = vsel %vm3207, %v3092, 0
        %v3350 = vsel %vm3207, %v3094, 0
        %v3352 = vsel %vm3207, %v3096, 0
        %v3354 = vsel %vm3207, %v3098, 0
        %v3356 = vsel %vm3207, %v3100, 0
        %v3358 = vsel %vm3207, %v3102, 0
        %v3360 = vsel %vm3207, %v3104, 0
        %v3362 = vsel %vm3207, %v3106, 0
        %v3364 = vsel %vm3207, %v3108, 0
        %v3366 = vsel %vm3207, %v3110, 0
        %v3368 = vsel %vm3207, %v3112, 0
        %v3370 = vsel %vm3207, %v3114, 0
        %v3372 = vsel %vm3207, %v3116, 0
        %v3374 = vsel %vm3207, %v3118, 0
        %v3376 = vsel %vm3207, %v3120, 0
        %v3378 = vsel %vm3207, %v3122, 0
        %v3380 = vsel %vm3207, %v3124, 0
        %v3382 = vsel %vm3207, %v3126, 0
        %v3384 = vsel %vm3207, %v3128, 0
        %v3386 = vsel %vm3207, %v3130, 0
        %v3388 = vsel %vm3207, %v3132, 0
        %v3390 = vsel %vm3207, %v3134, 0
        %v3392 = vsel %vm3207, %v3136, 0
        %v3394 = vsel %vm3207, %v3138, 0
        %v3396 = vsel %vm3207, %v3140, 0
        %v3398 = vsel %vm3207, %v3142, 0
        %v3400 = vsel %vm3207, %v3144, 0
        %v3402 = vsel %vm3207, %v3146, 0
        %v3404 = vsel %vm3207, %v3148, 0
        %v3406 = vsel %vm3207, %v3150, 0
        %v3408 = vsel %vm3207, %v3152, 0
        %v3410 = vsel %vm3207, %v3154, 0
        %v3412 = vsel %vm3207, %v3156, 0
        %v3414 = vsel %vm3207, %v3158, 0
        %v3416 = vsel %vm3207, %v3160, 0
        %v3418 = vsel %vm3207, %v3162, 0
        %v3420 = vsel %vm3207, %v3164, 0
        %v3422 = vsel %vm3207, %v3166, 0
        %v3424 = vsel %vm3207, %v3168, 0
        %v3426 = vsel %vm3207, %v3170, 0
        %v3428 = vsel %vm3207, %v3172, 0
        %v3430 = vsel %vm3207, %v3174, 0
        %v3432 = vsel %vm3207, %v3176, 0
        %v3434 = vsel %vm3207, %v3178, 0
        %v3436 = vsel %vm3207, %v3180, 0
        %v3438 = vsel %vm3207, %v3182, 0
        %v3440 = vsel %vm3207, %v3184, 0
        %v3442 = vsel %vm3207, %v3186, 0
        %v3444 = vsel %vm3207, %v3188, 0
        %v3446 = vsel %vm3207, %v3190, 0
        %v3448 = vsel %vm3207, %v3192, 0
        %v3450 = vsel %vm3207, %v3194, 0
        %v3452 = vsel %vm3207, %v3196, 0
        %v3454 = vsel %vm3207, %v3198, 0
        %v3456 = vsel %vm3207, %v3200, 0
        %v3458 = vsel %vm3207, %v3202, 0
        %v3460 = vsel %vm3207, %v3204, 0
        %v3462 = vsel %vm3207, %v3206, 0
        %vm3464 = vcmask 1040384
        %v3466 = vsel %vm3464, %v537, 0
        %3468 = vmatprep.subr.mxu0 0.0
        %3469 = vmatpush1.msra.mxu0 0.0
        %3470 = vmatprep.subr.mxu0 0.0
        %3471 = vmatpush1.msra.mxu0 0.0
        %3472 = vmatprep.subr.mxu0 0.0
        %3473 = vmatpush1.msra.mxu0 0.0
        %3474 = vmatprep.subr.mxu0 0.0
        %3475 = vmatpush1.msra.mxu0 0.0
        %3476 = vmatprep.subr.mxu0 0.0
        %3477 = vmatpush1.msra.mxu0 0.0
        %3478 = vmatprep.subr.mxu0 0.0
        %3479 = vmatpush1.msra.mxu0 0.0
        %3480 = vmatprep.subr.mxu0 0.0
        %3481 = vmatpush1.msra.mxu0 0.0
        %3482 = vmatprep.subr.mxu0 0.0
        %3483 = vmatpush1.msra.mxu0 0.0
        %3484 = vmatprep.subr.mxu0 0.0
        %3485 = vmatpush1.msra.mxu0 0.0
        %3486 = vmatprep.subr.mxu0 0.0
        %3487 = vmatpush1.msra.mxu0 0.0
        %3488 = vmatprep.subr.mxu0 0.0
        %3489 = vmatpush1.msra.mxu0 0.0
        %3490 = vmatprep.subr.mxu0 0.0
        %3491 = vmatpush1.msra.mxu0 0.0
        %3492 = vmatprep.subr.mxu0 0.0
        %3493 = vmatpush1.msra.mxu0 0.0
        %3494 = vmatprep.subr.mxu0 0.0
        %3495 = vmatpush1.msra.mxu0 0.0
        %3496 = vmatprep.subr.mxu0 0.0
        %3497 = vmatpush1.msra.mxu0 0.0
        %3498 = vmatprep.subr.mxu0 0.0
        %3499 = vmatpush1.msra.mxu0 %v3466
        %3500 = vmatprep.subr.mxu0 0.0
        %3501 = vmatpush2.msra.mxu0 0.0
        %3502 = vmatprep.subr.mxu0 0.0
        %3503 = vmatpush2.msra.mxu0 0.0
        %3504 = vmatprep.subr.mxu0 0.0
        %3505 = vmatpush2.msra.mxu0 0.0
        %3506 = vmatprep.subr.mxu0 0.0
        %3507 = vmatpush2.msra.mxu0 0.0
        %3508 = vmatprep.subr.mxu0 0.0
        %3509 = vmatpush2.msra.mxu0 0.0
        %3510 = vmatprep.subr.mxu0 0.0
        %3511 = vmatpush2.msra.mxu0 0.0
        %3512 = vmatprep.subr.mxu0 0.0
        %3513 = vmatpush2.msra.mxu0 0.0
        %3514 = vmatprep.subr.mxu0 0.0
        %3515 = vmatpush2.msra.mxu0 0.0
        %3516 = vmatprep.subr.mxu0 0.0
        %3517 = vmatpush2.msra.mxu0 0.0
        %3518 = vmatprep.subr.mxu0 0.0
        %3519 = vmatpush2.msra.mxu0 0.0
        %3520 = vmatprep.subr.mxu0 0.0
        %3521 = vmatpush2.msra.mxu0 0.0
        %3522 = vmatprep.subr.mxu0 0.0
        %3523 = vmatpush2.msra.mxu0 0.0
        %3524 = vmatprep.subr.mxu0 0.0
        %3525 = vmatpush2.msra.mxu0 0.0
        %3526 = vmatprep.subr.mxu0 0.0
        %3527 = vmatpush2.msra.mxu0 0.0
        %3528 = vmatprep.subr.mxu0 0.0
        %3529 = vmatpush2.msra.mxu0 0.0
        %3530 = vmatprep.subr.mxu0 0.0
        %3531 = vmatpush2.msra.mxu0 0.0
        %3532 = vmatprep.mubr.f32.mxu0 0.0
        %3533 = vmatmul.mubr.f32.gmra.mxu0 %v3208
        %v3534 = vpop.f32.mrf.mxu0
        %v3535 = vadd.f32 0.0, %v3534
        %v3536 = vpop.f32.mrf.mxu0
        %3537 = vmatprep.mubr.f32.mxu0 0.0
        %3538 = vmatmul.mubr.f32.gmra.mxu0 %v3210
        %v3539 = vpop.f32.mrf.mxu0
        %v3540 = vadd.f32 0.0, %v3539
        %v3541 = vpop.f32.mrf.mxu0
        %3542 = vmatprep.mubr.f32.mxu0 0.0
        %3543 = vmatmul.mubr.f32.gmra.mxu0 %v3212
        %v3544 = vpop.f32.mrf.mxu0
        %v3545 = vadd.f32 0.0, %v3544
        %v3546 = vpop.f32.mrf.mxu0
        %3547 = vmatprep.mubr.f32.mxu0 0.0
        %3548 = vmatmul.mubr.f32.gmra.mxu0 %v3214
        %v3549 = vpop.f32.mrf.mxu0
        %v3550 = vadd.f32 0.0, %v3549
        %v3551 = vpop.f32.mrf.mxu0
        %3552 = vmatprep.mubr.f32.mxu0 0.0
        %3553 = vmatmul.mubr.f32.gmra.mxu0 %v3216
        %v3554 = vpop.f32.mrf.mxu0
        %v3555 = vadd.f32 0.0, %v3554
        %v3556 = vpop.f32.mrf.mxu0
        %3557 = vmatprep.mubr.f32.mxu0 0.0
        %3558 = vmatmul.mubr.f32.gmra.mxu0 %v3218
        %v3559 = vpop.f32.mrf.mxu0
        %v3560 = vadd.f32 0.0, %v3559
        %v3561 = vpop.f32.mrf.mxu0
        %3562 = vmatprep.mubr.f32.mxu0 0.0
        %3563 = vmatmul.mubr.f32.gmra.mxu0 %v3220
        %v3564 = vpop.f32.mrf.mxu0
        %v3565 = vadd.f32 0.0, %v3564
        %v3566 = vpop.f32.mrf.mxu0
        %3567 = vmatprep.mubr.f32.mxu0 0.0
        %3568 = vmatmul.mubr.f32.gmra.mxu0 %v3222
        %v3569 = vpop.f32.mrf.mxu0
        %v3570 = vadd.f32 0.0, %v3569
        %v3571 = vpop.f32.mrf.mxu0
        %3572 = vmatprep.mubr.f32.mxu0 0.0
        %3573 = vmatmul.mubr.f32.gmra.mxu0 %v3224
        %v3574 = vpop.f32.mrf.mxu0
        %v3575 = vadd.f32 0.0, %v3574
        %v3576 = vpop.f32.mrf.mxu0
        %3577 = vmatprep.mubr.f32.mxu0 0.0
        %3578 = vmatmul.mubr.f32.gmra.mxu0 %v3226
        %v3579 = vpop.f32.mrf.mxu0
        %v3580 = vadd.f32 0.0, %v3579
        %v3581 = vpop.f32.mrf.mxu0
        %3582 = vmatprep.mubr.f32.mxu0 0.0
        %3583 = vmatmul.mubr.f32.gmra.mxu0 %v3228
        %v3584 = vpop.f32.mrf.mxu0
        %v3585 = vadd.f32 0.0, %v3584
        %v3586 = vpop.f32.mrf.mxu0
        %3587 = vmatprep.mubr.f32.mxu0 0.0
        %3588 = vmatmul.mubr.f32.gmra.mxu0 %v3230
        %v3589 = vpop.f32.mrf.mxu0
        %v3590 = vadd.f32 0.0, %v3589
        %v3591 = vpop.f32.mrf.mxu0
        %3592 = vmatprep.mubr.f32.mxu0 0.0
        %3593 = vmatmul.mubr.f32.gmra.mxu0 %v3232
        %v3594 = vpop.f32.mrf.mxu0
        %v3595 = vadd.f32 0.0, %v3594
        %v3596 = vpop.f32.mrf.mxu0
        %3597 = vmatprep.mubr.f32.mxu0 0.0
        %3598 = vmatmul.mubr.f32.gmra.mxu0 %v3234
        %v3599 = vpop.f32.mrf.mxu0
        %v3600 = vadd.f32 0.0, %v3599
        %v3601 = vpop.f32.mrf.mxu0
        %3602 = vmatprep.mubr.f32.mxu0 0.0
        %3603 = vmatmul.mubr.f32.gmra.mxu0 %v3236
        %v3604 = vpop.f32.mrf.mxu0
        %v3605 = vadd.f32 0.0, %v3604
        %v3606 = vpop.f32.mrf.mxu0
        %3607 = vmatprep.mubr.f32.mxu0 0.0
        %3608 = vmatmul.mubr.f32.gmra.mxu0 %v3238
        %v3609 = vpop.f32.mrf.mxu0
        %v3610 = vadd.f32 0.0, %v3609
        %v3611 = vpop.f32.mrf.mxu0
        %3612 = vmatprep.mubr.f32.mxu0 0.0
        %3613 = vmatmul.mubr.f32.gmra.mxu0 %v3240
        %v3614 = vpop.f32.mrf.mxu0
        %v3615 = vadd.f32 0.0, %v3614
        %v3616 = vpop.f32.mrf.mxu0
        %3617 = vmatprep.mubr.f32.mxu0 0.0
        %3618 = vmatmul.mubr.f32.gmra.mxu0 %v3242
        %v3619 = vpop.f32.mrf.mxu0
        %v3620 = vadd.f32 0.0, %v3619
        %v3621 = vpop.f32.mrf.mxu0
        %3622 = vmatprep.mubr.f32.mxu0 0.0
        %3623 = vmatmul.mubr.f32.gmra.mxu0 %v3244
        %v3624 = vpop.f32.mrf.mxu0
        %v3625 = vadd.f32 0.0, %v3624
        %v3626 = vpop.f32.mrf.mxu0
        %3627 = vmatprep.mubr.f32.mxu0 0.0
        %3628 = vmatmul.mubr.f32.gmra.mxu0 %v3246
        %v3629 = vpop.f32.mrf.mxu0
        %v3630 = vadd.f32 0.0, %v3629
        %v3631 = vpop.f32.mrf.mxu0
        %3632 = vmatprep.mubr.f32.mxu0 0.0
        %3633 = vmatmul.mubr.f32.gmra.mxu0 %v3248
        %v3634 = vpop.f32.mrf.mxu0
        %v3635 = vadd.f32 0.0, %v3634
        %v3636 = vpop.f32.mrf.mxu0
        %3637 = vmatprep.mubr.f32.mxu0 0.0
        %3638 = vmatmul.mubr.f32.gmra.mxu0 %v3250
        %v3639 = vpop.f32.mrf.mxu0
        %v3640 = vadd.f32 0.0, %v3639
        %v3641 = vpop.f32.mrf.mxu0
        %3642 = vmatprep.mubr.f32.mxu0 0.0
        %3643 = vmatmul.mubr.f32.gmra.mxu0 %v3252
        %v3644 = vpop.f32.mrf.mxu0
        %v3645 = vadd.f32 0.0, %v3644
        %v3646 = vpop.f32.mrf.mxu0
        %3647 = vmatprep.mubr.f32.mxu0 0.0
        %3648 = vmatmul.mubr.f32.gmra.mxu0 %v3254
        %v3649 = vpop.f32.mrf.mxu0
        %v3650 = vadd.f32 0.0, %v3649
        %v3651 = vpop.f32.mrf.mxu0
        %3652 = vmatprep.mubr.f32.mxu0 0.0
        %3653 = vmatmul.mubr.f32.gmra.mxu0 %v3256
        %v3654 = vpop.f32.mrf.mxu0
        %v3655 = vadd.f32 0.0, %v3654
        %v3656 = vpop.f32.mrf.mxu0
        %3657 = vmatprep.mubr.f32.mxu0 0.0
        %3658 = vmatmul.mubr.f32.gmra.mxu0 %v3258
        %v3659 = vpop.f32.mrf.mxu0
        %v3660 = vadd.f32 0.0, %v3659
        %v3661 = vpop.f32.mrf.mxu0
        %3662 = vmatprep.mubr.f32.mxu0 0.0
        %3663 = vmatmul.mubr.f32.gmra.mxu0 %v3260
        %v3664 = vpop.f32.mrf.mxu0
        %v3665 = vadd.f32 0.0, %v3664
        %v3666 = vpop.f32.mrf.mxu0
        %3667 = vmatprep.mubr.f32.mxu0 0.0
        %3668 = vmatmul.mubr.f32.gmra.mxu0 %v3262
        %v3669 = vpop.f32.mrf.mxu0
        %v3670 = vadd.f32 0.0, %v3669
        %v3671 = vpop.f32.mrf.mxu0
        %3672 = vmatprep.mubr.f32.mxu0 0.0
        %3673 = vmatmul.mubr.f32.gmra.mxu0 %v3264
        %v3674 = vpop.f32.mrf.mxu0
        %v3675 = vadd.f32 0.0, %v3674
        %v3676 = vpop.f32.mrf.mxu0
        %3677 = vmatprep.mubr.f32.mxu0 0.0
        %3678 = vmatmul.mubr.f32.gmra.mxu0 %v3266
        %v3679 = vpop.f32.mrf.mxu0
        %v3680 = vadd.f32 0.0, %v3679
        %v3681 = vpop.f32.mrf.mxu0
        %3682 = vmatprep.mubr.f32.mxu0 0.0
        %3683 = vmatmul.mubr.f32.gmra.mxu0 %v3268
        %v3684 = vpop.f32.mrf.mxu0
        %v3685 = vadd.f32 0.0, %v3684
        %v3686 = vpop.f32.mrf.mxu0
        %3687 = vmatprep.mubr.f32.mxu0 0.0
        %3688 = vmatmul.mubr.f32.gmra.mxu0 %v3270
        %v3689 = vpop.f32.mrf.mxu0
        %v3690 = vadd.f32 0.0, %v3689
        %v3691 = vpop.f32.mrf.mxu0
        %3692 = vmatprep.mubr.f32.mxu0 0.0
        %3693 = vmatmul.mubr.f32.gmra.mxu0 %v3272
        %v3694 = vpop.f32.mrf.mxu0
        %v3695 = vadd.f32 0.0, %v3694
        %v3696 = vpop.f32.mrf.mxu0
        %3697 = vmatprep.mubr.f32.mxu0 0.0
        %3698 = vmatmul.mubr.f32.gmra.mxu0 %v3274
        %v3699 = vpop.f32.mrf.mxu0
        %v3700 = vadd.f32 0.0, %v3699
        %v3701 = vpop.f32.mrf.mxu0
        %3702 = vmatprep.mubr.f32.mxu0 0.0
        %3703 = vmatmul.mubr.f32.gmra.mxu0 %v3276
        %v3704 = vpop.f32.mrf.mxu0
        %v3705 = vadd.f32 0.0, %v3704
        %v3706 = vpop.f32.mrf.mxu0
        %3707 = vmatprep.mubr.f32.mxu0 0.0
        %3708 = vmatmul.mubr.f32.gmra.mxu0 %v3278
        %v3709 = vpop.f32.mrf.mxu0
        %v3710 = vadd.f32 0.0, %v3709
        %v3711 = vpop.f32.mrf.mxu0
        %3712 = vmatprep.mubr.f32.mxu0 0.0
        %3713 = vmatmul.mubr.f32.gmra.mxu0 %v3280
        %v3714 = vpop.f32.mrf.mxu0
        %v3715 = vadd.f32 0.0, %v3714
        %v3716 = vpop.f32.mrf.mxu0
        %3717 = vmatprep.mubr.f32.mxu0 0.0
        %3718 = vmatmul.mubr.f32.gmra.mxu0 %v3282
        %v3719 = vpop.f32.mrf.mxu0
        %v3720 = vadd.f32 0.0, %v3719
        %v3721 = vpop.f32.mrf.mxu0
        %3722 = vmatprep.mubr.f32.mxu0 0.0
        %3723 = vmatmul.mubr.f32.gmra.mxu0 %v3284
        %v3724 = vpop.f32.mrf.mxu0
        %v3725 = vadd.f32 0.0, %v3724
        %v3726 = vpop.f32.mrf.mxu0
        %3727 = vmatprep.mubr.f32.mxu0 0.0
        %3728 = vmatmul.mubr.f32.gmra.mxu0 %v3286
        %v3729 = vpop.f32.mrf.mxu0
        %v3730 = vadd.f32 0.0, %v3729
        %v3731 = vpop.f32.mrf.mxu0
        %3732 = vmatprep.mubr.f32.mxu0 0.0
        %3733 = vmatmul.mubr.f32.gmra.mxu0 %v3288
        %v3734 = vpop.f32.mrf.mxu0
        %v3735 = vadd.f32 0.0, %v3734
        %v3736 = vpop.f32.mrf.mxu0
        %3737 = vmatprep.mubr.f32.mxu0 0.0
        %3738 = vmatmul.mubr.f32.gmra.mxu0 %v3290
        %v3739 = vpop.f32.mrf.mxu0
        %v3740 = vadd.f32 0.0, %v3739
        %v3741 = vpop.f32.mrf.mxu0
        %3742 = vmatprep.mubr.f32.mxu0 0.0
        %3743 = vmatmul.mubr.f32.gmra.mxu0 %v3292
        %v3744 = vpop.f32.mrf.mxu0
        %v3745 = vadd.f32 0.0, %v3744
        %v3746 = vpop.f32.mrf.mxu0
        %3747 = vmatprep.mubr.f32.mxu0 0.0
        %3748 = vmatmul.mubr.f32.gmra.mxu0 %v3294
        %v3749 = vpop.f32.mrf.mxu0
        %v3750 = vadd.f32 0.0, %v3749
        %v3751 = vpop.f32.mrf.mxu0
        %3752 = vmatprep.mubr.f32.mxu0 0.0
        %3753 = vmatmul.mubr.f32.gmra.mxu0 %v3296
        %v3754 = vpop.f32.mrf.mxu0
        %v3755 = vadd.f32 0.0, %v3754
        %v3756 = vpop.f32.mrf.mxu0
        %3757 = vmatprep.mubr.f32.mxu0 0.0
        %3758 = vmatmul.mubr.f32.gmra.mxu0 %v3298
        %v3759 = vpop.f32.mrf.mxu0
        %v3760 = vadd.f32 0.0, %v3759
        %v3761 = vpop.f32.mrf.mxu0
        %3762 = vmatprep.mubr.f32.mxu0 0.0
        %3763 = vmatmul.mubr.f32.gmra.mxu0 %v3300
        %v3764 = vpop.f32.mrf.mxu0
        %v3765 = vadd.f32 0.0, %v3764
        %v3766 = vpop.f32.mrf.mxu0
        %3767 = vmatprep.mubr.f32.mxu0 0.0
        %3768 = vmatmul.mubr.f32.gmra.mxu0 %v3302
        %v3769 = vpop.f32.mrf.mxu0
        %v3770 = vadd.f32 0.0, %v3769
        %v3771 = vpop.f32.mrf.mxu0
        %3772 = vmatprep.mubr.f32.mxu0 0.0
        %3773 = vmatmul.mubr.f32.gmra.mxu0 %v3304
        %v3774 = vpop.f32.mrf.mxu0
        %v3775 = vadd.f32 0.0, %v3774
        %v3776 = vpop.f32.mrf.mxu0
        %3777 = vmatprep.mubr.f32.mxu0 0.0
        %3778 = vmatmul.mubr.f32.gmra.mxu0 %v3306
        %v3779 = vpop.f32.mrf.mxu0
        %v3780 = vadd.f32 0.0, %v3779
        %v3781 = vpop.f32.mrf.mxu0
        %3782 = vmatprep.mubr.f32.mxu0 0.0
        %3783 = vmatmul.mubr.f32.gmra.mxu0 %v3308
        %v3784 = vpop.f32.mrf.mxu0
        %v3785 = vadd.f32 0.0, %v3784
        %v3786 = vpop.f32.mrf.mxu0
        %3787 = vmatprep.mubr.f32.mxu0 0.0
        %3788 = vmatmul.mubr.f32.gmra.mxu0 %v3310
        %v3789 = vpop.f32.mrf.mxu0
        %v3790 = vadd.f32 0.0, %v3789
        %v3791 = vpop.f32.mrf.mxu0
        %3792 = vmatprep.mubr.f32.mxu0 0.0
        %3793 = vmatmul.mubr.f32.gmra.mxu0 %v3312
        %v3794 = vpop.f32.mrf.mxu0
        %v3795 = vadd.f32 0.0, %v3794
        %v3796 = vpop.f32.mrf.mxu0
        %3797 = vmatprep.mubr.f32.mxu0 0.0
        %3798 = vmatmul.mubr.f32.gmra.mxu0 %v3314
        %v3799 = vpop.f32.mrf.mxu0
        %v3800 = vadd.f32 0.0, %v3799
        %v3801 = vpop.f32.mrf.mxu0
        %3802 = vmatprep.mubr.f32.mxu0 0.0
        %3803 = vmatmul.mubr.f32.gmra.mxu0 %v3316
        %v3804 = vpop.f32.mrf.mxu0
        %v3805 = vadd.f32 0.0, %v3804
        %v3806 = vpop.f32.mrf.mxu0
        %3807 = vmatprep.mubr.f32.mxu0 0.0
        %3808 = vmatmul.mubr.f32.gmra.mxu0 %v3318
        %v3809 = vpop.f32.mrf.mxu0
        %v3810 = vadd.f32 0.0, %v3809
        %v3811 = vpop.f32.mrf.mxu0
        %3812 = vmatprep.mubr.f32.mxu0 0.0
        %3813 = vmatmul.mubr.f32.gmra.mxu0 %v3320
        %v3814 = vpop.f32.mrf.mxu0
        %v3815 = vadd.f32 0.0, %v3814
        %v3816 = vpop.f32.mrf.mxu0
        %3817 = vmatprep.mubr.f32.mxu0 0.0
        %3818 = vmatmul.mubr.f32.gmra.mxu0 %v3322
        %v3819 = vpop.f32.mrf.mxu0
        %v3820 = vadd.f32 0.0, %v3819
        %v3821 = vpop.f32.mrf.mxu0
        %3822 = vmatprep.mubr.f32.mxu0 0.0
        %3823 = vmatmul.mubr.f32.gmra.mxu0 %v3324
        %v3824 = vpop.f32.mrf.mxu0
        %v3825 = vadd.f32 0.0, %v3824
        %v3826 = vpop.f32.mrf.mxu0
        %3827 = vmatprep.mubr.f32.mxu0 0.0
        %3828 = vmatmul.mubr.f32.gmra.mxu0 %v3326
        %v3829 = vpop.f32.mrf.mxu0
        %v3830 = vadd.f32 0.0, %v3829
        %v3831 = vpop.f32.mrf.mxu0
        %3832 = vmatprep.mubr.f32.mxu0 0.0
        %3833 = vmatmul.mubr.f32.gmra.mxu0 %v3328
        %v3834 = vpop.f32.mrf.mxu0
        %v3835 = vadd.f32 0.0, %v3834
        %v3836 = vpop.f32.mrf.mxu0
        %3837 = vmatprep.mubr.f32.mxu0 0.0
        %3838 = vmatmul.mubr.f32.gmra.mxu0 %v3330
        %v3839 = vpop.f32.mrf.mxu0
        %v3840 = vadd.f32 0.0, %v3839
        %v3841 = vpop.f32.mrf.mxu0
        %3842 = vmatprep.mubr.f32.mxu0 0.0
        %3843 = vmatmul.mubr.f32.gmra.mxu0 %v3332
        %v3844 = vpop.f32.mrf.mxu0
        %v3845 = vadd.f32 0.0, %v3844
        %v3846 = vpop.f32.mrf.mxu0
        %3847 = vmatprep.mubr.f32.mxu0 0.0
        %3848 = vmatmul.mubr.f32.gmra.mxu0 %v3334
        %v3849 = vpop.f32.mrf.mxu0
        %v3850 = vadd.f32 0.0, %v3849
        %v3851 = vpop.f32.mrf.mxu0
        %3852 = vmatprep.mubr.f32.mxu0 0.0
        %3853 = vmatmul.mubr.f32.gmra.mxu0 %v3336
        %v3854 = vpop.f32.mrf.mxu0
        %v3855 = vadd.f32 0.0, %v3854
        %v3856 = vpop.f32.mrf.mxu0
        %3857 = vmatprep.mubr.f32.mxu0 0.0
        %3858 = vmatmul.mubr.f32.gmra.mxu0 %v3338
        %v3859 = vpop.f32.mrf.mxu0
        %v3860 = vadd.f32 0.0, %v3859
        %v3861 = vpop.f32.mrf.mxu0
        %3862 = vmatprep.mubr.f32.mxu0 0.0
        %3863 = vmatmul.mubr.f32.gmra.mxu0 %v3340
        %v3864 = vpop.f32.mrf.mxu0
        %v3865 = vadd.f32 0.0, %v3864
        %v3866 = vpop.f32.mrf.mxu0
        %3867 = vmatprep.mubr.f32.mxu0 0.0
        %3868 = vmatmul.mubr.f32.gmra.mxu0 %v3342
        %v3869 = vpop.f32.mrf.mxu0
        %v3870 = vadd.f32 0.0, %v3869
        %v3871 = vpop.f32.mrf.mxu0
        %3872 = vmatprep.mubr.f32.mxu0 0.0
        %3873 = vmatmul.mubr.f32.gmra.mxu0 %v3344
        %v3874 = vpop.f32.mrf.mxu0
        %v3875 = vadd.f32 0.0, %v3874
        %v3876 = vpop.f32.mrf.mxu0
        %3877 = vmatprep.mubr.f32.mxu0 0.0
        %3878 = vmatmul.mubr.f32.gmra.mxu0 %v3346
        %v3879 = vpop.f32.mrf.mxu0
        %v3880 = vadd.f32 0.0, %v3879
        %v3881 = vpop.f32.mrf.mxu0
        %3882 = vmatprep.mubr.f32.mxu0 0.0
        %3883 = vmatmul.mubr.f32.gmra.mxu0 %v3348
        %v3884 = vpop.f32.mrf.mxu0
        %v3885 = vadd.f32 0.0, %v3884
        %v3886 = vpop.f32.mrf.mxu0
        %3887 = vmatprep.mubr.f32.mxu0 0.0
        %3888 = vmatmul.mubr.f32.gmra.mxu0 %v3350
        %v3889 = vpop.f32.mrf.mxu0
        %v3890 = vadd.f32 0.0, %v3889
        %v3891 = vpop.f32.mrf.mxu0
        %3892 = vmatprep.mubr.f32.mxu0 0.0
        %3893 = vmatmul.mubr.f32.gmra.mxu0 %v3352
        %v3894 = vpop.f32.mrf.mxu0
        %v3895 = vadd.f32 0.0, %v3894
        %v3896 = vpop.f32.mrf.mxu0
        %3897 = vmatprep.mubr.f32.mxu0 0.0
        %3898 = vmatmul.mubr.f32.gmra.mxu0 %v3354
        %v3899 = vpop.f32.mrf.mxu0
        %v3900 = vadd.f32 0.0, %v3899
        %v3901 = vpop.f32.mrf.mxu0
        %3902 = vmatprep.mubr.f32.mxu0 0.0
        %3903 = vmatmul.mubr.f32.gmra.mxu0 %v3356
        %v3904 = vpop.f32.mrf.mxu0
        %v3905 = vadd.f32 0.0, %v3904
        %v3906 = vpop.f32.mrf.mxu0
        %3907 = vmatprep.mubr.f32.mxu0 0.0
        %3908 = vmatmul.mubr.f32.gmra.mxu0 %v3358
        %v3909 = vpop.f32.mrf.mxu0
        %v3910 = vadd.f32 0.0, %v3909
        %v3911 = vpop.f32.mrf.mxu0
        %3912 = vmatprep.mubr.f32.mxu0 0.0
        %3913 = vmatmul.mubr.f32.gmra.mxu0 %v3360
        %v3914 = vpop.f32.mrf.mxu0
        %v3915 = vadd.f32 0.0, %v3914
        %v3916 = vpop.f32.mrf.mxu0
        %3917 = vmatprep.mubr.f32.mxu0 0.0
        %3918 = vmatmul.mubr.f32.gmra.mxu0 %v3362
        %v3919 = vpop.f32.mrf.mxu0
        %v3920 = vadd.f32 0.0, %v3919
        %v3921 = vpop.f32.mrf.mxu0
        %3922 = vmatprep.mubr.f32.mxu0 0.0
        %3923 = vmatmul.mubr.f32.gmra.mxu0 %v3364
        %v3924 = vpop.f32.mrf.mxu0
        %v3925 = vadd.f32 0.0, %v3924
        %v3926 = vpop.f32.mrf.mxu0
        %3927 = vmatprep.mubr.f32.mxu0 0.0
        %3928 = vmatmul.mubr.f32.gmra.mxu0 %v3366
        %v3929 = vpop.f32.mrf.mxu0
        %v3930 = vadd.f32 0.0, %v3929
        %v3931 = vpop.f32.mrf.mxu0
        %3932 = vmatprep.mubr.f32.mxu0 0.0
        %3933 = vmatmul.mubr.f32.gmra.mxu0 %v3368
        %v3934 = vpop.f32.mrf.mxu0
        %v3935 = vadd.f32 0.0, %v3934
        %v3936 = vpop.f32.mrf.mxu0
        %3937 = vmatprep.mubr.f32.mxu0 0.0
        %3938 = vmatmul.mubr.f32.gmra.mxu0 %v3370
        %v3939 = vpop.f32.mrf.mxu0
        %v3940 = vadd.f32 0.0, %v3939
        %v3941 = vpop.f32.mrf.mxu0
        %3942 = vmatprep.mubr.f32.mxu0 0.0
        %3943 = vmatmul.mubr.f32.gmra.mxu0 %v3372
        %v3944 = vpop.f32.mrf.mxu0
        %v3945 = vadd.f32 0.0, %v3944
        %v3946 = vpop.f32.mrf.mxu0
        %3947 = vmatprep.mubr.f32.mxu0 0.0
        %3948 = vmatmul.mubr.f32.gmra.mxu0 %v3374
        %v3949 = vpop.f32.mrf.mxu0
        %v3950 = vadd.f32 0.0, %v3949
        %v3951 = vpop.f32.mrf.mxu0
        %3952 = vmatprep.mubr.f32.mxu0 0.0
        %3953 = vmatmul.mubr.f32.gmra.mxu0 %v3376
        %v3954 = vpop.f32.mrf.mxu0
        %v3955 = vadd.f32 0.0, %v3954
        %v3956 = vpop.f32.mrf.mxu0
        %3957 = vmatprep.mubr.f32.mxu0 0.0
        %3958 = vmatmul.mubr.f32.gmra.mxu0 %v3378
        %v3959 = vpop.f32.mrf.mxu0
        %v3960 = vadd.f32 0.0, %v3959
        %v3961 = vpop.f32.mrf.mxu0
        %3962 = vmatprep.mubr.f32.mxu0 0.0
        %3963 = vmatmul.mubr.f32.gmra.mxu0 %v3380
        %v3964 = vpop.f32.mrf.mxu0
        %v3965 = vadd.f32 0.0, %v3964
        %v3966 = vpop.f32.mrf.mxu0
        %3967 = vmatprep.mubr.f32.mxu0 0.0
        %3968 = vmatmul.mubr.f32.gmra.mxu0 %v3382
        %v3969 = vpop.f32.mrf.mxu0
        %v3970 = vadd.f32 0.0, %v3969
        %v3971 = vpop.f32.mrf.mxu0
        %3972 = vmatprep.mubr.f32.mxu0 0.0
        %3973 = vmatmul.mubr.f32.gmra.mxu0 %v3384
        %v3974 = vpop.f32.mrf.mxu0
        %v3975 = vadd.f32 0.0, %v3974
        %v3976 = vpop.f32.mrf.mxu0
        %3977 = vmatprep.mubr.f32.mxu0 0.0
        %3978 = vmatmul.mubr.f32.gmra.mxu0 %v3386
        %v3979 = vpop.f32.mrf.mxu0
        %v3980 = vadd.f32 0.0, %v3979
        %v3981 = vpop.f32.mrf.mxu0
        %3982 = vmatprep.mubr.f32.mxu0 0.0
        %3983 = vmatmul.mubr.f32.gmra.mxu0 %v3388
        %v3984 = vpop.f32.mrf.mxu0
        %v3985 = vadd.f32 0.0, %v3984
        %v3986 = vpop.f32.mrf.mxu0
        %3987 = vmatprep.mubr.f32.mxu0 0.0
        %3988 = vmatmul.mubr.f32.gmra.mxu0 %v3390
        %v3989 = vpop.f32.mrf.mxu0
        %v3990 = vadd.f32 0.0, %v3989
        %v3991 = vpop.f32.mrf.mxu0
        %3992 = vmatprep.mubr.f32.mxu0 0.0
        %3993 = vmatmul.mubr.f32.gmra.mxu0 %v3392
        %v3994 = vpop.f32.mrf.mxu0
        %v3995 = vadd.f32 0.0, %v3994
        %v3996 = vpop.f32.mrf.mxu0
        %3997 = vmatprep.mubr.f32.mxu0 0.0
        %3998 = vmatmul.mubr.f32.gmra.mxu0 %v3394
        %v3999 = vpop.f32.mrf.mxu0
        %v4000 = vadd.f32 0.0, %v3999
        %v4001 = vpop.f32.mrf.mxu0
        %4002 = vmatprep.mubr.f32.mxu0 0.0
        %4003 = vmatmul.mubr.f32.gmra.mxu0 %v3396
        %v4004 = vpop.f32.mrf.mxu0
        %v4005 = vadd.f32 0.0, %v4004
        %v4006 = vpop.f32.mrf.mxu0
        %4007 = vmatprep.mubr.f32.mxu0 0.0
        %4008 = vmatmul.mubr.f32.gmra.mxu0 %v3398
        %v4009 = vpop.f32.mrf.mxu0
        %v4010 = vadd.f32 0.0, %v4009
        %v4011 = vpop.f32.mrf.mxu0
        %4012 = vmatprep.mubr.f32.mxu0 0.0
        %4013 = vmatmul.mubr.f32.gmra.mxu0 %v3400
        %v4014 = vpop.f32.mrf.mxu0
        %v4015 = vadd.f32 0.0, %v4014
        %v4016 = vpop.f32.mrf.mxu0
        %4017 = vmatprep.mubr.f32.mxu0 0.0
        %4018 = vmatmul.mubr.f32.gmra.mxu0 %v3402
        %v4019 = vpop.f32.mrf.mxu0
        %v4020 = vadd.f32 0.0, %v4019
        %v4021 = vpop.f32.mrf.mxu0
        %4022 = vmatprep.mubr.f32.mxu0 0.0
        %4023 = vmatmul.mubr.f32.gmra.mxu0 %v3404
        %v4024 = vpop.f32.mrf.mxu0
        %v4025 = vadd.f32 0.0, %v4024
        %v4026 = vpop.f32.mrf.mxu0
        %4027 = vmatprep.mubr.f32.mxu0 0.0
        %4028 = vmatmul.mubr.f32.gmra.mxu0 %v3406
        %v4029 = vpop.f32.mrf.mxu0
        %v4030 = vadd.f32 0.0, %v4029
        %v4031 = vpop.f32.mrf.mxu0
        %4032 = vmatprep.mubr.f32.mxu0 0.0
        %4033 = vmatmul.mubr.f32.gmra.mxu0 %v3408
        %v4034 = vpop.f32.mrf.mxu0
        %v4035 = vadd.f32 0.0, %v4034
        %v4036 = vpop.f32.mrf.mxu0
        %4037 = vmatprep.mubr.f32.mxu0 0.0
        %4038 = vmatmul.mubr.f32.gmra.mxu0 %v3410
        %v4039 = vpop.f32.mrf.mxu0
        %v4040 = vadd.f32 0.0, %v4039
        %v4041 = vpop.f32.mrf.mxu0
        %4042 = vmatprep.mubr.f32.mxu0 0.0
        %4043 = vmatmul.mubr.f32.gmra.mxu0 %v3412
        %v4044 = vpop.f32.mrf.mxu0
        %v4045 = vadd.f32 0.0, %v4044
        %v4046 = vpop.f32.mrf.mxu0
        %4047 = vmatprep.mubr.f32.mxu0 0.0
        %4048 = vmatmul.mubr.f32.gmra.mxu0 %v3414
        %v4049 = vpop.f32.mrf.mxu0
        %v4050 = vadd.f32 0.0, %v4049
        %v4051 = vpop.f32.mrf.mxu0
        %4052 = vmatprep.mubr.f32.mxu0 0.0
        %4053 = vmatmul.mubr.f32.gmra.mxu0 %v3416
        %v4054 = vpop.f32.mrf.mxu0
        %v4055 = vadd.f32 0.0, %v4054
        %v4056 = vpop.f32.mrf.mxu0
        %4057 = vmatprep.mubr.f32.mxu0 0.0
        %4058 = vmatmul.mubr.f32.gmra.mxu0 %v3418
        %v4059 = vpop.f32.mrf.mxu0
        %v4060 = vadd.f32 0.0, %v4059
        %v4061 = vpop.f32.mrf.mxu0
        %4062 = vmatprep.mubr.f32.mxu0 0.0
        %4063 = vmatmul.mubr.f32.gmra.mxu0 %v3420
        %v4064 = vpop.f32.mrf.mxu0
        %v4065 = vadd.f32 0.0, %v4064
        %v4066 = vpop.f32.mrf.mxu0
        %4067 = vmatprep.mubr.f32.mxu0 0.0
        %4068 = vmatmul.mubr.f32.gmra.mxu0 %v3422
        %v4069 = vpop.f32.mrf.mxu0
        %v4070 = vadd.f32 0.0, %v4069
        %v4071 = vpop.f32.mrf.mxu0
        %4072 = vmatprep.mubr.f32.mxu0 0.0
        %4073 = vmatmul.mubr.f32.gmra.mxu0 %v3424
        %v4074 = vpop.f32.mrf.mxu0
        %v4075 = vadd.f32 0.0, %v4074
        %v4076 = vpop.f32.mrf.mxu0
        %4077 = vmatprep.mubr.f32.mxu0 0.0
        %4078 = vmatmul.mubr.f32.gmra.mxu0 %v3426
        %v4079 = vpop.f32.mrf.mxu0
        %v4080 = vadd.f32 0.0, %v4079
        %v4081 = vpop.f32.mrf.mxu0
        %4082 = vmatprep.mubr.f32.mxu0 0.0
        %4083 = vmatmul.mubr.f32.gmra.mxu0 %v3428
        %v4084 = vpop.f32.mrf.mxu0
        %v4085 = vadd.f32 0.0, %v4084
        %v4086 = vpop.f32.mrf.mxu0
        %4087 = vmatprep.mubr.f32.mxu0 0.0
        %4088 = vmatmul.mubr.f32.gmra.mxu0 %v3430
        %v4089 = vpop.f32.mrf.mxu0
        %v4090 = vadd.f32 0.0, %v4089
        %v4091 = vpop.f32.mrf.mxu0
        %4092 = vmatprep.mubr.f32.mxu0 0.0
        %4093 = vmatmul.mubr.f32.gmra.mxu0 %v3432
        %v4094 = vpop.f32.mrf.mxu0
        %v4095 = vadd.f32 0.0, %v4094
        %v4096 = vpop.f32.mrf.mxu0
        %4097 = vmatprep.mubr.f32.mxu0 0.0
        %4098 = vmatmul.mubr.f32.gmra.mxu0 %v3434
        %v4099 = vpop.f32.mrf.mxu0
        %v4100 = vadd.f32 0.0, %v4099
        %v4101 = vpop.f32.mrf.mxu0
        %4102 = vmatprep.mubr.f32.mxu0 0.0
        %4103 = vmatmul.mubr.f32.gmra.mxu0 %v3436
        %v4104 = vpop.f32.mrf.mxu0
        %v4105 = vadd.f32 0.0, %v4104
        %v4106 = vpop.f32.mrf.mxu0
        %4107 = vmatprep.mubr.f32.mxu0 0.0
        %4108 = vmatmul.mubr.f32.gmra.mxu0 %v3438
        %v4109 = vpop.f32.mrf.mxu0
        %v4110 = vadd.f32 0.0, %v4109
        %v4111 = vpop.f32.mrf.mxu0
        %4112 = vmatprep.mubr.f32.mxu0 0.0
        %4113 = vmatmul.mubr.f32.gmra.mxu0 %v3440
        %v4114 = vpop.f32.mrf.mxu0
        %v4115 = vadd.f32 0.0, %v4114
        %v4116 = vpop.f32.mrf.mxu0
        %4117 = vmatprep.mubr.f32.mxu0 0.0
        %4118 = vmatmul.mubr.f32.gmra.mxu0 %v3442
        %v4119 = vpop.f32.mrf.mxu0
        %v4120 = vadd.f32 0.0, %v4119
        %v4121 = vpop.f32.mrf.mxu0
        %4122 = vmatprep.mubr.f32.mxu0 0.0
        %4123 = vmatmul.mubr.f32.gmra.mxu0 %v3444
        %v4124 = vpop.f32.mrf.mxu0
        %v4125 = vadd.f32 0.0, %v4124
        %v4126 = vpop.f32.mrf.mxu0
        %4127 = vmatprep.mubr.f32.mxu0 0.0
        %4128 = vmatmul.mubr.f32.gmra.mxu0 %v3446
        %v4129 = vpop.f32.mrf.mxu0
        %v4130 = vadd.f32 0.0, %v4129
        %v4131 = vpop.f32.mrf.mxu0
        %4132 = vmatprep.mubr.f32.mxu0 0.0
        %4133 = vmatmul.mubr.f32.gmra.mxu0 %v3448
        %v4134 = vpop.f32.mrf.mxu0
        %v4135 = vadd.f32 0.0, %v4134
        %v4136 = vpop.f32.mrf.mxu0
        %4137 = vmatprep.mubr.f32.mxu0 0.0
        %4138 = vmatmul.mubr.f32.gmra.mxu0 %v3450
        %v4139 = vpop.f32.mrf.mxu0
        %v4140 = vadd.f32 0.0, %v4139
        %v4141 = vpop.f32.mrf.mxu0
        %4142 = vmatprep.mubr.f32.mxu0 0.0
        %4143 = vmatmul.mubr.f32.gmra.mxu0 %v3452
        %v4144 = vpop.f32.mrf.mxu0
        %v4145 = vadd.f32 0.0, %v4144
        %v4146 = vpop.f32.mrf.mxu0
        %4147 = vmatprep.mubr.f32.mxu0 0.0
        %4148 = vmatmul.mubr.f32.gmra.mxu0 %v3454
        %v4149 = vpop.f32.mrf.mxu0
        %v4150 = vadd.f32 0.0, %v4149
        %v4151 = vpop.f32.mrf.mxu0
        %4152 = vmatprep.mubr.f32.mxu0 0.0
        %4153 = vmatmul.mubr.f32.gmra.mxu0 %v3456
        %v4154 = vpop.f32.mrf.mxu0
        %v4155 = vadd.f32 0.0, %v4154
        %v4156 = vpop.f32.mrf.mxu0
        %4157 = vmatprep.mubr.f32.mxu0 0.0
        %4158 = vmatmul.mubr.f32.gmra.mxu0 %v3458
        %v4159 = vpop.f32.mrf.mxu0
        %v4160 = vadd.f32 0.0, %v4159
        %v4161 = vpop.f32.mrf.mxu0
        %4162 = vmatprep.mubr.f32.mxu0 0.0
        %4163 = vmatmul.mubr.f32.gmra.mxu0 %v3460
        %v4164 = vpop.f32.mrf.mxu0
        %v4165 = vadd.f32 0.0, %v4164
        %v4166 = vpop.f32.mrf.mxu0
        %4167 = vmatprep.mubr.f32.mxu0 0.0
        %4168 = vmatmul.mubr.f32.gmra.mxu0 %v3462
        %v4169 = vpop.f32.mrf.mxu0
        %v4170 = vadd.f32 0.0, %v4169
        %v4171 = vpop.f32.mrf.mxu0
        %4172 = vdwg.mxu0
        %v4174 = vsel %vm3207, %v2302, 0
        %4176 = vmatprep.subr.mxu0 0.0
        %4177 = vmatpush1.msra.mxu0 0.0
        %4178 = vmatprep.subr.mxu0 0.0
        %4179 = vmatpush1.msra.mxu0 0.0
        %4180 = vmatprep.subr.mxu0 0.0
        %4181 = vmatpush1.msra.mxu0 0.0
        %4182 = vmatprep.subr.mxu0 0.0
        %4183 = vmatpush1.msra.mxu0 0.0
        %4184 = vmatprep.subr.mxu0 0.0
        %4185 = vmatpush1.msra.mxu0 0.0
        %4186 = vmatprep.subr.mxu0 0.0
        %4187 = vmatpush1.msra.mxu0 0.0
        %4188 = vmatprep.subr.mxu0 0.0
        %4189 = vmatpush1.msra.mxu0 0.0
        %4190 = vmatprep.subr.mxu0 0.0
        %4191 = vmatpush1.msra.mxu0 0.0
        %4192 = vmatprep.subr.mxu0 0.0
        %4193 = vmatpush1.msra.mxu0 0.0
        %4194 = vmatprep.subr.mxu0 0.0
        %4195 = vmatpush1.msra.mxu0 0.0
        %4196 = vmatprep.subr.mxu0 0.0
        %4197 = vmatpush1.msra.mxu0 0.0
        %4198 = vmatprep.subr.mxu0 0.0
        %4199 = vmatpush1.msra.mxu0 0.0
        %4200 = vmatprep.subr.mxu0 0.0
        %4201 = vmatpush1.msra.mxu0 0.0
        %4202 = vmatprep.subr.mxu0 0.0
        %4203 = vmatpush1.msra.mxu0 0.0
        %4204 = vmatprep.subr.mxu0 0.0
        %4205 = vmatpush1.msra.mxu0 0.0
        %4206 = vmatprep.subr.mxu0 0.0
        %4207 = vmatpush1.msra.mxu0 %v3466
        %4208 = vmatprep.subr.mxu0 0.0
        %4209 = vmatpush2.msra.mxu0 0.0
        %4210 = vmatprep.subr.mxu0 0.0
        %4211 = vmatpush2.msra.mxu0 0.0
        %4212 = vmatprep.subr.mxu0 0.0
        %4213 = vmatpush2.msra.mxu0 0.0
        %4214 = vmatprep.subr.mxu0 0.0
        %4215 = vmatpush2.msra.mxu0 0.0
        %4216 = vmatprep.subr.mxu0 0.0
        %4217 = vmatpush2.msra.mxu0 0.0
        %4218 = vmatprep.subr.mxu0 0.0
        %4219 = vmatpush2.msra.mxu0 0.0
        %4220 = vmatprep.subr.mxu0 0.0
        %4221 = vmatpush2.msra.mxu0 0.0
        %4222 = vmatprep.subr.mxu0 0.0
        %4223 = vmatpush2.msra.mxu0 0.0
        %4224 = vmatprep.subr.mxu0 0.0
        %4225 = vmatpush2.msra.mxu0 0.0
        %4226 = vmatprep.subr.mxu0 0.0
        %4227 = vmatpush2.msra.mxu0 0.0
        %4228 = vmatprep.subr.mxu0 0.0
        %4229 = vmatpush2.msra.mxu0 0.0
        %4230 = vmatprep.subr.mxu0 0.0
        %4231 = vmatpush2.msra.mxu0 0.0
        %4232 = vmatprep.subr.mxu0 0.0
        %4233 = vmatpush2.msra.mxu0 0.0
        %4234 = vmatprep.subr.mxu0 0.0
        %4235 = vmatpush2.msra.mxu0 0.0
        %4236 = vmatprep.subr.mxu0 0.0
        %4237 = vmatpush2.msra.mxu0 0.0
        %4238 = vmatprep.subr.mxu0 0.0
        %4239 = vmatpush2.msra.mxu0 0.0
        %4240 = vmatprep.mubr.f32.mxu0 0.0
        %4241 = vmatmul.mubr.f32.gmra.mxu0 %v4174
        %v4242 = vpop.f32.mrf.mxu0
        %v4243 = vadd.f32 0.0, %v4242
        %v4244 = vpop.f32.mrf.mxu0
        %4245 = vdwg.mxu0
        %v4246 = vlaneseq
        %v4247 = vand.u32 %v4246, 127
        %vm4248 = vcmp.ge.s32.totalorder %v4247, 16
        %vm4249 = vcmp.lt.s32.totalorder %v4247, 17
        %vm4250 = vmand %vm4248, %vm4249
        %v4251 = vsel %vm4250, 1, 0
        %v4252 = vcvt.s32.f32 %v4251
        %vm4253 = vcmp.lt.s32.totalorder %v4247, 16
        %v4254 = vsel %vm4253, 1, 0
        %vm4255 = vcmp.eq.s32.totalorder %v4254, 1
        %v4256 = vsel %vm4255, %v996, %v4252
        %v4257 = vsel %vm4255, %v1001, %v4252
        %v4258 = vsel %vm4255, %v1006, %v4252
        %v4259 = vsel %vm4255, %v1011, %v4252
        %v4260 = vsel %vm4255, %v1016, %v4252
        %v4261 = vsel %vm4255, %v1021, %v4252
        %v4262 = vsel %vm4255, %v1026, %v4252
        %v4263 = vsel %vm4255, %v1031, %v4252
        %v4264 = vsel %vm4255, %v1036, %v4252
        %v4265 = vsel %vm4255, %v1041, %v4252
        %v4266 = vsel %vm4255, %v1046, %v4252
        %v4267 = vsel %vm4255, %v1051, %v4252
        %v4268 = vsel %vm4255, %v1056, %v4252
        %v4269 = vsel %vm4255, %v1061, %v4252
        %v4270 = vsel %vm4255, %v1066, %v4252
        %v4271 = vsel %vm4255, %v1071, %v4252
        %v4272 = vsel %vm4255, %v1076, %v4252
        %v4273 = vsel %vm4255, %v1081, %v4252
        %v4274 = vsel %vm4255, %v1086, %v4252
        %v4275 = vsel %vm4255, %v1091, %v4252
        %v4276 = vsel %vm4255, %v1096, %v4252
        %v4277 = vsel %vm4255, %v1101, %v4252
        %v4278 = vsel %vm4255, %v1106, %v4252
        %v4279 = vsel %vm4255, %v1111, %v4252
        %v4280 = vsel %vm4255, %v1116, %v4252
        %v4281 = vsel %vm4255, %v1121, %v4252
        %v4282 = vsel %vm4255, %v1126, %v4252
        %v4283 = vsel %vm4255, %v1131, %v4252
        %v4284 = vsel %vm4255, %v1136, %v4252
        %v4285 = vsel %vm4255, %v1141, %v4252
        %v4286 = vsel %vm4255, %v1146, %v4252
        %v4287 = vsel %vm4255, %v1151, %v4252
        %v4288 = vsel %vm4255, %v1156, %v4252
        %v4289 = vsel %vm4255, %v1161, %v4252
        %v4290 = vsel %vm4255, %v1166, %v4252
        %v4291 = vsel %vm4255, %v1171, %v4252
        %v4292 = vsel %vm4255, %v1176, %v4252
        %v4293 = vsel %vm4255, %v1181, %v4252
        %v4294 = vsel %vm4255, %v1186, %v4252
        %v4295 = vsel %vm4255, %v1191, %v4252
        %v4296 = vsel %vm4255, %v1196, %v4252
        %v4297 = vsel %vm4255, %v1201, %v4252
        %v4298 = vsel %vm4255, %v1206, %v4252
        %v4299 = vsel %vm4255, %v1211, %v4252
        %v4300 = vsel %vm4255, %v1216, %v4252
        %v4301 = vsel %vm4255, %v1221, %v4252
        %v4302 = vsel %vm4255, %v1226, %v4252
        %v4303 = vsel %vm4255, %v1231, %v4252
        %v4304 = vsel %vm4255, %v1236, %v4252
        %v4305 = vsel %vm4255, %v1241, %v4252
        %v4306 = vsel %vm4255, %v1246, %v4252
        %v4307 = vsel %vm4255, %v1251, %v4252
        %v4308 = vsel %vm4255, %v1256, %v4252
        %v4309 = vsel %vm4255, %v1261, %v4252
        %v4310 = vsel %vm4255, %v1266, %v4252
        %v4311 = vsel %vm4255, %v1271, %v4252
        %v4312 = vsel %vm4255, %v1276, %v4252
        %v4313 = vsel %vm4255, %v1281, %v4252
        %v4314 = vsel %vm4255, %v1286, %v4252
        %v4315 = vsel %vm4255, %v1291, %v4252
        %v4316 = vsel %vm4255, %v1296, %v4252
        %v4317 = vsel %vm4255, %v1301, %v4252
        %v4318 = vsel %vm4255, %v1306, %v4252
        %v4319 = vsel %vm4255, %v1311, %v4252
        %v4320 = vsel %vm4255, %v1316, %v4252
        %v4321 = vsel %vm4255, %v1321, %v4252
        %v4322 = vsel %vm4255, %v1326, %v4252
        %v4323 = vsel %vm4255, %v1331, %v4252
        %v4324 = vsel %vm4255, %v1336, %v4252
        %v4325 = vsel %vm4255, %v1341, %v4252
        %v4326 = vsel %vm4255, %v1346, %v4252
        %v4327 = vsel %vm4255, %v1351, %v4252
        %v4328 = vsel %vm4255, %v1356, %v4252
        %v4329 = vsel %vm4255, %v1361, %v4252
        %v4330 = vsel %vm4255, %v1366, %v4252
        %v4331 = vsel %vm4255, %v1371, %v4252
        %v4332 = vsel %vm4255, %v1376, %v4252
        %v4333 = vsel %vm4255, %v1381, %v4252
        %v4334 = vsel %vm4255, %v1386, %v4252
        %v4335 = vsel %vm4255, %v1391, %v4252
        %v4336 = vsel %vm4255, %v1396, %v4252
        %v4337 = vsel %vm4255, %v1401, %v4252
        %v4338 = vsel %vm4255, %v1406, %v4252
        %v4339 = vsel %vm4255, %v1411, %v4252
        %v4340 = vsel %vm4255, %v1416, %v4252
        %v4341 = vsel %vm4255, %v1421, %v4252
        %v4342 = vsel %vm4255, %v1426, %v4252
        %v4343 = vsel %vm4255, %v1431, %v4252
        %v4344 = vsel %vm4255, %v1436, %v4252
        %v4345 = vsel %vm4255, %v1441, %v4252
        %v4346 = vsel %vm4255, %v1446, %v4252
        %v4347 = vsel %vm4255, %v1451, %v4252
        %v4348 = vsel %vm4255, %v1456, %v4252
        %v4349 = vsel %vm4255, %v1461, %v4252
        %v4350 = vsel %vm4255, %v1466, %v4252
        %v4351 = vsel %vm4255, %v1471, %v4252
        %v4352 = vsel %vm4255, %v1476, %v4252
        %v4353 = vsel %vm4255, %v1481, %v4252
        %v4354 = vsel %vm4255, %v1486, %v4252
        %v4355 = vsel %vm4255, %v1491, %v4252
        %v4356 = vsel %vm4255, %v1496, %v4252
        %v4357 = vsel %vm4255, %v1501, %v4252
        %v4358 = vsel %vm4255, %v1506, %v4252
        %v4359 = vsel %vm4255, %v1511, %v4252
        %v4360 = vsel %vm4255, %v1516, %v4252
        %v4361 = vsel %vm4255, %v1521, %v4252
        %v4362 = vsel %vm4255, %v1526, %v4252
        %v4363 = vsel %vm4255, %v1531, %v4252
        %v4364 = vsel %vm4255, %v1536, %v4252
        %v4365 = vsel %vm4255, %v1541, %v4252
        %v4366 = vsel %vm4255, %v1546, %v4252
        %v4367 = vsel %vm4255, %v1551, %v4252
        %v4368 = vsel %vm4255, %v1556, %v4252
        %v4369 = vsel %vm4255, %v1561, %v4252
        %v4370 = vsel %vm4255, %v1566, %v4252
        %v4371 = vsel %vm4255, %v1571, %v4252
        %v4372 = vsel %vm4255, %v1576, %v4252
        %v4373 = vsel %vm4255, %v1581, %v4252
        %v4374 = vsel %vm4255, %v1586, %v4252
        %v4375 = vsel %vm4255, %v1591, %v4252
        %v4376 = vsel %vm4255, %v1596, %v4252
        %v4377 = vsel %vm4255, %v1601, %v4252
        %v4378 = vsel %vm4255, %v1606, %v4252
        %v4379 = vsel %vm4255, %v1611, %v4252
        %v4380 = vsel %vm4255, %v1616, %v4252
        %v4381 = vsel %vm4255, %v1621, %v4252
        %v4382 = vsel %vm4255, %v1626, %v4252
        %v4383 = vsel %vm4255, %v1631, %v4252
        %v4384 = vmul.f32 %v3535, %v4256
        %v4385 = vmul.f32 %v3540, %v4257
        %v4386 = vmul.f32 %v3545, %v4258
        %v4387 = vmul.f32 %v3550, %v4259
        %v4388 = vmul.f32 %v3555, %v4260
        %v4389 = vmul.f32 %v3560, %v4261
        %v4390 = vmul.f32 %v3565, %v4262
        %v4391 = vmul.f32 %v3570, %v4263
        %v4392 = vmul.f32 %v3575, %v4264
        %v4393 = vmul.f32 %v3580, %v4265
        %v4394 = vmul.f32 %v3585, %v4266
        %v4395 = vmul.f32 %v3590, %v4267
        %v4396 = vmul.f32 %v3595, %v4268
        %v4397 = vmul.f32 %v3600, %v4269
        %v4398 = vmul.f32 %v3605, %v4270
        %v4399 = vmul.f32 %v3610, %v4271
        %v4400 = vmul.f32 %v3615, %v4272
        %v4401 = vmul.f32 %v3620, %v4273
        %v4402 = vmul.f32 %v3625, %v4274
        %v4403 = vmul.f32 %v3630, %v4275
        %v4404 = vmul.f32 %v3635, %v4276
        %v4405 = vmul.f32 %v3640, %v4277
        %v4406 = vmul.f32 %v3645, %v4278
        %v4407 = vmul.f32 %v3650, %v4279
        %v4408 = vmul.f32 %v3655, %v4280
        %v4409 = vmul.f32 %v3660, %v4281
        %v4410 = vmul.f32 %v3665, %v4282
        %v4411 = vmul.f32 %v3670, %v4283
        %v4412 = vmul.f32 %v3675, %v4284
        %v4413 = vmul.f32 %v3680, %v4285
        %v4414 = vmul.f32 %v3685, %v4286
        %v4415 = vmul.f32 %v3690, %v4287
        %v4416 = vmul.f32 %v3695, %v4288
        %v4417 = vmul.f32 %v3700, %v4289
        %v4418 = vmul.f32 %v3705, %v4290
        %v4419 = vmul.f32 %v3710, %v4291
        %v4420 = vmul.f32 %v3715, %v4292
        %v4421 = vmul.f32 %v3720, %v4293
        %v4422 = vmul.f32 %v3725, %v4294
        %v4423 = vmul.f32 %v3730, %v4295
        %v4424 = vmul.f32 %v3735, %v4296
        %v4425 = vmul.f32 %v3740, %v4297
        %v4426 = vmul.f32 %v3745, %v4298
        %v4427 = vmul.f32 %v3750, %v4299
        %v4428 = vmul.f32 %v3755, %v4300
        %v4429 = vmul.f32 %v3760, %v4301
        %v4430 = vmul.f32 %v3765, %v4302
        %v4431 = vmul.f32 %v3770, %v4303
        %v4432 = vmul.f32 %v3775, %v4304
        %v4433 = vmul.f32 %v3780, %v4305
        %v4434 = vmul.f32 %v3785, %v4306
        %v4435 = vmul.f32 %v3790, %v4307
        %v4436 = vmul.f32 %v3795, %v4308
        %v4437 = vmul.f32 %v3800, %v4309
        %v4438 = vmul.f32 %v3805, %v4310
        %v4439 = vmul.f32 %v3810, %v4311
        %v4440 = vmul.f32 %v3815, %v4312
        %v4441 = vmul.f32 %v3820, %v4313
        %v4442 = vmul.f32 %v3825, %v4314
        %v4443 = vmul.f32 %v3830, %v4315
        %v4444 = vmul.f32 %v3835, %v4316
        %v4445 = vmul.f32 %v3840, %v4317
        %v4446 = vmul.f32 %v3845, %v4318
        %v4447 = vmul.f32 %v3850, %v4319
        %v4448 = vmul.f32 %v3855, %v4320
        %v4449 = vmul.f32 %v3860, %v4321
        %v4450 = vmul.f32 %v3865, %v4322
        %v4451 = vmul.f32 %v3870, %v4323
        %v4452 = vmul.f32 %v3875, %v4324
        %v4453 = vmul.f32 %v3880, %v4325
        %v4454 = vmul.f32 %v3885, %v4326
        %v4455 = vmul.f32 %v3890, %v4327
        %v4456 = vmul.f32 %v3895, %v4328
        %v4457 = vmul.f32 %v3900, %v4329
        %v4458 = vmul.f32 %v3905, %v4330
        %v4459 = vmul.f32 %v3910, %v4331
        %v4460 = vmul.f32 %v3915, %v4332
        %v4461 = vmul.f32 %v3920, %v4333
        %v4462 = vmul.f32 %v3925, %v4334
        %v4463 = vmul.f32 %v3930, %v4335
        %v4464 = vmul.f32 %v3935, %v4336
        %v4465 = vmul.f32 %v3940, %v4337
        %v4466 = vmul.f32 %v3945, %v4338
        %v4467 = vmul.f32 %v3950, %v4339
        %v4468 = vmul.f32 %v3955, %v4340
        %v4469 = vmul.f32 %v3960, %v4341
        %v4470 = vmul.f32 %v3965, %v4342
        %v4471 = vmul.f32 %v3970, %v4343
        %v4472 = vmul.f32 %v3975, %v4344
        %v4473 = vmul.f32 %v3980, %v4345
        %v4474 = vmul.f32 %v3985, %v4346
        %v4475 = vmul.f32 %v3990, %v4347
        %v4476 = vmul.f32 %v3995, %v4348
        %v4477 = vmul.f32 %v4000, %v4349
        %v4478 = vmul.f32 %v4005, %v4350
        %v4479 = vmul.f32 %v4010, %v4351
        %v4480 = vmul.f32 %v4015, %v4352
        %v4481 = vmul.f32 %v4020, %v4353
        %v4482 = vmul.f32 %v4025, %v4354
        %v4483 = vmul.f32 %v4030, %v4355
        %v4484 = vmul.f32 %v4035, %v4356
        %v4485 = vmul.f32 %v4040, %v4357
        %v4486 = vmul.f32 %v4045, %v4358
        %v4487 = vmul.f32 %v4050, %v4359
        %v4488 = vmul.f32 %v4055, %v4360
        %v4489 = vmul.f32 %v4060, %v4361
        %v4490 = vmul.f32 %v4065, %v4362
        %v4491 = vmul.f32 %v4070, %v4363
        %v4492 = vmul.f32 %v4075, %v4364
        %v4493 = vmul.f32 %v4080, %v4365
        %v4494 = vmul.f32 %v4085, %v4366
        %v4495 = vmul.f32 %v4090, %v4367
        %v4496 = vmul.f32 %v4095, %v4368
        %v4497 = vmul.f32 %v4100, %v4369
        %v4498 = vmul.f32 %v4105, %v4370
        %v4499 = vmul.f32 %v4110, %v4371
        %v4500 = vmul.f32 %v4115, %v4372
        %v4501 = vmul.f32 %v4120, %v4373
        %v4502 = vmul.f32 %v4125, %v4374
        %v4503 = vmul.f32 %v4130, %v4375
        %v4504 = vmul.f32 %v4135, %v4376
        %v4505 = vmul.f32 %v4140, %v4377
        %v4506 = vmul.f32 %v4145, %v4378
        %v4507 = vmul.f32 %v4150, %v4379
        %v4508 = vmul.f32 %v4155, %v4380
        %v4509 = vmul.f32 %v4160, %v4381
        %v4510 = vmul.f32 %v4165, %v4382
        %v4511 = vmul.f32 %v4170, %v4383
        %v4512 = vpack.c.bf16 %v4385, %v4384
        %v4513 = vpack.c.bf16 %v4387, %v4386
        %v4514 = vpack.c.bf16 %v4389, %v4388
        %v4515 = vpack.c.bf16 %v4391, %v4390
        %v4516 = vpack.c.bf16 %v4393, %v4392
        %v4517 = vpack.c.bf16 %v4395, %v4394
        %v4518 = vpack.c.bf16 %v4397, %v4396
        %v4519 = vpack.c.bf16 %v4399, %v4398
        %v4520 = vpack.c.bf16 %v4401, %v4400
        %v4521 = vpack.c.bf16 %v4403, %v4402
        %v4522 = vpack.c.bf16 %v4405, %v4404
        %v4523 = vpack.c.bf16 %v4407, %v4406
        %v4524 = vpack.c.bf16 %v4409, %v4408
        %v4525 = vpack.c.bf16 %v4411, %v4410
        %v4526 = vpack.c.bf16 %v4413, %v4412
        %v4527 = vpack.c.bf16 %v4415, %v4414
        %v4528 = vpack.c.bf16 %v4417, %v4416
        %v4529 = vpack.c.bf16 %v4419, %v4418
        %v4530 = vpack.c.bf16 %v4421, %v4420
        %v4531 = vpack.c.bf16 %v4423, %v4422
        %v4532 = vpack.c.bf16 %v4425, %v4424
        %v4533 = vpack.c.bf16 %v4427, %v4426
        %v4534 = vpack.c.bf16 %v4429, %v4428
        %v4535 = vpack.c.bf16 %v4431, %v4430
        %v4536 = vpack.c.bf16 %v4433, %v4432
        %v4537 = vpack.c.bf16 %v4435, %v4434
        %v4538 = vpack.c.bf16 %v4437, %v4436
        %v4539 = vpack.c.bf16 %v4439, %v4438
        %v4540 = vpack.c.bf16 %v4441, %v4440
        %v4541 = vpack.c.bf16 %v4443, %v4442
        %v4542 = vpack.c.bf16 %v4445, %v4444
        %v4543 = vpack.c.bf16 %v4447, %v4446
        %v4544 = vpack.c.bf16 %v4449, %v4448
        %v4545 = vpack.c.bf16 %v4451, %v4450
        %v4546 = vpack.c.bf16 %v4453, %v4452
        %v4547 = vpack.c.bf16 %v4455, %v4454
        %v4548 = vpack.c.bf16 %v4457, %v4456
        %v4549 = vpack.c.bf16 %v4459, %v4458
        %v4550 = vpack.c.bf16 %v4461, %v4460
        %v4551 = vpack.c.bf16 %v4463, %v4462
        %v4552 = vpack.c.bf16 %v4465, %v4464
        %v4553 = vpack.c.bf16 %v4467, %v4466
        %v4554 = vpack.c.bf16 %v4469, %v4468
        %v4555 = vpack.c.bf16 %v4471, %v4470
        %v4556 = vpack.c.bf16 %v4473, %v4472
        %v4557 = vpack.c.bf16 %v4475, %v4474
        %v4558 = vpack.c.bf16 %v4477, %v4476
        %v4559 = vpack.c.bf16 %v4479, %v4478
        %v4560 = vpack.c.bf16 %v4481, %v4480
        %v4561 = vpack.c.bf16 %v4483, %v4482
        %v4562 = vpack.c.bf16 %v4485, %v4484
        %v4563 = vpack.c.bf16 %v4487, %v4486
        %v4564 = vpack.c.bf16 %v4489, %v4488
        %v4565 = vpack.c.bf16 %v4491, %v4490
        %v4566 = vpack.c.bf16 %v4493, %v4492
        %v4567 = vpack.c.bf16 %v4495, %v4494
        %v4568 = vpack.c.bf16 %v4497, %v4496
        %v4569 = vpack.c.bf16 %v4499, %v4498
        %v4570 = vpack.c.bf16 %v4501, %v4500
        %v4571 = vpack.c.bf16 %v4503, %v4502
        %v4572 = vpack.c.bf16 %v4505, %v4504
        %v4573 = vpack.c.bf16 %v4507, %v4506
        %v4574 = vpack.c.bf16 %v4509, %v4508
        %v4575 = vpack.c.bf16 %v4511, %v4510
        %v4576 = vld [vmem:[%s344] sm:$0xff]
        %v4577 = vld [vmem:[%s344 + $0x8] sm:$0xff]
        %v4578 = vld [vmem:[%s344 + $0x10] sm:$0xff]
        %v4579 = vld [vmem:[%s344 + $0x18] sm:$0xff]
        %v4580 = vld [vmem:[%s344 + $0x20] sm:$0xff]
        %v4581 = vld [vmem:[%s344 + $0x28] sm:$0xff]
        %v4582 = vld [vmem:[%s344 + $0x30] sm:$0xff]
        %v4583 = vld [vmem:[%s344 + $0x38] sm:$0xff]
        %v4584 = vld [vmem:[%s344 + $0x40] sm:$0xff]
        %v4585 = vld [vmem:[%s344 + $0x48] sm:$0xff]
        %v4586 = vld [vmem:[%s344 + $0x50] sm:$0xff]
        %v4587 = vld [vmem:[%s344 + $0x58] sm:$0xff]
        %v4588 = vld [vmem:[%s344 + $0x60] sm:$0xff]
        %v4589 = vld [vmem:[%s344 + $0x68] sm:$0xff]
        %v4590 = vld [vmem:[%s344 + $0x70] sm:$0xff]
        %v4591 = vld [vmem:[%s344 + $0x78] sm:$0xff]
        %v4592 = vld [vmem:[%s344 + $0x80] sm:$0xff]
        %v4593 = vld [vmem:[%s344 + $0x88] sm:$0xff]
        %v4594 = vld [vmem:[%s344 + $0x90] sm:$0xff]
        %v4595 = vld [vmem:[%s344 + $0x98] sm:$0xff]
        %v4596 = vld [vmem:[%s344 + $0xa0] sm:$0xff]
        %v4597 = vld [vmem:[%s344 + $0xa8] sm:$0xff]
        %v4598 = vld [vmem:[%s344 + $0xb0] sm:$0xff]
        %v4599 = vld [vmem:[%s344 + $0xb8] sm:$0xff]
        %v4600 = vld [vmem:[%s344 + $0xc0] sm:$0xff]
        %v4601 = vld [vmem:[%s344 + $0xc8] sm:$0xff]
        %v4602 = vld [vmem:[%s344 + $0xd0] sm:$0xff]
        %v4603 = vld [vmem:[%s344 + $0xd8] sm:$0xff]
        %v4604 = vld [vmem:[%s344 + $0xe0] sm:$0xff]
        %v4605 = vld [vmem:[%s344 + $0xe8] sm:$0xff]
        %v4606 = vld [vmem:[%s344 + $0xf0] sm:$0xff]
        %v4607 = vld [vmem:[%s344 + $0xf8] sm:$0xff]
        %v4608 = vld [vmem:[%s344 + $0x100] sm:$0xff]
        %v4609 = vld [vmem:[%s344 + $0x108] sm:$0xff]
        %v4610 = vld [vmem:[%s344 + $0x110] sm:$0xff]
        %v4611 = vld [vmem:[%s344 + $0x118] sm:$0xff]
        %v4612 = vld [vmem:[%s344 + $0x120] sm:$0xff]
        %v4613 = vld [vmem:[%s344 + $0x128] sm:$0xff]
        %v4614 = vld [vmem:[%s344 + $0x130] sm:$0xff]
        %v4615 = vld [vmem:[%s344 + $0x138] sm:$0xff]
        %v4616 = vld [vmem:[%s344 + $0x140] sm:$0xff]
        %v4617 = vld [vmem:[%s344 + $0x148] sm:$0xff]
        %v4618 = vld [vmem:[%s344 + $0x150] sm:$0xff]
        %v4619 = vld [vmem:[%s344 + $0x158] sm:$0xff]
        %v4620 = vld [vmem:[%s344 + $0x160] sm:$0xff]
        %v4621 = vld [vmem:[%s344 + $0x168] sm:$0xff]
        %v4622 = vld [vmem:[%s344 + $0x170] sm:$0xff]
        %v4623 = vld [vmem:[%s344 + $0x178] sm:$0xff]
        %v4624 = vld [vmem:[%s344 + $0x180] sm:$0xff]
        %v4625 = vld [vmem:[%s344 + $0x188] sm:$0xff]
        %v4626 = vld [vmem:[%s344 + $0x190] sm:$0xff]
        %v4627 = vld [vmem:[%s344 + $0x198] sm:$0xff]
        %v4628 = vld [vmem:[%s344 + $0x1a0] sm:$0xff]
        %v4629 = vld [vmem:[%s344 + $0x1a8] sm:$0xff]
        %v4630 = vld [vmem:[%s344 + $0x1b0] sm:$0xff]
        %v4631 = vld [vmem:[%s344 + $0x1b8] sm:$0xff]
        %v4632 = vld [vmem:[%s344 + $0x1c0] sm:$0xff]
        %v4633 = vld [vmem:[%s344 + $0x1c8] sm:$0xff]
        %v4634 = vld [vmem:[%s344 + $0x1d0] sm:$0xff]
        %v4635 = vld [vmem:[%s344 + $0x1d8] sm:$0xff]
        %v4636 = vld [vmem:[%s344 + $0x1e0] sm:$0xff]
        %v4637 = vld [vmem:[%s344 + $0x1e8] sm:$0xff]
        %v4638 = vld [vmem:[%s344 + $0x1f0] sm:$0xff]
        %v4639 = vld [vmem:[%s344 + $0x1f8] sm:$0xff]
        %v4704 = vunpack.c.l.b16 %v4576
        %v4705 = vunpack.c.h.b16 %v4576
        %v4706 = vunpack.c.l.b16 %v4577
        %v4707 = vunpack.c.h.b16 %v4577
        %v4708 = vunpack.c.l.b16 %v4578
        %v4709 = vunpack.c.h.b16 %v4578
        %v4710 = vunpack.c.l.b16 %v4579
        %v4711 = vunpack.c.h.b16 %v4579
        %v4712 = vunpack.c.l.b16 %v4580
        %v4713 = vunpack.c.h.b16 %v4580
        %v4714 = vunpack.c.l.b16 %v4581
        %v4715 = vunpack.c.h.b16 %v4581
        %v4716 = vunpack.c.l.b16 %v4582
        %v4717 = vunpack.c.h.b16 %v4582
        %v4718 = vunpack.c.l.b16 %v4583
        %v4719 = vunpack.c.h.b16 %v4583
        %v4720 = vunpack.c.l.b16 %v4584
        %v4721 = vunpack.c.h.b16 %v4584
        %v4722 = vunpack.c.l.b16 %v4585
        %v4723 = vunpack.c.h.b16 %v4585
        %v4724 = vunpack.c.l.b16 %v4586
        %v4725 = vunpack.c.h.b16 %v4586
        %v4726 = vunpack.c.l.b16 %v4587
        %v4727 = vunpack.c.h.b16 %v4587
        %v4728 = vunpack.c.l.b16 %v4588
        %v4729 = vunpack.c.h.b16 %v4588
        %v4730 = vunpack.c.l.b16 %v4589
        %v4731 = vunpack.c.h.b16 %v4589
        %v4732 = vunpack.c.l.b16 %v4590
        %v4733 = vunpack.c.h.b16 %v4590
        %v4734 = vunpack.c.l.b16 %v4591
        %v4735 = vunpack.c.h.b16 %v4591
        %v4736 = vunpack.c.l.b16 %v4592
        %v4737 = vunpack.c.h.b16 %v4592
        %v4738 = vunpack.c.l.b16 %v4593
        %v4739 = vunpack.c.h.b16 %v4593
        %v4740 = vunpack.c.l.b16 %v4594
        %v4741 = vunpack.c.h.b16 %v4594
        %v4742 = vunpack.c.l.b16 %v4595
        %v4743 = vunpack.c.h.b16 %v4595
        %v4744 = vunpack.c.l.b16 %v4596
        %v4745 = vunpack.c.h.b16 %v4596
        %v4746 = vunpack.c.l.b16 %v4597
        %v4747 = vunpack.c.h.b16 %v4597
        %v4748 = vunpack.c.l.b16 %v4598
        %v4749 = vunpack.c.h.b16 %v4598
        %v4750 = vunpack.c.l.b16 %v4599
        %v4751 = vunpack.c.h.b16 %v4599
        %v4752 = vunpack.c.l.b16 %v4600
        %v4753 = vunpack.c.h.b16 %v4600
        %v4754 = vunpack.c.l.b16 %v4601
        %v4755 = vunpack.c.h.b16 %v4601
        %v4756 = vunpack.c.l.b16 %v4602
        %v4757 = vunpack.c.h.b16 %v4602
        %v4758 = vunpack.c.l.b16 %v4603
        %v4759 = vunpack.c.h.b16 %v4603
        %v4760 = vunpack.c.l.b16 %v4604
        %v4761 = vunpack.c.h.b16 %v4604
        %v4762 = vunpack.c.l.b16 %v4605
        %v4763 = vunpack.c.h.b16 %v4605
        %v4764 = vunpack.c.l.b16 %v4606
        %v4765 = vunpack.c.h.b16 %v4606
        %v4766 = vunpack.c.l.b16 %v4607
        %v4767 = vunpack.c.h.b16 %v4607
        %v4768 = vunpack.c.l.b16 %v4608
        %v4769 = vunpack.c.h.b16 %v4608
        %v4770 = vunpack.c.l.b16 %v4609
        %v4771 = vunpack.c.h.b16 %v4609
        %v4772 = vunpack.c.l.b16 %v4610
        %v4773 = vunpack.c.h.b16 %v4610
        %v4774 = vunpack.c.l.b16 %v4611
        %v4775 = vunpack.c.h.b16 %v4611
        %v4776 = vunpack.c.l.b16 %v4612
        %v4777 = vunpack.c.h.b16 %v4612
        %v4778 = vunpack.c.l.b16 %v4613
        %v4779 = vunpack.c.h.b16 %v4613
        %v4780 = vunpack.c.l.b16 %v4614
        %v4781 = vunpack.c.h.b16 %v4614
        %v4782 = vunpack.c.l.b16 %v4615
        %v4783 = vunpack.c.h.b16 %v4615
        %v4784 = vunpack.c.l.b16 %v4616
        %v4785 = vunpack.c.h.b16 %v4616
        %v4786 = vunpack.c.l.b16 %v4617
        %v4787 = vunpack.c.h.b16 %v4617
        %v4788 = vunpack.c.l.b16 %v4618
        %v4789 = vunpack.c.h.b16 %v4618
        %v4790 = vunpack.c.l.b16 %v4619
        %v4791 = vunpack.c.h.b16 %v4619
        %v4792 = vunpack.c.l.b16 %v4620
        %v4793 = vunpack.c.h.b16 %v4620
        %v4794 = vunpack.c.l.b16 %v4621
        %v4795 = vunpack.c.h.b16 %v4621
        %v4796 = vunpack.c.l.b16 %v4622
        %v4797 = vunpack.c.h.b16 %v4622
        %v4798 = vunpack.c.l.b16 %v4623
        %v4799 = vunpack.c.h.b16 %v4623
        %v4800 = vunpack.c.l.b16 %v4624
        %v4801 = vunpack.c.h.b16 %v4624
        %v4802 = vunpack.c.l.b16 %v4625
        %v4803 = vunpack.c.h.b16 %v4625
        %v4804 = vunpack.c.l.b16 %v4626
        %v4805 = vunpack.c.h.b16 %v4626
        %v4806 = vunpack.c.l.b16 %v4627
        %v4807 = vunpack.c.h.b16 %v4627
        %v4808 = vunpack.c.l.b16 %v4628
        %v4809 = vunpack.c.h.b16 %v4628
        %v4810 = vunpack.c.l.b16 %v4629
        %v4811 = vunpack.c.h.b16 %v4629
        %v4812 = vunpack.c.l.b16 %v4630
        %v4813 = vunpack.c.h.b16 %v4630
        %v4814 = vunpack.c.l.b16 %v4631
        %v4815 = vunpack.c.h.b16 %v4631
        %v4816 = vunpack.c.l.b16 %v4632
        %v4817 = vunpack.c.h.b16 %v4632
        %v4818 = vunpack.c.l.b16 %v4633
        %v4819 = vunpack.c.h.b16 %v4633
        %v4820 = vunpack.c.l.b16 %v4634
        %v4821 = vunpack.c.h.b16 %v4634
        %v4822 = vunpack.c.l.b16 %v4635
        %v4823 = vunpack.c.h.b16 %v4635
        %v4824 = vunpack.c.l.b16 %v4636
        %v4825 = vunpack.c.h.b16 %v4636
        %v4826 = vunpack.c.l.b16 %v4637
        %v4827 = vunpack.c.h.b16 %v4637
        %v4828 = vunpack.c.l.b16 %v4638
        %v4829 = vunpack.c.h.b16 %v4638
        %v4830 = vunpack.c.l.b16 %v4639
        %v4831 = vunpack.c.h.b16 %v4639
        %v4832 = vpack.c.b16 %v4712, %v4704
        %v4833 = vpack.c.b16 %v4713, %v4705
        %v4834 = vpack.c.b16 %v4714, %v4706
        %v4835 = vpack.c.b16 %v4715, %v4707
        %v4836 = vpack.c.b16 %v4716, %v4708
        %v4837 = vpack.c.b16 %v4717, %v4709
        %v4838 = vpack.c.b16 %v4718, %v4710
        %v4839 = vpack.c.b16 %v4719, %v4711
        %v4840 = vpack.c.b16 %v4728, %v4720
        %v4841 = vpack.c.b16 %v4729, %v4721
        %v4842 = vpack.c.b16 %v4730, %v4722
        %v4843 = vpack.c.b16 %v4731, %v4723
        %v4844 = vpack.c.b16 %v4732, %v4724
        %v4845 = vpack.c.b16 %v4733, %v4725
        %v4846 = vpack.c.b16 %v4734, %v4726
        %v4847 = vpack.c.b16 %v4735, %v4727
        %v4848 = vpack.c.b16 %v4744, %v4736
        %v4849 = vpack.c.b16 %v4745, %v4737
        %v4850 = vpack.c.b16 %v4746, %v4738
        %v4851 = vpack.c.b16 %v4747, %v4739
        %v4852 = vpack.c.b16 %v4748, %v4740
        %v4853 = vpack.c.b16 %v4749, %v4741
        %v4854 = vpack.c.b16 %v4750, %v4742
        %v4855 = vpack.c.b16 %v4751, %v4743
        %v4856 = vpack.c.b16 %v4760, %v4752
        %v4857 = vpack.c.b16 %v4761, %v4753
        %v4858 = vpack.c.b16 %v4762, %v4754
        %v4859 = vpack.c.b16 %v4763, %v4755
        %v4860 = vpack.c.b16 %v4764, %v4756
        %v4861 = vpack.c.b16 %v4765, %v4757
        %v4862 = vpack.c.b16 %v4766, %v4758
        %v4863 = vpack.c.b16 %v4767, %v4759
        %v4864 = vpack.c.b16 %v4776, %v4768
        %v4865 = vpack.c.b16 %v4777, %v4769
        %v4866 = vpack.c.b16 %v4778, %v4770
        %v4867 = vpack.c.b16 %v4779, %v4771
        %v4868 = vpack.c.b16 %v4780, %v4772
        %v4869 = vpack.c.b16 %v4781, %v4773
        %v4870 = vpack.c.b16 %v4782, %v4774
        %v4871 = vpack.c.b16 %v4783, %v4775
        %v4872 = vpack.c.b16 %v4792, %v4784
        %v4873 = vpack.c.b16 %v4793, %v4785
        %v4874 = vpack.c.b16 %v4794, %v4786
        %v4875 = vpack.c.b16 %v4795, %v4787
        %v4876 = vpack.c.b16 %v4796, %v4788
        %v4877 = vpack.c.b16 %v4797, %v4789
        %v4878 = vpack.c.b16 %v4798, %v4790
        %v4879 = vpack.c.b16 %v4799, %v4791
        %v4880 = vpack.c.b16 %v4808, %v4800
        %v4881 = vpack.c.b16 %v4809, %v4801
        %v4882 = vpack.c.b16 %v4810, %v4802
        %v4883 = vpack.c.b16 %v4811, %v4803
        %v4884 = vpack.c.b16 %v4812, %v4804
        %v4885 = vpack.c.b16 %v4813, %v4805
        %v4886 = vpack.c.b16 %v4814, %v4806
        %v4887 = vpack.c.b16 %v4815, %v4807
        %v4888 = vpack.c.b16 %v4824, %v4816
        %v4889 = vpack.c.b16 %v4825, %v4817
        %v4890 = vpack.c.b16 %v4826, %v4818
        %v4891 = vpack.c.b16 %v4827, %v4819
        %v4892 = vpack.c.b16 %v4828, %v4820
        %v4893 = vpack.c.b16 %v4829, %v4821
        %v4894 = vpack.c.b16 %v4830, %v4822
        %v4895 = vpack.c.b16 %v4831, %v4823
        %4960 = vmatprep.subr.bf16.mxu0 0
        %4961 = vmatpush1.bf16.msra.mxu0 %v4519
        %4962 = vmatprep.subr.bf16.mxu0 0
        %4963 = vmatpush1.bf16.msra.mxu0 %v4518
        %4964 = vmatprep.subr.bf16.mxu0 0
        %4965 = vmatpush1.bf16.msra.mxu0 %v4517
        %4966 = vmatprep.subr.bf16.mxu0 0
        %4967 = vmatpush1.bf16.msra.mxu0 %v4516
        %4968 = vmatprep.subr.bf16.mxu0 0
        %4969 = vmatpush1.bf16.msra.mxu0 %v4515
        %4970 = vmatprep.subr.bf16.mxu0 0
        %4971 = vmatpush1.bf16.msra.mxu0 %v4514
        %4972 = vmatprep.subr.bf16.mxu0 0
        %4973 = vmatpush1.bf16.msra.mxu0 %v4513
        %4974 = vmatprep.subr.bf16.mxu0 0
        %4975 = vmatpush1.bf16.msra.mxu0 %v4512
        %4976 = vmatprep.subr.bf16.mxu0 0
        %4977 = vmatpush2.bf16.msra.mxu0 %v4527
        %4978 = vmatprep.subr.bf16.mxu0 0
        %4979 = vmatpush2.bf16.msra.mxu0 %v4526
        %4980 = vmatprep.subr.bf16.mxu0 0
        %4981 = vmatpush2.bf16.msra.mxu0 %v4525
        %4982 = vmatprep.subr.bf16.mxu0 0
        %4983 = vmatpush2.bf16.msra.mxu0 %v4524
        %4984 = vmatprep.subr.bf16.mxu0 0
        %4985 = vmatpush2.bf16.msra.mxu0 %v4523
        %4986 = vmatprep.subr.bf16.mxu0 0
        %4987 = vmatpush2.bf16.msra.mxu0 %v4522
        %4988 = vmatprep.subr.bf16.mxu0 0
        %4989 = vmatpush2.bf16.msra.mxu0 %v4521
        %4990 = vmatprep.subr.bf16.mxu0 0
        %4991 = vmatpush2.bf16.msra.mxu0 %v4520
        %4992 = vmatprep.mubr.bf16.mxu0 %v4833
        %4993 = vmatmul.mubr.bf16.gmra.mxu0 %v4832
        %v4994 = vpop.f32.mrf.mxu0
        %v4995 = vadd.f32 0.0, %v4994
        %v4996 = vpop.f32.mrf.mxu0
        %v4997 = vpop.f32.mrf.mxu0
        %v4998 = vadd.f32 0.0, %v4997
        %v4999 = vpop.f32.mrf.mxu0
        %5000 = vmatprep.mubr.bf16.mxu0 %v4841
        %5001 = vmatmul.mubr.bf16.gmra.mxu0 %v4840
        %v5002 = vpop.f32.mrf.mxu0
        %v5003 = vadd.f32 0.0, %v5002
        %v5004 = vpop.f32.mrf.mxu0
        %v5005 = vpop.f32.mrf.mxu0
        %v5006 = vadd.f32 0.0, %v5005
        %v5007 = vpop.f32.mrf.mxu0
        %5008 = vmatprep.mubr.bf16.mxu0 %v4849
        %5009 = vmatmul.mubr.bf16.gmra.mxu0 %v4848
        %v5010 = vpop.f32.mrf.mxu0
        %v5011 = vadd.f32 0.0, %v5010
        %v5012 = vpop.f32.mrf.mxu0
        %v5013 = vpop.f32.mrf.mxu0
        %v5014 = vadd.f32 0.0, %v5013
        %v5015 = vpop.f32.mrf.mxu0
        %5016 = vmatprep.mubr.bf16.mxu0 %v4857
        %5017 = vmatmul.mubr.bf16.gmra.mxu0 %v4856
        %v5018 = vpop.f32.mrf.mxu0
        %v5019 = vadd.f32 0.0, %v5018
        %v5020 = vpop.f32.mrf.mxu0
        %v5021 = vpop.f32.mrf.mxu0
        %v5022 = vadd.f32 0.0, %v5021
        %v5023 = vpop.f32.mrf.mxu0
        %5024 = vmatprep.mubr.bf16.mxu0 %v4865
        %5025 = vmatmul.mubr.bf16.gmra.mxu0 %v4864
        %v5026 = vpop.f32.mrf.mxu0
        %v5027 = vadd.f32 0.0, %v5026
        %v5028 = vpop.f32.mrf.mxu0
        %v5029 = vpop.f32.mrf.mxu0
        %v5030 = vadd.f32 0.0, %v5029
        %v5031 = vpop.f32.mrf.mxu0
        %5032 = vmatprep.mubr.bf16.mxu0 %v4873
        %5033 = vmatmul.mubr.bf16.gmra.mxu0 %v4872
        %v5034 = vpop.f32.mrf.mxu0
        %v5035 = vadd.f32 0.0, %v5034
        %v5036 = vpop.f32.mrf.mxu0
        %v5037 = vpop.f32.mrf.mxu0
        %v5038 = vadd.f32 0.0, %v5037
        %v5039 = vpop.f32.mrf.mxu0
        %5040 = vmatprep.mubr.bf16.mxu0 %v4881
        %5041 = vmatmul.mubr.bf16.gmra.mxu0 %v4880
        %v5042 = vpop.f32.mrf.mxu0
        %v5043 = vadd.f32 0.0, %v5042
        %v5044 = vpop.f32.mrf.mxu0
        %v5045 = vpop.f32.mrf.mxu0
        %v5046 = vadd.f32 0.0, %v5045
        %v5047 = vpop.f32.mrf.mxu0
        %5048 = vmatprep.mubr.bf16.mxu0 %v4889
        %5049 = vmatmul.mubr.bf16.gmra.mxu0 %v4888
        %v5050 = vpop.f32.mrf.mxu0
        %v5051 = vadd.f32 0.0, %v5050
        %v5052 = vpop.f32.mrf.mxu0
        %v5053 = vpop.f32.mrf.mxu0
        %v5054 = vadd.f32 0.0, %v5053
        %v5055 = vpop.f32.mrf.mxu0
        %5056 = vdwg.mxu0
        %5057 = vmatprep.subr.bf16.mxu0 0
        %5058 = vmatpush1.bf16.msra.mxu0 %v4535
        %5059 = vmatprep.subr.bf16.mxu0 0
        %5060 = vmatpush1.bf16.msra.mxu0 %v4534
        %5061 = vmatprep.subr.bf16.mxu0 0
        %5062 = vmatpush1.bf16.msra.mxu0 %v4533
        %5063 = vmatprep.subr.bf16.mxu0 0
        %5064 = vmatpush1.bf16.msra.mxu0 %v4532
        %5065 = vmatprep.subr.bf16.mxu0 0
        %5066 = vmatpush1.bf16.msra.mxu0 %v4531
        %5067 = vmatprep.subr.bf16.mxu0 0
        %5068 = vmatpush1.bf16.msra.mxu0 %v4530
        %5069 = vmatprep.subr.bf16.mxu0 0
        %5070 = vmatpush1.bf16.msra.mxu0 %v4529
        %5071 = vmatprep.subr.bf16.mxu0 0
        %5072 = vmatpush1.bf16.msra.mxu0 %v4528
        %5073 = vmatprep.subr.bf16.mxu0 0
        %5074 = vmatpush2.bf16.msra.mxu0 %v4543
        %5075 = vmatprep.subr.bf16.mxu0 0
        %5076 = vmatpush2.bf16.msra.mxu0 %v4542
        %5077 = vmatprep.subr.bf16.mxu0 0
        %5078 = vmatpush2.bf16.msra.mxu0 %v4541
        %5079 = vmatprep.subr.bf16.mxu0 0
        %5080 = vmatpush2.bf16.msra.mxu0 %v4540
        %5081 = vmatprep.subr.bf16.mxu0 0
        %5082 = vmatpush2.bf16.msra.mxu0 %v4539
        %5083 = vmatprep.subr.bf16.mxu0 0
        %5084 = vmatpush2.bf16.msra.mxu0 %v4538
        %5085 = vmatprep.subr.bf16.mxu0 0
        %5086 = vmatpush2.bf16.msra.mxu0 %v4537
        %5087 = vmatprep.subr.bf16.mxu0 0
        %5088 = vmatpush2.bf16.msra.mxu0 %v4536
        %5089 = vmatprep.mubr.bf16.mxu0 %v4835
        %5090 = vmatmul.mubr.bf16.gmra.mxu0 %v4834
        %v5091 = vpop.f32.mrf.mxu0
        %v5092 = vadd.f32 %v4995, %v5091
        %v5093 = vpop.f32.mrf.mxu0
        %v5094 = vpop.f32.mrf.mxu0
        %v5095 = vadd.f32 %v4998, %v5094
        %v5096 = vpop.f32.mrf.mxu0
        %5097 = vmatprep.mubr.bf16.mxu0 %v4843
        %5098 = vmatmul.mubr.bf16.gmra.mxu0 %v4842
        %v5099 = vpop.f32.mrf.mxu0
        %v5100 = vadd.f32 %v5003, %v5099
        %v5101 = vpop.f32.mrf.mxu0
        %v5102 = vpop.f32.mrf.mxu0
        %v5103 = vadd.f32 %v5006, %v5102
        %v5104 = vpop.f32.mrf.mxu0
        %5105 = vmatprep.mubr.bf16.mxu0 %v4851
        %5106 = vmatmul.mubr.bf16.gmra.mxu0 %v4850
        %v5107 = vpop.f32.mrf.mxu0
        %v5108 = vadd.f32 %v5011, %v5107
        %v5109 = vpop.f32.mrf.mxu0
        %v5110 = vpop.f32.mrf.mxu0
        %v5111 = vadd.f32 %v5014, %v5110
        %v5112 = vpop.f32.mrf.mxu0
        %5113 = vmatprep.mubr.bf16.mxu0 %v4859
        %5114 = vmatmul.mubr.bf16.gmra.mxu0 %v4858
        %v5115 = vpop.f32.mrf.mxu0
        %v5116 = vadd.f32 %v5019, %v5115
        %v5117 = vpop.f32.mrf.mxu0
        %v5118 = vpop.f32.mrf.mxu0
        %v5119 = vadd.f32 %v5022, %v5118
        %v5120 = vpop.f32.mrf.mxu0
        %5121 = vmatprep.mubr.bf16.mxu0 %v4867
        %5122 = vmatmul.mubr.bf16.gmra.mxu0 %v4866
        %v5123 = vpop.f32.mrf.mxu0
        %v5124 = vadd.f32 %v5027, %v5123
        %v5125 = vpop.f32.mrf.mxu0
        %v5126 = vpop.f32.mrf.mxu0
        %v5127 = vadd.f32 %v5030, %v5126
        %v5128 = vpop.f32.mrf.mxu0
        %5129 = vmatprep.mubr.bf16.mxu0 %v4875
        %5130 = vmatmul.mubr.bf16.gmra.mxu0 %v4874
        %v5131 = vpop.f32.mrf.mxu0
        %v5132 = vadd.f32 %v5035, %v5131
        %v5133 = vpop.f32.mrf.mxu0
        %v5134 = vpop.f32.mrf.mxu0
        %v5135 = vadd.f32 %v5038, %v5134
        %v5136 = vpop.f32.mrf.mxu0
        %5137 = vmatprep.mubr.bf16.mxu0 %v4883
        %5138 = vmatmul.mubr.bf16.gmra.mxu0 %v4882
        %v5139 = vpop.f32.mrf.mxu0
        %v5140 = vadd.f32 %v5043, %v5139
        %v5141 = vpop.f32.mrf.mxu0
        %v5142 = vpop.f32.mrf.mxu0
        %v5143 = vadd.f32 %v5046, %v5142
        %v5144 = vpop.f32.mrf.mxu0
        %5145 = vmatprep.mubr.bf16.mxu0 %v4891
        %5146 = vmatmul.mubr.bf16.gmra.mxu0 %v4890
        %v5147 = vpop.f32.mrf.mxu0
        %v5148 = vadd.f32 %v5051, %v5147
        %v5149 = vpop.f32.mrf.mxu0
        %v5150 = vpop.f32.mrf.mxu0
        %v5151 = vadd.f32 %v5054, %v5150
        %v5152 = vpop.f32.mrf.mxu0
        %5153 = vdwg.mxu0
        %5154 = vmatprep.subr.bf16.mxu0 0
        %5155 = vmatpush1.bf16.msra.mxu0 %v4551
        %5156 = vmatprep.subr.bf16.mxu0 0
        %5157 = vmatpush1.bf16.msra.mxu0 %v4550
        %5158 = vmatprep.subr.bf16.mxu0 0
        %5159 = vmatpush1.bf16.msra.mxu0 %v4549
        %5160 = vmatprep.subr.bf16.mxu0 0
        %5161 = vmatpush1.bf16.msra.mxu0 %v4548
        %5162 = vmatprep.subr.bf16.mxu0 0
        %5163 = vmatpush1.bf16.msra.mxu0 %v4547
        %5164 = vmatprep.subr.bf16.mxu0 0
        %5165 = vmatpush1.bf16.msra.mxu0 %v4546
        %5166 = vmatprep.subr.bf16.mxu0 0
        %5167 = vmatpush1.bf16.msra.mxu0 %v4545
        %5168 = vmatprep.subr.bf16.mxu0 0
        %5169 = vmatpush1.bf16.msra.mxu0 %v4544
        %5170 = vmatprep.subr.bf16.mxu0 0
        %5171 = vmatpush2.bf16.msra.mxu0 %v4559
        %5172 = vmatprep.subr.bf16.mxu0 0
        %5173 = vmatpush2.bf16.msra.mxu0 %v4558
        %5174 = vmatprep.subr.bf16.mxu0 0
        %5175 = vmatpush2.bf16.msra.mxu0 %v4557
        %5176 = vmatprep.subr.bf16.mxu0 0
        %5177 = vmatpush2.bf16.msra.mxu0 %v4556
        %5178 = vmatprep.subr.bf16.mxu0 0
        %5179 = vmatpush2.bf16.msra.mxu0 %v4555
        %5180 = vmatprep.subr.bf16.mxu0 0
        %5181 = vmatpush2.bf16.msra.mxu0 %v4554
        %5182 = vmatprep.subr.bf16.mxu0 0
        %5183 = vmatpush2.bf16.msra.mxu0 %v4553
        %5184 = vmatprep.subr.bf16.mxu0 0
        %5185 = vmatpush2.bf16.msra.mxu0 %v4552
        %5186 = vmatprep.mubr.bf16.mxu0 %v4837
        %5187 = vmatmul.mubr.bf16.gmra.mxu0 %v4836
        %v5188 = vpop.f32.mrf.mxu0
        %v5189 = vadd.f32 %v5092, %v5188
        %v5190 = vpop.f32.mrf.mxu0
        %v5191 = vpop.f32.mrf.mxu0
        %v5192 = vadd.f32 %v5095, %v5191
        %v5193 = vpop.f32.mrf.mxu0
        %5194 = vmatprep.mubr.bf16.mxu0 %v4845
        %5195 = vmatmul.mubr.bf16.gmra.mxu0 %v4844
        %v5196 = vpop.f32.mrf.mxu0
        %v5197 = vadd.f32 %v5100, %v5196
        %v5198 = vpop.f32.mrf.mxu0
        %v5199 = vpop.f32.mrf.mxu0
        %v5200 = vadd.f32 %v5103, %v5199
        %v5201 = vpop.f32.mrf.mxu0
        %5202 = vmatprep.mubr.bf16.mxu0 %v4853
        %5203 = vmatmul.mubr.bf16.gmra.mxu0 %v4852
        %v5204 = vpop.f32.mrf.mxu0
        %v5205 = vadd.f32 %v5108, %v5204
        %v5206 = vpop.f32.mrf.mxu0
        %v5207 = vpop.f32.mrf.mxu0
        %v5208 = vadd.f32 %v5111, %v5207
        %v5209 = vpop.f32.mrf.mxu0
        %5210 = vmatprep.mubr.bf16.mxu0 %v4861
        %5211 = vmatmul.mubr.bf16.gmra.mxu0 %v4860
        %v5212 = vpop.f32.mrf.mxu0
        %v5213 = vadd.f32 %v5116, %v5212
        %v5214 = vpop.f32.mrf.mxu0
        %v5215 = vpop.f32.mrf.mxu0
        %v5216 = vadd.f32 %v5119, %v5215
        %v5217 = vpop.f32.mrf.mxu0
        %5218 = vmatprep.mubr.bf16.mxu0 %v4869
        %5219 = vmatmul.mubr.bf16.gmra.mxu0 %v4868
        %v5220 = vpop.f32.mrf.mxu0
        %v5221 = vadd.f32 %v5124, %v5220
        %v5222 = vpop.f32.mrf.mxu0
        %v5223 = vpop.f32.mrf.mxu0
        %v5224 = vadd.f32 %v5127, %v5223
        %v5225 = vpop.f32.mrf.mxu0
        %5226 = vmatprep.mubr.bf16.mxu0 %v4877
        %5227 = vmatmul.mubr.bf16.gmra.mxu0 %v4876
        %v5228 = vpop.f32.mrf.mxu0
        %v5229 = vadd.f32 %v5132, %v5228
        %v5230 = vpop.f32.mrf.mxu0
        %v5231 = vpop.f32.mrf.mxu0
        %v5232 = vadd.f32 %v5135, %v5231
        %v5233 = vpop.f32.mrf.mxu0
        %5234 = vmatprep.mubr.bf16.mxu0 %v4885
        %5235 = vmatmul.mubr.bf16.gmra.mxu0 %v4884
        %v5236 = vpop.f32.mrf.mxu0
        %v5237 = vadd.f32 %v5140, %v5236
        %v5238 = vpop.f32.mrf.mxu0
        %v5239 = vpop.f32.mrf.mxu0
        %v5240 = vadd.f32 %v5143, %v5239
        %v5241 = vpop.f32.mrf.mxu0
        %5242 = vmatprep.mubr.bf16.mxu0 %v4893
        %5243 = vmatmul.mubr.bf16.gmra.mxu0 %v4892
        %v5244 = vpop.f32.mrf.mxu0
        %v5245 = vadd.f32 %v5148, %v5244
        %v5246 = vpop.f32.mrf.mxu0
        %v5247 = vpop.f32.mrf.mxu0
        %v5248 = vadd.f32 %v5151, %v5247
        %v5249 = vpop.f32.mrf.mxu0
        %5250 = vdwg.mxu0
        %5251 = vmatprep.subr.bf16.mxu0 0
        %5252 = vmatpush1.bf16.msra.mxu0 %v4567
        %5253 = vmatprep.subr.bf16.mxu0 0
        %5254 = vmatpush1.bf16.msra.mxu0 %v4566
        %5255 = vmatprep.subr.bf16.mxu0 0
        %5256 = vmatpush1.bf16.msra.mxu0 %v4565
        %5257 = vmatprep.subr.bf16.mxu0 0
        %5258 = vmatpush1.bf16.msra.mxu0 %v4564
        %5259 = vmatprep.subr.bf16.mxu0 0
        %5260 = vmatpush1.bf16.msra.mxu0 %v4563
        %5261 = vmatprep.subr.bf16.mxu0 0
        %5262 = vmatpush1.bf16.msra.mxu0 %v4562
        %5263 = vmatprep.subr.bf16.mxu0 0
        %5264 = vmatpush1.bf16.msra.mxu0 %v4561
        %5265 = vmatprep.subr.bf16.mxu0 0
        %5266 = vmatpush1.bf16.msra.mxu0 %v4560
        %5267 = vmatprep.subr.bf16.mxu0 0
        %5268 = vmatpush2.bf16.msra.mxu0 %v4575
        %5269 = vmatprep.subr.bf16.mxu0 0
        %5270 = vmatpush2.bf16.msra.mxu0 %v4574
        %5271 = vmatprep.subr.bf16.mxu0 0
        %5272 = vmatpush2.bf16.msra.mxu0 %v4573
        %5273 = vmatprep.subr.bf16.mxu0 0
        %5274 = vmatpush2.bf16.msra.mxu0 %v4572
        %5275 = vmatprep.subr.bf16.mxu0 0
        %5276 = vmatpush2.bf16.msra.mxu0 %v4571
        %5277 = vmatprep.subr.bf16.mxu0 0
        %5278 = vmatpush2.bf16.msra.mxu0 %v4570
        %5279 = vmatprep.subr.bf16.mxu0 0
        %5280 = vmatpush2.bf16.msra.mxu0 %v4569
        %5281 = vmatprep.subr.bf16.mxu0 0
        %5282 = vmatpush2.bf16.msra.mxu0 %v4568
        %5283 = vmatprep.mubr.bf16.mxu0 %v4839
        %5284 = vmatmul.mubr.bf16.gmra.mxu0 %v4838
        %v5285 = vpop.f32.mrf.mxu0
        %v5286 = vadd.f32 %v5189, %v5285
        %v5287 = vpop.f32.mrf.mxu0
        %v5288 = vpop.f32.mrf.mxu0
        %v5289 = vadd.f32 %v5192, %v5288
        %v5290 = vpop.f32.mrf.mxu0
        %5291 = vmatprep.mubr.bf16.mxu0 %v4847
        %5292 = vmatmul.mubr.bf16.gmra.mxu0 %v4846
        %v5293 = vpop.f32.mrf.mxu0
        %v5294 = vadd.f32 %v5197, %v5293
        %v5295 = vpop.f32.mrf.mxu0
        %v5296 = vpop.f32.mrf.mxu0
        %v5297 = vadd.f32 %v5200, %v5296
        %v5298 = vpop.f32.mrf.mxu0
        %5299 = vmatprep.mubr.bf16.mxu0 %v4855
        %5300 = vmatmul.mubr.bf16.gmra.mxu0 %v4854
        %v5301 = vpop.f32.mrf.mxu0
        %v5302 = vadd.f32 %v5205, %v5301
        %v5303 = vpop.f32.mrf.mxu0
        %v5304 = vpop.f32.mrf.mxu0
        %v5305 = vadd.f32 %v5208, %v5304
        %v5306 = vpop.f32.mrf.mxu0
        %5307 = vmatprep.mubr.bf16.mxu0 %v4863
        %5308 = vmatmul.mubr.bf16.gmra.mxu0 %v4862
        %v5309 = vpop.f32.mrf.mxu0
        %v5310 = vadd.f32 %v5213, %v5309
        %v5311 = vpop.f32.mrf.mxu0
        %v5312 = vpop.f32.mrf.mxu0
        %v5313 = vadd.f32 %v5216, %v5312
        %v5314 = vpop.f32.mrf.mxu0
        %5315 = vmatprep.mubr.bf16.mxu0 %v4871
        %5316 = vmatmul.mubr.bf16.gmra.mxu0 %v4870
        %v5317 = vpop.f32.mrf.mxu0
        %v5318 = vadd.f32 %v5221, %v5317
        %v5319 = vpop.f32.mrf.mxu0
        %v5320 = vpop.f32.mrf.mxu0
        %v5321 = vadd.f32 %v5224, %v5320
        %v5322 = vpop.f32.mrf.mxu0
        %5323 = vmatprep.mubr.bf16.mxu0 %v4879
        %5324 = vmatmul.mubr.bf16.gmra.mxu0 %v4878
        %v5325 = vpop.f32.mrf.mxu0
        %v5326 = vadd.f32 %v5229, %v5325
        %v5327 = vpop.f32.mrf.mxu0
        %v5328 = vpop.f32.mrf.mxu0
        %v5329 = vadd.f32 %v5232, %v5328
        %v5330 = vpop.f32.mrf.mxu0
        %5331 = vmatprep.mubr.bf16.mxu0 %v4887
        %5332 = vmatmul.mubr.bf16.gmra.mxu0 %v4886
        %v5333 = vpop.f32.mrf.mxu0
        %v5334 = vadd.f32 %v5237, %v5333
        %v5335 = vpop.f32.mrf.mxu0
        %v5336 = vpop.f32.mrf.mxu0
        %v5337 = vadd.f32 %v5240, %v5336
        %v5338 = vpop.f32.mrf.mxu0
        %5339 = vmatprep.mubr.bf16.mxu0 %v4895
        %5340 = vmatmul.mubr.bf16.gmra.mxu0 %v4894
        %v5341 = vpop.f32.mrf.mxu0
        %v5342 = vadd.f32 %v5245, %v5341
        %v5343 = vpop.f32.mrf.mxu0
        %v5344 = vpop.f32.mrf.mxu0
        %v5345 = vadd.f32 %v5248, %v5344
        %v5346 = vpop.f32.mrf.mxu0
        %5347 = vdwg.mxu0
        %v5348 = vld [vmem:[#allocation3] sm:$0xff]
        %v5349 = vld [vmem:[#allocation3 + $0x8] sm:$0xff]
        %v5350 = vld [vmem:[#allocation3 + $0x10] sm:$0xff]
        %v5351 = vld [vmem:[#allocation3 + $0x18] sm:$0xff]
        %v5352 = vld [vmem:[#allocation3 + $0x20] sm:$0xff]
        %v5353 = vld [vmem:[#allocation3 + $0x28] sm:$0xff]
        %v5354 = vld [vmem:[#allocation3 + $0x30] sm:$0xff]
        %v5355 = vld [vmem:[#allocation3 + $0x38] sm:$0xff]
        %v5356 = vld [vmem:[#allocation3 + $0x40] sm:$0xff]
        %v5357 = vld [vmem:[#allocation3 + $0x48] sm:$0xff]
        %v5358 = vld [vmem:[#allocation3 + $0x50] sm:$0xff]
        %v5359 = vld [vmem:[#allocation3 + $0x58] sm:$0xff]
        %v5360 = vld [vmem:[#allocation3 + $0x60] sm:$0xff]
        %v5361 = vld [vmem:[#allocation3 + $0x68] sm:$0xff]
        %v5362 = vld [vmem:[#allocation3 + $0x70] sm:$0xff]
        %v5363 = vld [vmem:[#allocation3 + $0x78] sm:$0xff]
        %v5364 = vlaneseq
        %v5365 = vshrl.u32 %v5364, 7
        %v5366 = vsub.s32 0, %v5365
        %v5367 = vrot.slane %v4243, %v5366
        %v5368 = vmul.f32 %v5367, %v5348
        %v5369 = vmul.f32 %v5367, %v5349
        %v5370 = vmul.f32 %v5367, %v5350
        %v5371 = vmul.f32 %v5367, %v5351
        %v5372 = vmul.f32 %v5367, %v5352
        %v5373 = vmul.f32 %v5367, %v5353
        %v5374 = vmul.f32 %v5367, %v5354
        %v5375 = vmul.f32 %v5367, %v5355
        %v5376 = vmul.f32 %v5367, %v5356
        %v5377 = vmul.f32 %v5367, %v5357
        %v5378 = vmul.f32 %v5367, %v5358
        %v5379 = vmul.f32 %v5367, %v5359
        %v5380 = vmul.f32 %v5367, %v5360
        %v5381 = vmul.f32 %v5367, %v5361
        %v5382 = vmul.f32 %v5367, %v5362
        %v5383 = vmul.f32 %v5367, %v5363
        %v5384 = vadd.f32 %v5368, %v5286
        %v5385 = vadd.f32 %v5369, %v5289
        %v5386 = vadd.f32 %v5370, %v5294
        %v5387 = vadd.f32 %v5371, %v5297
        %v5388 = vadd.f32 %v5372, %v5302
        %v5389 = vadd.f32 %v5373, %v5305
        %v5390 = vadd.f32 %v5374, %v5310
        %v5391 = vadd.f32 %v5375, %v5313
        %v5392 = vadd.f32 %v5376, %v5318
        %v5393 = vadd.f32 %v5377, %v5321
        %v5394 = vadd.f32 %v5378, %v5326
        %v5395 = vadd.f32 %v5379, %v5329
        %v5396 = vadd.f32 %v5380, %v5334
        %v5397 = vadd.f32 %v5381, %v5337
        %v5398 = vadd.f32 %v5382, %v5342
        %v5399 = vadd.f32 %v5383, %v5345
        %5400 = vst [vmem:[#allocation3] sm:$0xff] %v5384
        %5401 = vst [vmem:[#allocation3 + $0x8] sm:$0xff] %v5385
        %5402 = vst [vmem:[#allocation3 + $0x10] sm:$0xff] %v5386
        %5403 = vst [vmem:[#allocation3 + $0x18] sm:$0xff] %v5387
        %5404 = vst [vmem:[#allocation3 + $0x20] sm:$0xff] %v5388
        %5405 = vst [vmem:[#allocation3 + $0x28] sm:$0xff] %v5389
        %5406 = vst [vmem:[#allocation3 + $0x30] sm:$0xff] %v5390
        %5407 = vst [vmem:[#allocation3 + $0x38] sm:$0xff] %v5391
        %5408 = vst [vmem:[#allocation3 + $0x40] sm:$0xff] %v5392
        %5409 = vst [vmem:[#allocation3 + $0x48] sm:$0xff] %v5393
        %5410 = vst [vmem:[#allocation3 + $0x50] sm:$0xff] %v5394
        %5411 = vst [vmem:[#allocation3 + $0x58] sm:$0xff] %v5395
        %5412 = vst [vmem:[#allocation3 + $0x60] sm:$0xff] %v5396
        %5413 = vst [vmem:[#allocation3 + $0x68] sm:$0xff] %v5397
        %5414 = vst [vmem:[#allocation3 + $0x70] sm:$0xff] %v5398
        %5415 = vst [vmem:[#allocation3 + $0x78] sm:$0xff] %v5399
        %vm5416 = vcmask 0
        %5417 = vst.msk [vmem:[#allocation2] sm:$0x1] %vm5416, %v2299
        %p5418 = scmp.eq.s32.totalorder %s20, 1
        // Predicated region
        $region64: #{gat_forward.3} parent=54 // pred_check
          %p5419 = pneg %p5418
        $region65: #{gat_forward.3} parent=54 // pred_check_branch
          %5421 = sbr.rel (%p5419) target = $region67
        $region66: #{gat_forward.3} parent=54 // pred_region
          %v5422 = vld [vmem:[#allocation3] sm:$0xff]
          %v5423 = vld [vmem:[#allocation3 + $0x8] sm:$0xff]
          %v5424 = vld [vmem:[#allocation3 + $0x10] sm:$0xff]
          %v5425 = vld [vmem:[#allocation3 + $0x18] sm:$0xff]
          %v5426 = vld [vmem:[#allocation3 + $0x20] sm:$0xff]
          %v5427 = vld [vmem:[#allocation3 + $0x28] sm:$0xff]
          %v5428 = vld [vmem:[#allocation3 + $0x30] sm:$0xff]
          %v5429 = vld [vmem:[#allocation3 + $0x38] sm:$0xff]
          %v5430 = vld [vmem:[#allocation3 + $0x40] sm:$0xff]
          %v5431 = vld [vmem:[#allocation3 + $0x48] sm:$0xff]
          %v5432 = vld [vmem:[#allocation3 + $0x50] sm:$0xff]
          %v5433 = vld [vmem:[#allocation3 + $0x58] sm:$0xff]
          %v5434 = vld [vmem:[#allocation3 + $0x60] sm:$0xff]
          %v5435 = vld [vmem:[#allocation3 + $0x68] sm:$0xff]
          %v5436 = vld [vmem:[#allocation3 + $0x70] sm:$0xff]
          %v5437 = vld [vmem:[#allocation3 + $0x78] sm:$0xff]
          %v5438 = vadd.f32 %v5422, 1e-16
          %v5439 = vadd.f32 %v5423, 1e-16
          %v5440 = vadd.f32 %v5424, 1e-16
          %v5441 = vadd.f32 %v5425, 1e-16
          %v5442 = vadd.f32 %v5426, 1e-16
          %v5443 = vadd.f32 %v5427, 1e-16
          %v5444 = vadd.f32 %v5428, 1e-16
          %v5445 = vadd.f32 %v5429, 1e-16
          %v5446 = vadd.f32 %v5430, 1e-16
          %v5447 = vadd.f32 %v5431, 1e-16
          %v5448 = vadd.f32 %v5432, 1e-16
          %v5449 = vadd.f32 %v5433, 1e-16
          %v5450 = vadd.f32 %v5434, 1e-16
          %v5451 = vadd.f32 %v5435, 1e-16
          %v5452 = vadd.f32 %v5436, 1e-16
          %v5453 = vadd.f32 %v5437, 1e-16
          %v5454 = vrcp.pop %v5438
          %v5455 = vmul.f32 1.0, %v5454
          %v5456 = vrcp.pop %v5439
          %v5457 = vmul.f32 1.0, %v5456
          %v5458 = vrcp.pop %v5440
          %v5459 = vmul.f32 1.0, %v5458
          %v5460 = vrcp.pop %v5441
          %v5461 = vmul.f32 1.0, %v5460
          %v5462 = vrcp.pop %v5442
          %v5463 = vmul.f32 1.0, %v5462
          %v5464 = vrcp.pop %v5443
          %v5465 = vmul.f32 1.0, %v5464
          %v5466 = vrcp.pop %v5444
          %v5467 = vmul.f32 1.0, %v5466
          %v5468 = vrcp.pop %v5445
          %v5469 = vmul.f32 1.0, %v5468
          %v5470 = vrcp.pop %v5446
          %v5471 = vmul.f32 1.0, %v5470
          %v5472 = vrcp.pop %v5447
          %v5473 = vmul.f32 1.0, %v5472
          %v5474 = vrcp.pop %v5448
          %v5475 = vmul.f32 1.0, %v5474
          %v5476 = vrcp.pop %v5449
          %v5477 = vmul.f32 1.0, %v5476
          %v5478 = vrcp.pop %v5450
          %v5479 = vmul.f32 1.0, %v5478
          %v5480 = vrcp.pop %v5451
          %v5481 = vmul.f32 1.0, %v5480
          %v5482 = vrcp.pop %v5452
          %v5483 = vmul.f32 1.0, %v5482
          %v5484 = vrcp.pop %v5453
          %v5485 = vmul.f32 1.0, %v5484
          %5502 = vrot.lane.b32.xlu0 %v5455, 112
          %v5503 = vpop.permute.xlu0 %5502
          %5504 = vrot.lane.b32.xlu0 %v5457, 112
          %v5505 = vpop.permute.xlu0 %5504
          %5506 = vrot.lane.b32.xlu0 %v5459, 112
          %v5507 = vpop.permute.xlu0 %5506
          %5508 = vrot.lane.b32.xlu0 %v5461, 112
          %v5509 = vpop.permute.xlu0 %5508
          %5510 = vrot.lane.b32.xlu0 %v5463, 112
          %v5511 = vpop.permute.xlu0 %5510
          %5512 = vrot.lane.b32.xlu0 %v5465, 112
          %v5513 = vpop.permute.xlu0 %5512
          %5514 = vrot.lane.b32.xlu0 %v5467, 112
          %v5515 = vpop.permute.xlu0 %5514
          %5516 = vrot.lane.b32.xlu0 %v5469, 112
          %v5517 = vpop.permute.xlu0 %5516
          %5518 = vrot.lane.b32.xlu0 %v5471, 112
          %v5519 = vpop.permute.xlu0 %5518
          %5520 = vrot.lane.b32.xlu0 %v5473, 112
          %v5521 = vpop.permute.xlu0 %5520
          %5522 = vrot.lane.b32.xlu0 %v5475, 112
          %v5523 = vpop.permute.xlu0 %5522
          %5524 = vrot.lane.b32.xlu0 %v5477, 112
          %v5525 = vpop.permute.xlu0 %5524
          %5526 = vrot.lane.b32.xlu0 %v5479, 112
          %v5527 = vpop.permute.xlu0 %5526
          %5528 = vrot.lane.b32.xlu0 %v5481, 112
          %v5529 = vpop.permute.xlu0 %5528
          %5530 = vrot.lane.b32.xlu0 %v5483, 112
          %v5531 = vpop.permute.xlu0 %5530
          %5532 = vrot.lane.b32.xlu0 %v5485, 112
          %v5533 = vpop.permute.xlu0 %5532
          %v5534 = vsel %vm3207, %v5503, 0
          %v5536 = vsel %vm3207, %v5505, 0
          %v5538 = vsel %vm3207, %v5507, 0
          %v5540 = vsel %vm3207, %v5509, 0
          %v5542 = vsel %vm3207, %v5511, 0
          %v5544 = vsel %vm3207, %v5513, 0
          %v5546 = vsel %vm3207, %v5515, 0
          %v5548 = vsel %vm3207, %v5517, 0
          %v5550 = vsel %vm3207, %v5519, 0
          %v5552 = vsel %vm3207, %v5521, 0
          %v5554 = vsel %vm3207, %v5523, 0
          %v5556 = vsel %vm3207, %v5525, 0
          %v5558 = vsel %vm3207, %v5527, 0
          %v5560 = vsel %vm3207, %v5529, 0
          %v5562 = vsel %vm3207, %v5531, 0
          %v5564 = vsel %vm3207, %v5533, 0
          %5566 = vmatprep.subr.mxu0 0.0
          %5567 = vmatpush1.msra.mxu0 0.0
          %5568 = vmatprep.subr.mxu0 0.0
          %5569 = vmatpush1.msra.mxu0 0.0
          %5570 = vmatprep.subr.mxu0 0.0
          %5571 = vmatpush1.msra.mxu0 0.0
          %5572 = vmatprep.subr.mxu0 0.0
          %5573 = vmatpush1.msra.mxu0 0.0
          %5574 = vmatprep.subr.mxu0 0.0
          %5575 = vmatpush1.msra.mxu0 0.0
          %5576 = vmatprep.subr.mxu0 0.0
          %5577 = vmatpush1.msra.mxu0 0.0
          %5578 = vmatprep.subr.mxu0 0.0
          %5579 = vmatpush1.msra.mxu0 0.0
          %5580 = vmatprep.subr.mxu0 0.0
          %5581 = vmatpush1.msra.mxu0 0.0
          %5582 = vmatprep.subr.mxu0 0.0
          %5583 = vmatpush1.msra.mxu0 0.0
          %5584 = vmatprep.subr.mxu0 0.0
          %5585 = vmatpush1.msra.mxu0 0.0
          %5586 = vmatprep.subr.mxu0 0.0
          %5587 = vmatpush1.msra.mxu0 0.0
          %5588 = vmatprep.subr.mxu0 0.0
          %5589 = vmatpush1.msra.mxu0 0.0
          %5590 = vmatprep.subr.mxu0 0.0
          %5591 = vmatpush1.msra.mxu0 0.0
          %5592 = vmatprep.subr.mxu0 0.0
          %5593 = vmatpush1.msra.mxu0 0.0
          %5594 = vmatprep.subr.mxu0 0.0
          %5595 = vmatpush1.msra.mxu0 0.0
          %5596 = vmatprep.subr.mxu0 0.0
          %5597 = vmatpush1.msra.mxu0 %v3466
          %5598 = vmatprep.subr.mxu0 0.0
          %5599 = vmatpush2.msra.mxu0 0.0
          %5600 = vmatprep.subr.mxu0 0.0
          %5601 = vmatpush2.msra.mxu0 0.0
          %5602 = vmatprep.subr.mxu0 0.0
          %5603 = vmatpush2.msra.mxu0 0.0
          %5604 = vmatprep.subr.mxu0 0.0
          %5605 = vmatpush2.msra.mxu0 0.0
          %5606 = vmatprep.subr.mxu0 0.0
          %5607 = vmatpush2.msra.mxu0 0.0
          %5608 = vmatprep.subr.mxu0 0.0
          %5609 = vmatpush2.msra.mxu0 0.0
          %5610 = vmatprep.subr.mxu0 0.0
          %5611 = vmatpush2.msra.mxu0 0.0
          %5612 = vmatprep.subr.mxu0 0.0
          %5613 = vmatpush2.msra.mxu0 0.0
          %5614 = vmatprep.subr.mxu0 0.0
          %5615 = vmatpush2.msra.mxu0 0.0
          %5616 = vmatprep.subr.mxu0 0.0
          %5617 = vmatpush2.msra.mxu0 0.0
          %5618 = vmatprep.subr.mxu0 0.0
          %5619 = vmatpush2.msra.mxu0 0.0
          %5620 = vmatprep.subr.mxu0 0.0
          %5621 = vmatpush2.msra.mxu0 0.0
          %5622 = vmatprep.subr.mxu0 0.0
          %5623 = vmatpush2.msra.mxu0 0.0
          %5624 = vmatprep.subr.mxu0 0.0
          %5625 = vmatpush2.msra.mxu0 0.0
          %5626 = vmatprep.subr.mxu0 0.0
          %5627 = vmatpush2.msra.mxu0 0.0
          %5628 = vmatprep.subr.mxu0 0.0
          %5629 = vmatpush2.msra.mxu0 0.0
          %5630 = vmatprep.mubr.f32.mxu0 0.0
          %5631 = vmatmul.mubr.f32.gmra.mxu0 %v5534
          %v5632 = vpop.f32.mrf.mxu0
          %v5633 = vadd.f32 0.0, %v5632
          %v5634 = vpop.f32.mrf.mxu0
          %5635 = vmatprep.mubr.f32.mxu0 0.0
          %5636 = vmatmul.mubr.f32.gmra.mxu0 %v5536
          %v5637 = vpop.f32.mrf.mxu0
          %v5638 = vadd.f32 0.0, %v5637
          %v5639 = vpop.f32.mrf.mxu0
          %5640 = vmatprep.mubr.f32.mxu0 0.0
          %5641 = vmatmul.mubr.f32.gmra.mxu0 %v5538
          %v5642 = vpop.f32.mrf.mxu0
          %v5643 = vadd.f32 0.0, %v5642
          %v5644 = vpop.f32.mrf.mxu0
          %5645 = vmatprep.mubr.f32.mxu0 0.0
          %5646 = vmatmul.mubr.f32.gmra.mxu0 %v5540
          %v5647 = vpop.f32.mrf.mxu0
          %v5648 = vadd.f32 0.0, %v5647
          %v5649 = vpop.f32.mrf.mxu0
          %5650 = vmatprep.mubr.f32.mxu0 0.0
          %5651 = vmatmul.mubr.f32.gmra.mxu0 %v5542
          %v5652 = vpop.f32.mrf.mxu0
          %v5653 = vadd.f32 0.0, %v5652
          %v5654 = vpop.f32.mrf.mxu0
          %5655 = vmatprep.mubr.f32.mxu0 0.0
          %5656 = vmatmul.mubr.f32.gmra.mxu0 %v5544
          %v5657 = vpop.f32.mrf.mxu0
          %v5658 = vadd.f32 0.0, %v5657
          %v5659 = vpop.f32.mrf.mxu0
          %5660 = vmatprep.mubr.f32.mxu0 0.0
          %5661 = vmatmul.mubr.f32.gmra.mxu0 %v5546
          %v5662 = vpop.f32.mrf.mxu0
          %v5663 = vadd.f32 0.0, %v5662
          %v5664 = vpop.f32.mrf.mxu0
          %5665 = vmatprep.mubr.f32.mxu0 0.0
          %5666 = vmatmul.mubr.f32.gmra.mxu0 %v5548
          %v5667 = vpop.f32.mrf.mxu0
          %v5668 = vadd.f32 0.0, %v5667
          %v5669 = vpop.f32.mrf.mxu0
          %5670 = vmatprep.mubr.f32.mxu0 0.0
          %5671 = vmatmul.mubr.f32.gmra.mxu0 %v5550
          %v5672 = vpop.f32.mrf.mxu0
          %v5673 = vadd.f32 0.0, %v5672
          %v5674 = vpop.f32.mrf.mxu0
          %5675 = vmatprep.mubr.f32.mxu0 0.0
          %5676 = vmatmul.mubr.f32.gmra.mxu0 %v5552
          %v5677 = vpop.f32.mrf.mxu0
          %v5678 = vadd.f32 0.0, %v5677
          %v5679 = vpop.f32.mrf.mxu0
          %5680 = vmatprep.mubr.f32.mxu0 0.0
          %5681 = vmatmul.mubr.f32.gmra.mxu0 %v5554
          %v5682 = vpop.f32.mrf.mxu0
          %v5683 = vadd.f32 0.0, %v5682
          %v5684 = vpop.f32.mrf.mxu0
          %5685 = vmatprep.mubr.f32.mxu0 0.0
          %5686 = vmatmul.mubr.f32.gmra.mxu0 %v5556
          %v5687 = vpop.f32.mrf.mxu0
          %v5688 = vadd.f32 0.0, %v5687
          %v5689 = vpop.f32.mrf.mxu0
          %5690 = vmatprep.mubr.f32.mxu0 0.0
          %5691 = vmatmul.mubr.f32.gmra.mxu0 %v5558
          %v5692 = vpop.f32.mrf.mxu0
          %v5693 = vadd.f32 0.0, %v5692
          %v5694 = vpop.f32.mrf.mxu0
          %5695 = vmatprep.mubr.f32.mxu0 0.0
          %5696 = vmatmul.mubr.f32.gmra.mxu0 %v5560
          %v5697 = vpop.f32.mrf.mxu0
          %v5698 = vadd.f32 0.0, %v5697
          %v5699 = vpop.f32.mrf.mxu0
          %5700 = vmatprep.mubr.f32.mxu0 0.0
          %5701 = vmatmul.mubr.f32.gmra.mxu0 %v5562
          %v5702 = vpop.f32.mrf.mxu0
          %v5703 = vadd.f32 0.0, %v5702
          %v5704 = vpop.f32.mrf.mxu0
          %5705 = vmatprep.mubr.f32.mxu0 0.0
          %5706 = vmatmul.mubr.f32.gmra.mxu0 %v5564
          %v5707 = vpop.f32.mrf.mxu0
          %v5708 = vadd.f32 0.0, %v5707
          %v5709 = vpop.f32.mrf.mxu0
          %5710 = vdwg.mxu0
          %v5711 = vmul.f32 %v5422, %v5633
          %v5712 = vmul.f32 %v5423, %v5638
          %v5713 = vmul.f32 %v5424, %v5643
          %v5714 = vmul.f32 %v5425, %v5648
          %v5715 = vmul.f32 %v5426, %v5653
          %v5716 = vmul.f32 %v5427, %v5658
          %v5717 = vmul.f32 %v5428, %v5663
          %v5718 = vmul.f32 %v5429, %v5668
          %v5719 = vmul.f32 %v5430, %v5673
          %v5720 = vmul.f32 %v5431, %v5678
          %v5721 = vmul.f32 %v5432, %v5683
          %v5722 = vmul.f32 %v5433, %v5688
          %v5723 = vmul.f32 %v5434, %v5693
          %v5724 = vmul.f32 %v5435, %v5698
          %v5725 = vmul.f32 %v5436, %v5703
          %v5726 = vmul.f32 %v5437, %v5708
          %vm5727 = vcmp.gt.f32.partialorder %v5711, 0.0
          %vm5728 = vcmp.gt.f32.partialorder %v5712, 0.0
          %vm5729 = vcmp.gt.f32.partialorder %v5713, 0.0
          %vm5730 = vcmp.gt.f32.partialorder %v5714, 0.0
          %vm5731 = vcmp.gt.f32.partialorder %v5715, 0.0
          %vm5732 = vcmp.gt.f32.partialorder %v5716, 0.0
          %vm5733 = vcmp.gt.f32.partialorder %v5717, 0.0
          %vm5734 = vcmp.gt.f32.partialorder %v5718, 0.0
          %vm5735 = vcmp.gt.f32.partialorder %v5719, 0.0
          %vm5736 = vcmp.gt.f32.partialorder %v5720, 0.0
          %vm5737 = vcmp.gt.f32.partialorder %v5721, 0.0
          %vm5738 = vcmp.gt.f32.partialorder %v5722, 0.0
          %vm5739 = vcmp.gt.f32.partialorder %v5723, 0.0
          %vm5740 = vcmp.gt.f32.partialorder %v5724, 0.0
          %vm5741 = vcmp.gt.f32.partialorder %v5725, 0.0
          %vm5742 = vcmp.gt.f32.partialorder %v5726, 0.0
          %v5743 = vmin.f32 %v5711, 0.0
          %v5744 = vmin.f32 %v5712, 0.0
          %v5745 = vmin.f32 %v5713, 0.0
          %v5746 = vmin.f32 %v5714, 0.0
          %v5747 = vmin.f32 %v5715, 0.0
          %v5748 = vmin.f32 %v5716, 0.0
          %v5749 = vmin.f32 %v5717, 0.0
          %v5750 = vmin.f32 %v5718, 0.0
          %v5751 = vmin.f32 %v5719, 0.0
          %v5752 = vmin.f32 %v5720, 0.0
          %v5753 = vmin.f32 %v5721, 0.0
          %v5754 = vmin.f32 %v5722, 0.0
          %v5755 = vmin.f32 %v5723, 0.0
          %v5756 = vmin.f32 %v5724, 0.0
          %v5757 = vmin.f32 %v5725, 0.0
          %v5758 = vmin.f32 %v5726, 0.0
          %v5759 = vmul.f32 %v5743, 1.442695
          %v5760 = vpow.pop %v5759
          %v5761 = vmul.f32 %v5744, 1.442695
          %v5762 = vpow.pop %v5761
          %v5763 = vmul.f32 %v5745, 1.442695
          %v5764 = vpow.pop %v5763
          %v5765 = vmul.f32 %v5746, 1.442695
          %v5766 = vpow.pop %v5765
          %v5767 = vmul.f32 %v5747, 1.442695
          %v5768 = vpow.pop %v5767
          %v5769 = vmul.f32 %v5748, 1.442695
          %v5770 = vpow.pop %v5769
          %v5771 = vmul.f32 %v5749, 1.442695
          %v5772 = vpow.pop %v5771
          %v5773 = vmul.f32 %v5750, 1.442695
          %v5774 = vpow.pop %v5773
          %v5775 = vmul.f32 %v5751, 1.442695
          %v5776 = vpow.pop %v5775
          %v5777 = vmul.f32 %v5752, 1.442695
          %v5778 = vpow.pop %v5777
          %v5779 = vmul.f32 %v5753, 1.442695
          %v5780 = vpow.pop %v5779
          %v5781 = vmul.f32 %v5754, 1.442695
          %v5782 = vpow.pop %v5781
          %v5783 = vmul.f32 %v5755, 1.442695
          %v5784 = vpow.pop %v5783
          %v5785 = vmul.f32 %v5756, 1.442695
          %v5786 = vpow.pop %v5785
          %v5787 = vmul.f32 %v5757, 1.442695
          %v5788 = vpow.pop %v5787
          %v5789 = vmul.f32 %v5758, 1.442695
          %v5790 = vpow.pop %v5789
          %v5791 = vsub.f32 %v5760, 1.0
          %v5792 = vsub.f32 %v5762, 1.0
          %v5793 = vsub.f32 %v5764, 1.0
          %v5794 = vsub.f32 %v5766, 1.0
          %v5795 = vsub.f32 %v5768, 1.0
          %v5796 = vsub.f32 %v5770, 1.0
          %v5797 = vsub.f32 %v5772, 1.0
          %v5798 = vsub.f32 %v5774, 1.0
          %v5799 = vsub.f32 %v5776, 1.0
          %v5800 = vsub.f32 %v5778, 1.0
          %v5801 = vsub.f32 %v5780, 1.0
          %v5802 = vsub.f32 %v5782, 1.0
          %v5803 = vsub.f32 %v5784, 1.0
          %v5804 = vsub.f32 %v5786, 1.0
          %v5805 = vsub.f32 %v5788, 1.0
          %v5806 = vsub.f32 %v5790, 1.0
          %v5807 = vsel %vm5727, %v5711, %v5791
          %v5808 = vsel %vm5728, %v5712, %v5792
          %v5809 = vsel %vm5729, %v5713, %v5793
          %v5810 = vsel %vm5730, %v5714, %v5794
          %v5811 = vsel %vm5731, %v5715, %v5795
          %v5812 = vsel %vm5732, %v5716, %v5796
          %v5813 = vsel %vm5733, %v5717, %v5797
          %v5814 = vsel %vm5734, %v5718, %v5798
          %v5815 = vsel %vm5735, %v5719, %v5799
          %v5816 = vsel %vm5736, %v5720, %v5800
          %v5817 = vsel %vm5737, %v5721, %v5801
          %v5818 = vsel %vm5738, %v5722, %v5802
          %v5819 = vsel %vm5739, %v5723, %v5803
          %v5820 = vsel %vm5740, %v5724, %v5804
          %v5821 = vsel %vm5741, %v5725, %v5805
          %v5822 = vsel %vm5742, %v5726, %v5806
          %5823 = vst [vmem:[%s384] sm:$0xff] %v5807
          %5824 = vst [vmem:[%s384 + $0x8] sm:$0xff] %v5808
          %5825 = vst [vmem:[%s384 + $0x10] sm:$0xff] %v5809
          %5826 = vst [vmem:[%s384 + $0x18] sm:$0xff] %v5810
          %5827 = vst [vmem:[%s384 + $0x20] sm:$0xff] %v5811
          %5828 = vst [vmem:[%s384 + $0x28] sm:$0xff] %v5812
          %5829 = vst [vmem:[%s384 + $0x30] sm:$0xff] %v5813
          %5830 = vst [vmem:[%s384 + $0x38] sm:$0xff] %v5814
          %5831 = vst [vmem:[%s384 + $0x40] sm:$0xff] %v5815
          %5832 = vst [vmem:[%s384 + $0x48] sm:$0xff] %v5816
          %5833 = vst [vmem:[%s384 + $0x50] sm:$0xff] %v5817
          %5834 = vst [vmem:[%s384 + $0x58] sm:$0xff] %v5818
          %5835 = vst [vmem:[%s384 + $0x60] sm:$0xff] %v5819
          %5836 = vst [vmem:[%s384 + $0x68] sm:$0xff] %v5820
          %5837 = vst [vmem:[%s384 + $0x70] sm:$0xff] %v5821
          %5838 = vst [vmem:[%s384 + $0x78] sm:$0xff] %v5822
        $region67: #{gat_forward.3} parent=54 // pred_fallthru
          _
        %s5839 = smul.u32 16, %s19
        %p5840 = scmp.lt.s32.totalorder %s5839, 31
        %s5841 = scalar_select %p5840, %s5839, 31
        %s5842 = smul.addr %s5841, 8
        %s5843 = scalar_lea.vmem %s4, %s5842
        // Predicated region
        $region68: #{gat_forward.3} parent=54 // pred_check
          %p5844 = pneg %p141
        $region69: #{gat_forward.3} parent=54 // pred_check_branch
          %5846 = sbr.rel (%p5844) target = $region71
        $region70: #{gat_forward.3} parent=54 // pred_region
          %s5847 = smul.u32 16, %s19
        $region71: #{gat_forward.3} parent=54 // pred_fallthru
          _
      $region55: #{gat_forward.3} parent=5 // pred_fallthru
        _
      %p5848 = scmp.le.s32.totalorder 2, %s10
      // Predicated region
      $region72: #{gat_forward.3} parent=5 // pred_check
        %p5849 = pneg %p5848
      $region73: #{gat_forward.3} parent=5 // pred_check_branch
        %5851 = sbr.rel (%p5849) target = $region75
      $region74: #{gat_forward.3} parent=5 // pred_region
        %s5852 = ssub.s32 %s10, 2
        // Predicated region
        $region76: #{gat_forward.3} parent=74 // pred_check
          %p5853 = pneg %p147
        $region77: #{gat_forward.3} parent=74 // pred_check_branch
          %5855 = sbr.rel (%p5853) target = $region79
        $region78: #{gat_forward.3} parent=74 // pred_region
          %s5856 = smul.u32 16, %s21
          %p5857 = scmp.lt.s32.totalorder %s5856, 31
          %s5858 = scalar_select %p5857, %s5856, 31
          %s5859 = smul.addr %s5858, 8
          %s5860 = scalar_lea.vmem %s4, %s5859
        $region79: #{gat_forward.3} parent=74 // pred_fallthru
          _
      $region75: #{gat_forward.3} parent=5 // pred_fallthru
        _
    $region6: #{gat_forward.3} parent=1 // loop_footer
      %s14 = sadd.s32 1, %s10
    $region7: #{gat_forward.3} parent=1 // loop_footer_branch
      %9 = sbr.rel target = $region3
    $region8: #{gat_forward.3} parent=1 // loop_exit
      _

</llo_original>
